<compile_context>
chip_gen: v7x
topology: tpu7x:2x2x1
jax: 0.10.0
libtpu: 0.0.40
codegen_flags: <defaults>
</compile_context>

<pallas_src>
import functools
import math

import jax
import jax.numpy as jnp
from jax.experimental import pallas as pl
from jax.experimental.pallas import tpu as pltpu

SLOPE = 0.05  # LeakyReLU negative slope used everywhere in the module.


# ----------------------------------------------------------------------------
# Pallas kernels
# ----------------------------------------------------------------------------
def _conv_gemm_kernel(w_ref, c_ref, b_ref, o_ref, *, slope):
    # Lane-dense conv GEMM: out (N, M) = lrelu(W (N,K) @ cols^T (K,M) + b (N,1))
    y = jnp.dot(w_ref[...], c_ref[...], preferred_element_type=jnp.float32)
    y = y + b_ref[...]
    o_ref[...] = jnp.where(y >= 0.0, y, slope * y)


def _conv_gemm_batched_kernel(w_ref, c_ref, b_ref, o_ref, *, slope):
    # Same as above with a leading grid axis (one independent GEMM per step).
    y = jnp.dot(w_ref[0], c_ref[0], preferred_element_type=jnp.float32)
    y = y + b_ref[0]
    o_ref[0] = jnp.where(y >= 0.0, y, slope * y)


def _fc_fused_kernel(vn_ref, vo_ref,
                     nw1_ref, nb1_ref, nw2_ref, nb2_ref,
                     nw3_ref, nb3_ref, nw4_ref, nb4_ref,
                     ow1_ref, ob1_ref, ow2_ref, ob2_ref, ow3_ref, ob3_ref,
                     o_ref, *, slope):
    # Both FC stacks, transposed chain:  h^T(N,B) = act(W(N,K) @ h^T(K,B) + b).
    def lin(w_ref, b_ref, h, act):
        y = jnp.dot(w_ref[...], h, preferred_element_type=jnp.float32) + b_ref[...]
        return jnp.where(y >= 0.0, y, slope * y) if act else y

    # new branch: fully_connect_modul_266 (Dropout = identity in eval mode)
    h = lin(nw1_ref, nb1_ref, vn_ref[...], True)
    h = lin(nw2_ref, nb2_ref, h, True)
    h = lin(nw3_ref, nb3_ref, h, True)
    h = lin(nw4_ref, nb4_ref, h, False)                  # (128, B)
    # old branch: fully_connect_modul_265 (BN eval scale folded into ow2 cols)
    g = lin(ow1_ref, ob1_ref, vo_ref[...], True)
    g = lin(ow2_ref, ob2_ref, g, True)
    g = lin(ow3_ref, ob3_ref, g, False)                  # (64, B)
    o_ref[...] = jnp.concatenate([h, g], axis=0)         # (192, B)


# ----------------------------------------------------------------------------
# Pallas wrappers
# ----------------------------------------------------------------------------
def conv_gemm(w2d, colsT, b, *, m_tile=None):
    """w2d: (N, K), colsT: (K, M), b: (N,) -> lrelu(W @ colsT + b) of shape (N, M)."""
    N, K = w2d.shape
    M = colsT.shape[1]
    if m_tile is None or M % m_tile != 0:
        m_tile = M
    grid = (M // m_tile,)
    cost = pl.CostEstimate(flops=2 * N * K * M + 2 * N * M, transcendentals=0,
                           bytes_accessed=4 * (N * K + K * M + N + N * M))
    return pl.pallas_call(
        functools.partial(_conv_gemm_kernel, slope=SLOPE),
        out_shape=jax.ShapeDtypeStruct((N, M), jnp.float32),
        grid=grid,
        in_specs=[
            pl.BlockSpec((N, K), lambda i: (0, 0)),
            pl.BlockSpec((K, m_tile), lambda i: (0, i)),
            pl.BlockSpec((N, 1), lambda i: (0, 0)),
        ],
        out_specs=pl.BlockSpec((N, m_tile), lambda i: (0, i)),
        compiler_params=pltpu.CompilerParams(dimension_semantics=("parallel",)),
        cost_estimate=cost,
    )(w2d, colsT, b.reshape(N, 1))


def conv_gemm_batched(w3d, colsT3d, b2d):
    """w3d: (G,N,K), colsT3d: (G,K,M), b2d: (G,N) -> (G,N,M); grid over G (parallel)."""
    G, N, K = w3d.shape
    M = colsT3d.shape[2]
    cost = pl.CostEstimate(flops=G * (2 * N * K * M + 2 * N * M), transcendentals=0,
                           bytes_accessed=4 * G * (N * K + K * M + N + N * M))
    return pl.pallas_call(
        functools.partial(_conv_gemm_batched_kernel, slope=SLOPE),
        out_shape=jax.ShapeDtypeStruct((G, N, M), jnp.float32),
        grid=(G,),
        in_specs=[
            pl.BlockSpec((1, N, K), lambda g: (g, 0, 0)),
            pl.BlockSpec((1, K, M), lambda g: (g, 0, 0)),
            pl.BlockSpec((1, N, 1), lambda g: (g, 0, 0)),
        ],
        out_specs=pl.BlockSpec((1, N, M), lambda g: (g, 0, 0)),
        compiler_params=pltpu.CompilerParams(dimension_semantics=("parallel",)),
        cost_estimate=cost,
    )(w3d, colsT3d, b2d.reshape(G, N, 1))


def fc_fused(vnT, voT, fc_params):
    """vnT/voT: (352, B) feature columns; fc_params: 14 arrays (w, b) x 7 layers."""
    args = [vnT, voT] + list(fc_params)
    B = vnT.shape[1]
    specs = [pl.BlockSpec(a.shape, lambda i: (0, 0)) for a in args]
    flops = sum(2 * w.shape[0] * w.shape[1] * B for w in fc_params[0::2])
    bytes_acc = 4 * (sum(int(a.size) for a in args) + 192 * B)
    return pl.pallas_call(
        functools.partial(_fc_fused_kernel, slope=SLOPE),
        out_shape=jax.ShapeDtypeStruct((192, B), jnp.float32),
        grid=(1,),
        in_specs=specs,
        out_specs=pl.BlockSpec((192, B), lambda i: (0, 0)),
        compiler_params=pltpu.CompilerParams(dimension_semantics=("arbitrary",)),
        cost_estimate=pl.CostEstimate(flops=flops, transcendentals=0,
                                      bytes_accessed=bytes_acc),
    )(*args)


# ----------------------------------------------------------------------------
# im2col (transposed / channel-major): rows ordered (c, ki, kj) so they match
# PyTorch conv weight.reshape(O, C*kh*kw); columns ordered (b, ho, wo).
# TODO(synk): patch extraction stays as XLA glue (slices+stack); moving the
# gather in-kernel via pl.ds would remove it but adds border-mask complexity.
# ----------------------------------------------------------------------------
def im2col_T(a, kh, kw, stride, pad):
    C, B, H, W = a.shape
    Ho = (H + 2 * pad - kh) // stride + 1
    Wo = (W + 2 * pad - kw) // stride + 1
    ap = jnp.pad(a, ((0, 0), (0, 0), (pad, pad), (pad, pad)))
    rows = []
    for ki in range(kh):
        for kj in range(kw):
            rows.append(ap[:, :, ki:ki + stride * Ho:stride,
                           kj:kj + stride * Wo:stride])
    p = jnp.stack(rows, axis=1)                       # (C, kh*kw, B, Ho, Wo)
    return p.reshape(C * kh * kw, B * Ho * Wo), Ho, Wo


# ----------------------------------------------------------------------------
# Deterministic parameter init, mirroring reset_parameters():
# weight ~ U(-1/sqrt(size(0)), +1/sqrt(size(0))), bias = 0; BatchNorm gamma ~ U,
# beta = 0, running stats (mean=0, var=1).
# ----------------------------------------------------------------------------
def _uinit(key, shape):
    lim = 1.0 / math.sqrt(shape[0])
    return jax.random.uniform(key, shape, jnp.float32, -lim, lim)


def init_params(key):
    specs = {
        # conv_simple_features_01 (new branch)
        "n_c00_w": (4, 1, 5, 5), "n_c01_w": (16, 4, 5, 5),
        "n_c02_w": (20, 16, 3, 3), "n_c03_w": (22, 20, 3, 3),
        # fully_connect_modul_266
        "n_d01_w": (300, 352), "n_d02_w": (256, 300),
        "n_d03_w": (200, 256), "n_d04_w": (128, 200),
        # conv_simple_features_00 (old branch)
        "o_c00_w": (4, 1, 5, 5), "o_c01_w": (16, 4, 5, 5), "o_c02_w": (22, 16, 3, 3),
        # fully_connect_modul_265
        "o_d01_w": (256, 352), "o_d02_w": (128, 256), "o_d03_w": (64, 128),
        "o_bn_gamma": (256,),
    }
    keys = jax.random.split(key, len(specs))
    params = {name: _uinit(k, shape) for k, (name, shape) in zip(keys, specs.items())}
    for name in list(params):
        if name.endswith("_w"):
            params[name.replace("_w", "_b")] = jnp.zeros((specs[name][0],), jnp.float32)
    return params


# ----------------------------------------------------------------------------
# Forward pass of TL_005_concatenate (eval mode).
# ----------------------------------------------------------------------------
def forward(params, x):
    B = x.shape[0]
    xc = jnp.transpose(x.astype(jnp.float32), (1, 0, 2, 3))   # (1, B, 128, 128)

    # --- conv00 of BOTH branches fused into one 1->8 conv GEMM (M = B*32*32) ---
    cols0, H1, W1 = im2col_T(xc, 5, 5, 4, 2)                  # (25, B*1024)
    w0 = jnp.concatenate([params["n_c00_w"], params["o_c00_w"]], axis=0).reshape(8, 25)
    b0 = jnp.concatenate([params["n_c00_b"], params["o_c00_b"]])
    a0 = conv_gemm(w0, cols0, b0, m_tile=1024)                # (8, B*1024), lrelu'd
    a0 = a0.reshape(8, B, H1, W1)
    a0_new, a0_old = a0[:4], a0[4:]

    # --- conv01 of both branches: one pallas_call, leading parallel grid axis ---
    c1n, H2, W2 = im2col_T(a0_new, 5, 5, 4, 2)                # (100, B*64)
    c1o, _, _ = im2col_T(a0_old, 5, 5, 4, 2)
    cols1 = jnp.stack([c1n, c1o])                             # (2, 100, B*64)
    w1 = jnp.stack([params["n_c01_w"].reshape(16, 100),
                    params["o_c01_w"].reshape(16, 100)])
    b1 = jnp.stack([params["n_c01_b"], params["o_c01_b"]])
    a1 = conv_gemm_batched(w1, cols1, b1)                     # (2, 16, B*64), lrelu'd
    a1_new = a1[0].reshape(16, B, H2, W2)
    a1_old = a1[1].reshape(16, B, H2, W2)

    # --- conv02 of both branches (new 16->20 padded to 22, old 16->22), batched ---
    c2n, H3, W3 = im2col_T(a1_new, 3, 3, 1, 1)                # (144, B*64)
    c2o, _, _ = im2col_T(a1_old, 3, 3, 1, 1)
    cols2 = jnp.stack([c2n, c2o])
    w2 = jnp.stack([jnp.pad(params["n_c02_w"].reshape(20, 144), ((0, 2), (0, 0))),
                    params["o_c02_w"].reshape(22, 144)])
    b2 = jnp.stack([jnp.pad(params["n_c02_b"], (0, 2)), params["o_c02_b"]])
    a2 = conv_gemm_batched(w2, cols2, b2)                     # (2, 22, B*64)
    a2_new = a2[0, :20].reshape(20, B, H3, W3)                # real 20 channels, lrelu'd
    # Old branch: conv02 -> pool -> lrelu; lrelu already applied in-kernel
    # (LeakyReLU is monotone, so it commutes with max-pool -- exact).
    a2_old = a2[1]                                            # (22, B*64)

    # --- conv03 (new branch only); lrelu applied in-kernel (commutes with pool) ---
    c3, H4, W4 = im2col_T(a2_new, 3, 3, 1, 1)                 # (180, B*64)
    a3_new = conv_gemm(params["n_c03_w"].reshape(22, 180), c3, params["n_c03_b"])

    # --- 2x2 max-pool + flatten to feature columns (352, B), order (c, h, w) ---
    # TODO(synk): max-pool kept as tiny JAX glue (22 x B x 8 x 8 reduction).
    def pool_flatten(a, H, W):
        y = a.reshape(22, B, H // 2, 2, W // 2, 2).max(axis=(3, 5))  # (22,B,H/2,W/2)
        return y.transpose(0, 2, 3, 1).reshape(22 * (H // 2) * (W // 2), B)

    vnT = pool_flatten(a3_new, H4, W4)                        # (352, B)
    voT = pool_flatten(a2_old, H3, W3)                        # (352, B)

    # --- both FC stacks fused into ONE pallas_call ---
    # BatchNorm1d eval: running_mean=0, running_var=1, beta=0 -> pure scale,
    # folded into the input columns of o_d02_w (exact: (h*s) @ W2^T == h @ (W2*s)^T).
    bn_scale = params["o_bn_gamma"] / jnp.sqrt(1.0 + 1e-5)
    ow2_folded = params["o_d02_w"] * bn_scale[None, :]
    fc_params = [
        params["n_d01_w"], params["n_d01_b"].reshape(-1, 1),
        params["n_d02_w"], params["n_d02_b"].reshape(-1, 1),
        params["n_d03_w"], params["n_d03_b"].reshape(-1, 1),
        params["n_d04_w"], params["n_d04_b"].reshape(-1, 1),
        params["o_d01_w"], params["o_d01_b"].reshape(-1, 1),
        ow2_folded,        params["o_d02_b"].reshape(-1, 1),
        params["o_d03_w"], params["o_d03_b"].reshape(-1, 1),
    ]
    outT = fc_fused(vnT, voT, fc_params)                      # (192, B): [new128; old64]
    return jnp.squeeze(outT.T)                                # (B, 192), like torch.cat(...,1).squeeze()


if __name__ == "__main__":
    key = jax.random.PRNGKey(0)
    pkey, xkey = jax.random.split(key)
    params = init_params(pkey)
    # imageSize must be (128, 128) so the flattened conv features are 352.
    x = jax.random.normal(xkey, (2, 1, 128, 128), jnp.float32)

    out = jax.jit(forward)(params, x)
    out = jax.block_until_ready(out)
    assert out.shape == (2, 192), out.shape
    assert bool(jnp.all(jnp.isfinite(out)))
    print("KERNEL_OK")
</pallas_src>

<mosaic_0001>
module attributes {stable_mosaic.version = 11 : i64} {
  func.func @_conv_gemm_kernel(%arg0: i32, %arg1: memref<8x25xf32, #tpu.memory_space<vmem>>, %arg2: memref<25x1024xf32, #tpu.memory_space<vmem>>, %arg3: memref<8x1xf32, #tpu.memory_space<vmem>>, %arg4: memref<8x1024xf32, #tpu.memory_space<vmem>>) attributes {dimension_semantics = [#tpu.dimension_semantics<parallel>], iteration_bounds = array<i64: 2>, scalar_prefetch = 0 : i64, scratch_operands = 0 : i64, tpu.core_type = #tpu.core_type<tc>, window_params = [{pipeline_mode = #tpu.pipeline_mode<synchronous>, transform_indices = @transform_0, window_bounds = array<i64: 8, 25>}, {transform_indices = @transform_1, window_bounds = array<i64: 25, 1024>}, {pipeline_mode = #tpu.pipeline_mode<synchronous>, transform_indices = @transform_2, window_bounds = array<i64: 8, 1>}, {transform_indices = @transform_3, window_bounds = array<i64: 8, 1024>}]} {
    %c0 = arith.constant 0 : index
    %c0_0 = arith.constant 0 : index
    %0 = vector.load %arg1[%c0, %c0_0] : memref<8x25xf32, #tpu.memory_space<vmem>>, vector<8x25xf32>
    %c0_1 = arith.constant 0 : index
    %c0_2 = arith.constant 0 : index
    %1 = vector.load %arg2[%c0_1, %c0_2] : memref<25x1024xf32, #tpu.memory_space<vmem>>, vector<25x1024xf32>
    %cst = arith.constant dense<0.000000e+00> : vector<8x1024xf32>
    %2 = tpu.matmul %0, %1, %cst {dimension_numbers = #tpu.dot_dimension_numbers<[1], [0], [0], [1], [0, 0, 1, 1], [], []>} : vector<8x25xf32>, vector<25x1024xf32>, vector<8x1024xf32> -> vector<8x1024xf32>
    %c0_3 = arith.constant 0 : index
    %c0_4 = arith.constant 0 : index
    %3 = vector.load %arg3[%c0_3, %c0_4] : memref<8x1xf32, #tpu.memory_space<vmem>>, vector<8x1xf32>
    %4 = vector.broadcast %3 : vector<8x1xf32> to vector<8x1024xf32>
    %5 = arith.addf %2, %4 : vector<8x1024xf32>
    %cst_5 = arith.constant 0.000000e+00 : f32
    %6 = vector.broadcast %cst_5 : f32 to vector<8x1024xf32>
    %7 = arith.cmpf oge, %5, %6 : vector<8x1024xf32>
    %cst_6 = arith.constant 5.000000e-02 : f32
    %8 = vector.broadcast %cst_6 : f32 to vector<8x1024xf32>
    %9 = arith.mulf %8, %5 : vector<8x1024xf32>
    %10 = arith.select %7, %5, %9 : vector<8x1024xi1>, vector<8x1024xf32>
    %c0_7 = arith.constant 0 : index
    %c0_8 = arith.constant 0 : index
    %11 = vector.load %arg4[%c0_7, %c0_8] : memref<8x1024xf32, #tpu.memory_space<vmem>>, vector<8x1024xf32>
    tpu.vector_store %arg4[%c0_7, %c0_8], %10 {strides = array<i32>} : memref<8x1024xf32, #tpu.memory_space<vmem>>, vector<8x1024xf32>,
    return
  }
  func.func @transform_0(%arg0: i32) -> (i32, i32) {
    %c0_i32 = arith.constant 0 : i32
    %c0_i32_0 = arith.constant 0 : i32
    %c0_i32_1 = arith.constant 0 : i32
    return %c0_i32, %c0_i32_0 : i32, i32
  }
  func.func @transform_1(%arg0: i32) -> (i32, i32) {
    %c0_i32 = arith.constant 0 : i32
    %c0_i32_0 = arith.constant 0 : i32
    return %c0_i32, %arg0 : i32, i32
  }
  func.func @transform_2(%arg0: i32) -> (i32, i32) {
    %c0_i32 = arith.constant 0 : i32
    %c0_i32_0 = arith.constant 0 : i32
    %c0_i32_1 = arith.constant 0 : i32
    return %c0_i32, %c0_i32_0 : i32, i32
  }
  func.func @transform_3(%arg0: i32) -> (i32, i32) {
    %c0_i32 = arith.constant 0 : i32
    %c0_i32_0 = arith.constant 0 : i32
    return %c0_i32, %arg0 : i32, i32
  }
}

module attributes {stable_mosaic.version = 11 : i64} {
  func.func @_conv_gemm_batched_kernel(%arg0: i32, %arg1: memref<1x16x100xf32, #tpu.memory_space<vmem>>, %arg2: memref<1x100x128xf32, #tpu.memory_space<vmem>>, %arg3: memref<1x16x1xf32, #tpu.memory_space<vmem>>, %arg4: memref<1x16x128xf32, #tpu.memory_space<vmem>>) attributes {dimension_semantics = [#tpu.dimension_semantics<parallel>], iteration_bounds = array<i64: 2>, scalar_prefetch = 0 : i64, scratch_operands = 0 : i64, tpu.core_type = #tpu.core_type<tc>, window_params = [{transform_indices = @transform_0, window_bounds = array<i64: 1, 16, 100>}, {transform_indices = @transform_1, window_bounds = array<i64: 1, 100, 128>}, {transform_indices = @transform_2, window_bounds = array<i64: 1, 16, 1>}, {transform_indices = @transform_3, window_bounds = array<i64: 1, 16, 128>}]} {
    %c0 = arith.constant 0 : index
    %c0_0 = arith.constant 0 : index
    %c0_1 = arith.constant 0 : index
    %0 = vector.load %arg1[%c0, %c0_0, %c0_1] : memref<1x16x100xf32, #tpu.memory_space<vmem>>, vector<1x16x100xf32>
    %1 = vector.shape_cast %0 : vector<1x16x100xf32> to vector<16x100xf32>
    %c0_2 = arith.constant 0 : index
    %c0_3 = arith.constant 0 : index
    %c0_4 = arith.constant 0 : index
    %2 = vector.load %arg2[%c0_2, %c0_3, %c0_4] : memref<1x100x128xf32, #tpu.memory_space<vmem>>, vector<1x100x128xf32>
    %3 = vector.shape_cast %2 : vector<1x100x128xf32> to vector<100x128xf32>
    %cst = arith.constant dense<0.000000e+00> : vector<16x128xf32>
    %4 = tpu.matmul %1, %3, %cst {dimension_numbers = #tpu.dot_dimension_numbers<[1], [0], [0], [1], [0, 0, 1, 1], [], []>} : vector<16x100xf32>, vector<100x128xf32>, vector<16x128xf32> -> vector<16x128xf32>
    %c0_5 = arith.constant 0 : index
    %c0_6 = arith.constant 0 : index
    %c0_7 = arith.constant 0 : index
    %5 = vector.load %arg3[%c0_5, %c0_6, %c0_7] : memref<1x16x1xf32, #tpu.memory_space<vmem>>, vector<1x16x1xf32>
    %6 = vector.shape_cast %5 : vector<1x16x1xf32> to vector<16x1xf32>
    %7 = vector.broadcast %6 : vector<16x1xf32> to vector<16x128xf32>
    %8 = arith.addf %4, %7 : vector<16x128xf32>
    %cst_8 = arith.constant 0.000000e+00 : f32
    %9 = vector.broadcast %cst_8 : f32 to vector<16x128xf32>
    %10 = arith.cmpf oge, %8, %9 : vector<16x128xf32>
    %cst_9 = arith.constant 5.000000e-02 : f32
    %11 = vector.broadcast %cst_9 : f32 to vector<16x128xf32>
    %12 = arith.mulf %11, %8 : vector<16x128xf32>
    %13 = arith.select %10, %8, %12 : vector<16x128xi1>, vector<16x128xf32>
    %c0_10 = arith.constant 0 : index
    %c0_11 = arith.constant 0 : index
    %c0_12 = arith.constant 0 : index
    %14 = vector.load %arg4[%c0_10, %c0_11, %c0_12] : memref<1x16x128xf32, #tpu.memory_space<vmem>>, vector<1x16x128xf32>
    %15 = vector.shape_cast %14 : vector<1x16x128xf32> to vector<16x128xf32>
    %16 = vector.shape_cast %13 : vector<16x128xf32> to vector<1x16x128xf32>
    tpu.vector_store %arg4[%c0_10, %c0_11, %c0_12], %16 {strides = array<i32>} : memref<1x16x128xf32, #tpu.memory_space<vmem>>, vector<1x16x128xf32>,
    return
  }
  func.func @transform_0(%arg0: i32) -> (i32, i32, i32) {
    %c0_i32 = arith.constant 0 : i32
    %c0_i32_0 = arith.constant 0 : i32
    %c0_i32_1 = arith.constant 0 : i32
    return %arg0, %c0_i32, %c0_i32_0 : i32, i32, i32
  }
  func.func @transform_1(%arg0: i32) -> (i32, i32, i32) {
    %c0_i32 = arith.constant 0 : i32
    %c0_i32_0 = arith.constant 0 : i32
    %c0_i32_1 = arith.constant 0 : i32
    return %arg0, %c0_i32, %c0_i32_0 : i32, i32, i32
  }
  func.func @transform_2(%arg0: i32) -> (i32, i32, i32) {
    %c0_i32 = arith.constant 0 : i32
    %c0_i32_0 = arith.constant 0 : i32
    %c0_i32_1 = arith.constant 0 : i32
    return %arg0, %c0_i32, %c0_i32_0 : i32, i32, i32
  }
  func.func @transform_3(%arg0: i32) -> (i32, i32, i32) {
    %c0_i32 = arith.constant 0 : i32
    %c0_i32_0 = arith.constant 0 : i32
    %c0_i32_1 = arith.constant 0 : i32
    return %arg0, %c0_i32, %c0_i32_0 : i32, i32, i32
  }
}

module attributes {stable_mosaic.version = 11 : i64} {
  func.func @_conv_gemm_batched_kernel(%arg0: i32, %arg1: memref<1x22x144xf32, #tpu.memory_space<vmem>>, %arg2: memref<1x144x128xf32, #tpu.memory_space<vmem>>, %arg3: memref<1x22x1xf32, #tpu.memory_space<vmem>>, %arg4: memref<1x22x128xf32, #tpu.memory_space<vmem>>) attributes {dimension_semantics = [#tpu.dimension_semantics<parallel>], iteration_bounds = array<i64: 2>, scalar_prefetch = 0 : i64, scratch_operands = 0 : i64, tpu.core_type = #tpu.core_type<tc>, window_params = [{transform_indices = @transform_0, window_bounds = array<i64: 1, 22, 144>}, {transform_indices = @transform_1, window_bounds = array<i64: 1, 144, 128>}, {transform_indices = @transform_2, window_bounds = array<i64: 1, 22, 1>}, {transform_indices = @transform_3, window_bounds = array<i64: 1, 22, 128>}]} {
    %c0 = arith.constant 0 : index
    %c0_0 = arith.constant 0 : index
    %c0_1 = arith.constant 0 : index
    %0 = vector.load %arg1[%c0, %c0_0, %c0_1] : memref<1x22x144xf32, #tpu.memory_space<vmem>>, vector<1x22x144xf32>
    %1 = vector.shape_cast %0 : vector<1x22x144xf32> to vector<22x144xf32>
    %c0_2 = arith.constant 0 : index
    %c0_3 = arith.constant 0 : index
    %c0_4 = arith.constant 0 : index
    %2 = vector.load %arg2[%c0_2, %c0_3, %c0_4] : memref<1x144x128xf32, #tpu.memory_space<vmem>>, vector<1x144x128xf32>
    %3 = vector.shape_cast %2 : vector<1x144x128xf32> to vector<144x128xf32>
    %cst = arith.constant dense<0.000000e+00> : vector<22x128xf32>
    %4 = tpu.matmul %1, %3, %cst {dimension_numbers = #tpu.dot_dimension_numbers<[1], [0], [0], [1], [0, 0, 1, 1], [], []>} : vector<22x144xf32>, vector<144x128xf32>, vector<22x128xf32> -> vector<22x128xf32>
    %c0_5 = arith.constant 0 : index
    %c0_6 = arith.constant 0 : index
    %c0_7 = arith.constant 0 : index
    %5 = vector.load %arg3[%c0_5, %c0_6, %c0_7] : memref<1x22x1xf32, #tpu.memory_space<vmem>>, vector<1x22x1xf32>
    %6 = vector.shape_cast %5 : vector<1x22x1xf32> to vector<22x1xf32>
    %7 = vector.broadcast %6 : vector<22x1xf32> to vector<22x128xf32>
    %8 = arith.addf %4, %7 : vector<22x128xf32>
    %cst_8 = arith.constant 0.000000e+00 : f32
    %9 = vector.broadcast %cst_8 : f32 to vector<22x128xf32>
    %10 = arith.cmpf oge, %8, %9 : vector<22x128xf32>
    %cst_9 = arith.constant 5.000000e-02 : f32
    %11 = vector.broadcast %cst_9 : f32 to vector<22x128xf32>
    %12 = arith.mulf %11, %8 : vector<22x128xf32>
    %13 = arith.select %10, %8, %12 : vector<22x128xi1>, vector<22x128xf32>
    %c0_10 = arith.constant 0 : index
    %c0_11 = arith.constant 0 : index
    %c0_12 = arith.constant 0 : index
    %14 = vector.load %arg4[%c0_10, %c0_11, %c0_12] : memref<1x22x128xf32, #tpu.memory_space<vmem>>, vector<1x22x128xf32>
    %15 = vector.shape_cast %14 : vector<1x22x128xf32> to vector<22x128xf32>
    %16 = vector.shape_cast %13 : vector<22x128xf32> to vector<1x22x128xf32>
    tpu.vector_store %arg4[%c0_10, %c0_11, %c0_12], %16 {strides = array<i32>} : memref<1x22x128xf32, #tpu.memory_space<vmem>>, vector<1x22x128xf32>,
    return
  }
  func.func @transform_0(%arg0: i32) -> (i32, i32, i32) {
    %c0_i32 = arith.constant 0 : i32
    %c0_i32_0 = arith.constant 0 : i32
    %c0_i32_1 = arith.constant 0 : i32
    return %arg0, %c0_i32, %c0_i32_0 : i32, i32, i32
  }
  func.func @transform_1(%arg0: i32) -> (i32, i32, i32) {
    %c0_i32 = arith.constant 0 : i32
    %c0_i32_0 = arith.constant 0 : i32
    %c0_i32_1 = arith.constant 0 : i32
    return %arg0, %c0_i32, %c0_i32_0 : i32, i32, i32
  }
  func.func @transform_2(%arg0: i32) -> (i32, i32, i32) {
    %c0_i32 = arith.constant 0 : i32
    %c0_i32_0 = arith.constant 0 : i32
    %c0_i32_1 = arith.constant 0 : i32
    return %arg0, %c0_i32, %c0_i32_0 : i32, i32, i32
  }
  func.func @transform_3(%arg0: i32) -> (i32, i32, i32) {
    %c0_i32 = arith.constant 0 : i32
    %c0_i32_0 = arith.constant 0 : i32
    %c0_i32_1 = arith.constant 0 : i32
    return %arg0, %c0_i32, %c0_i32_0 : i32, i32, i32
  }
}

module attributes {stable_mosaic.version = 11 : i64} {
  func.func @_conv_gemm_kernel(%arg0: i32, %arg1: memref<22x180xf32, #tpu.memory_space<vmem>>, %arg2: memref<180x128xf32, #tpu.memory_space<vmem>>, %arg3: memref<22x1xf32, #tpu.memory_space<vmem>>, %arg4: memref<22x128xf32, #tpu.memory_space<vmem>>) attributes {dimension_semantics = [#tpu.dimension_semantics<parallel>], iteration_bounds = array<i64: 1>, scalar_prefetch = 0 : i64, scratch_operands = 0 : i64, tpu.core_type = #tpu.core_type<tc>, window_params = [{pipeline_mode = #tpu.pipeline_mode<synchronous>, transform_indices = @transform_0, window_bounds = array<i64: 22, 180>}, {transform_indices = @transform_1, window_bounds = array<i64: 180, 128>}, {pipeline_mode = #tpu.pipeline_mode<synchronous>, transform_indices = @transform_2, window_bounds = array<i64: 22, 1>}, {transform_indices = @transform_3, window_bounds = array<i64: 22, 128>}]} {
    %c0 = arith.constant 0 : index
    %c0_0 = arith.constant 0 : index
    %0 = vector.load %arg1[%c0, %c0_0] : memref<22x180xf32, #tpu.memory_space<vmem>>, vector<22x180xf32>
    %c0_1 = arith.constant 0 : index
    %c0_2 = arith.constant 0 : index
    %1 = vector.load %arg2[%c0_1, %c0_2] : memref<180x128xf32, #tpu.memory_space<vmem>>, vector<180x128xf32>
    %cst = arith.constant dense<0.000000e+00> : vector<22x128xf32>
    %2 = tpu.matmul %0, %1, %cst {dimension_numbers = #tpu.dot_dimension_numbers<[1], [0], [0], [1], [0, 0, 1, 1], [], []>} : vector<22x180xf32>, vector<180x128xf32>, vector<22x128xf32> -> vector<22x128xf32>
    %c0_3 = arith.constant 0 : index
    %c0_4 = arith.constant 0 : index
    %3 = vector.load %arg3[%c0_3, %c0_4] : memref<22x1xf32, #tpu.memory_space<vmem>>, vector<22x1xf32>
    %4 = vector.broadcast %3 : vector<22x1xf32> to vector<22x128xf32>
    %5 = arith.addf %2, %4 : vector<22x128xf32>
    %cst_5 = arith.constant 0.000000e+00 : f32
    %6 = vector.broadcast %cst_5 : f32 to vector<22x128xf32>
    %7 = arith.cmpf oge, %5, %6 : vector<22x128xf32>
    %cst_6 = arith.constant 5.000000e-02 : f32
    %8 = vector.broadcast %cst_6 : f32 to vector<22x128xf32>
    %9 = arith.mulf %8, %5 : vector<22x128xf32>
    %10 = arith.select %7, %5, %9 : vector<22x128xi1>, vector<22x128xf32>
    %c0_7 = arith.constant 0 : index
    %c0_8 = arith.constant 0 : index
    %11 = vector.load %arg4[%c0_7, %c0_8] : memref<22x128xf32, #tpu.memory_space<vmem>>, vector<22x128xf32>
    tpu.vector_store %arg4[%c0_7, %c0_8], %10 {strides = array<i32>} : memref<22x128xf32, #tpu.memory_space<vmem>>, vector<22x128xf32>,
    return
  }
  func.func @transform_0(%arg0: i32) -> (i32, i32) {
    %c0_i32 = arith.constant 0 : i32
    %c0_i32_0 = arith.constant 0 : i32
    %c0_i32_1 = arith.constant 0 : i32
    return %c0_i32, %c0_i32_0 : i32, i32
  }
  func.func @transform_1(%arg0: i32) -> (i32, i32) {
    %c0_i32 = arith.constant 0 : i32
    %c0_i32_0 = arith.constant 0 : i32
    return %c0_i32, %arg0 : i32, i32
  }
  func.func @transform_2(%arg0: i32) -> (i32, i32) {
    %c0_i32 = arith.constant 0 : i32
    %c0_i32_0 = arith.constant 0 : i32
    %c0_i32_1 = arith.constant 0 : i32
    return %c0_i32, %c0_i32_0 : i32, i32
  }
  func.func @transform_3(%arg0: i32) -> (i32, i32) {
    %c0_i32 = arith.constant 0 : i32
    %c0_i32_0 = arith.constant 0 : i32
    return %c0_i32, %arg0 : i32, i32
  }
}

module attributes {stable_mosaic.version = 11 : i64} {
  func.func @_fc_fused_kernel(%arg0: i32, %arg1: memref<352x2xf32, #tpu.memory_space<vmem>>, %arg2: memref<352x2xf32, #tpu.memory_space<vmem>>, %arg3: memref<300x352xf32, #tpu.memory_space<vmem>>, %arg4: memref<300x1xf32, #tpu.memory_space<vmem>>, %arg5: memref<256x300xf32, #tpu.memory_space<vmem>>, %arg6: memref<256x1xf32, #tpu.memory_space<vmem>>, %arg7: memref<200x256xf32, #tpu.memory_space<vmem>>, %arg8: memref<200x1xf32, #tpu.memory_space<vmem>>, %arg9: memref<128x200xf32, #tpu.memory_space<vmem>>, %arg10: memref<128x1xf32, #tpu.memory_space<vmem>>, %arg11: memref<256x352xf32, #tpu.memory_space<vmem>>, %arg12: memref<256x1xf32, #tpu.memory_space<vmem>>, %arg13: memref<128x256xf32, #tpu.memory_space<vmem>>, %arg14: memref<128x1xf32, #tpu.memory_space<vmem>>, %arg15: memref<64x128xf32, #tpu.memory_space<vmem>>, %arg16: memref<64x1xf32, #tpu.memory_space<vmem>>, %arg17: memref<192x2xf32, #tpu.memory_space<vmem>>) attributes {dimension_semantics = [#tpu.dimension_semantics<arbitrary>], iteration_bounds = array<i64: 1>, scalar_prefetch = 0 : i64, scratch_operands = 0 : i64, tpu.core_type = #tpu.core_type<tc>, window_params = [{pipeline_mode = #tpu.pipeline_mode<synchronous>, transform_indices = @transform_0, window_bounds = array<i64: 352, 2>}, {pipeline_mode = #tpu.pipeline_mode<synchronous>, transform_indices = @transform_1, window_bounds = array<i64: 352, 2>}, {pipeline_mode = #tpu.pipeline_mode<synchronous>, transform_indices = @transform_2, window_bounds = array<i64: 300, 352>}, {pipeline_mode = #tpu.pipeline_mode<synchronous>, transform_indices = @transform_3, window_bounds = array<i64: 300, 1>}, {pipeline_mode = #tpu.pipeline_mode<synchronous>, transform_indices = @transform_4, window_bounds = array<i64: 256, 300>}, {pipeline_mode = #tpu.pipeline_mode<synchronous>, transform_indices = @transform_5, window_bounds = array<i64: 256, 1>}, {pipeline_mode = #tpu.pipeline_mode<synchronous>, transform_indices = @transform_6, window_bounds = array<i64: 200, 256>}, {pipeline_mode = #tpu.pipeline_mode<synchronous>, transform_indices = @transform_7, window_bounds = array<i64: 200, 1>}, {pipeline_mode = #tpu.pipeline_mode<synchronous>, transform_indices = @transform_8, window_bounds = array<i64: 128, 200>}, {pipeline_mode = #tpu.pipeline_mode<synchronous>, transform_indices = @transform_9, window_bounds = array<i64: 128, 1>}, {pipeline_mode = #tpu.pipeline_mode<synchronous>, transform_indices = @transform_10, window_bounds = array<i64: 256, 352>}, {pipeline_mode = #tpu.pipeline_mode<synchronous>, transform_indices = @transform_11, window_bounds = array<i64: 256, 1>}, {pipeline_mode = #tpu.pipeline_mode<synchronous>, transform_indices = @transform_12, window_bounds = array<i64: 128, 256>}, {pipeline_mode = #tpu.pipeline_mode<synchronous>, transform_indices = @transform_13, window_bounds = array<i64: 128, 1>}, {pipeline_mode = #tpu.pipeline_mode<synchronous>, transform_indices = @transform_14, window_bounds = array<i64: 64, 128>}, {pipeline_mode = #tpu.pipeline_mode<synchronous>, transform_indices = @transform_15, window_bounds = array<i64: 64, 1>}, {pipeline_mode = #tpu.pipeline_mode<synchronous>, transform_indices = @transform_16, window_bounds = array<i64: 192, 2>}]} {
    %c0 = arith.constant 0 : index
    %c0_0 = arith.constant 0 : index
    %0 = vector.load %arg1[%c0, %c0_0] : memref<352x2xf32, #tpu.memory_space<vmem>>, vector<352x2xf32>
    %c0_1 = arith.constant 0 : index
    %c0_2 = arith.constant 0 : index
    %1 = vector.load %arg3[%c0_1, %c0_2] : memref<300x352xf32, #tpu.memory_space<vmem>>, vector<300x352xf32>
    %cst = arith.constant dense<0.000000e+00> : vector<300x2xf32>
    %2 = tpu.matmul %1, %0, %cst {dimension_numbers = #tpu.dot_dimension_numbers<[1], [0], [0], [1], [0, 0, 1, 1], [], []>} : vector<300x352xf32>, vector<352x2xf32>, vector<300x2xf32> -> vector<300x2xf32>
    %c0_3 = arith.constant 0 : index
    %c0_4 = arith.constant 0 : index
    %3 = vector.load %arg4[%c0_3, %c0_4] : memref<300x1xf32, #tpu.memory_space<vmem>>, vector<300x1xf32>
    %4 = vector.broadcast %3 : vector<300x1xf32> to vector<300x2xf32>
    %5 = arith.addf %2, %4 : vector<300x2xf32>
    %cst_5 = arith.constant 0.000000e+00 : f32
    %6 = vector.broadcast %cst_5 : f32 to vector<300x2xf32>
    %7 = arith.cmpf oge, %5, %6 : vector<300x2xf32>
    %cst_6 = arith.constant 5.000000e-02 : f32
    %8 = vector.broadcast %cst_6 : f32 to vector<300x2xf32>
    %9 = arith.mulf %8, %5 : vector<300x2xf32>
    %10 = arith.select %7, %5, %9 : vector<300x2xi1>, vector<300x2xf32>
    %c0_7 = arith.constant 0 : index
    %c0_8 = arith.constant 0 : index
    %11 = vector.load %arg5[%c0_7, %c0_8] : memref<256x300xf32, #tpu.memory_space<vmem>>, vector<256x300xf32>
    %cst_9 = arith.constant dense<0.000000e+00> : vector<256x2xf32>
    %12 = tpu.matmul %11, %10, %cst_9 {dimension_numbers = #tpu.dot_dimension_numbers<[1], [0], [0], [1], [0, 0, 1, 1], [], []>} : vector<256x300xf32>, vector<300x2xf32>, vector<256x2xf32> -> vector<256x2xf32>
    %c0_10 = arith.constant 0 : index
    %c0_11 = arith.constant 0 : index
    %13 = vector.load %arg6[%c0_10, %c0_11] : memref<256x1xf32, #tpu.memory_space<vmem>>, vector<256x1xf32>
    %14 = vector.broadcast %13 : vector<256x1xf32> to vector<256x2xf32>
    %15 = arith.addf %12, %14 : vector<256x2xf32>
    %cst_12 = arith.constant 0.000000e+00 : f32
    %16 = vector.broadcast %cst_12 : f32 to vector<256x2xf32>
    %17 = arith.cmpf oge, %15, %16 : vector<256x2xf32>
    %cst_13 = arith.constant 5.000000e-02 : f32
    %18 = vector.broadcast %cst_13 : f32 to vector<256x2xf32>
    %19 = arith.mulf %18, %15 : vector<256x2xf32>
    %20 = arith.select %17, %15, %19 : vector<256x2xi1>, vector<256x2xf32>
    %c0_14 = arith.constant 0 : index
    %c0_15 = arith.constant 0 : index
    %21 = vector.load %arg7[%c0_14, %c0_15] : memref<200x256xf32, #tpu.memory_space<vmem>>, vector<200x256xf32>
    %cst_16 = arith.constant dense<0.000000e+00> : vector<200x2xf32>
    %22 = tpu.matmul %21, %20, %cst_16 {dimension_numbers = #tpu.dot_dimension_numbers<[1], [0], [0], [1], [0, 0, 1, 1], [], []>} : vector<200x256xf32>, vector<256x2xf32>, vector<200x2xf32> -> vector<200x2xf32>
    %c0_17 = arith.constant 0 : index
    %c0_18 = arith.constant 0 : index
    %23 = vector.load %arg8[%c0_17, %c0_18] : memref<200x1xf32, #tpu.memory_space<vmem>>, vector<200x1xf32>
    %24 = vector.broadcast %23 : vector<200x1xf32> to vector<200x2xf32>
    %25 = arith.addf %22, %24 : vector<200x2xf32>
    %cst_19 = arith.constant 0.000000e+00 : f32
    %26 = vector.broadcast %cst_19 : f32 to vector<200x2xf32>
    %27 = arith.cmpf oge, %25, %26 : vector<200x2xf32>
    %cst_20 = arith.constant 5.000000e-02 : f32
    %28 = vector.broadcast %cst_20 : f32 to vector<200x2xf32>
    %29 = arith.mulf %28, %25 : vector<200x2xf32>
    %30 = arith.select %27, %25, %29 : vector<200x2xi1>, vector<200x2xf32>
    %c0_21 = arith.constant 0 : index
    %c0_22 = arith.constant 0 : index
    %31 = vector.load %arg9[%c0_21, %c0_22] : memref<128x200xf32, #tpu.memory_space<vmem>>, vector<128x200xf32>
    %cst_23 = arith.constant dense<0.000000e+00> : vector<128x2xf32>
    %32 = tpu.matmul %31, %30, %cst_23 {dimension_numbers = #tpu.dot_dimension_numbers<[1], [0], [0], [1], [0, 0, 1, 1], [], []>} : vector<128x200xf32>, vector<200x2xf32>, vector<128x2xf32> -> vector<128x2xf32>
    %c0_24 = arith.constant 0 : index
    %c0_25 = arith.constant 0 : index
    %33 = vector.load %arg10[%c0_24, %c0_25] : memref<128x1xf32, #tpu.memory_space<vmem>>, vector<128x1xf32>
    %34 = vector.broadcast %33 : vector<128x1xf32> to vector<128x2xf32>
    %35 = arith.addf %32, %34 : vector<128x2xf32>
    %c0_26 = arith.constant 0 : index
    %c0_27 = arith.constant 0 : index
    %36 = vector.load %arg2[%c0_26, %c0_27] : memref<352x2xf32, #tpu.memory_space<vmem>>, vector<352x2xf32>
    %c0_28 = arith.constant 0 : index
    %c0_29 = arith.constant 0 : index
    %37 = vector.load %arg11[%c0_28, %c0_29] : memref<256x352xf32, #tpu.memory_space<vmem>>, vector<256x352xf32>
    %cst_30 = arith.constant dense<0.000000e+00> : vector<256x2xf32>
    %38 = tpu.matmul %37, %36, %cst_30 {dimension_numbers = #tpu.dot_dimension_numbers<[1], [0], [0], [1], [0, 0, 1, 1], [], []>} : vector<256x352xf32>, vector<352x2xf32>, vector<256x2xf32> -> vector<256x2xf32>
    %c0_31 = arith.constant 0 : index
    %c0_32 = arith.constant 0 : index
    %39 = vector.load %arg12[%c0_31, %c0_32] : memref<256x1xf32, #tpu.memory_space<vmem>>, vector<256x1xf32>
    %40 = vector.broadcast %39 : vector<256x1xf32> to vector<256x2xf32>
    %41 = arith.addf %38, %40 : vector<256x2xf32>
    %cst_33 = arith.constant 0.000000e+00 : f32
    %42 = vector.broadcast %cst_33 : f32 to vector<256x2xf32>
    %43 = arith.cmpf oge, %41, %42 : vector<256x2xf32>
    %cst_34 = arith.constant 5.000000e-02 : f32
    %44 = vector.broadcast %cst_34 : f32 to vector<256x2xf32>
    %45 = arith.mulf %44, %41 : vector<256x2xf32>
    %46 = arith.select %43, %41, %45 : vector<256x2xi1>, vector<256x2xf32>
    %c0_35 = arith.constant 0 : index
    %c0_36 = arith.constant 0 : index
    %47 = vector.load %arg13[%c0_35, %c0_36] : memref<128x256xf32, #tpu.memory_space<vmem>>, vector<128x256xf32>
    %cst_37 = arith.constant dense<0.000000e+00> : vector<128x2xf32>
    %48 = tpu.matmul %47, %46, %cst_37 {dimension_numbers = #tpu.dot_dimension_numbers<[1], [0], [0], [1], [0, 0, 1, 1], [], []>} : vector<128x256xf32>, vector<256x2xf32>, vector<128x2xf32> -> vector<128x2xf32>
    %c0_38 = arith.constant 0 : index
    %c0_39 = arith.constant 0 : index
    %49 = vector.load %arg14[%c0_38, %c0_39] : memref<128x1xf32, #tpu.memory_space<vmem>>, vector<128x1xf32>
    %50 = vector.broadcast %49 : vector<128x1xf32> to vector<128x2xf32>
    %51 = arith.addf %48, %50 : vector<128x2xf32>
    %cst_40 = arith.constant 0.000000e+00 : f32
    %52 = vector.broadcast %cst_40 : f32 to vector<128x2xf32>
    %53 = arith.cmpf oge, %51, %52 : vector<128x2xf32>
    %cst_41 = arith.constant 5.000000e-02 : f32
    %54 = vector.broadcast %cst_41 : f32 to vector<128x2xf32>
    %55 = arith.mulf %54, %51 : vector<128x2xf32>
    %56 = arith.select %53, %51, %55 : vector<128x2xi1>, vector<128x2xf32>
    %c0_42 = arith.constant 0 : index
    %c0_43 = arith.constant 0 : index
    %57 = vector.load %arg15[%c0_42, %c0_43] : memref<64x128xf32, #tpu.memory_space<vmem>>, vector<64x128xf32>
    %cst_44 = arith.constant dense<0.000000e+00> : vector<64x2xf32>
    %58 = tpu.matmul %57, %56, %cst_44 {dimension_numbers = #tpu.dot_dimension_numbers<[1], [0], [0], [1], [0, 0, 1, 1], [], []>} : vector<64x128xf32>, vector<128x2xf32>, vector<64x2xf32> -> vector<64x2xf32>
    %c0_45 = arith.constant 0 : index
    %c0_46 = arith.constant 0 : index
    %59 = vector.load %arg16[%c0_45, %c0_46] : memref<64x1xf32, #tpu.memory_space<vmem>>, vector<64x1xf32>
    %60 = vector.broadcast %59 : vector<64x1xf32> to vector<64x2xf32>
    %61 = arith.addf %58, %60 : vector<64x2xf32>
    %62 = tpu.concatenate %35, %61 in 0 : vector<128x2xf32>, vector<64x2xf32> -> vector<192x2xf32>
    %c0_47 = arith.constant 0 : index
    %c0_48 = arith.constant 0 : index
    %63 = vector.load %arg17[%c0_47, %c0_48] : memref<192x2xf32, #tpu.memory_space<vmem>>, vector<192x2xf32>
    tpu.vector_store %arg17[%c0_47, %c0_48], %62 {strides = array<i32>} : memref<192x2xf32, #tpu.memory_space<vmem>>, vector<192x2xf32>,
    return
  }
  func.func @transform_0(%arg0: i32) -> (i32, i32) {
    %c0_i32 = arith.constant 0 : i32
    %c0_i32_0 = arith.constant 0 : i32
    %c0_i32_1 = arith.constant 0 : i32
    return %c0_i32, %c0_i32_0 : i32, i32
  }
  func.func @transform_1(%arg0: i32) -> (i32, i32) {
    %c0_i32 = arith.constant 0 : i32
    %c0_i32_0 = arith.constant 0 : i32
    %c0_i32_1 = arith.constant 0 : i32
    return %c0_i32, %c0_i32_0 : i32, i32
  }
  func.func @transform_2(%arg0: i32) -> (i32, i32) {
    %c0_i32 = arith.constant 0 : i32
    %c0_i32_0 = arith.constant 0 : i32
    %c0_i32_1 = arith.constant 0 : i32
    return %c0_i32, %c0_i32_0 : i32, i32
  }
  func.func @transform_3(%arg0: i32) -> (i32, i32) {
    %c0_i32 = arith.constant 0 : i32
    %c0_i32_0 = arith.constant 0 : i32
    %c0_i32_1 = arith.constant 0 : i32
    return %c0_i32, %c0_i32_0 : i32, i32
  }
  func.func @transform_4(%arg0: i32) -> (i32, i32) {
    %c0_i32 = arith.constant 0 : i32
    %c0_i32_0 = arith.constant 0 : i32
    %c0_i32_1 = arith.constant 0 : i32
    return %c0_i32, %c0_i32_0 : i32, i32
  }
  func.func @transform_5(%arg0: i32) -> (i32, i32) {
    %c0_i32 = arith.constant 0 : i32
    %c0_i32_0 = arith.constant 0 : i32
    %c0_i32_1 = arith.constant 0 : i32
    return %c0_i32, %c0_i32_0 : i32, i32
  }
  func.func @transform_6(%arg0: i32) -> (i32, i32) {
    %c0_i32 = arith.constant 0 : i32
    %c0_i32_0 = arith.constant 0 : i32
    %c0_i32_1 = arith.constant 0 : i32
    return %c0_i32, %c0_i32_0 : i32, i32
  }
  func.func @transform_7(%arg0: i32) -> (i32, i32) {
    %c0_i32 = arith.constant 0 : i32
    %c0_i32_0 = arith.constant 0 : i32
    %c0_i32_1 = arith.constant 0 : i32
    return %c0_i32, %c0_i32_0 : i32, i32
  }
  func.func @transform_8(%arg0: i32) -> (i32, i32) {
    %c0_i32 = arith.constant 0 : i32
    %c0_i32_0 = arith.constant 0 : i32
    %c0_i32_1 = arith.constant 0 : i32
    return %c0_i32, %c0_i32_0 : i32, i32
  }
  func.func @transform_9(%arg0: i32) -> (i32, i32) {
    %c0_i32 = arith.constant 0 : i32
    %c0_i32_0 = arith.constant 0 : i32
    %c0_i32_1 = arith.constant 0 : i32
    return %c0_i32, %c0_i32_0 : i32, i32
  }
  func.func @transform_10(%arg0: i32) -> (i32, i32) {
    %c0_i32 = arith.constant 0 : i32
    %c0_i32_0 = arith.constant 0 : i32
    %c0_i32_1 = arith.constant 0 : i32
    return %c0_i32, %c0_i32_0 : i32, i32
  }
  func.func @transform_11(%arg0: i32) -> (i32, i32) {
    %c0_i32 = arith.constant 0 : i32
    %c0_i32_0 = arith.constant 0 : i32
    %c0_i32_1 = arith.constant 0 : i32
    return %c0_i32, %c0_i32_0 : i32, i32
  }
  func.func @transform_12(%arg0: i32) -> (i32, i32) {
    %c0_i32 = arith.constant 0 : i32
    %c0_i32_0 = arith.constant 0 : i32
    %c0_i32_1 = arith.constant 0 : i32
    return %c0_i32, %c0_i32_0 : i32, i32
  }
  func.func @transform_13(%arg0: i32) -> (i32, i32) {
    %c0_i32 = arith.constant 0 : i32
    %c0_i32_0 = arith.constant 0 : i32
    %c0_i32_1 = arith.constant 0 : i32
    return %c0_i32, %c0_i32_0 : i32, i32
  }
  func.func @transform_14(%arg0: i32) -> (i32, i32) {
    %c0_i32 = arith.constant 0 : i32
    %c0_i32_0 = arith.constant 0 : i32
    %c0_i32_1 = arith.constant 0 : i32
    return %c0_i32, %c0_i32_0 : i32, i32
  }
  func.func @transform_15(%arg0: i32) -> (i32, i32) {
    %c0_i32 = arith.constant 0 : i32
    %c0_i32_0 = arith.constant 0 : i32
    %c0_i32_1 = arith.constant 0 : i32
    return %c0_i32, %c0_i32_0 : i32, i32
  }
  func.func @transform_16(%arg0: i32) -> (i32, i32) {
    %c0_i32 = arith.constant 0 : i32
    %c0_i32_0 = arith.constant 0 : i32
    %c0_i32_1 = arith.constant 0 : i32
    return %c0_i32, %c0_i32_0 : i32, i32
  }
}

</mosaic_0001>

<llo_original>
// kernel: forward.5
$region0: #{forward.5}
  #allocation0 [shape = 'u32[]', space=smem, size = 0x4, offset = 0x4, fixed_abs, tag = 'smem constant byte address 0x4 - core index']
  #allocation1 [shape = 'u32[144,128]{1,0:T(1,128)}', space=vmem, size = 0x12000, scoped, tag = 'internal scratch']
  %s0 = inlined_call_operand.vmem [shape: f32[8,25], index: 0, kind: input, shape index: {}]
  %s1 = inlined_call_operand.vmem [shape: f32[25,2048], index: 1, kind: input, shape index: {}]
  %s2 = inlined_call_operand.vmem [shape: f32[8,1], index: 2, kind: input, shape index: {}]
  %s3 = inlined_call_operand.vmem [shape: f32[8,2048], index: 3, kind: output, shape index: {}]
  %s4 = sld [smem:[#allocation0]]
  $region68: #{forward.5} parent=0
    _
  %s6 = ssub.s32 1, %s4
  %s7 = scalar_select 0, %s6, %s4
  $region1: #{forward.5} parent=0
    #allocation2 [shape = 'u8[262144]{0}', space=vmem, size = 0x40000, scoped, tag = 'input window, operand 1']
    loop: start=0, step=1, limit=4
    $region2: #{forward.5} parent=1 // loop_pre_header
      _
    $region3: #{forward.5} parent=1 // loop_header
      %s9 = sphi 0, %s13
      %p10 = scmp.ge.s32.totalorder %s9, 4
      %s17 = sphi 0, %s17
      %s19 = sphi 0, %s17
      %s20 = sphi 0, %s19
      %s34 = sphi 0, %s20
      %s40 = sphi 0, %s42
      %s43 = sphi 0, %s40
      %s44 = sphi 0, %s43
      %s60 = sphi 0, %s44
      %s64 = sphi 0, %s64
      %s66 = sphi 0, %s64
      %s67 = sphi 0, %s66
      %s81 = sphi 0, %s67
      %s87 = sphi 0, %s89
      %s90 = sphi 0, %s87
      %s91 = sphi 0, %s90
      %s107 = sphi 0, %s91
    $region4: #{forward.5} parent=1 // loop_header_branch
      %12 = sbr.rel (%p10) target = $region8
    $region5: #{forward.5} parent=1 // loop_body
      %s14 = ssub.s32 %s9, 1
      %s15 = ssub.s32 %s9, 2
      %s16 = sadd.s32 %s9, 1
      %s18 = sadd.s32 %s17, 1
      %p21 = scmp.eq.s32.totalorder %s9, 1
      %p22 = scmp.ne.s32.totalorder %s17, %s19
      %p23 = scmp.eq.s32.totalorder %s9, 0
      %p24 = por %p22, %p23
      %p25 = scmp.ne.s32.totalorder %s17, %s19
      %p26 = scmp.eq.s32.totalorder %s14, 1
      %p27 = por %p25, %p26
      %p28 = scmp.ne.s32.totalorder %s19, %s20
      %p29 = scmp.eq.s32.totalorder %s14, 0
      %p30 = por %p28, %p29
      %p31 = scmp.ne.s32.totalorder %s19, %s20
      %p32 = scmp.eq.s32.totalorder %s15, 1
      %p33 = por %p31, %p32
      %p35 = scmp.ne.s32.totalorder %s20, %s34
      %p36 = scmp.eq.s32.totalorder %s15, 0
      %p37 = por %p35, %p36
      %s38 = ssub.s32 %s9, %s16
      %p39 = scmp.eq.s32.totalorder %s38, 0
      %s41 = sadd.s32 %s40, 1
      %s42 = scalar_select %p39, %s40, %s41
      %p45 = pneg %p39
      %p46 = scmp.eq.s32.totalorder %s9, 1
      %p47 = por %p45, %p46
      %p48 = scmp.ne.s32.totalorder %s40, %s43
      %p49 = scmp.eq.s32.totalorder %s9, 0
      %p50 = por %p48, %p49
      %p51 = scmp.ne.s32.totalorder %s40, %s43
      %p52 = scmp.eq.s32.totalorder %s14, 1
      %p53 = por %p51, %p52
      %p54 = scmp.ne.s32.totalorder %s43, %s44
      %p55 = scmp.eq.s32.totalorder %s14, 0
      %p56 = por %p54, %p55
      %p57 = scmp.ne.s32.totalorder %s43, %s44
      %p58 = scmp.eq.s32.totalorder %s15, 1
      %p59 = por %p57, %p58
      %p61 = scmp.ne.s32.totalorder %s44, %s60
      %p62 = scmp.eq.s32.totalorder %s15, 0
      %p63 = por %p61, %p62
      %s65 = sadd.s32 %s64, 1
      %p68 = scmp.eq.s32.totalorder %s9, 1
      %p69 = scmp.ne.s32.totalorder %s64, %s66
      %p70 = scmp.eq.s32.totalorder %s9, 0
      %p71 = por %p69, %p70
      %p72 = scmp.ne.s32.totalorder %s64, %s66
      %p73 = scmp.eq.s32.totalorder %s14, 1
      %p74 = por %p72, %p73
      %p75 = scmp.ne.s32.totalorder %s66, %s67
      %p76 = scmp.eq.s32.totalorder %s14, 0
      %p77 = por %p75, %p76
      %p78 = scmp.ne.s32.totalorder %s66, %s67
      %p79 = scmp.eq.s32.totalorder %s15, 1
      %p80 = por %p78, %p79
      %p82 = scmp.ne.s32.totalorder %s67, %s81
      %p83 = scmp.eq.s32.totalorder %s15, 0
      %p84 = por %p82, %p83
      %s85 = ssub.s32 %s9, %s16
      %p86 = scmp.eq.s32.totalorder %s85, 0
      %s88 = sadd.s32 %s87, 1
      %s89 = scalar_select %p86, %s87, %s88
      %p92 = pneg %p86
      %p93 = scmp.eq.s32.totalorder %s9, 1
      %p94 = por %p92, %p93
      %p95 = scmp.ne.s32.totalorder %s87, %s90
      %p96 = scmp.eq.s32.totalorder %s9, 0
      %p97 = por %p95, %p96
      %p98 = scmp.ne.s32.totalorder %s87, %s90
      %p99 = scmp.eq.s32.totalorder %s14, 1
      %p100 = por %p98, %p99
      %p101 = scmp.ne.s32.totalorder %s90, %s91
      %p102 = scmp.eq.s32.totalorder %s14, 0
      %p103 = por %p101, %p102
      %p104 = scmp.ne.s32.totalorder %s90, %s91
      %p105 = scmp.eq.s32.totalorder %s15, 1
      %p106 = por %p104, %p105
      %p108 = scmp.ne.s32.totalorder %s91, %s107
      %p109 = scmp.eq.s32.totalorder %s15, 0
      %p110 = por %p108, %p109
      %p111 = scmp.le.s32.totalorder 1, %s9
      %p112 = scmp.lt.s32.totalorder %s9, 3
      %p113 = pnand %p111, %p112
      %p114 = pneg %p113
      // Predicated region
      $region9: #{forward.5} parent=5 // pred_check
        _
      $region10: #{forward.5} parent=5 // pred_check_branch
        %116 = sbr.rel (%p113) target = $region12
      $region11: #{forward.5} parent=5 // pred_region
        %s117 = ssub.s32 %s9, 1
        // Predicated region
        $region13: #{forward.5} parent=11 // pred_check
          %p118 = pneg %p30
        $region14: #{forward.5} parent=11 // pred_check_branch
          %120 = sbr.rel (%p118) target = $region16
        $region15: #{forward.5} parent=11 // pred_region
          _
        $region16: #{forward.5} parent=11 // pred_fallthru
          _
        // Predicated region
        $region17: #{forward.5} parent=11 // pred_check
          %p121 = pneg %p77
        $region18: #{forward.5} parent=11 // pred_check_branch
          %123 = sbr.rel (%p121) target = $region20
        $region19: #{forward.5} parent=11 // pred_region
          _
        $region20: #{forward.5} parent=11 // pred_fallthru
          _
      $region12: #{forward.5} parent=5 // pred_fallthru
        _
      %p124 = scmp.lt.s32.totalorder %s9, 2
      // Predicated region
      $region21: #{forward.5} parent=5 // pred_check
        %p125 = pneg %p124
      $region22: #{forward.5} parent=5 // pred_check_branch
        %127 = sbr.rel (%p125) target = $region24
      $region23: #{forward.5} parent=5 // pred_region
        // Predicated region
        $region25: #{forward.5} parent=23 // pred_check
          %p128 = pneg %p50
        $region26: #{forward.5} parent=23 // pred_check_branch
          %130 = sbr.rel (%p128) target = $region28
        $region27: #{forward.5} parent=23 // pred_region
          %s131 = sand.u32 %s40, 1
          %s132 = sand.u32 %s40, 1
          %s133 = smul.addr %s132, 256
          %s134 = scalar_lea.vmem [#allocation2], %s133
          %s135 = smul.u32 8, %s9
          %s136 = smul.addr %s135, 8
          %s137 = scalar_lea.vmem %s1, %s136
          // Predicated region
          $region29: #{forward.5} parent=27 // pred_check
            _
          $region30: #{forward.5} parent=27 // pred_check_branch
            %139 = sbr.rel (0) target = $region32
          $region31: #{forward.5} parent=27 // pred_region
            // Predicated region
            $region33: #{forward.5} parent=31 // pred_check
              _
            $region34: #{forward.5} parent=31 // pred_check_branch
              %141 = sbr.rel (0) target = $region36
            $region35: #{forward.5} parent=31 // pred_region
              loop: start=0, step=1, limit=1
              $region37: #{forward.5} parent=35 // loop_pre_header
                _
              $region38: #{forward.5} parent=35 // loop_header
                %s143 = sphi 0, %s147
                %p144 = scmp.ge.s32.totalorder %s143, 1
                %s148 = sphi %s137, %s137
                %s149 = sphi %s134, %s134
              $region39: #{forward.5} parent=35 // loop_header_branch
                %146 = sbr.rel (%p144) target = $region43
              $region40: #{forward.5} parent=35 // loop_body
                %v150 = vld [vmem:[%s148] sm:$0xff]
                %151 = vst [vmem:[%s149] sm:$0xff] %v150
                %v152 = vld [vmem:[%s148 + $0x8] sm:$0xff]
                %153 = vst [vmem:[%s149 + $0x8] sm:$0xff] %v152
                %v154 = vld [vmem:[%s148 + $0x10] sm:$0xff]
                %155 = vst [vmem:[%s149 + $0x10] sm:$0xff] %v154
                %v156 = vld [vmem:[%s148 + $0x18] sm:$0xff]
                %157 = vst [vmem:[%s149 + $0x18] sm:$0xff] %v156
                %v158 = vld [vmem:[%s148 + $0x20] sm:$0xff]
                %159 = vst [vmem:[%s149 + $0x20] sm:$0xff] %v158
                %v160 = vld [vmem:[%s148 + $0x28] sm:$0xff]
                %161 = vst [vmem:[%s149 + $0x28] sm:$0xff] %v160
                %v162 = vld [vmem:[%s148 + $0x30] sm:$0xff]
                %163 = vst [vmem:[%s149 + $0x30] sm:$0xff] %v162
                %v164 = vld [vmem:[%s148 + $0x38] sm:$0xff]
                %165 = vst [vmem:[%s149 + $0x38] sm:$0xff] %v164
                %v166 = vld [vmem:[%s148 + $0x80] sm:$0xff]
                %167 = vst [vmem:[%s149 + $0x40] sm:$0xff] %v166
                %v168 = vld [vmem:[%s148 + $0x88] sm:$0xff]
                %169 = vst [vmem:[%s149 + $0x48] sm:$0xff] %v168
                %v170 = vld [vmem:[%s148 + $0x90] sm:$0xff]
                %171 = vst [vmem:[%s149 + $0x50] sm:$0xff] %v170
                %v172 = vld [vmem:[%s148 + $0x98] sm:$0xff]
                %173 = vst [vmem:[%s149 + $0x58] sm:$0xff] %v172
                %v174 = vld [vmem:[%s148 + $0xa0] sm:$0xff]
                %175 = vst [vmem:[%s149 + $0x60] sm:$0xff] %v174
                %v176 = vld [vmem:[%s148 + $0xa8] sm:$0xff]
                %177 = vst [vmem:[%s149 + $0x68] sm:$0xff] %v176
                %v178 = vld [vmem:[%s148 + $0xb0] sm:$0xff]
                %179 = vst [vmem:[%s149 + $0x70] sm:$0xff] %v178
                %v180 = vld [vmem:[%s148 + $0xb8] sm:$0xff]
                %181 = vst [vmem:[%s149 + $0x78] sm:$0xff] %v180
                %v182 = vld [vmem:[%s148 + $0x100] sm:$0xff]
                %183 = vst [vmem:[%s149 + $0x80] sm:$0xff] %v182
                %v184 = vld [vmem:[%s148 + $0x108] sm:$0xff]
                %185 = vst [vmem:[%s149 + $0x88] sm:$0xff] %v184
                %v186 = vld [vmem:[%s148 + $0x110] sm:$0xff]
                %187 = vst [vmem:[%s149 + $0x90] sm:$0xff] %v186
                %v188 = vld [vmem:[%s148 + $0x118] sm:$0xff]
                %189 = vst [vmem:[%s149 + $0x98] sm:$0xff] %v188
                %v190 = vld [vmem:[%s148 + $0x120] sm:$0xff]
                %191 = vst [vmem:[%s149 + $0xa0] sm:$0xff] %v190
                %v192 = vld [vmem:[%s148 + $0x128] sm:$0xff]
                %193 = vst [vmem:[%s149 + $0xa8] sm:$0xff] %v192
                %v194 = vld [vmem:[%s148 + $0x130] sm:$0xff]
                %195 = vst [vmem:[%s149 + $0xb0] sm:$0xff] %v194
                %v196 = vld [vmem:[%s148 + $0x138] sm:$0xff]
                %197 = vst [vmem:[%s149 + $0xb8] sm:$0xff] %v196
                %v198 = vld [vmem:[%s148 + $0x180] sm:$0xff]
                %199 = vst [vmem:[%s149 + $0xc0] sm:$0xff] %v198
                %v200 = vld [vmem:[%s148 + $0x188] sm:$0xff]
                %201 = vst [vmem:[%s149 + $0xc8] sm:$0xff] %v200
                %v202 = vld [vmem:[%s148 + $0x190] sm:$0xff]
                %203 = vst [vmem:[%s149 + $0xd0] sm:$0xff] %v202
                %v204 = vld [vmem:[%s148 + $0x198] sm:$0xff]
                %205 = vst [vmem:[%s149 + $0xd8] sm:$0xff] %v204
                %v206 = vld [vmem:[%s148 + $0x1a0] sm:$0xff]
                %207 = vst [vmem:[%s149 + $0xe0] sm:$0xff] %v206
                %v208 = vld [vmem:[%s148 + $0x1a8] sm:$0xff]
                %209 = vst [vmem:[%s149 + $0xe8] sm:$0xff] %v208
                %v210 = vld [vmem:[%s148 + $0x1b0] sm:$0xff]
                %211 = vst [vmem:[%s149 + $0xf0] sm:$0xff] %v210
                %v212 = vld [vmem:[%s148 + $0x1b8] sm:$0xff]
                %213 = vst [vmem:[%s149 + $0xf8] sm:$0xff] %v212
              $region41: #{forward.5} parent=35 // loop_footer
                %s147 = sadd.s32 1, %s143
              $region42: #{forward.5} parent=35 // loop_footer_branch
                %142 = sbr.rel target = $region38
              $region43: #{forward.5} parent=35 // loop_exit
                _
            $region36: #{forward.5} parent=31 // pred_fallthru
              _
            // Predicated region
            $region44: #{forward.5} parent=31 // pred_check
              _
            $region45: #{forward.5} parent=31 // pred_check_branch
              %215 = sbr.rel target = $region47
            $region46: #{forward.5} parent=31 // pred_region
              _
            $region47: #{forward.5} parent=31 // pred_fallthru
              _
          $region32: #{forward.5} parent=27 // pred_fallthru
            _
          %216 = vnop
        $region28: #{forward.5} parent=23 // pred_fallthru
          _
      $region24: #{forward.5} parent=5 // pred_fallthru
        _
      %p217 = scmp.le.s32.totalorder 1, %s9
      %p218 = scmp.lt.s32.totalorder %s9, 3
      %p219 = pnand %p217, %p218
      %p220 = pneg %p219
      // Predicated region
      $region48: #{forward.5} parent=5 // pred_check
        _
      $region49: #{forward.5} parent=5 // pred_check_branch
        %222 = sbr.rel (%p219) target = $region51
      $region50: #{forward.5} parent=5 // pred_region
        %s223 = ssub.s32 %s9, 1
        %s224 = sand.u32 %s43, 1
        %s225 = sand.u32 %s43, 1
        %s226 = smul.addr %s225, 256
        %s227 = scalar_lea.vmem [#allocation2], %s226
        // Predicated region
        $region52: #{forward.5} parent=50 // pred_check
          %p228 = pneg %p56
        $region53: #{forward.5} parent=50 // pred_check_branch
          %230 = sbr.rel (%p228) target = $region55
        $region54: #{forward.5} parent=50 // pred_region
          _
        $region55: #{forward.5} parent=50 // pred_fallthru
          _
        %p231 = pneg %p30
        %p232 = pneg %p27
        %s233 = sand.u32 %s43, 1
        %s234 = sand.u32 %s43, 1
        %s235 = smul.addr %s234, 256
        %s236 = scalar_lea.vmem [#allocation2], %s235
        %p237 = pneg %p56
        %p238 = pneg %p53
        %p239 = pneg %p77
        %p240 = pneg %p74
        %p241 = pneg %p103
        %p242 = pneg %p100
        %s243 = smul.u32 8, %s14
        %p244 = scmp.lt.s32.totalorder %s243, 15
        %s245 = scalar_select %p244, %s243, 15
        %s246 = smul.addr %s245, 8
        %s247 = scalar_lea.vmem %s3, %s246
        %s248 = smul.u32 8, %s14
        %s249 = smul.u32 8, %s14
        %p250 = scmp.lt.s32.totalorder %s249, 15
        %s251 = scalar_select %p250, %s249, 15
        %s252 = smul.addr %s251, 8
        %s253 = scalar_lea.vmem %s3, %s252
        %s254 = smul.u32 8, %s14
        %v255 = vld [vmem:[%s0] sm:$0xff]
        %v256 = vld [vmem:[%s227] sm:$0xff]
        %v257 = vld [vmem:[%s227 + $0x8] sm:$0xff]
        %v258 = vld [vmem:[%s227 + $0x10] sm:$0xff]
        %v259 = vld [vmem:[%s227 + $0x18] sm:$0xff]
        %v260 = vld [vmem:[%s227 + $0x20] sm:$0xff]
        %v261 = vld [vmem:[%s227 + $0x28] sm:$0xff]
        %v262 = vld [vmem:[%s227 + $0x30] sm:$0xff]
        %v263 = vld [vmem:[%s227 + $0x38] sm:$0xff]
        %v264 = vld [vmem:[%s227 + $0x40] sm:$0xff]
        %v265 = vld [vmem:[%s227 + $0x48] sm:$0xff]
        %v266 = vld [vmem:[%s227 + $0x50] sm:$0xff]
        %v267 = vld [vmem:[%s227 + $0x58] sm:$0xff]
        %v268 = vld [vmem:[%s227 + $0x60] sm:$0xff]
        %v269 = vld [vmem:[%s227 + $0x68] sm:$0xff]
        %v270 = vld [vmem:[%s227 + $0x70] sm:$0xff]
        %v271 = vld [vmem:[%s227 + $0x78] sm:$0xff]
        %v272 = vld [vmem:[%s227 + $0x80] sm:$0xff]
        %v273 = vld [vmem:[%s227 + $0x88] sm:$0xff]
        %v274 = vld [vmem:[%s227 + $0x90] sm:$0xff]
        %v275 = vld [vmem:[%s227 + $0x98] sm:$0xff]
        %v276 = vld [vmem:[%s227 + $0xa0] sm:$0xff]
        %v277 = vld [vmem:[%s227 + $0xa8] sm:$0xff]
        %v278 = vld [vmem:[%s227 + $0xb0] sm:$0xff]
        %v279 = vld [vmem:[%s227 + $0xb8] sm:$0xff]
        %v280 = vld [vmem:[%s227 + $0xc0] sm:$0x1]
        %v281 = vld [vmem:[%s227 + $0xc8] sm:$0x1]
        %v282 = vld [vmem:[%s227 + $0xd0] sm:$0x1]
        %v283 = vld [vmem:[%s227 + $0xd8] sm:$0x1]
        %v284 = vld [vmem:[%s227 + $0xe0] sm:$0x1]
        %v285 = vld [vmem:[%s227 + $0xe8] sm:$0x1]
        %v286 = vld [vmem:[%s227 + $0xf0] sm:$0x1]
        %v287 = vld [vmem:[%s227 + $0xf8] sm:$0x1]
        %v288 = vld [vmem:[%s2] sm:$0xff]
        %290 = vset.pattern.permute.xlu0 0
        %291 = vperm.xlu0 %290, %v288
        %v292 = vpop.permute.xlu0 %291
        %vm294 = vcmask 203776
        %v296 = vsel %vm294, %v255, 0
        %vm298 = vcmask 1040384
        %v300 = vsel %vm298, %v280, 0
        %v303 = vsel %vm298, %v281, 0
        %v306 = vsel %vm298, %v282, 0
        %v309 = vsel %vm298, %v283, 0
        %v312 = vsel %vm298, %v284, 0
        %v315 = vsel %vm298, %v285, 0
        %v318 = vsel %vm298, %v286, 0
        %v321 = vsel %vm298, %v287, 0
        %323 = vmatprep.subr.mxu0 %v257
        %324 = vmatpush1.msra.mxu0 %v256
        %325 = vmatprep.subr.mxu0 %v265
        %326 = vmatpush1.msra.mxu0 %v264
        %327 = vmatprep.subr.mxu0 %v273
        %328 = vmatpush1.msra.mxu0 %v272
        %329 = vmatprep.subr.mxu0 %v303
        %330 = vmatpush1.msra.mxu0 %v300
        %331 = vmatprep.subr.mxu0 0.0
        %332 = vmatpush1.msra.mxu0 0.0
        %333 = vmatprep.subr.mxu0 0.0
        %334 = vmatpush1.msra.mxu0 0.0
        %335 = vmatprep.subr.mxu0 0.0
        %336 = vmatpush1.msra.mxu0 0.0
        %337 = vmatprep.subr.mxu0 0.0
        %338 = vmatpush1.msra.mxu0 0.0
        %339 = vmatprep.subr.mxu0 0.0
        %340 = vmatpush1.msra.mxu0 0.0
        %341 = vmatprep.subr.mxu0 0.0
        %342 = vmatpush1.msra.mxu0 0.0
        %343 = vmatprep.subr.mxu0 0.0
        %344 = vmatpush1.msra.mxu0 0.0
        %345 = vmatprep.subr.mxu0 0.0
        %346 = vmatpush1.msra.mxu0 0.0
        %347 = vmatprep.subr.mxu0 0.0
        %348 = vmatpush1.msra.mxu0 0.0
        %349 = vmatprep.subr.mxu0 0.0
        %350 = vmatpush1.msra.mxu0 0.0
        %351 = vmatprep.subr.mxu0 0.0
        %352 = vmatpush1.msra.mxu0 0.0
        %353 = vmatprep.subr.mxu0 0.0
        %354 = vmatpush1.msra.mxu0 0.0
        %355 = vmatprep.subr.mxu0 0.0
        %356 = vmatpush1.msra.mxu0 0.0
        %357 = vmatprep.subr.mxu0 0.0
        %358 = vmatpush1.msra.mxu0 0.0
        %359 = vmatprep.subr.mxu0 0.0
        %360 = vmatpush1.msra.mxu0 0.0
        %361 = vmatprep.subr.mxu0 0.0
        %362 = vmatpush1.msra.mxu0 0.0
        %363 = vmatprep.subr.mxu0 0.0
        %364 = vmatpush1.msra.mxu0 0.0
        %365 = vmatprep.subr.mxu0 0.0
        %366 = vmatpush1.msra.mxu0 0.0
        %367 = vmatprep.subr.mxu0 0.0
        %368 = vmatpush1.msra.mxu0 0.0
        %369 = vmatprep.subr.mxu0 0.0
        %370 = vmatpush1.msra.mxu0 0.0
        %371 = vmatprep.subr.mxu0 0.0
        %372 = vmatpush1.msra.mxu0 0.0
        %373 = vmatprep.subr.mxu0 0.0
        %374 = vmatpush1.msra.mxu0 0.0
        %375 = vmatprep.subr.mxu0 0.0
        %376 = vmatpush1.msra.mxu0 0.0
        %377 = vmatprep.subr.mxu0 0.0
        %378 = vmatpush1.msra.mxu0 0.0
        %379 = vmatprep.subr.mxu0 0.0
        %380 = vmatpush1.msra.mxu0 0.0
        %381 = vmatprep.subr.mxu0 0.0
        %382 = vmatpush1.msra.mxu0 0.0
        %383 = vmatprep.subr.mxu0 0.0
        %384 = vmatpush1.msra.mxu0 0.0
        %385 = vmatprep.subr.mxu0 0.0
        %386 = vmatpush1.msra.mxu0 0.0
        %387 = vmatprep.mubr.f32.mxu0 0.0
        %388 = vmatmul.mubr.f32.gmra.mrb[0].mxu0 %v296
        %v389 = vpop.f32.mrb[0].mxu0
        %v390 = vadd.f32 %v292, %v389
        %v391 = vpop.f32.mrb[0].mxu0
        %v392 = vadd.f32 %v292, %v391
        %393 = vdwg.mxu0
        %394 = vmatprep.subr.mxu0 %v259
        %395 = vmatpush1.msra.mxu0 %v258
        %396 = vmatprep.subr.mxu0 %v267
        %397 = vmatpush1.msra.mxu0 %v266
        %398 = vmatprep.subr.mxu0 %v275
        %399 = vmatpush1.msra.mxu0 %v274
        %400 = vmatprep.subr.mxu0 %v309
        %401 = vmatpush1.msra.mxu0 %v306
        %402 = vmatprep.subr.mxu0 0.0
        %403 = vmatpush1.msra.mxu0 0.0
        %404 = vmatprep.subr.mxu0 0.0
        %405 = vmatpush1.msra.mxu0 0.0
        %406 = vmatprep.subr.mxu0 0.0
        %407 = vmatpush1.msra.mxu0 0.0
        %408 = vmatprep.subr.mxu0 0.0
        %409 = vmatpush1.msra.mxu0 0.0
        %410 = vmatprep.subr.mxu0 0.0
        %411 = vmatpush1.msra.mxu0 0.0
        %412 = vmatprep.subr.mxu0 0.0
        %413 = vmatpush1.msra.mxu0 0.0
        %414 = vmatprep.subr.mxu0 0.0
        %415 = vmatpush1.msra.mxu0 0.0
        %416 = vmatprep.subr.mxu0 0.0
        %417 = vmatpush1.msra.mxu0 0.0
        %418 = vmatprep.subr.mxu0 0.0
        %419 = vmatpush1.msra.mxu0 0.0
        %420 = vmatprep.subr.mxu0 0.0
        %421 = vmatpush1.msra.mxu0 0.0
        %422 = vmatprep.subr.mxu0 0.0
        %423 = vmatpush1.msra.mxu0 0.0
        %424 = vmatprep.subr.mxu0 0.0
        %425 = vmatpush1.msra.mxu0 0.0
        %426 = vmatprep.subr.mxu0 0.0
        %427 = vmatpush1.msra.mxu0 0.0
        %428 = vmatprep.subr.mxu0 0.0
        %429 = vmatpush1.msra.mxu0 0.0
        %430 = vmatprep.subr.mxu0 0.0
        %431 = vmatpush1.msra.mxu0 0.0
        %432 = vmatprep.subr.mxu0 0.0
        %433 = vmatpush1.msra.mxu0 0.0
        %434 = vmatprep.subr.mxu0 0.0
        %435 = vmatpush1.msra.mxu0 0.0
        %436 = vmatprep.subr.mxu0 0.0
        %437 = vmatpush1.msra.mxu0 0.0
        %438 = vmatprep.subr.mxu0 0.0
        %439 = vmatpush1.msra.mxu0 0.0
        %440 = vmatprep.subr.mxu0 0.0
        %441 = vmatpush1.msra.mxu0 0.0
        %442 = vmatprep.subr.mxu0 0.0
        %443 = vmatpush1.msra.mxu0 0.0
        %444 = vmatprep.subr.mxu0 0.0
        %445 = vmatpush1.msra.mxu0 0.0
        %446 = vmatprep.subr.mxu0 0.0
        %447 = vmatpush1.msra.mxu0 0.0
        %448 = vmatprep.subr.mxu0 0.0
        %449 = vmatpush1.msra.mxu0 0.0
        %450 = vmatprep.subr.mxu0 0.0
        %451 = vmatpush1.msra.mxu0 0.0
        %452 = vmatprep.subr.mxu0 0.0
        %453 = vmatpush1.msra.mxu0 0.0
        %454 = vmatprep.subr.mxu0 0.0
        %455 = vmatpush1.msra.mxu0 0.0
        %456 = vmatprep.subr.mxu0 0.0
        %457 = vmatpush1.msra.mxu0 0.0
        %458 = vmatprep.mubr.f32.mxu0 0.0
        %459 = vmatmul.mubr.f32.gmra.mrb[0].mxu0 %v296
        %v460 = vpop.f32.mrb[0].mxu0
        %v461 = vadd.f32 %v292, %v460
        %v462 = vpop.f32.mrb[0].mxu0
        %v463 = vadd.f32 %v292, %v462
        %464 = vdwg.mxu0
        %465 = vmatprep.subr.mxu0 %v261
        %466 = vmatpush1.msra.mxu0 %v260
        %467 = vmatprep.subr.mxu0 %v269
        %468 = vmatpush1.msra.mxu0 %v268
        %469 = vmatprep.subr.mxu0 %v277
        %470 = vmatpush1.msra.mxu0 %v276
        %471 = vmatprep.subr.mxu0 %v315
        %472 = vmatpush1.msra.mxu0 %v312
        %473 = vmatprep.subr.mxu0 0.0
        %474 = vmatpush1.msra.mxu0 0.0
        %475 = vmatprep.subr.mxu0 0.0
        %476 = vmatpush1.msra.mxu0 0.0
        %477 = vmatprep.subr.mxu0 0.0
        %478 = vmatpush1.msra.mxu0 0.0
        %479 = vmatprep.subr.mxu0 0.0
        %480 = vmatpush1.msra.mxu0 0.0
        %481 = vmatprep.subr.mxu0 0.0
        %482 = vmatpush1.msra.mxu0 0.0
        %483 = vmatprep.subr.mxu0 0.0
        %484 = vmatpush1.msra.mxu0 0.0
        %485 = vmatprep.subr.mxu0 0.0
        %486 = vmatpush1.msra.mxu0 0.0
        %487 = vmatprep.subr.mxu0 0.0
        %488 = vmatpush1.msra.mxu0 0.0
        %489 = vmatprep.subr.mxu0 0.0
        %490 = vmatpush1.msra.mxu0 0.0
        %491 = vmatprep.subr.mxu0 0.0
        %492 = vmatpush1.msra.mxu0 0.0
        %493 = vmatprep.subr.mxu0 0.0
        %494 = vmatpush1.msra.mxu0 0.0
        %495 = vmatprep.subr.mxu0 0.0
        %496 = vmatpush1.msra.mxu0 0.0
        %497 = vmatprep.subr.mxu0 0.0
        %498 = vmatpush1.msra.mxu0 0.0
        %499 = vmatprep.subr.mxu0 0.0
        %500 = vmatpush1.msra.mxu0 0.0
        %501 = vmatprep.subr.mxu0 0.0
        %502 = vmatpush1.msra.mxu0 0.0
        %503 = vmatprep.subr.mxu0 0.0
        %504 = vmatpush1.msra.mxu0 0.0
        %505 = vmatprep.subr.mxu0 0.0
        %506 = vmatpush1.msra.mxu0 0.0
        %507 = vmatprep.subr.mxu0 0.0
        %508 = vmatpush1.msra.mxu0 0.0
        %509 = vmatprep.subr.mxu0 0.0
        %510 = vmatpush1.msra.mxu0 0.0
        %511 = vmatprep.subr.mxu0 0.0
        %512 = vmatpush1.msra.mxu0 0.0
        %513 = vmatprep.subr.mxu0 0.0
        %514 = vmatpush1.msra.mxu0 0.0
        %515 = vmatprep.subr.mxu0 0.0
        %516 = vmatpush1.msra.mxu0 0.0
        %517 = vmatprep.subr.mxu0 0.0
        %518 = vmatpush1.msra.mxu0 0.0
        %519 = vmatprep.subr.mxu0 0.0
        %520 = vmatpush1.msra.mxu0 0.0
        %521 = vmatprep.subr.mxu0 0.0
        %522 = vmatpush1.msra.mxu0 0.0
        %523 = vmatprep.subr.mxu0 0.0
        %524 = vmatpush1.msra.mxu0 0.0
        %525 = vmatprep.subr.mxu0 0.0
        %526 = vmatpush1.msra.mxu0 0.0
        %527 = vmatprep.subr.mxu0 0.0
        %528 = vmatpush1.msra.mxu0 0.0
        %529 = vmatprep.mubr.f32.mxu0 0.0
        %530 = vmatmul.mubr.f32.gmra.mrb[0].mxu0 %v296
        %v531 = vpop.f32.mrb[0].mxu0
        %v532 = vadd.f32 %v292, %v531
        %v533 = vpop.f32.mrb[0].mxu0
        %v534 = vadd.f32 %v292, %v533
        %535 = vdwg.mxu0
        %536 = vmatprep.subr.mxu0 %v263
        %537 = vmatpush1.msra.mxu0 %v262
        %538 = vmatprep.subr.mxu0 %v271
        %539 = vmatpush1.msra.mxu0 %v270
        %540 = vmatprep.subr.mxu0 %v279
        %541 = vmatpush1.msra.mxu0 %v278
        %542 = vmatprep.subr.mxu0 %v321
        %543 = vmatpush1.msra.mxu0 %v318
        %544 = vmatprep.subr.mxu0 0.0
        %545 = vmatpush1.msra.mxu0 0.0
        %546 = vmatprep.subr.mxu0 0.0
        %547 = vmatpush1.msra.mxu0 0.0
        %548 = vmatprep.subr.mxu0 0.0
        %549 = vmatpush1.msra.mxu0 0.0
        %550 = vmatprep.subr.mxu0 0.0
        %551 = vmatpush1.msra.mxu0 0.0
        %552 = vmatprep.subr.mxu0 0.0
        %553 = vmatpush1.msra.mxu0 0.0
        %554 = vmatprep.subr.mxu0 0.0
        %555 = vmatpush1.msra.mxu0 0.0
        %556 = vmatprep.subr.mxu0 0.0
        %557 = vmatpush1.msra.mxu0 0.0
        %558 = vmatprep.subr.mxu0 0.0
        %559 = vmatpush1.msra.mxu0 0.0
        %560 = vmatprep.subr.mxu0 0.0
        %561 = vmatpush1.msra.mxu0 0.0
        %562 = vmatprep.subr.mxu0 0.0
        %563 = vmatpush1.msra.mxu0 0.0
        %564 = vmatprep.subr.mxu0 0.0
        %565 = vmatpush1.msra.mxu0 0.0
        %566 = vmatprep.subr.mxu0 0.0
        %567 = vmatpush1.msra.mxu0 0.0
        %568 = vmatprep.subr.mxu0 0.0
        %569 = vmatpush1.msra.mxu0 0.0
        %570 = vmatprep.subr.mxu0 0.0
        %571 = vmatpush1.msra.mxu0 0.0
        %572 = vmatprep.subr.mxu0 0.0
        %573 = vmatpush1.msra.mxu0 0.0
        %574 = vmatprep.subr.mxu0 0.0
        %575 = vmatpush1.msra.mxu0 0.0
        %576 = vmatprep.subr.mxu0 0.0
        %577 = vmatpush1.msra.mxu0 0.0
        %578 = vmatprep.subr.mxu0 0.0
        %579 = vmatpush1.msra.mxu0 0.0
        %580 = vmatprep.subr.mxu0 0.0
        %581 = vmatpush1.msra.mxu0 0.0
        %582 = vmatprep.subr.mxu0 0.0
        %583 = vmatpush1.msra.mxu0 0.0
        %584 = vmatprep.subr.mxu0 0.0
        %585 = vmatpush1.msra.mxu0 0.0
        %586 = vmatprep.subr.mxu0 0.0
        %587 = vmatpush1.msra.mxu0 0.0
        %588 = vmatprep.subr.mxu0 0.0
        %589 = vmatpush1.msra.mxu0 0.0
        %590 = vmatprep.subr.mxu0 0.0
        %591 = vmatpush1.msra.mxu0 0.0
        %592 = vmatprep.subr.mxu0 0.0
        %593 = vmatpush1.msra.mxu0 0.0
        %594 = vmatprep.subr.mxu0 0.0
        %595 = vmatpush1.msra.mxu0 0.0
        %596 = vmatprep.subr.mxu0 0.0
        %597 = vmatpush1.msra.mxu0 0.0
        %598 = vmatprep.subr.mxu0 0.0
        %599 = vmatpush1.msra.mxu0 0.0
        %600 = vmatprep.mubr.f32.mxu0 0.0
        %601 = vmatmul.mubr.f32.gmra.mrb[0].mxu0 %v296
        %v602 = vpop.f32.mrb[0].mxu0
        %v603 = vadd.f32 %v292, %v602
        %v604 = vpop.f32.mrb[0].mxu0
        %v605 = vadd.f32 %v292, %v604
        %606 = vdwg.mxu0
        %vm607 = vcmp.ge.f32.partialorder %v390, 0.0
        %vm608 = vcmp.ge.f32.partialorder %v392, 0.0
        %vm609 = vcmp.ge.f32.partialorder %v461, 0.0
        %vm610 = vcmp.ge.f32.partialorder %v463, 0.0
        %vm611 = vcmp.ge.f32.partialorder %v532, 0.0
        %vm612 = vcmp.ge.f32.partialorder %v534, 0.0
        %vm613 = vcmp.ge.f32.partialorder %v603, 0.0
        %vm614 = vcmp.ge.f32.partialorder %v605, 0.0
        %v615 = vmul.f32 %v390, 0.05
        %v616 = vmul.f32 %v392, 0.05
        %v617 = vmul.f32 %v461, 0.05
        %v618 = vmul.f32 %v463, 0.05
        %v619 = vmul.f32 %v532, 0.05
        %v620 = vmul.f32 %v534, 0.05
        %v621 = vmul.f32 %v603, 0.05
        %v622 = vmul.f32 %v605, 0.05
        %v623 = vsel %vm607, %v390, %v615
        %v624 = vsel %vm608, %v392, %v616
        %v625 = vsel %vm609, %v461, %v617
        %v626 = vsel %vm610, %v463, %v618
        %v627 = vsel %vm611, %v532, %v619
        %v628 = vsel %vm612, %v534, %v620
        %v629 = vsel %vm613, %v603, %v621
        %v630 = vsel %vm614, %v605, %v622
        %631 = vst [vmem:[%s253] sm:$0xff] %v623
        %632 = vst [vmem:[%s253 + $0x8] sm:$0xff] %v624
        %633 = vst [vmem:[%s253 + $0x10] sm:$0xff] %v625
        %634 = vst [vmem:[%s253 + $0x18] sm:$0xff] %v626
        %635 = vst [vmem:[%s253 + $0x20] sm:$0xff] %v627
        %636 = vst [vmem:[%s253 + $0x28] sm:$0xff] %v628
        %637 = vst [vmem:[%s253 + $0x30] sm:$0xff] %v629
        %638 = vst [vmem:[%s253 + $0x38] sm:$0xff] %v630
        %s639 = smul.u32 8, %s14
        %p640 = scmp.lt.s32.totalorder %s639, 15
        %s641 = scalar_select %p640, %s639, 15
        %s642 = smul.addr %s641, 8
        %s643 = scalar_lea.vmem %s3, %s642
        // Predicated region
        $region56: #{forward.5} parent=50 // pred_check
          %p644 = pneg %p100
        $region57: #{forward.5} parent=50 // pred_check_branch
          %646 = sbr.rel (%p644) target = $region59
        $region58: #{forward.5} parent=50 // pred_region
          %s647 = smul.u32 8, %s14
        $region59: #{forward.5} parent=50 // pred_fallthru
          _
      $region51: #{forward.5} parent=5 // pred_fallthru
        _
      %p648 = scmp.le.s32.totalorder 2, %s9
      // Predicated region
      $region60: #{forward.5} parent=5 // pred_check
        %p649 = pneg %p648
      $region61: #{forward.5} parent=5 // pred_check_branch
        %651 = sbr.rel (%p649) target = $region63
      $region62: #{forward.5} parent=5 // pred_region
        %s652 = ssub.s32 %s9, 2
        // Predicated region
        $region64: #{forward.5} parent=62 // pred_check
          %p653 = pneg %p106
        $region65: #{forward.5} parent=62 // pred_check_branch
          %655 = sbr.rel (%p653) target = $region67
        $region66: #{forward.5} parent=62 // pred_region
          %s656 = smul.u32 8, %s15
          %p657 = scmp.lt.s32.totalorder %s656, 15
          %s658 = scalar_select %p657, %s656, 15
          %s659 = smul.addr %s658, 8
          %s660 = scalar_lea.vmem %s3, %s659
        $region67: #{forward.5} parent=62 // pred_fallthru
          _
      $region63: #{forward.5} parent=5 // pred_fallthru
        _
    $region6: #{forward.5} parent=1 // loop_footer
      %s13 = sadd.s32 1, %s9
    $region7: #{forward.5} parent=1 // loop_footer_branch
      %8 = sbr.rel target = $region3
    $region8: #{forward.5} parent=1 // loop_exit
      _

// kernel: forward.6
$region0: #{forward.6}
  #allocation0 [shape = 'u32[]', space=smem, size = 0x4, offset = 0x4, fixed_abs, tag = 'smem constant byte address 0x4 - core index']
  #allocation1 [shape = 'u32[144,128]{1,0:T(1,128)}', space=vmem, size = 0x12000, scoped, tag = 'internal scratch']
  %s0 = inlined_call_operand.vmem [shape: f32[2,16,100], index: 0, kind: input, shape index: {}]
  %s1 = inlined_call_operand.vmem [shape: f32[2,100,128], index: 1, kind: input, shape index: {}]
  %s2 = inlined_call_operand.vmem [shape: f32[2,16,1], index: 2, kind: input, shape index: {}]
  %s3 = inlined_call_operand.vmem [shape: f32[2,16,128], index: 3, kind: output, shape index: {}]
  %s4 = sld [smem:[#allocation0]]
  $region45: #{forward.6} parent=0
    _
  %s6 = ssub.s32 1, %s4
  %s7 = scalar_select 0, %s6, %s4
  loop: start=0, step=1, limit=4
  $region2: #{forward.6} parent=0 // loop_pre_header
    _
  $region3: #{forward.6} parent=0 // loop_header
    %s9 = sphi 0, %s13
    %p10 = scmp.ge.s32.totalorder %s9, 4
    %s19 = sphi 0, %s21
    %s22 = sphi 0, %s19
    %s23 = sphi 0, %s22
    %s39 = sphi 0, %s23
    %s45 = sphi 0, %s47
    %s48 = sphi 0, %s45
    %s49 = sphi 0, %s48
    %s65 = sphi 0, %s49
    %s71 = sphi 0, %s73
    %s74 = sphi 0, %s71
    %s75 = sphi 0, %s74
    %s91 = sphi 0, %s75
    %s97 = sphi 0, %s99
    %s100 = sphi 0, %s97
    %s101 = sphi 0, %s100
    %s117 = sphi 0, %s101
  $region4: #{forward.6} parent=0 // loop_header_branch
    %12 = sbr.rel (%p10) target = $region8
  $region5: #{forward.6} parent=0 // loop_body
    %s14 = ssub.s32 %s9, 1
    %s15 = ssub.s32 %s9, 2
    %s16 = sadd.s32 %s9, 1
    %s17 = ssub.s32 %s9, %s16
    %p18 = scmp.eq.s32.totalorder %s17, 0
    %s20 = sadd.s32 %s19, 1
    %s21 = scalar_select %p18, %s19, %s20
    %p24 = pneg %p18
    %p25 = scmp.eq.s32.totalorder %s9, 1
    %p26 = por %p24, %p25
    %p27 = scmp.ne.s32.totalorder %s19, %s22
    %p28 = scmp.eq.s32.totalorder %s9, 0
    %p29 = por %p27, %p28
    %p30 = scmp.ne.s32.totalorder %s19, %s22
    %p31 = scmp.eq.s32.totalorder %s14, 1
    %p32 = por %p30, %p31
    %p33 = scmp.ne.s32.totalorder %s22, %s23
    %p34 = scmp.eq.s32.totalorder %s14, 0
    %p35 = por %p33, %p34
    %p36 = scmp.ne.s32.totalorder %s22, %s23
    %p37 = scmp.eq.s32.totalorder %s15, 1
    %p38 = por %p36, %p37
    %p40 = scmp.ne.s32.totalorder %s23, %s39
    %p41 = scmp.eq.s32.totalorder %s15, 0
    %p42 = por %p40, %p41
    %s43 = ssub.s32 %s9, %s16
    %p44 = scmp.eq.s32.totalorder %s43, 0
    %s46 = sadd.s32 %s45, 1
    %s47 = scalar_select %p44, %s45, %s46
    %p50 = pneg %p44
    %p51 = scmp.eq.s32.totalorder %s9, 1
    %p52 = por %p50, %p51
    %p53 = scmp.ne.s32.totalorder %s45, %s48
    %p54 = scmp.eq.s32.totalorder %s9, 0
    %p55 = por %p53, %p54
    %p56 = scmp.ne.s32.totalorder %s45, %s48
    %p57 = scmp.eq.s32.totalorder %s14, 1
    %p58 = por %p56, %p57
    %p59 = scmp.ne.s32.totalorder %s48, %s49
    %p60 = scmp.eq.s32.totalorder %s14, 0
    %p61 = por %p59, %p60
    %p62 = scmp.ne.s32.totalorder %s48, %s49
    %p63 = scmp.eq.s32.totalorder %s15, 1
    %p64 = por %p62, %p63
    %p66 = scmp.ne.s32.totalorder %s49, %s65
    %p67 = scmp.eq.s32.totalorder %s15, 0
    %p68 = por %p66, %p67
    %s69 = ssub.s32 %s9, %s16
    %p70 = scmp.eq.s32.totalorder %s69, 0
    %s72 = sadd.s32 %s71, 1
    %s73 = scalar_select %p70, %s71, %s72
    %p76 = pneg %p70
    %p77 = scmp.eq.s32.totalorder %s9, 1
    %p78 = por %p76, %p77
    %p79 = scmp.ne.s32.totalorder %s71, %s74
    %p80 = scmp.eq.s32.totalorder %s9, 0
    %p81 = por %p79, %p80
    %p82 = scmp.ne.s32.totalorder %s71, %s74
    %p83 = scmp.eq.s32.totalorder %s14, 1
    %p84 = por %p82, %p83
    %p85 = scmp.ne.s32.totalorder %s74, %s75
    %p86 = scmp.eq.s32.totalorder %s14, 0
    %p87 = por %p85, %p86
    %p88 = scmp.ne.s32.totalorder %s74, %s75
    %p89 = scmp.eq.s32.totalorder %s15, 1
    %p90 = por %p88, %p89
    %p92 = scmp.ne.s32.totalorder %s75, %s91
    %p93 = scmp.eq.s32.totalorder %s15, 0
    %p94 = por %p92, %p93
    %s95 = ssub.s32 %s9, %s16
    %p96 = scmp.eq.s32.totalorder %s95, 0
    %s98 = sadd.s32 %s97, 1
    %s99 = scalar_select %p96, %s97, %s98
    %p102 = pneg %p96
    %p103 = scmp.eq.s32.totalorder %s9, 1
    %p104 = por %p102, %p103
    %p105 = scmp.ne.s32.totalorder %s97, %s100
    %p106 = scmp.eq.s32.totalorder %s9, 0
    %p107 = por %p105, %p106
    %p108 = scmp.ne.s32.totalorder %s97, %s100
    %p109 = scmp.eq.s32.totalorder %s14, 1
    %p110 = por %p108, %p109
    %p111 = scmp.ne.s32.totalorder %s100, %s101
    %p112 = scmp.eq.s32.totalorder %s14, 0
    %p113 = por %p111, %p112
    %p114 = scmp.ne.s32.totalorder %s100, %s101
    %p115 = scmp.eq.s32.totalorder %s15, 1
    %p116 = por %p114, %p115
    %p118 = scmp.ne.s32.totalorder %s101, %s117
    %p119 = scmp.eq.s32.totalorder %s15, 0
    %p120 = por %p118, %p119
    %p121 = scmp.le.s32.totalorder 1, %s9
    %p122 = scmp.lt.s32.totalorder %s9, 3
    %p123 = pnand %p121, %p122
    %p124 = pneg %p123
    // Predicated region
    $region9: #{forward.6} parent=5 // pred_check
      _
    $region10: #{forward.6} parent=5 // pred_check_branch
      %126 = sbr.rel (%p123) target = $region12
    $region11: #{forward.6} parent=5 // pred_region
      %s127 = ssub.s32 %s9, 1
    $region12: #{forward.6} parent=5 // pred_fallthru
      _
    %p128 = scmp.lt.s32.totalorder %s9, 2
    // Predicated region
    $region13: #{forward.6} parent=5 // pred_check
      %p129 = pneg %p128
    $region14: #{forward.6} parent=5 // pred_check_branch
      %131 = sbr.rel (%p129) target = $region16
    $region15: #{forward.6} parent=5 // pred_region
      // Predicated region
      $region17: #{forward.6} parent=15 // pred_check
        %p132 = pneg %p29
      $region18: #{forward.6} parent=15 // pred_check_branch
        %134 = sbr.rel (%p132) target = $region20
      $region19: #{forward.6} parent=15 // pred_region
        %p135 = scmp.lt.s32.totalorder %s9, 1
        %s136 = scalar_select %p135, %s9, 1
        %s137 = smul.addr %s136, 2
        %s138 = smul.addr %s137, 8
        %s139 = scalar_lea.vmem %s0, %s138
      $region20: #{forward.6} parent=15 // pred_fallthru
        _
      // Predicated region
      $region21: #{forward.6} parent=15 // pred_check
        %p140 = pneg %p55
      $region22: #{forward.6} parent=15 // pred_check_branch
        %142 = sbr.rel (%p140) target = $region24
      $region23: #{forward.6} parent=15 // pred_region
        %p143 = scmp.lt.s32.totalorder %s9, 1
        %s144 = scalar_select %p143, %s9, 1
        %s145 = smul.addr %s144, 13
        %s146 = smul.addr %s145, 8
        %s147 = scalar_lea.vmem %s1, %s146
      $region24: #{forward.6} parent=15 // pred_fallthru
        _
      // Predicated region
      $region25: #{forward.6} parent=15 // pred_check
        %p148 = pneg %p81
      $region26: #{forward.6} parent=15 // pred_check_branch
        %150 = sbr.rel (%p148) target = $region28
      $region27: #{forward.6} parent=15 // pred_region
        %p151 = scmp.lt.s32.totalorder %s9, 1
        %s152 = scalar_select %p151, %s9, 1
        %s153 = smul.addr %s152, 2
        %s154 = smul.addr %s153, 8
        %s155 = scalar_lea.vmem %s2, %s154
      $region28: #{forward.6} parent=15 // pred_fallthru
        _
    $region16: #{forward.6} parent=5 // pred_fallthru
      _
    %p156 = scmp.le.s32.totalorder 1, %s9
    %p157 = scmp.lt.s32.totalorder %s9, 3
    %p158 = pnand %p156, %p157
    %p159 = pneg %p158
    // Predicated region
    $region29: #{forward.6} parent=5 // pred_check
      _
    $region30: #{forward.6} parent=5 // pred_check_branch
      %161 = sbr.rel (%p158) target = $region32
    $region31: #{forward.6} parent=5 // pred_region
      %s162 = ssub.s32 %s9, 1
      %p163 = scmp.lt.s32.totalorder %s14, 1
      %s164 = scalar_select %p163, %s14, 1
      %s165 = smul.addr %s164, 2
      %s166 = smul.addr %s165, 8
      %s167 = scalar_lea.vmem %s0, %s166
      %p168 = pneg %p35
      %p169 = pneg %p32
      %p170 = scmp.lt.s32.totalorder %s14, 1
      %s171 = scalar_select %p170, %s14, 1
      %s172 = smul.addr %s171, 13
      %s173 = smul.addr %s172, 8
      %s174 = scalar_lea.vmem %s1, %s173
      %p175 = pneg %p61
      %p176 = pneg %p58
      %p177 = scmp.lt.s32.totalorder %s14, 1
      %s178 = scalar_select %p177, %s14, 1
      %s179 = smul.addr %s178, 2
      %s180 = smul.addr %s179, 8
      %s181 = scalar_lea.vmem %s2, %s180
      %p182 = pneg %p87
      %p183 = pneg %p84
      %p184 = pneg %p113
      %p185 = pneg %p110
      %p186 = scmp.lt.s32.totalorder %s14, 1
      %s187 = scalar_select %p186, %s14, 1
      %s188 = smul.addr %s187, 2
      %s189 = smul.addr %s188, 8
      %s190 = scalar_lea.vmem %s3, %s189
      %p191 = scmp.lt.s32.totalorder %s14, 1
      %s192 = scalar_select %p191, %s14, 1
      %s193 = smul.addr %s192, 2
      %s194 = smul.addr %s193, 8
      %s195 = scalar_lea.vmem %s0, %s194
      %p196 = scmp.lt.s32.totalorder %s14, 1
      %s197 = scalar_select %p196, %s14, 1
      %s198 = smul.addr %s197, 13
      %s199 = smul.addr %s198, 8
      %s200 = scalar_lea.vmem %s1, %s199
      %p201 = scmp.lt.s32.totalorder %s14, 1
      %s202 = scalar_select %p201, %s14, 1
      %s203 = smul.addr %s202, 2
      %s204 = smul.addr %s203, 8
      %s205 = scalar_lea.vmem %s2, %s204
      %p206 = scmp.lt.s32.totalorder %s14, 1
      %s207 = scalar_select %p206, %s14, 1
      %s208 = smul.addr %s207, 2
      %s209 = smul.addr %s208, 8
      %s210 = scalar_lea.vmem %s3, %s209
      %v211 = vld [vmem:[%s195] sm:$0xff]
      %v212 = vld [vmem:[%s195 + $0x8] sm:$0xff]
      %v213 = vld [vmem:[%s200] sm:$0xff]
      %v214 = vld [vmem:[%s200 + $0x8] sm:$0xff]
      %v215 = vld [vmem:[%s200 + $0x10] sm:$0xff]
      %v216 = vld [vmem:[%s200 + $0x18] sm:$0xff]
      %v217 = vld [vmem:[%s200 + $0x20] sm:$0xff]
      %v218 = vld [vmem:[%s200 + $0x28] sm:$0xff]
      %v219 = vld [vmem:[%s200 + $0x30] sm:$0xff]
      %v220 = vld [vmem:[%s200 + $0x38] sm:$0xff]
      %v221 = vld [vmem:[%s200 + $0x40] sm:$0xff]
      %v222 = vld [vmem:[%s200 + $0x48] sm:$0xff]
      %v223 = vld [vmem:[%s200 + $0x50] sm:$0xff]
      %v224 = vld [vmem:[%s200 + $0x58] sm:$0xff]
      %v225 = vld [vmem:[%s200 + $0x60] sm:$0xf]
      %v226 = vld [vmem:[%s205] sm:$0xff]
      %v227 = vld [vmem:[%s205 + $0x8] sm:$0xff]
      %229 = vset.pattern.permute.xlu0 0
      %230 = vperm.xlu0 %229, %v226
      %v231 = vpop.permute.xlu0 %230
      %234 = vset.pattern.permute.xlu0 0
      %235 = vperm.xlu0 %234, %v227
      %v236 = vpop.permute.xlu0 %235
      %vm238 = vcmask 818176
      %v240 = vsel %vm238, %v211, 0
      %v243 = vsel %vm238, %v212, 0
      %vm245 = vcmask 1043456
      %v247 = vsel %vm245, %v225, 0
      %249 = vmatprep.subr.mxu0 0.0
      %250 = vmatpush1.msra.mxu0 %v213
      %251 = vmatprep.subr.mxu0 0.0
      %252 = vmatpush1.msra.mxu0 %v214
      %253 = vmatprep.subr.mxu0 0.0
      %254 = vmatpush1.msra.mxu0 %v215
      %255 = vmatprep.subr.mxu0 0.0
      %256 = vmatpush1.msra.mxu0 %v216
      %257 = vmatprep.subr.mxu0 0.0
      %258 = vmatpush1.msra.mxu0 %v217
      %259 = vmatprep.subr.mxu0 0.0
      %260 = vmatpush1.msra.mxu0 %v218
      %261 = vmatprep.subr.mxu0 0.0
      %262 = vmatpush1.msra.mxu0 %v219
      %263 = vmatprep.subr.mxu0 0.0
      %264 = vmatpush1.msra.mxu0 %v220
      %265 = vmatprep.subr.mxu0 0.0
      %266 = vmatpush1.msra.mxu0 %v221
      %267 = vmatprep.subr.mxu0 0.0
      %268 = vmatpush1.msra.mxu0 %v222
      %269 = vmatprep.subr.mxu0 0.0
      %270 = vmatpush1.msra.mxu0 %v223
      %271 = vmatprep.subr.mxu0 0.0
      %272 = vmatpush1.msra.mxu0 %v224
      %273 = vmatprep.subr.mxu0 0.0
      %274 = vmatpush1.msra.mxu0 %v247
      %275 = vmatprep.subr.mxu0 0.0
      %276 = vmatpush1.msra.mxu0 0.0
      %277 = vmatprep.subr.mxu0 0.0
      %278 = vmatpush1.msra.mxu0 0.0
      %279 = vmatprep.subr.mxu0 0.0
      %280 = vmatpush1.msra.mxu0 0.0
      %281 = vmatprep.subr.mxu0 0.0
      %282 = vmatpush1.msra.mxu0 0.0
      %283 = vmatprep.subr.mxu0 0.0
      %284 = vmatpush1.msra.mxu0 0.0
      %285 = vmatprep.subr.mxu0 0.0
      %286 = vmatpush1.msra.mxu0 0.0
      %287 = vmatprep.subr.mxu0 0.0
      %288 = vmatpush1.msra.mxu0 0.0
      %289 = vmatprep.subr.mxu0 0.0
      %290 = vmatpush1.msra.mxu0 0.0
      %291 = vmatprep.subr.mxu0 0.0
      %292 = vmatpush1.msra.mxu0 0.0
      %293 = vmatprep.subr.mxu0 0.0
      %294 = vmatpush1.msra.mxu0 0.0
      %295 = vmatprep.subr.mxu0 0.0
      %296 = vmatpush1.msra.mxu0 0.0
      %297 = vmatprep.subr.mxu0 0.0
      %298 = vmatpush1.msra.mxu0 0.0
      %299 = vmatprep.subr.mxu0 0.0
      %300 = vmatpush1.msra.mxu0 0.0
      %301 = vmatprep.subr.mxu0 0.0
      %302 = vmatpush1.msra.mxu0 0.0
      %303 = vmatprep.subr.mxu0 0.0
      %304 = vmatpush1.msra.mxu0 0.0
      %305 = vmatprep.subr.mxu0 0.0
      %306 = vmatpush1.msra.mxu0 0.0
      %307 = vmatprep.subr.mxu0 0.0
      %308 = vmatpush1.msra.mxu0 0.0
      %309 = vmatprep.subr.mxu0 0.0
      %310 = vmatpush1.msra.mxu0 0.0
      %311 = vmatprep.subr.mxu0 0.0
      %312 = vmatpush1.msra.mxu0 0.0
      %313 = vmatprep.mubr.f32.mxu0 0.0
      %314 = vmatmul.mubr.f32.gmra.mrb[0].mxu0 %v240
      %v315 = vpop.f32.mrb[0].mxu0
      %v316 = vadd.f32 %v231, %v315
      %v317 = vpop.f32.mrb[0].mxu0
      %318 = vmatprep.mubr.f32.mxu0 0.0
      %319 = vmatmul.mubr.f32.gmra.mrb[0].mxu0 %v243
      %v320 = vpop.f32.mrb[0].mxu0
      %v321 = vadd.f32 %v236, %v320
      %v322 = vpop.f32.mrb[0].mxu0
      %323 = vdwg.mxu0
      %vm324 = vcmp.ge.f32.partialorder %v316, 0.0
      %vm325 = vcmp.ge.f32.partialorder %v321, 0.0
      %v326 = vmul.f32 %v316, 0.05
      %v327 = vmul.f32 %v321, 0.05
      %v328 = vsel %vm324, %v316, %v326
      %v329 = vsel %vm325, %v321, %v327
      %330 = vst [vmem:[%s210] sm:$0xff] %v328
      %331 = vst [vmem:[%s210 + $0x8] sm:$0xff] %v329
      %p332 = scmp.lt.s32.totalorder %s14, 1
      %s333 = scalar_select %p332, %s14, 1
      %s334 = smul.addr %s333, 2
      %s335 = smul.addr %s334, 8
      %s336 = scalar_lea.vmem %s3, %s335
      // Predicated region
      $region33: #{forward.6} parent=31 // pred_check
        %p337 = pneg %p110
      $region34: #{forward.6} parent=31 // pred_check_branch
        %339 = sbr.rel (%p337) target = $region36
      $region35: #{forward.6} parent=31 // pred_region
        _
      $region36: #{forward.6} parent=31 // pred_fallthru
        _
    $region32: #{forward.6} parent=5 // pred_fallthru
      _
    %p340 = scmp.le.s32.totalorder 2, %s9
    // Predicated region
    $region37: #{forward.6} parent=5 // pred_check
      %p341 = pneg %p340
    $region38: #{forward.6} parent=5 // pred_check_branch
      %343 = sbr.rel (%p341) target = $region40
    $region39: #{forward.6} parent=5 // pred_region
      %s344 = ssub.s32 %s9, 2
      // Predicated region
      $region41: #{forward.6} parent=39 // pred_check
        %p345 = pneg %p116
      $region42: #{forward.6} parent=39 // pred_check_branch
        %347 = sbr.rel (%p345) target = $region44
      $region43: #{forward.6} parent=39 // pred_region
        %p348 = scmp.lt.s32.totalorder %s15, 1
        %s349 = scalar_select %p348, %s15, 1
        %s350 = smul.addr %s349, 2
        %s351 = smul.addr %s350, 8
        %s352 = scalar_lea.vmem %s3, %s351
      $region44: #{forward.6} parent=39 // pred_fallthru
        _
    $region40: #{forward.6} parent=5 // pred_fallthru
      _
  $region6: #{forward.6} parent=0 // loop_footer
    %s13 = sadd.s32 1, %s9
  $region7: #{forward.6} parent=0 // loop_footer_branch
    %8 = sbr.rel target = $region3
  $region8: #{forward.6} parent=0 // loop_exit
    _

// kernel: forward.7
$region0: #{forward.7}
  #allocation0 [shape = 'u32[]', space=smem, size = 0x4, offset = 0x4, fixed_abs, tag = 'smem constant byte address 0x4 - core index']
  #allocation1 [shape = 'u32[144,128]{1,0:T(1,128)}', space=vmem, size = 0x12000, scoped, tag = 'internal scratch']
  %s0 = inlined_call_operand.vmem [shape: f32[2,22,144], index: 0, kind: input, shape index: {}]
  %s1 = inlined_call_operand.vmem [shape: f32[2,144,128], index: 1, kind: input, shape index: {}]
  %s2 = inlined_call_operand.vmem [shape: f32[2,22,1], index: 2, kind: input, shape index: {}]
  %s3 = inlined_call_operand.vmem [shape: f32[2,22,128], index: 3, kind: output, shape index: {}]
  %s4 = sld [smem:[#allocation0]]
  $region45: #{forward.7} parent=0
    _
  %s6 = ssub.s32 1, %s4
  %s7 = scalar_select 0, %s6, %s4
  loop: start=0, step=1, limit=4
  $region2: #{forward.7} parent=0 // loop_pre_header
    _
  $region3: #{forward.7} parent=0 // loop_header
    %s9 = sphi 0, %s13
    %p10 = scmp.ge.s32.totalorder %s9, 4
    %s19 = sphi 0, %s21
    %s22 = sphi 0, %s19
    %s23 = sphi 0, %s22
    %s39 = sphi 0, %s23
    %s45 = sphi 0, %s47
    %s48 = sphi 0, %s45
    %s49 = sphi 0, %s48
    %s65 = sphi 0, %s49
    %s71 = sphi 0, %s73
    %s74 = sphi 0, %s71
    %s75 = sphi 0, %s74
    %s91 = sphi 0, %s75
    %s97 = sphi 0, %s99
    %s100 = sphi 0, %s97
    %s101 = sphi 0, %s100
    %s117 = sphi 0, %s101
  $region4: #{forward.7} parent=0 // loop_header_branch
    %12 = sbr.rel (%p10) target = $region8
  $region5: #{forward.7} parent=0 // loop_body
    %s14 = ssub.s32 %s9, 1
    %s15 = ssub.s32 %s9, 2
    %s16 = sadd.s32 %s9, 1
    %s17 = ssub.s32 %s9, %s16
    %p18 = scmp.eq.s32.totalorder %s17, 0
    %s20 = sadd.s32 %s19, 1
    %s21 = scalar_select %p18, %s19, %s20
    %p24 = pneg %p18
    %p25 = scmp.eq.s32.totalorder %s9, 1
    %p26 = por %p24, %p25
    %p27 = scmp.ne.s32.totalorder %s19, %s22
    %p28 = scmp.eq.s32.totalorder %s9, 0
    %p29 = por %p27, %p28
    %p30 = scmp.ne.s32.totalorder %s19, %s22
    %p31 = scmp.eq.s32.totalorder %s14, 1
    %p32 = por %p30, %p31
    %p33 = scmp.ne.s32.totalorder %s22, %s23
    %p34 = scmp.eq.s32.totalorder %s14, 0
    %p35 = por %p33, %p34
    %p36 = scmp.ne.s32.totalorder %s22, %s23
    %p37 = scmp.eq.s32.totalorder %s15, 1
    %p38 = por %p36, %p37
    %p40 = scmp.ne.s32.totalorder %s23, %s39
    %p41 = scmp.eq.s32.totalorder %s15, 0
    %p42 = por %p40, %p41
    %s43 = ssub.s32 %s9, %s16
    %p44 = scmp.eq.s32.totalorder %s43, 0
    %s46 = sadd.s32 %s45, 1
    %s47 = scalar_select %p44, %s45, %s46
    %p50 = pneg %p44
    %p51 = scmp.eq.s32.totalorder %s9, 1
    %p52 = por %p50, %p51
    %p53 = scmp.ne.s32.totalorder %s45, %s48
    %p54 = scmp.eq.s32.totalorder %s9, 0
    %p55 = por %p53, %p54
    %p56 = scmp.ne.s32.totalorder %s45, %s48
    %p57 = scmp.eq.s32.totalorder %s14, 1
    %p58 = por %p56, %p57
    %p59 = scmp.ne.s32.totalorder %s48, %s49
    %p60 = scmp.eq.s32.totalorder %s14, 0
    %p61 = por %p59, %p60
    %p62 = scmp.ne.s32.totalorder %s48, %s49
    %p63 = scmp.eq.s32.totalorder %s15, 1
    %p64 = por %p62, %p63
    %p66 = scmp.ne.s32.totalorder %s49, %s65
    %p67 = scmp.eq.s32.totalorder %s15, 0
    %p68 = por %p66, %p67
    %s69 = ssub.s32 %s9, %s16
    %p70 = scmp.eq.s32.totalorder %s69, 0
    %s72 = sadd.s32 %s71, 1
    %s73 = scalar_select %p70, %s71, %s72
    %p76 = pneg %p70
    %p77 = scmp.eq.s32.totalorder %s9, 1
    %p78 = por %p76, %p77
    %p79 = scmp.ne.s32.totalorder %s71, %s74
    %p80 = scmp.eq.s32.totalorder %s9, 0
    %p81 = por %p79, %p80
    %p82 = scmp.ne.s32.totalorder %s71, %s74
    %p83 = scmp.eq.s32.totalorder %s14, 1
    %p84 = por %p82, %p83
    %p85 = scmp.ne.s32.totalorder %s74, %s75
    %p86 = scmp.eq.s32.totalorder %s14, 0
    %p87 = por %p85, %p86
    %p88 = scmp.ne.s32.totalorder %s74, %s75
    %p89 = scmp.eq.s32.totalorder %s15, 1
    %p90 = por %p88, %p89
    %p92 = scmp.ne.s32.totalorder %s75, %s91
    %p93 = scmp.eq.s32.totalorder %s15, 0
    %p94 = por %p92, %p93
    %s95 = ssub.s32 %s9, %s16
    %p96 = scmp.eq.s32.totalorder %s95, 0
    %s98 = sadd.s32 %s97, 1
    %s99 = scalar_select %p96, %s97, %s98
    %p102 = pneg %p96
    %p103 = scmp.eq.s32.totalorder %s9, 1
    %p104 = por %p102, %p103
    %p105 = scmp.ne.s32.totalorder %s97, %s100
    %p106 = scmp.eq.s32.totalorder %s9, 0
    %p107 = por %p105, %p106
    %p108 = scmp.ne.s32.totalorder %s97, %s100
    %p109 = scmp.eq.s32.totalorder %s14, 1
    %p110 = por %p108, %p109
    %p111 = scmp.ne.s32.totalorder %s100, %s101
    %p112 = scmp.eq.s32.totalorder %s14, 0
    %p113 = por %p111, %p112
    %p114 = scmp.ne.s32.totalorder %s100, %s101
    %p115 = scmp.eq.s32.totalorder %s15, 1
    %p116 = por %p114, %p115
    %p118 = scmp.ne.s32.totalorder %s101, %s117
    %p119 = scmp.eq.s32.totalorder %s15, 0
    %p120 = por %p118, %p119
    %p121 = scmp.le.s32.totalorder 1, %s9
    %p122 = scmp.lt.s32.totalorder %s9, 3
    %p123 = pnand %p121, %p122
    %p124 = pneg %p123
    // Predicated region
    $region9: #{forward.7} parent=5 // pred_check
      _
    $region10: #{forward.7} parent=5 // pred_check_branch
      %126 = sbr.rel (%p123) target = $region12
    $region11: #{forward.7} parent=5 // pred_region
      %s127 = ssub.s32 %s9, 1
    $region12: #{forward.7} parent=5 // pred_fallthru
      _
    %p128 = scmp.lt.s32.totalorder %s9, 2
    // Predicated region
    $region13: #{forward.7} parent=5 // pred_check
      %p129 = pneg %p128
    $region14: #{forward.7} parent=5 // pred_check_branch
      %131 = sbr.rel (%p129) target = $region16
    $region15: #{forward.7} parent=5 // pred_region
      // Predicated region
      $region17: #{forward.7} parent=15 // pred_check
        %p132 = pneg %p29
      $region18: #{forward.7} parent=15 // pred_check_branch
        %134 = sbr.rel (%p132) target = $region20
      $region19: #{forward.7} parent=15 // pred_region
        %p135 = scmp.lt.s32.totalorder %s9, 1
        %s136 = scalar_select %p135, %s9, 1
        %s137 = smul.addr %s136, 6
        %s138 = smul.addr %s137, 8
        %s139 = scalar_lea.vmem %s0, %s138
      $region20: #{forward.7} parent=15 // pred_fallthru
        _
      // Predicated region
      $region21: #{forward.7} parent=15 // pred_check
        %p140 = pneg %p55
      $region22: #{forward.7} parent=15 // pred_check_branch
        %142 = sbr.rel (%p140) target = $region24
      $region23: #{forward.7} parent=15 // pred_region
        %p143 = scmp.lt.s32.totalorder %s9, 1
        %s144 = scalar_select %p143, %s9, 1
        %s145 = smul.addr %s144, 18
        %s146 = smul.addr %s145, 8
        %s147 = scalar_lea.vmem %s1, %s146
      $region24: #{forward.7} parent=15 // pred_fallthru
        _
      // Predicated region
      $region25: #{forward.7} parent=15 // pred_check
        %p148 = pneg %p81
      $region26: #{forward.7} parent=15 // pred_check_branch
        %150 = sbr.rel (%p148) target = $region28
      $region27: #{forward.7} parent=15 // pred_region
        %p151 = scmp.lt.s32.totalorder %s9, 1
        %s152 = scalar_select %p151, %s9, 1
        %s153 = smul.addr %s152, 3
        %s154 = smul.addr %s153, 8
        %s155 = scalar_lea.vmem %s2, %s154
      $region28: #{forward.7} parent=15 // pred_fallthru
        _
    $region16: #{forward.7} parent=5 // pred_fallthru
      _
    %p156 = scmp.le.s32.totalorder 1, %s9
    %p157 = scmp.lt.s32.totalorder %s9, 3
    %p158 = pnand %p156, %p157
    %p159 = pneg %p158
    // Predicated region
    $region29: #{forward.7} parent=5 // pred_check
      _
    $region30: #{forward.7} parent=5 // pred_check_branch
      %161 = sbr.rel (%p158) target = $region32
    $region31: #{forward.7} parent=5 // pred_region
      %s162 = ssub.s32 %s9, 1
      %p163 = scmp.lt.s32.totalorder %s14, 1
      %s164 = scalar_select %p163, %s14, 1
      %s165 = smul.addr %s164, 6
      %s166 = smul.addr %s165, 8
      %s167 = scalar_lea.vmem %s0, %s166
      %p168 = pneg %p35
      %p169 = pneg %p32
      %p170 = scmp.lt.s32.totalorder %s14, 1
      %s171 = scalar_select %p170, %s14, 1
      %s172 = smul.addr %s171, 18
      %s173 = smul.addr %s172, 8
      %s174 = scalar_lea.vmem %s1, %s173
      %p175 = pneg %p61
      %p176 = pneg %p58
      %p177 = scmp.lt.s32.totalorder %s14, 1
      %s178 = scalar_select %p177, %s14, 1
      %s179 = smul.addr %s178, 3
      %s180 = smul.addr %s179, 8
      %s181 = scalar_lea.vmem %s2, %s180
      %p182 = pneg %p87
      %p183 = pneg %p84
      %p184 = pneg %p113
      %p185 = pneg %p110
      %p186 = scmp.lt.s32.totalorder %s14, 1
      %s187 = scalar_select %p186, %s14, 1
      %s188 = smul.addr %s187, 3
      %s189 = smul.addr %s188, 8
      %s190 = scalar_lea.vmem %s3, %s189
      %p191 = scmp.lt.s32.totalorder %s14, 1
      %s192 = scalar_select %p191, %s14, 1
      %s193 = smul.addr %s192, 6
      %s194 = smul.addr %s193, 8
      %s195 = scalar_lea.vmem %s0, %s194
      %p196 = scmp.lt.s32.totalorder %s14, 1
      %s197 = scalar_select %p196, %s14, 1
      %s198 = smul.addr %s197, 18
      %s199 = smul.addr %s198, 8
      %s200 = scalar_lea.vmem %s1, %s199
      %p201 = scmp.lt.s32.totalorder %s14, 1
      %s202 = scalar_select %p201, %s14, 1
      %s203 = smul.addr %s202, 3
      %s204 = smul.addr %s203, 8
      %s205 = scalar_lea.vmem %s2, %s204
      %p206 = scmp.lt.s32.totalorder %s14, 1
      %s207 = scalar_select %p206, %s14, 1
      %s208 = smul.addr %s207, 3
      %s209 = smul.addr %s208, 8
      %s210 = scalar_lea.vmem %s3, %s209
      %v211 = vld [vmem:[%s195] sm:$0xff]
      %v212 = vld [vmem:[%s195 + $0x8] sm:$0xff]
      %v213 = vld [vmem:[%s195 + $0x10] sm:$0xff]
      %v214 = vld [vmem:[%s195 + $0x18] sm:$0xff]
      %v215 = vld [vmem:[%s195 + $0x20] sm:$0x3f]
      %v216 = vld [vmem:[%s195 + $0x28] sm:$0x3f]
      %v217 = vld [vmem:[%s200] sm:$0xff]
      %v218 = vld [vmem:[%s200 + $0x8] sm:$0xff]
      %v219 = vld [vmem:[%s200 + $0x10] sm:$0xff]
      %v220 = vld [vmem:[%s200 + $0x18] sm:$0xff]
      %v221 = vld [vmem:[%s200 + $0x20] sm:$0xff]
      %v222 = vld [vmem:[%s200 + $0x28] sm:$0xff]
      %v223 = vld [vmem:[%s200 + $0x30] sm:$0xff]
      %v224 = vld [vmem:[%s200 + $0x38] sm:$0xff]
      %v225 = vld [vmem:[%s200 + $0x40] sm:$0xff]
      %v226 = vld [vmem:[%s200 + $0x48] sm:$0xff]
      %v227 = vld [vmem:[%s200 + $0x50] sm:$0xff]
      %v228 = vld [vmem:[%s200 + $0x58] sm:$0xff]
      %v229 = vld [vmem:[%s200 + $0x60] sm:$0xff]
      %v230 = vld [vmem:[%s200 + $0x68] sm:$0xff]
      %v231 = vld [vmem:[%s200 + $0x70] sm:$0xff]
      %v232 = vld [vmem:[%s200 + $0x78] sm:$0xff]
      %v233 = vld [vmem:[%s200 + $0x80] sm:$0xff]
      %v234 = vld [vmem:[%s200 + $0x88] sm:$0xff]
      %v235 = vld [vmem:[%s205] sm:$0xff]
      %v236 = vld [vmem:[%s205 + $0x8] sm:$0xff]
      %v237 = vld [vmem:[%s205 + $0x10] sm:$0x3f]
      %239 = vset.pattern.permute.xlu0 0
      %240 = vperm.xlu0 %239, %v235
      %v241 = vpop.permute.xlu0 %240
      %244 = vset.pattern.permute.xlu0 0
      %245 = vperm.xlu0 %244, %v236
      %v246 = vpop.permute.xlu0 %245
      %249 = vset.pattern.permute.xlu0 0
      %250 = vperm.xlu0 %249, %v237
      %v251 = vpop.permute.xlu0 %250
      %vm253 = vcmask 130048
      %v255 = vsel %vm253, %v212, 0
      %v258 = vsel %vm253, %v214, 0
      %v261 = vsel %vm253, %v216, 0
      %263 = vmatprep.subr.mxu0 0.0
      %264 = vmatpush1.msra.mxu0 %v217
      %265 = vmatprep.subr.mxu0 0.0
      %266 = vmatpush1.msra.mxu0 %v218
      %267 = vmatprep.subr.mxu0 0.0
      %268 = vmatpush1.msra.mxu0 %v219
      %269 = vmatprep.subr.mxu0 0.0
      %270 = vmatpush1.msra.mxu0 %v220
      %271 = vmatprep.subr.mxu0 0.0
      %272 = vmatpush1.msra.mxu0 %v221
      %273 = vmatprep.subr.mxu0 0.0
      %274 = vmatpush1.msra.mxu0 %v222
      %275 = vmatprep.subr.mxu0 0.0
      %276 = vmatpush1.msra.mxu0 %v223
      %277 = vmatprep.subr.mxu0 0.0
      %278 = vmatpush1.msra.mxu0 %v224
      %279 = vmatprep.subr.mxu0 0.0
      %280 = vmatpush1.msra.mxu0 %v225
      %281 = vmatprep.subr.mxu0 0.0
      %282 = vmatpush1.msra.mxu0 %v226
      %283 = vmatprep.subr.mxu0 0.0
      %284 = vmatpush1.msra.mxu0 %v227
      %285 = vmatprep.subr.mxu0 0.0
      %286 = vmatpush1.msra.mxu0 %v228
      %287 = vmatprep.subr.mxu0 0.0
      %288 = vmatpush1.msra.mxu0 %v229
      %289 = vmatprep.subr.mxu0 0.0
      %290 = vmatpush1.msra.mxu0 %v230
      %291 = vmatprep.subr.mxu0 0.0
      %292 = vmatpush1.msra.mxu0 %v231
      %293 = vmatprep.subr.mxu0 0.0
      %294 = vmatpush1.msra.mxu0 %v232
      %295 = vmatprep.subr.mxu0 0.0
      %296 = vmatpush1.msra.mxu0 %v233
      %297 = vmatprep.subr.mxu0 0.0
      %298 = vmatpush1.msra.mxu0 %v234
      %299 = vmatprep.subr.mxu0 0.0
      %300 = vmatpush1.msra.mxu0 0.0
      %301 = vmatprep.subr.mxu0 0.0
      %302 = vmatpush1.msra.mxu0 0.0
      %303 = vmatprep.subr.mxu0 0.0
      %304 = vmatpush1.msra.mxu0 0.0
      %305 = vmatprep.subr.mxu0 0.0
      %306 = vmatpush1.msra.mxu0 0.0
      %307 = vmatprep.subr.mxu0 0.0
      %308 = vmatpush1.msra.mxu0 0.0
      %309 = vmatprep.subr.mxu0 0.0
      %310 = vmatpush1.msra.mxu0 0.0
      %311 = vmatprep.subr.mxu0 0.0
      %312 = vmatpush1.msra.mxu0 0.0
      %313 = vmatprep.subr.mxu0 0.0
      %314 = vmatpush1.msra.mxu0 0.0
      %315 = vmatprep.subr.mxu0 0.0
      %316 = vmatpush1.msra.mxu0 0.0
      %317 = vmatprep.subr.mxu0 0.0
      %318 = vmatpush1.msra.mxu0 0.0
      %319 = vmatprep.subr.mxu0 0.0
      %320 = vmatpush1.msra.mxu0 0.0
      %321 = vmatprep.subr.mxu0 0.0
      %322 = vmatpush1.msra.mxu0 0.0
      %323 = vmatprep.subr.mxu0 0.0
      %324 = vmatpush1.msra.mxu0 0.0
      %325 = vmatprep.subr.mxu0 0.0
      %326 = vmatpush1.msra.mxu0 0.0
      %327 = vmatprep.mubr.f32.mxu0 %v255
      %328 = vmatmul.mubr.f32.gmra.mrb[0].mxu0 %v211
      %v329 = vpop.f32.mrb[0].mxu0
      %v330 = vadd.f32 %v241, %v329
      %v331 = vpop.f32.mrb[0].mxu0
      %332 = vmatprep.mubr.f32.mxu0 %v258
      %333 = vmatmul.mubr.f32.gmra.mrb[0].mxu0 %v213
      %v334 = vpop.f32.mrb[0].mxu0
      %v335 = vadd.f32 %v246, %v334
      %v336 = vpop.f32.mrb[0].mxu0
      %337 = vmatprep.mubr.f32.mxu0 %v261
      %338 = vmatmul.mubr.f32.gmra.mrb[0].mxu0 %v215
      %v339 = vpop.f32.mrb[0].mxu0
      %v340 = vadd.f32 %v251, %v339
      %v341 = vpop.f32.mrb[0].mxu0
      %342 = vdwg.mxu0
      %vm343 = vcmp.ge.f32.partialorder %v330, 0.0
      %vm344 = vcmp.ge.f32.partialorder %v335, 0.0
      %vm345 = vcmp.ge.f32.partialorder %v340, 0.0
      %v346 = vmul.f32 %v330, 0.05
      %v347 = vmul.f32 %v335, 0.05
      %v348 = vmul.f32 %v340, 0.05
      %v349 = vsel %vm343, %v330, %v346
      %v350 = vsel %vm344, %v335, %v347
      %v351 = vsel %vm345, %v340, %v348
      %352 = vst [vmem:[%s210] sm:$0xff] %v349
      %353 = vst [vmem:[%s210 + $0x8] sm:$0xff] %v350
      %354 = vst [vmem:[%s210 + $0x10] sm:$0x3f] %v351
      %p355 = scmp.lt.s32.totalorder %s14, 1
      %s356 = scalar_select %p355, %s14, 1
      %s357 = smul.addr %s356, 3
      %s358 = smul.addr %s357, 8
      %s359 = scalar_lea.vmem %s3, %s358
      // Predicated region
      $region33: #{forward.7} parent=31 // pred_check
        %p360 = pneg %p110
      $region34: #{forward.7} parent=31 // pred_check_branch
        %362 = sbr.rel (%p360) target = $region36
      $region35: #{forward.7} parent=31 // pred_region
        _
      $region36: #{forward.7} parent=31 // pred_fallthru
        _
    $region32: #{forward.7} parent=5 // pred_fallthru
      _
    %p363 = scmp.le.s32.totalorder 2, %s9
    // Predicated region
    $region37: #{forward.7} parent=5 // pred_check
      %p364 = pneg %p363
    $region38: #{forward.7} parent=5 // pred_check_branch
      %366 = sbr.rel (%p364) target = $region40
    $region39: #{forward.7} parent=5 // pred_region
      %s367 = ssub.s32 %s9, 2
      // Predicated region
      $region41: #{forward.7} parent=39 // pred_check
        %p368 = pneg %p116
      $region42: #{forward.7} parent=39 // pred_check_branch
        %370 = sbr.rel (%p368) target = $region44
      $region43: #{forward.7} parent=39 // pred_region
        %p371 = scmp.lt.s32.totalorder %s15, 1
        %s372 = scalar_select %p371, %s15, 1
        %s373 = smul.addr %s372, 3
        %s374 = smul.addr %s373, 8
        %s375 = scalar_lea.vmem %s3, %s374
      $region44: #{forward.7} parent=39 // pred_fallthru
        _
    $region40: #{forward.7} parent=5 // pred_fallthru
      _
  $region6: #{forward.7} parent=0 // loop_footer
    %s13 = sadd.s32 1, %s9
  $region7: #{forward.7} parent=0 // loop_footer_branch
    %8 = sbr.rel target = $region3
  $region8: #{forward.7} parent=0 // loop_exit
    _

// kernel: forward.8
$region0: #{forward.8}
  #allocation0 [shape = 'u32[]', space=smem, size = 0x4, offset = 0x4, fixed_abs, tag = 'smem constant byte address 0x4 - core index']
  #allocation1 [shape = 'u32[144,128]{1,0:T(1,128)}', space=vmem, size = 0x12000, scoped, tag = 'internal scratch']
  %s0 = inlined_call_operand.vmem [shape: f32[22,180], index: 0, kind: input, shape index: {}]
  %s1 = inlined_call_operand.vmem [shape: f32[180,128], index: 1, kind: input, shape index: {}]
  %s2 = inlined_call_operand.vmem [shape: f32[22,1], index: 2, kind: input, shape index: {}]
  %s3 = inlined_call_operand.vmem [shape: f32[22,128], index: 3, kind: output, shape index: {}]
  %s4 = sld [smem:[#allocation0]]
  $region22: #{forward.8} parent=0
    _
  %s6 = ssub.s32 1, %s4
  %s7 = scalar_select 0, %s6, %s4
  // Predicated region
  $region2: #{forward.8} parent=0 // pred_check
    _
  $region3: #{forward.8} parent=0 // pred_check_branch
    %9 = sbr.rel (0) target = $region5
  $region4: #{forward.8} parent=0 // pred_region
    _
  $region5: #{forward.8} parent=0 // pred_fallthru
    _
  // Predicated region
  $region6: #{forward.8} parent=0 // pred_check
    _
  $region7: #{forward.8} parent=0 // pred_check_branch
    %11 = sbr.rel (0) target = $region9
  $region8: #{forward.8} parent=0 // pred_region
    _
  $region9: #{forward.8} parent=0 // pred_fallthru
    _
  // Predicated region
  $region10: #{forward.8} parent=0 // pred_check
    _
  $region11: #{forward.8} parent=0 // pred_check_branch
    %13 = sbr.rel (0) target = $region13
  $region12: #{forward.8} parent=0 // pred_region
    _
  $region13: #{forward.8} parent=0 // pred_fallthru
    _
  %v14 = vld [vmem:[%s0] sm:$0xff]
  %v15 = vld [vmem:[%s0 + $0x8] sm:$0xff]
  %v16 = vld [vmem:[%s0 + $0x10] sm:$0xff]
  %v17 = vld [vmem:[%s0 + $0x18] sm:$0xff]
  %v18 = vld [vmem:[%s0 + $0x20] sm:$0x3f]
  %v19 = vld [vmem:[%s0 + $0x28] sm:$0x3f]
  %v20 = vld [vmem:[%s1] sm:$0xff]
  %v21 = vld [vmem:[%s1 + $0x8] sm:$0xff]
  %v22 = vld [vmem:[%s1 + $0x10] sm:$0xff]
  %v23 = vld [vmem:[%s1 + $0x18] sm:$0xff]
  %v24 = vld [vmem:[%s1 + $0x20] sm:$0xff]
  %v25 = vld [vmem:[%s1 + $0x28] sm:$0xff]
  %v26 = vld [vmem:[%s1 + $0x30] sm:$0xff]
  %v27 = vld [vmem:[%s1 + $0x38] sm:$0xff]
  %v28 = vld [vmem:[%s1 + $0x40] sm:$0xff]
  %v29 = vld [vmem:[%s1 + $0x48] sm:$0xff]
  %v30 = vld [vmem:[%s1 + $0x50] sm:$0xff]
  %v31 = vld [vmem:[%s1 + $0x58] sm:$0xff]
  %v32 = vld [vmem:[%s1 + $0x60] sm:$0xff]
  %v33 = vld [vmem:[%s1 + $0x68] sm:$0xff]
  %v34 = vld [vmem:[%s1 + $0x70] sm:$0xff]
  %v35 = vld [vmem:[%s1 + $0x78] sm:$0xff]
  %v36 = vld [vmem:[%s1 + $0x80] sm:$0xff]
  %v37 = vld [vmem:[%s1 + $0x88] sm:$0xff]
  %v38 = vld [vmem:[%s1 + $0x90] sm:$0xff]
  %v39 = vld [vmem:[%s1 + $0x98] sm:$0xff]
  %v40 = vld [vmem:[%s1 + $0xa0] sm:$0xff]
  %v41 = vld [vmem:[%s1 + $0xa8] sm:$0xff]
  %v42 = vld [vmem:[%s1 + $0xb0] sm:$0xf]
  %v43 = vld [vmem:[%s2] sm:$0xff]
  %v44 = vld [vmem:[%s2 + $0x8] sm:$0xff]
  %v45 = vld [vmem:[%s2 + $0x10] sm:$0x3f]
  %47 = vset.pattern.permute.xlu0 0
  %48 = vperm.xlu0 %47, %v43
  %v49 = vpop.permute.xlu0 %48
  %52 = vset.pattern.permute.xlu0 0
  %53 = vperm.xlu0 %52, %v44
  %v54 = vpop.permute.xlu0 %53
  %57 = vset.pattern.permute.xlu0 0
  %58 = vperm.xlu0 %57, %v45
  %v59 = vpop.permute.xlu0 %58
  %vm61 = vcmask 424960
  %v63 = vsel %vm61, %v15, 0
  %v66 = vsel %vm61, %v17, 0
  %v69 = vsel %vm61, %v19, 0
  %vm71 = vcmask 1043456
  %v73 = vsel %vm71, %v42, 0
  %75 = vmatprep.subr.mxu0 0.0
  %76 = vmatpush1.msra.mxu0 %v20
  %77 = vmatprep.subr.mxu0 0.0
  %78 = vmatpush1.msra.mxu0 %v21
  %79 = vmatprep.subr.mxu0 0.0
  %80 = vmatpush1.msra.mxu0 %v22
  %81 = vmatprep.subr.mxu0 0.0
  %82 = vmatpush1.msra.mxu0 %v23
  %83 = vmatprep.subr.mxu0 0.0
  %84 = vmatpush1.msra.mxu0 %v24
  %85 = vmatprep.subr.mxu0 0.0
  %86 = vmatpush1.msra.mxu0 %v25
  %87 = vmatprep.subr.mxu0 0.0
  %88 = vmatpush1.msra.mxu0 %v26
  %89 = vmatprep.subr.mxu0 0.0
  %90 = vmatpush1.msra.mxu0 %v27
  %91 = vmatprep.subr.mxu0 0.0
  %92 = vmatpush1.msra.mxu0 %v28
  %93 = vmatprep.subr.mxu0 0.0
  %94 = vmatpush1.msra.mxu0 %v29
  %95 = vmatprep.subr.mxu0 0.0
  %96 = vmatpush1.msra.mxu0 %v30
  %97 = vmatprep.subr.mxu0 0.0
  %98 = vmatpush1.msra.mxu0 %v31
  %99 = vmatprep.subr.mxu0 0.0
  %100 = vmatpush1.msra.mxu0 %v32
  %101 = vmatprep.subr.mxu0 0.0
  %102 = vmatpush1.msra.mxu0 %v33
  %103 = vmatprep.subr.mxu0 0.0
  %104 = vmatpush1.msra.mxu0 %v34
  %105 = vmatprep.subr.mxu0 0.0
  %106 = vmatpush1.msra.mxu0 %v35
  %107 = vmatprep.subr.mxu0 0.0
  %108 = vmatpush1.msra.mxu0 %v36
  %109 = vmatprep.subr.mxu0 0.0
  %110 = vmatpush1.msra.mxu0 %v37
  %111 = vmatprep.subr.mxu0 0.0
  %112 = vmatpush1.msra.mxu0 %v38
  %113 = vmatprep.subr.mxu0 0.0
  %114 = vmatpush1.msra.mxu0 %v39
  %115 = vmatprep.subr.mxu0 0.0
  %116 = vmatpush1.msra.mxu0 %v40
  %117 = vmatprep.subr.mxu0 0.0
  %118 = vmatpush1.msra.mxu0 %v41
  %119 = vmatprep.subr.mxu0 0.0
  %120 = vmatpush1.msra.mxu0 %v73
  %121 = vmatprep.subr.mxu0 0.0
  %122 = vmatpush1.msra.mxu0 0.0
  %123 = vmatprep.subr.mxu0 0.0
  %124 = vmatpush1.msra.mxu0 0.0
  %125 = vmatprep.subr.mxu0 0.0
  %126 = vmatpush1.msra.mxu0 0.0
  %127 = vmatprep.subr.mxu0 0.0
  %128 = vmatpush1.msra.mxu0 0.0
  %129 = vmatprep.subr.mxu0 0.0
  %130 = vmatpush1.msra.mxu0 0.0
  %131 = vmatprep.subr.mxu0 0.0
  %132 = vmatpush1.msra.mxu0 0.0
  %133 = vmatprep.subr.mxu0 0.0
  %134 = vmatpush1.msra.mxu0 0.0
  %135 = vmatprep.subr.mxu0 0.0
  %136 = vmatpush1.msra.mxu0 0.0
  %137 = vmatprep.subr.mxu0 0.0
  %138 = vmatpush1.msra.mxu0 0.0
  %139 = vmatprep.mubr.f32.mxu0 %v63
  %140 = vmatmul.mubr.f32.gmra.mrb[0].mxu0 %v14
  %v141 = vpop.f32.mrb[0].mxu0
  %v142 = vadd.f32 %v49, %v141
  %v143 = vpop.f32.mrb[0].mxu0
  %144 = vmatprep.mubr.f32.mxu0 %v66
  %145 = vmatmul.mubr.f32.gmra.mrb[0].mxu0 %v16
  %v146 = vpop.f32.mrb[0].mxu0
  %v147 = vadd.f32 %v54, %v146
  %v148 = vpop.f32.mrb[0].mxu0
  %149 = vmatprep.mubr.f32.mxu0 %v69
  %150 = vmatmul.mubr.f32.gmra.mrb[0].mxu0 %v18
  %v151 = vpop.f32.mrb[0].mxu0
  %v152 = vadd.f32 %v59, %v151
  %v153 = vpop.f32.mrb[0].mxu0
  %154 = vdwg.mxu0
  %vm155 = vcmp.ge.f32.partialorder %v142, 0.0
  %vm156 = vcmp.ge.f32.partialorder %v147, 0.0
  %vm157 = vcmp.ge.f32.partialorder %v152, 0.0
  %v158 = vmul.f32 %v142, 0.05
  %v159 = vmul.f32 %v147, 0.05
  %v160 = vmul.f32 %v152, 0.05
  %v161 = vsel %vm155, %v142, %v158
  %v162 = vsel %vm156, %v147, %v159
  %v163 = vsel %vm157, %v152, %v160
  %164 = vst [vmem:[%s3] sm:$0xff] %v161
  %165 = vst [vmem:[%s3 + $0x8] sm:$0xff] %v162
  %166 = vst [vmem:[%s3 + $0x10] sm:$0x3f] %v163
  // Predicated region
  $region14: #{forward.8} parent=0 // pred_check
    _
  $region15: #{forward.8} parent=0 // pred_check_branch
    %168 = sbr.rel (0) target = $region17
  $region16: #{forward.8} parent=0 // pred_region
    _
  $region17: #{forward.8} parent=0 // pred_fallthru
    _
  // Predicated region
  $region18: #{forward.8} parent=0 // pred_check
    _
  $region19: #{forward.8} parent=0 // pred_check_branch
    %170 = sbr.rel (0) target = $region21
  $region20: #{forward.8} parent=0 // pred_region
    _
  $region21: #{forward.8} parent=0 // pred_fallthru
    _

// kernel: forward.9
$region0: #{forward.9}
  #allocation0 [shape = 'u32[]', space=smem, size = 0x4, offset = 0x4, fixed_abs, tag = 'smem constant byte address 0x4 - core index']
  #allocation1 [shape = 'u32[144,128]{1,0:T(1,128)}', space=vmem, size = 0x12000, scoped, tag = 'internal scratch']
  %s0 = inlined_call_operand.vmem [shape: f32[352,2], index: 0, kind: input, shape index: {}]
  %s1 = inlined_call_operand.vmem [shape: f32[352,2], index: 1, kind: input, shape index: {}]
  %s2 = inlined_call_operand.vmem [shape: f32[300,352], index: 2, kind: input, shape index: {}]
  %s3 = inlined_call_operand.vmem [shape: f32[300,1], index: 3, kind: input, shape index: {}]
  %s4 = inlined_call_operand.vmem [shape: f32[256,300], index: 4, kind: input, shape index: {}]
  %s5 = inlined_call_operand.vmem [shape: f32[256,1], index: 5, kind: input, shape index: {}]
  %s6 = inlined_call_operand.vmem [shape: f32[200,256], index: 6, kind: input, shape index: {}]
  %s7 = inlined_call_operand.vmem [shape: f32[200,1], index: 7, kind: input, shape index: {}]
  %s8 = inlined_call_operand.vmem [shape: f32[128,200], index: 8, kind: input, shape index: {}]
  %s9 = inlined_call_operand.vmem [shape: f32[128,1], index: 9, kind: input, shape index: {}]
  %s10 = inlined_call_operand.vmem [shape: f32[256,352], index: 10, kind: input, shape index: {}]
  %s11 = inlined_call_operand.vmem [shape: f32[256,1], index: 11, kind: input, shape index: {}]
  %s12 = inlined_call_operand.vmem [shape: f32[128,256], index: 12, kind: input, shape index: {}]
  %s13 = inlined_call_operand.vmem [shape: f32[128,1], index: 13, kind: input, shape index: {}]
  %s14 = inlined_call_operand.vmem [shape: f32[64,128], index: 14, kind: input, shape index: {}]
  %s15 = inlined_call_operand.vmem [shape: f32[64,1], index: 15, kind: input, shape index: {}]
  %s16 = inlined_call_operand.vmem [shape: f32[192,2], index: 16, kind: output, shape index: {}]
  %s17 = sld [smem:[#allocation0]]
  $region74: #{forward.9} parent=0
    _
  %s19 = ssub.s32 1, %s17
  %s20 = scalar_select 0, %s19, %s17
  // Predicated region
  $region2: #{forward.9} parent=0 // pred_check
    _
  $region3: #{forward.9} parent=0 // pred_check_branch
    %22 = sbr.rel (0) target = $region5
  $region4: #{forward.9} parent=0 // pred_region
    _
  $region5: #{forward.9} parent=0 // pred_fallthru
    _
  // Predicated region
  $region6: #{forward.9} parent=0 // pred_check
    _
  $region7: #{forward.9} parent=0 // pred_check_branch
    %24 = sbr.rel (0) target = $region9
  $region8: #{forward.9} parent=0 // pred_region
    _
  $region9: #{forward.9} parent=0 // pred_fallthru
    _
  // Predicated region
  $region10: #{forward.9} parent=0 // pred_check
    _
  $region11: #{forward.9} parent=0 // pred_check_branch
    %26 = sbr.rel (0) target = $region13
  $region12: #{forward.9} parent=0 // pred_region
    _
  $region13: #{forward.9} parent=0 // pred_fallthru
    _
  // Predicated region
  $region14: #{forward.9} parent=0 // pred_check
    _
  $region15: #{forward.9} parent=0 // pred_check_branch
    %28 = sbr.rel (0) target = $region17
  $region16: #{forward.9} parent=0 // pred_region
    _
  $region17: #{forward.9} parent=0 // pred_fallthru
    _
  // Predicated region
  $region18: #{forward.9} parent=0 // pred_check
    _
  $region19: #{forward.9} parent=0 // pred_check_branch
    %30 = sbr.rel (0) target = $region21
  $region20: #{forward.9} parent=0 // pred_region
    _
  $region21: #{forward.9} parent=0 // pred_fallthru
    _
  // Predicated region
  $region22: #{forward.9} parent=0 // pred_check
    _
  $region23: #{forward.9} parent=0 // pred_check_branch
    %32 = sbr.rel (0) target = $region25
  $region24: #{forward.9} parent=0 // pred_region
    _
  $region25: #{forward.9} parent=0 // pred_fallthru
    _
  // Predicated region
  $region26: #{forward.9} parent=0 // pred_check
    _
  $region27: #{forward.9} parent=0 // pred_check_branch
    %34 = sbr.rel (0) target = $region29
  $region28: #{forward.9} parent=0 // pred_region
    _
  $region29: #{forward.9} parent=0 // pred_fallthru
    _
  // Predicated region
  $region30: #{forward.9} parent=0 // pred_check
    _
  $region31: #{forward.9} parent=0 // pred_check_branch
    %36 = sbr.rel (0) target = $region33
  $region32: #{forward.9} parent=0 // pred_region
    _
  $region33: #{forward.9} parent=0 // pred_fallthru
    _
  // Predicated region
  $region34: #{forward.9} parent=0 // pred_check
    _
  $region35: #{forward.9} parent=0 // pred_check_branch
    %38 = sbr.rel (0) target = $region37
  $region36: #{forward.9} parent=0 // pred_region
    _
  $region37: #{forward.9} parent=0 // pred_fallthru
    _
  // Predicated region
  $region38: #{forward.9} parent=0 // pred_check
    _
  $region39: #{forward.9} parent=0 // pred_check_branch
    %40 = sbr.rel (0) target = $region41
  $region40: #{forward.9} parent=0 // pred_region
    _
  $region41: #{forward.9} parent=0 // pred_fallthru
    _
  // Predicated region
  $region42: #{forward.9} parent=0 // pred_check
    _
  $region43: #{forward.9} parent=0 // pred_check_branch
    %42 = sbr.rel (0) target = $region45
  $region44: #{forward.9} parent=0 // pred_region
    _
  $region45: #{forward.9} parent=0 // pred_fallthru
    _
  // Predicated region
  $region46: #{forward.9} parent=0 // pred_check
    _
  $region47: #{forward.9} parent=0 // pred_check_branch
    %44 = sbr.rel (0) target = $region49
  $region48: #{forward.9} parent=0 // pred_region
    _
  $region49: #{forward.9} parent=0 // pred_fallthru
    _
  // Predicated region
  $region50: #{forward.9} parent=0 // pred_check
    _
  $region51: #{forward.9} parent=0 // pred_check_branch
    %46 = sbr.rel (0) target = $region53
  $region52: #{forward.9} parent=0 // pred_region
    _
  $region53: #{forward.9} parent=0 // pred_fallthru
    _
  // Predicated region
  $region54: #{forward.9} parent=0 // pred_check
    _
  $region55: #{forward.9} parent=0 // pred_check_branch
    %48 = sbr.rel (0) target = $region57
  $region56: #{forward.9} parent=0 // pred_region
    _
  $region57: #{forward.9} parent=0 // pred_fallthru
    _
  // Predicated region
  $region58: #{forward.9} parent=0 // pred_check
    _
  $region59: #{forward.9} parent=0 // pred_check_branch
    %50 = sbr.rel (0) target = $region61
  $region60: #{forward.9} parent=0 // pred_region
    _
  $region61: #{forward.9} parent=0 // pred_fallthru
    _
  // Predicated region
  $region62: #{forward.9} parent=0 // pred_check
    _
  $region63: #{forward.9} parent=0 // pred_check_branch
    %52 = sbr.rel (0) target = $region65
  $region64: #{forward.9} parent=0 // pred_region
    _
  $region65: #{forward.9} parent=0 // pred_fallthru
    _
  %v53 = vld [vmem:[%s0] sm:$0xff]
  %v54 = vld [vmem:[%s0 + $0x8] sm:$0xff]
  %v55 = vld [vmem:[%s0 + $0x10] sm:$0xff]
  %v56 = vld [vmem:[%s0 + $0x18] sm:$0xff]
  %v57 = vld [vmem:[%s0 + $0x20] sm:$0xff]
  %v58 = vld [vmem:[%s0 + $0x28] sm:$0xff]
  %v59 = vld [vmem:[%s0 + $0x30] sm:$0xff]
  %v60 = vld [vmem:[%s0 + $0x38] sm:$0xff]
  %v61 = vld [vmem:[%s0 + $0x40] sm:$0xff]
  %v62 = vld [vmem:[%s0 + $0x48] sm:$0xff]
  %v63 = vld [vmem:[%s0 + $0x50] sm:$0xff]
  %v64 = vld [vmem:[%s0 + $0x58] sm:$0xff]
  %v65 = vld [vmem:[%s0 + $0x60] sm:$0xff]
  %v66 = vld [vmem:[%s0 + $0x68] sm:$0xff]
  %v67 = vld [vmem:[%s0 + $0x70] sm:$0xff]
  %v68 = vld [vmem:[%s0 + $0x78] sm:$0xff]
  %v69 = vld [vmem:[%s0 + $0x80] sm:$0xff]
  %v70 = vld [vmem:[%s0 + $0x88] sm:$0xff]
  %v71 = vld [vmem:[%s0 + $0x90] sm:$0xff]
  %v72 = vld [vmem:[%s0 + $0x98] sm:$0xff]
  %v73 = vld [vmem:[%s0 + $0xa0] sm:$0xff]
  %v74 = vld [vmem:[%s0 + $0xa8] sm:$0xff]
  %v75 = vld [vmem:[%s0 + $0xb0] sm:$0xff]
  %v76 = vld [vmem:[%s0 + $0xb8] sm:$0xff]
  %v77 = vld [vmem:[%s0 + $0xc0] sm:$0xff]
  %v78 = vld [vmem:[%s0 + $0xc8] sm:$0xff]
  %v79 = vld [vmem:[%s0 + $0xd0] sm:$0xff]
  %v80 = vld [vmem:[%s0 + $0xd8] sm:$0xff]
  %v81 = vld [vmem:[%s0 + $0xe0] sm:$0xff]
  %v82 = vld [vmem:[%s0 + $0xe8] sm:$0xff]
  %v83 = vld [vmem:[%s0 + $0xf0] sm:$0xff]
  %v84 = vld [vmem:[%s0 + $0xf8] sm:$0xff]
  %v85 = vld [vmem:[%s0 + $0x100] sm:$0xff]
  %v86 = vld [vmem:[%s0 + $0x108] sm:$0xff]
  %v87 = vld [vmem:[%s0 + $0x110] sm:$0xff]
  %v88 = vld [vmem:[%s0 + $0x118] sm:$0xff]
  %v89 = vld [vmem:[%s0 + $0x120] sm:$0xff]
  %v90 = vld [vmem:[%s0 + $0x128] sm:$0xff]
  %v91 = vld [vmem:[%s0 + $0x130] sm:$0xff]
  %v92 = vld [vmem:[%s0 + $0x138] sm:$0xff]
  %v93 = vld [vmem:[%s0 + $0x140] sm:$0xff]
  %v94 = vld [vmem:[%s0 + $0x148] sm:$0xff]
  %v95 = vld [vmem:[%s0 + $0x150] sm:$0xff]
  %v96 = vld [vmem:[%s0 + $0x158] sm:$0xff]
  %v97 = vld [vmem:[%s2] sm:$0xff]
  %v98 = vld [vmem:[%s2 + $0x8] sm:$0xff]
  %v99 = vld [vmem:[%s2 + $0x10] sm:$0xff]
  %v100 = vld [vmem:[%s2 + $0x18] sm:$0xff]
  %v101 = vld [vmem:[%s2 + $0x20] sm:$0xff]
  %v102 = vld [vmem:[%s2 + $0x28] sm:$0xff]
  %v103 = vld [vmem:[%s2 + $0x30] sm:$0xff]
  %v104 = vld [vmem:[%s2 + $0x38] sm:$0xff]
  %v105 = vld [vmem:[%s2 + $0x40] sm:$0xff]
  %v106 = vld [vmem:[%s2 + $0x48] sm:$0xff]
  %v107 = vld [vmem:[%s2 + $0x50] sm:$0xff]
  %v108 = vld [vmem:[%s2 + $0x58] sm:$0xff]
  %v109 = vld [vmem:[%s2 + $0x60] sm:$0xff]
  %v110 = vld [vmem:[%s2 + $0x68] sm:$0xff]
  %v111 = vld [vmem:[%s2 + $0x70] sm:$0xff]
  %v112 = vld [vmem:[%s2 + $0x78] sm:$0xff]
  %v113 = vld [vmem:[%s2 + $0x80] sm:$0xff]
  %v114 = vld [vmem:[%s2 + $0x88] sm:$0xff]
  %v115 = vld [vmem:[%s2 + $0x90] sm:$0xff]
  %v116 = vld [vmem:[%s2 + $0x98] sm:$0xff]
  %v117 = vld [vmem:[%s2 + $0xa0] sm:$0xff]
  %v118 = vld [vmem:[%s2 + $0xa8] sm:$0xff]
  %v119 = vld [vmem:[%s2 + $0xb0] sm:$0xff]
  %v120 = vld [vmem:[%s2 + $0xb8] sm:$0xff]
  %v121 = vld [vmem:[%s2 + $0xc0] sm:$0xff]
  %v122 = vld [vmem:[%s2 + $0xc8] sm:$0xff]
  %v123 = vld [vmem:[%s2 + $0xd0] sm:$0xff]
  %v124 = vld [vmem:[%s2 + $0xd8] sm:$0xff]
  %v125 = vld [vmem:[%s2 + $0xe0] sm:$0xff]
  %v126 = vld [vmem:[%s2 + $0xe8] sm:$0xff]
  %v127 = vld [vmem:[%s2 + $0xf0] sm:$0xff]
  %v128 = vld [vmem:[%s2 + $0xf8] sm:$0xff]
  %v129 = vld [vmem:[%s2 + $0x100] sm:$0xff]
  %v130 = vld [vmem:[%s2 + $0x108] sm:$0xff]
  %v131 = vld [vmem:[%s2 + $0x110] sm:$0xff]
  %v132 = vld [vmem:[%s2 + $0x118] sm:$0xff]
  %v133 = vld [vmem:[%s2 + $0x120] sm:$0xff]
  %v134 = vld [vmem:[%s2 + $0x128] sm:$0xff]
  %v135 = vld [vmem:[%s2 + $0x130] sm:$0xff]
  %v136 = vld [vmem:[%s2 + $0x138] sm:$0xff]
  %v137 = vld [vmem:[%s2 + $0x140] sm:$0xff]
  %v138 = vld [vmem:[%s2 + $0x148] sm:$0xff]
  %v139 = vld [vmem:[%s2 + $0x150] sm:$0xff]
  %v140 = vld [vmem:[%s2 + $0x158] sm:$0xff]
  %v141 = vld [vmem:[%s2 + $0x160] sm:$0xff]
  %v142 = vld [vmem:[%s2 + $0x168] sm:$0xff]
  %v143 = vld [vmem:[%s2 + $0x170] sm:$0xff]
  %v144 = vld [vmem:[%s2 + $0x178] sm:$0xff]
  %v145 = vld [vmem:[%s2 + $0x180] sm:$0xff]
  %v146 = vld [vmem:[%s2 + $0x188] sm:$0xff]
  %v147 = vld [vmem:[%s2 + $0x190] sm:$0xff]
  %v148 = vld [vmem:[%s2 + $0x198] sm:$0xff]
  %v149 = vld [vmem:[%s2 + $0x1a0] sm:$0xff]
  %v150 = vld [vmem:[%s2 + $0x1a8] sm:$0xff]
  %v151 = vld [vmem:[%s2 + $0x1b0] sm:$0xff]
  %v152 = vld [vmem:[%s2 + $0x1b8] sm:$0xff]
  %v153 = vld [vmem:[%s2 + $0x1c0] sm:$0xff]
  %v154 = vld [vmem:[%s2 + $0x1c8] sm:$0xff]
  %v155 = vld [vmem:[%s2 + $0x1d0] sm:$0xff]
  %v156 = vld [vmem:[%s2 + $0x1d8] sm:$0xff]
  %v157 = vld [vmem:[%s2 + $0x1e0] sm:$0xff]
  %v158 = vld [vmem:[%s2 + $0x1e8] sm:$0xff]
  %v159 = vld [vmem:[%s2 + $0x1f0] sm:$0xff]
  %v160 = vld [vmem:[%s2 + $0x1f8] sm:$0xff]
  %v161 = vld [vmem:[%s2 + $0x200] sm:$0xff]
  %v162 = vld [vmem:[%s2 + $0x208] sm:$0xff]
  %v163 = vld [vmem:[%s2 + $0x210] sm:$0xff]
  %v164 = vld [vmem:[%s2 + $0x218] sm:$0xff]
  %v165 = vld [vmem:[%s2 + $0x220] sm:$0xff]
  %v166 = vld [vmem:[%s2 + $0x228] sm:$0xff]
  %v167 = vld [vmem:[%s2 + $0x230] sm:$0xff]
  %v168 = vld [vmem:[%s2 + $0x238] sm:$0xff]
  %v169 = vld [vmem:[%s2 + $0x240] sm:$0xff]
  %v170 = vld [vmem:[%s2 + $0x248] sm:$0xff]
  %v171 = vld [vmem:[%s2 + $0x250] sm:$0xff]
  %v172 = vld [vmem:[%s2 + $0x258] sm:$0xff]
  %v173 = vld [vmem:[%s2 + $0x260] sm:$0xff]
  %v174 = vld [vmem:[%s2 + $0x268] sm:$0xff]
  %v175 = vld [vmem:[%s2 + $0x270] sm:$0xff]
  %v176 = vld [vmem:[%s2 + $0x278] sm:$0xff]
  %v177 = vld [vmem:[%s2 + $0x280] sm:$0xff]
  %v178 = vld [vmem:[%s2 + $0x288] sm:$0xff]
  %v179 = vld [vmem:[%s2 + $0x290] sm:$0xff]
  %v180 = vld [vmem:[%s2 + $0x298] sm:$0xff]
  %v181 = vld [vmem:[%s2 + $0x2a0] sm:$0xff]
  %v182 = vld [vmem:[%s2 + $0x2a8] sm:$0xff]
  %v183 = vld [vmem:[%s2 + $0x2b0] sm:$0xff]
  %v184 = vld [vmem:[%s2 + $0x2b8] sm:$0xff]
  %v185 = vld [vmem:[%s2 + $0x2c0] sm:$0xff]
  %v186 = vld [vmem:[%s2 + $0x2c8] sm:$0xff]
  %v187 = vld [vmem:[%s2 + $0x2d0] sm:$0xff]
  %v188 = vld [vmem:[%s2 + $0x2d8] sm:$0xff]
  %v189 = vld [vmem:[%s2 + $0x2e0] sm:$0xff]
  %v190 = vld [vmem:[%s2 + $0x2e8] sm:$0xff]
  %v191 = vld [vmem:[%s2 + $0x2f0] sm:$0xff]
  %v192 = vld [vmem:[%s2 + $0x2f8] sm:$0xff]
  %v193 = vld [vmem:[%s2 + $0x300] sm:$0xff]
  %v194 = vld [vmem:[%s2 + $0x308] sm:$0xff]
  %v195 = vld [vmem:[%s2 + $0x310] sm:$0xff]
  %v196 = vld [vmem:[%s2 + $0x318] sm:$0xff]
  %v197 = vld [vmem:[%s2 + $0x320] sm:$0xff]
  %v198 = vld [vmem:[%s2 + $0x328] sm:$0xff]
  %v199 = vld [vmem:[%s2 + $0x330] sm:$0xff]
  %v200 = vld [vmem:[%s2 + $0x338] sm:$0xff]
  %v201 = vld [vmem:[%s2 + $0x340] sm:$0xff]
  %v202 = vld [vmem:[%s2 + $0x348] sm:$0xff]
  %v203 = vld [vmem:[%s2 + $0x350] sm:$0xff]
  %v204 = vld [vmem:[%s2 + $0x358] sm:$0xff]
  %v205 = vld [vmem:[%s2 + $0x360] sm:$0xff]
  %v206 = vld [vmem:[%s2 + $0x368] sm:$0xff]
  %v207 = vld [vmem:[%s2 + $0x370] sm:$0xff]
  %v208 = vld [vmem:[%s2 + $0x378] sm:$0xf]
  %v209 = vld [vmem:[%s2 + $0x380] sm:$0xf]
  %v210 = vld [vmem:[%s2 + $0x388] sm:$0xf]
  %v211 = vld [vmem:[%s3] sm:$0xff]
  %v212 = vld [vmem:[%s3 + $0x8] sm:$0xff]
  %v213 = vld [vmem:[%s3 + $0x10] sm:$0xff]
  %v214 = vld [vmem:[%s3 + $0x18] sm:$0xff]
  %v215 = vld [vmem:[%s3 + $0x20] sm:$0xff]
  %v216 = vld [vmem:[%s3 + $0x28] sm:$0xff]
  %v217 = vld [vmem:[%s3 + $0x30] sm:$0xff]
  %v218 = vld [vmem:[%s3 + $0x38] sm:$0xff]
  %v219 = vld [vmem:[%s3 + $0x40] sm:$0xff]
  %v220 = vld [vmem:[%s3 + $0x48] sm:$0xff]
  %v221 = vld [vmem:[%s3 + $0x50] sm:$0xff]
  %v222 = vld [vmem:[%s3 + $0x58] sm:$0xff]
  %v223 = vld [vmem:[%s3 + $0x60] sm:$0xff]
  %v224 = vld [vmem:[%s3 + $0x68] sm:$0xff]
  %v225 = vld [vmem:[%s3 + $0x70] sm:$0xff]
  %v226 = vld [vmem:[%s3 + $0x78] sm:$0xff]
  %v227 = vld [vmem:[%s3 + $0x80] sm:$0xff]
  %v228 = vld [vmem:[%s3 + $0x88] sm:$0xff]
  %v229 = vld [vmem:[%s3 + $0x90] sm:$0xff]
  %v230 = vld [vmem:[%s3 + $0x98] sm:$0xff]
  %v231 = vld [vmem:[%s3 + $0xa0] sm:$0xff]
  %v232 = vld [vmem:[%s3 + $0xa8] sm:$0xff]
  %v233 = vld [vmem:[%s3 + $0xb0] sm:$0xff]
  %v234 = vld [vmem:[%s3 + $0xb8] sm:$0xff]
  %v235 = vld [vmem:[%s3 + $0xc0] sm:$0xff]
  %v236 = vld [vmem:[%s3 + $0xc8] sm:$0xff]
  %v237 = vld [vmem:[%s3 + $0xd0] sm:$0xff]
  %v238 = vld [vmem:[%s3 + $0xd8] sm:$0xff]
  %v239 = vld [vmem:[%s3 + $0xe0] sm:$0xff]
  %v240 = vld [vmem:[%s3 + $0xe8] sm:$0xff]
  %v241 = vld [vmem:[%s3 + $0xf0] sm:$0xff]
  %v242 = vld [vmem:[%s3 + $0xf8] sm:$0xff]
  %v243 = vld [vmem:[%s3 + $0x100] sm:$0xff]
  %v244 = vld [vmem:[%s3 + $0x108] sm:$0xff]
  %v245 = vld [vmem:[%s3 + $0x110] sm:$0xff]
  %v246 = vld [vmem:[%s3 + $0x118] sm:$0xff]
  %v247 = vld [vmem:[%s3 + $0x120] sm:$0xff]
  %v248 = vld [vmem:[%s3 + $0x128] sm:$0xf]
  %250 = vset.pattern.permute.xlu0 0
  %251 = vperm.xlu0 %250, %v211
  %v252 = vpop.permute.xlu0 %251
  %255 = vset.pattern.permute.xlu0 0
  %256 = vperm.xlu0 %255, %v212
  %v257 = vpop.permute.xlu0 %256
  %260 = vset.pattern.permute.xlu0 0
  %261 = vperm.xlu0 %260, %v213
  %v262 = vpop.permute.xlu0 %261
  %265 = vset.pattern.permute.xlu0 0
  %266 = vperm.xlu0 %265, %v214
  %v267 = vpop.permute.xlu0 %266
  %270 = vset.pattern.permute.xlu0 0
  %271 = vperm.xlu0 %270, %v215
  %v272 = vpop.permute.xlu0 %271
  %275 = vset.pattern.permute.xlu0 0
  %276 = vperm.xlu0 %275, %v216
  %v277 = vpop.permute.xlu0 %276
  %280 = vset.pattern.permute.xlu0 0
  %281 = vperm.xlu0 %280, %v217
  %v282 = vpop.permute.xlu0 %281
  %285 = vset.pattern.permute.xlu0 0
  %286 = vperm.xlu0 %285, %v218
  %v287 = vpop.permute.xlu0 %286
  %290 = vset.pattern.permute.xlu0 0
  %291 = vperm.xlu0 %290, %v219
  %v292 = vpop.permute.xlu0 %291
  %295 = vset.pattern.permute.xlu0 0
  %296 = vperm.xlu0 %295, %v220
  %v297 = vpop.permute.xlu0 %296
  %300 = vset.pattern.permute.xlu0 0
  %301 = vperm.xlu0 %300, %v221
  %v302 = vpop.permute.xlu0 %301
  %305 = vset.pattern.permute.xlu0 0
  %306 = vperm.xlu0 %305, %v222
  %v307 = vpop.permute.xlu0 %306
  %310 = vset.pattern.permute.xlu0 0
  %311 = vperm.xlu0 %310, %v223
  %v312 = vpop.permute.xlu0 %311
  %315 = vset.pattern.permute.xlu0 0
  %316 = vperm.xlu0 %315, %v224
  %v317 = vpop.permute.xlu0 %316
  %320 = vset.pattern.permute.xlu0 0
  %321 = vperm.xlu0 %320, %v225
  %v322 = vpop.permute.xlu0 %321
  %325 = vset.pattern.permute.xlu0 0
  %326 = vperm.xlu0 %325, %v226
  %v327 = vpop.permute.xlu0 %326
  %330 = vset.pattern.permute.xlu0 0
  %331 = vperm.xlu0 %330, %v227
  %v332 = vpop.permute.xlu0 %331
  %335 = vset.pattern.permute.xlu0 0
  %336 = vperm.xlu0 %335, %v228
  %v337 = vpop.permute.xlu0 %336
  %340 = vset.pattern.permute.xlu0 0
  %341 = vperm.xlu0 %340, %v229
  %v342 = vpop.permute.xlu0 %341
  %345 = vset.pattern.permute.xlu0 0
  %346 = vperm.xlu0 %345, %v230
  %v347 = vpop.permute.xlu0 %346
  %350 = vset.pattern.permute.xlu0 0
  %351 = vperm.xlu0 %350, %v231
  %v352 = vpop.permute.xlu0 %351
  %355 = vset.pattern.permute.xlu0 0
  %356 = vperm.xlu0 %355, %v232
  %v357 = vpop.permute.xlu0 %356
  %360 = vset.pattern.permute.xlu0 0
  %361 = vperm.xlu0 %360, %v233
  %v362 = vpop.permute.xlu0 %361
  %365 = vset.pattern.permute.xlu0 0
  %366 = vperm.xlu0 %365, %v234
  %v367 = vpop.permute.xlu0 %366
  %370 = vset.pattern.permute.xlu0 0
  %371 = vperm.xlu0 %370, %v235
  %v372 = vpop.permute.xlu0 %371
  %375 = vset.pattern.permute.xlu0 0
  %376 = vperm.xlu0 %375, %v236
  %v377 = vpop.permute.xlu0 %376
  %380 = vset.pattern.permute.xlu0 0
  %381 = vperm.xlu0 %380, %v237
  %v382 = vpop.permute.xlu0 %381
  %385 = vset.pattern.permute.xlu0 0
  %386 = vperm.xlu0 %385, %v238
  %v387 = vpop.permute.xlu0 %386
  %390 = vset.pattern.permute.xlu0 0
  %391 = vperm.xlu0 %390, %v239
  %v392 = vpop.permute.xlu0 %391
  %395 = vset.pattern.permute.xlu0 0
  %396 = vperm.xlu0 %395, %v240
  %v397 = vpop.permute.xlu0 %396
  %400 = vset.pattern.permute.xlu0 0
  %401 = vperm.xlu0 %400, %v241
  %v402 = vpop.permute.xlu0 %401
  %405 = vset.pattern.permute.xlu0 0
  %406 = vperm.xlu0 %405, %v242
  %v407 = vpop.permute.xlu0 %406
  %410 = vset.pattern.permute.xlu0 0
  %411 = vperm.xlu0 %410, %v243
  %v412 = vpop.permute.xlu0 %411
  %415 = vset.pattern.permute.xlu0 0
  %416 = vperm.xlu0 %415, %v244
  %v417 = vpop.permute.xlu0 %416
  %420 = vset.pattern.permute.xlu0 0
  %421 = vperm.xlu0 %420, %v245
  %v422 = vpop.permute.xlu0 %421
  %425 = vset.pattern.permute.xlu0 0
  %426 = vperm.xlu0 %425, %v246
  %v427 = vpop.permute.xlu0 %426
  %430 = vset.pattern.permute.xlu0 0
  %431 = vperm.xlu0 %430, %v247
  %v432 = vpop.permute.xlu0 %431
  %435 = vset.pattern.permute.xlu0 0
  %436 = vperm.xlu0 %435, %v248
  %v437 = vpop.permute.xlu0 %436
  %vm439 = vcmask 785408
  %v441 = vsel %vm439, %v99, 0
  %v444 = vsel %vm439, %v102, 0
  %v447 = vsel %vm439, %v105, 0
  %v450 = vsel %vm439, %v108, 0
  %v453 = vsel %vm439, %v111, 0
  %v456 = vsel %vm439, %v114, 0
  %v459 = vsel %vm439, %v117, 0
  %v462 = vsel %vm439, %v120, 0
  %v465 = vsel %vm439, %v123, 0
  %v468 = vsel %vm439, %v126, 0
  %v471 = vsel %vm439, %v129, 0
  %v474 = vsel %vm439, %v132, 0
  %v477 = vsel %vm439, %v135, 0
  %v480 = vsel %vm439, %v138, 0
  %v483 = vsel %vm439, %v141, 0
  %v486 = vsel %vm439, %v144, 0
  %v489 = vsel %vm439, %v147, 0
  %v492 = vsel %vm439, %v150, 0
  %v495 = vsel %vm439, %v153, 0
  %v498 = vsel %vm439, %v156, 0
  %v501 = vsel %vm439, %v159, 0
  %v504 = vsel %vm439, %v162, 0
  %v507 = vsel %vm439, %v165, 0
  %v510 = vsel %vm439, %v168, 0
  %v513 = vsel %vm439, %v171, 0
  %v516 = vsel %vm439, %v174, 0
  %v519 = vsel %vm439, %v177, 0
  %v522 = vsel %vm439, %v180, 0
  %v525 = vsel %vm439, %v183, 0
  %v528 = vsel %vm439, %v186, 0
  %v531 = vsel %vm439, %v189, 0
  %v534 = vsel %vm439, %v192, 0
  %v537 = vsel %vm439, %v195, 0
  %v540 = vsel %vm439, %v198, 0
  %v543 = vsel %vm439, %v201, 0
  %v546 = vsel %vm439, %v204, 0
  %v549 = vsel %vm439, %v207, 0
  %v552 = vsel %vm439, %v210, 0
  %554 = vmatprep.subr.mxu0 0.0
  %555 = vmatpush1.msra.mxu0 %v53
  %556 = vmatprep.subr.mxu0 0.0
  %557 = vmatpush1.msra.mxu0 %v54
  %558 = vmatprep.subr.mxu0 0.0
  %559 = vmatpush1.msra.mxu0 %v55
  %560 = vmatprep.subr.mxu0 0.0
  %561 = vmatpush1.msra.mxu0 %v56
  %562 = vmatprep.subr.mxu0 0.0
  %563 = vmatpush1.msra.mxu0 %v57
  %564 = vmatprep.subr.mxu0 0.0
  %565 = vmatpush1.msra.mxu0 %v58
  %566 = vmatprep.subr.mxu0 0.0
  %567 = vmatpush1.msra.mxu0 %v59
  %568 = vmatprep.subr.mxu0 0.0
  %569 = vmatpush1.msra.mxu0 %v60
  %570 = vmatprep.subr.mxu0 0.0
  %571 = vmatpush1.msra.mxu0 %v61
  %572 = vmatprep.subr.mxu0 0.0
  %573 = vmatpush1.msra.mxu0 %v62
  %574 = vmatprep.subr.mxu0 0.0
  %575 = vmatpush1.msra.mxu0 %v63
  %576 = vmatprep.subr.mxu0 0.0
  %577 = vmatpush1.msra.mxu0 %v64
  %578 = vmatprep.subr.mxu0 0.0
  %579 = vmatpush1.msra.mxu0 %v65
  %580 = vmatprep.subr.mxu0 0.0
  %581 = vmatpush1.msra.mxu0 %v66
  %582 = vmatprep.subr.mxu0 0.0
  %583 = vmatpush1.msra.mxu0 %v67
  %584 = vmatprep.subr.mxu0 0.0
  %585 = vmatpush1.msra.mxu0 %v68
  %586 = vmatprep.subr.mxu0 0.0
  %587 = vmatpush1.msra.mxu0 %v69
  %588 = vmatprep.subr.mxu0 0.0
  %589 = vmatpush1.msra.mxu0 %v70
  %590 = vmatprep.subr.mxu0 0.0
  %591 = vmatpush1.msra.mxu0 %v71
  %592 = vmatprep.subr.mxu0 0.0
  %593 = vmatpush1.msra.mxu0 %v72
  %594 = vmatprep.subr.mxu0 0.0
  %595 = vmatpush1.msra.mxu0 %v73
  %596 = vmatprep.subr.mxu0 0.0
  %597 = vmatpush1.msra.mxu0 %v74
  %598 = vmatprep.subr.mxu0 0.0
  %599 = vmatpush1.msra.mxu0 %v75
  %600 = vmatprep.subr.mxu0 0.0
  %601 = vmatpush1.msra.mxu0 %v76
  %602 = vmatprep.subr.mxu0 0.0
  %603 = vmatpush1.msra.mxu0 %v77
  %604 = vmatprep.subr.mxu0 0.0
  %605 = vmatpush1.msra.mxu0 %v78
  %606 = vmatprep.subr.mxu0 0.0
  %607 = vmatpush1.msra.mxu0 %v79
  %608 = vmatprep.subr.mxu0 0.0
  %609 = vmatpush1.msra.mxu0 %v80
  %610 = vmatprep.subr.mxu0 0.0
  %611 = vmatpush1.msra.mxu0 %v81
  %612 = vmatprep.subr.mxu0 0.0
  %613 = vmatpush1.msra.mxu0 %v82
  %614 = vmatprep.subr.mxu0 0.0
  %615 = vmatpush1.msra.mxu0 %v83
  %616 = vmatprep.subr.mxu0 0.0
  %617 = vmatpush1.msra.mxu0 %v84
  %618 = vmatprep.mubr.f32.mxu0 %v98
  %619 = vmatmul.mubr.f32.gmra.mrb[0].mxu0 %v97
  %v620 = vpop.f32.mrb[0].mxu0
  %v621 = vadd.f32 %v252, %v620
  %v622 = vpop.f32.mrb[0].mxu0
  %623 = vmatprep.mubr.f32.mxu0 %v101
  %624 = vmatmul.mubr.f32.gmra.mrb[0].mxu0 %v100
  %v625 = vpop.f32.mrb[0].mxu0
  %v626 = vadd.f32 %v257, %v625
  %v627 = vpop.f32.mrb[0].mxu0
  %628 = vmatprep.mubr.f32.mxu0 %v104
  %629 = vmatmul.mubr.f32.gmra.mrb[0].mxu0 %v103
  %v630 = vpop.f32.mrb[0].mxu0
  %v631 = vadd.f32 %v262, %v630
  %v632 = vpop.f32.mrb[0].mxu0
  %633 = vmatprep.mubr.f32.mxu0 %v107
  %634 = vmatmul.mubr.f32.gmra.mrb[0].mxu0 %v106
  %v635 = vpop.f32.mrb[0].mxu0
  %v636 = vadd.f32 %v267, %v635
  %v637 = vpop.f32.mrb[0].mxu0
  %638 = vmatprep.mubr.f32.mxu0 %v110
  %639 = vmatmul.mubr.f32.gmra.mrb[0].mxu0 %v109
  %v640 = vpop.f32.mrb[0].mxu0
  %v641 = vadd.f32 %v272, %v640
  %v642 = vpop.f32.mrb[0].mxu0
  %643 = vmatprep.mubr.f32.mxu0 %v113
  %644 = vmatmul.mubr.f32.gmra.mrb[0].mxu0 %v112
  %v645 = vpop.f32.mrb[0].mxu0
  %v646 = vadd.f32 %v277, %v645
  %v647 = vpop.f32.mrb[0].mxu0
  %648 = vmatprep.mubr.f32.mxu0 %v116
  %649 = vmatmul.mubr.f32.gmra.mrb[0].mxu0 %v115
  %v650 = vpop.f32.mrb[0].mxu0
  %v651 = vadd.f32 %v282, %v650
  %v652 = vpop.f32.mrb[0].mxu0
  %653 = vmatprep.mubr.f32.mxu0 %v119
  %654 = vmatmul.mubr.f32.gmra.mrb[0].mxu0 %v118
  %v655 = vpop.f32.mrb[0].mxu0
  %v656 = vadd.f32 %v287, %v655
  %v657 = vpop.f32.mrb[0].mxu0
  %658 = vmatprep.mubr.f32.mxu0 %v122
  %659 = vmatmul.mubr.f32.gmra.mrb[0].mxu0 %v121
  %v660 = vpop.f32.mrb[0].mxu0
  %v661 = vadd.f32 %v292, %v660
  %v662 = vpop.f32.mrb[0].mxu0
  %663 = vmatprep.mubr.f32.mxu0 %v125
  %664 = vmatmul.mubr.f32.gmra.mrb[0].mxu0 %v124
  %v665 = vpop.f32.mrb[0].mxu0
  %v666 = vadd.f32 %v297, %v665
  %v667 = vpop.f32.mrb[0].mxu0
  %668 = vmatprep.mubr.f32.mxu0 %v128
  %669 = vmatmul.mubr.f32.gmra.mrb[0].mxu0 %v127
  %v670 = vpop.f32.mrb[0].mxu0
  %v671 = vadd.f32 %v302, %v670
  %v672 = vpop.f32.mrb[0].mxu0
  %673 = vmatprep.mubr.f32.mxu0 %v131
  %674 = vmatmul.mubr.f32.gmra.mrb[0].mxu0 %v130
  %v675 = vpop.f32.mrb[0].mxu0
  %v676 = vadd.f32 %v307, %v675
  %v677 = vpop.f32.mrb[0].mxu0
  %678 = vmatprep.mubr.f32.mxu0 %v134
  %679 = vmatmul.mubr.f32.gmra.mrb[0].mxu0 %v133
  %v680 = vpop.f32.mrb[0].mxu0
  %v681 = vadd.f32 %v312, %v680
  %v682 = vpop.f32.mrb[0].mxu0
  %683 = vmatprep.mubr.f32.mxu0 %v137
  %684 = vmatmul.mubr.f32.gmra.mrb[0].mxu0 %v136
  %v685 = vpop.f32.mrb[0].mxu0
  %v686 = vadd.f32 %v317, %v685
  %v687 = vpop.f32.mrb[0].mxu0
  %688 = vmatprep.mubr.f32.mxu0 %v140
  %689 = vmatmul.mubr.f32.gmra.mrb[0].mxu0 %v139
  %v690 = vpop.f32.mrb[0].mxu0
  %v691 = vadd.f32 %v322, %v690
  %v692 = vpop.f32.mrb[0].mxu0
  %693 = vmatprep.mubr.f32.mxu0 %v143
  %694 = vmatmul.mubr.f32.gmra.mrb[0].mxu0 %v142
  %v695 = vpop.f32.mrb[0].mxu0
  %v696 = vadd.f32 %v327, %v695
  %v697 = vpop.f32.mrb[0].mxu0
  %698 = vmatprep.mubr.f32.mxu0 %v146
  %699 = vmatmul.mubr.f32.gmra.mrb[0].mxu0 %v145
  %v700 = vpop.f32.mrb[0].mxu0
  %v701 = vadd.f32 %v332, %v700
  %v702 = vpop.f32.mrb[0].mxu0
  %703 = vmatprep.mubr.f32.mxu0 %v149
  %704 = vmatmul.mubr.f32.gmra.mrb[0].mxu0 %v148
  %v705 = vpop.f32.mrb[0].mxu0
  %v706 = vadd.f32 %v337, %v705
  %v707 = vpop.f32.mrb[0].mxu0
  %708 = vmatprep.mubr.f32.mxu0 %v152
  %709 = vmatmul.mubr.f32.gmra.mrb[0].mxu0 %v151
  %v710 = vpop.f32.mrb[0].mxu0
  %v711 = vadd.f32 %v342, %v710
  %v712 = vpop.f32.mrb[0].mxu0
  %713 = vmatprep.mubr.f32.mxu0 %v155
  %714 = vmatmul.mubr.f32.gmra.mrb[0].mxu0 %v154
  %v715 = vpop.f32.mrb[0].mxu0
  %v716 = vadd.f32 %v347, %v715
  %v717 = vpop.f32.mrb[0].mxu0
  %718 = vmatprep.mubr.f32.mxu0 %v158
  %719 = vmatmul.mubr.f32.gmra.mrb[0].mxu0 %v157
  %v720 = vpop.f32.mrb[0].mxu0
  %v721 = vadd.f32 %v352, %v720
  %v722 = vpop.f32.mrb[0].mxu0
  %723 = vmatprep.mubr.f32.mxu0 %v161
  %724 = vmatmul.mubr.f32.gmra.mrb[0].mxu0 %v160
  %v725 = vpop.f32.mrb[0].mxu0
  %v726 = vadd.f32 %v357, %v725
  %v727 = vpop.f32.mrb[0].mxu0
  %728 = vmatprep.mubr.f32.mxu0 %v164
  %729 = vmatmul.mubr.f32.gmra.mrb[0].mxu0 %v163
  %v730 = vpop.f32.mrb[0].mxu0
  %v731 = vadd.f32 %v362, %v730
  %v732 = vpop.f32.mrb[0].mxu0
  %733 = vmatprep.mubr.f32.mxu0 %v167
  %734 = vmatmul.mubr.f32.gmra.mrb[0].mxu0 %v166
  %v735 = vpop.f32.mrb[0].mxu0
  %v736 = vadd.f32 %v367, %v735
  %v737 = vpop.f32.mrb[0].mxu0
  %738 = vmatprep.mubr.f32.mxu0 %v170
  %739 = vmatmul.mubr.f32.gmra.mrb[0].mxu0 %v169
  %v740 = vpop.f32.mrb[0].mxu0
  %v741 = vadd.f32 %v372, %v740
  %v742 = vpop.f32.mrb[0].mxu0
  %743 = vmatprep.mubr.f32.mxu0 %v173
  %744 = vmatmul.mubr.f32.gmra.mrb[0].mxu0 %v172
  %v745 = vpop.f32.mrb[0].mxu0
  %v746 = vadd.f32 %v377, %v745
  %v747 = vpop.f32.mrb[0].mxu0
  %748 = vmatprep.mubr.f32.mxu0 %v176
  %749 = vmatmul.mubr.f32.gmra.mrb[0].mxu0 %v175
  %v750 = vpop.f32.mrb[0].mxu0
  %v751 = vadd.f32 %v382, %v750
  %v752 = vpop.f32.mrb[0].mxu0
  %753 = vmatprep.mubr.f32.mxu0 %v179
  %754 = vmatmul.mubr.f32.gmra.mrb[0].mxu0 %v178
  %v755 = vpop.f32.mrb[0].mxu0
  %v756 = vadd.f32 %v387, %v755
  %v757 = vpop.f32.mrb[0].mxu0
  %758 = vmatprep.mubr.f32.mxu0 %v182
  %759 = vmatmul.mubr.f32.gmra.mrb[0].mxu0 %v181
  %v760 = vpop.f32.mrb[0].mxu0
  %v761 = vadd.f32 %v392, %v760
  %v762 = vpop.f32.mrb[0].mxu0
  %763 = vmatprep.mubr.f32.mxu0 %v185
  %764 = vmatmul.mubr.f32.gmra.mrb[0].mxu0 %v184
  %v765 = vpop.f32.mrb[0].mxu0
  %v766 = vadd.f32 %v397, %v765
  %v767 = vpop.f32.mrb[0].mxu0
  %768 = vmatprep.mubr.f32.mxu0 %v188
  %769 = vmatmul.mubr.f32.gmra.mrb[0].mxu0 %v187
  %v770 = vpop.f32.mrb[0].mxu0
  %v771 = vadd.f32 %v402, %v770
  %v772 = vpop.f32.mrb[0].mxu0
  %773 = vmatprep.mubr.f32.mxu0 %v191
  %774 = vmatmul.mubr.f32.gmra.mrb[0].mxu0 %v190
  %v775 = vpop.f32.mrb[0].mxu0
  %v776 = vadd.f32 %v407, %v775
  %v777 = vpop.f32.mrb[0].mxu0
  %778 = vmatprep.mubr.f32.mxu0 %v194
  %779 = vmatmul.mubr.f32.gmra.mrb[0].mxu0 %v193
  %v780 = vpop.f32.mrb[0].mxu0
  %v781 = vadd.f32 %v412, %v780
  %v782 = vpop.f32.mrb[0].mxu0
  %783 = vmatprep.mubr.f32.mxu0 %v197
  %784 = vmatmul.mubr.f32.gmra.mrb[0].mxu0 %v196
  %v785 = vpop.f32.mrb[0].mxu0
  %v786 = vadd.f32 %v417, %v785
  %v787 = vpop.f32.mrb[0].mxu0
  %788 = vmatprep.mubr.f32.mxu0 %v200
  %789 = vmatmul.mubr.f32.gmra.mrb[0].mxu0 %v199
  %v790 = vpop.f32.mrb[0].mxu0
  %v791 = vadd.f32 %v422, %v790
  %v792 = vpop.f32.mrb[0].mxu0
  %793 = vmatprep.mubr.f32.mxu0 %v203
  %794 = vmatmul.mubr.f32.gmra.mrb[0].mxu0 %v202
  %v795 = vpop.f32.mrb[0].mxu0
  %v796 = vadd.f32 %v427, %v795
  %v797 = vpop.f32.mrb[0].mxu0
  %798 = vmatprep.mubr.f32.mxu0 %v206
  %799 = vmatmul.mubr.f32.gmra.mrb[0].mxu0 %v205
  %v800 = vpop.f32.mrb[0].mxu0
  %v801 = vadd.f32 %v432, %v800
  %v802 = vpop.f32.mrb[0].mxu0
  %803 = vmatprep.mubr.f32.mxu0 %v209
  %804 = vmatmul.mubr.f32.gmra.mrb[0].mxu0 %v208
  %v805 = vpop.f32.mrb[0].mxu0
  %v806 = vadd.f32 %v437, %v805
  %v807 = vpop.f32.mrb[0].mxu0
  %808 = vdwg.mxu0
  %809 = vmatprep.subr.mxu0 0.0
  %810 = vmatpush1.msra.mxu0 %v85
  %811 = vmatprep.subr.mxu0 0.0
  %812 = vmatpush1.msra.mxu0 %v86
  %813 = vmatprep.subr.mxu0 0.0
  %814 = vmatpush1.msra.mxu0 %v87
  %815 = vmatprep.subr.mxu0 0.0
  %816 = vmatpush1.msra.mxu0 %v88
  %817 = vmatprep.subr.mxu0 0.0
  %818 = vmatpush1.msra.mxu0 %v89
  %819 = vmatprep.subr.mxu0 0.0
  %820 = vmatpush1.msra.mxu0 %v90
  %821 = vmatprep.subr.mxu0 0.0
  %822 = vmatpush1.msra.mxu0 %v91
  %823 = vmatprep.subr.mxu0 0.0
  %824 = vmatpush1.msra.mxu0 %v92
  %825 = vmatprep.subr.mxu0 0.0
  %826 = vmatpush1.msra.mxu0 %v93
  %827 = vmatprep.subr.mxu0 0.0
  %828 = vmatpush1.msra.mxu0 %v94
  %829 = vmatprep.subr.mxu0 0.0
  %830 = vmatpush1.msra.mxu0 %v95
  %831 = vmatprep.subr.mxu0 0.0
  %832 = vmatpush1.msra.mxu0 %v96
  %833 = vmatprep.subr.mxu0 0.0
  %834 = vmatpush1.msra.mxu0 0.0
  %835 = vmatprep.subr.mxu0 0.0
  %836 = vmatpush1.msra.mxu0 0.0
  %837 = vmatprep.subr.mxu0 0.0
  %838 = vmatpush1.msra.mxu0 0.0
  %839 = vmatprep.subr.mxu0 0.0
  %840 = vmatpush1.msra.mxu0 0.0
  %841 = vmatprep.subr.mxu0 0.0
  %842 = vmatpush1.msra.mxu0 0.0
  %843 = vmatprep.subr.mxu0 0.0
  %844 = vmatpush1.msra.mxu0 0.0
  %845 = vmatprep.subr.mxu0 0.0
  %846 = vmatpush1.msra.mxu0 0.0
  %847 = vmatprep.subr.mxu0 0.0
  %848 = vmatpush1.msra.mxu0 0.0
  %849 = vmatprep.subr.mxu0 0.0
  %850 = vmatpush1.msra.mxu0 0.0
  %851 = vmatprep.subr.mxu0 0.0
  %852 = vmatpush1.msra.mxu0 0.0
  %853 = vmatprep.subr.mxu0 0.0
  %854 = vmatpush1.msra.mxu0 0.0
  %855 = vmatprep.subr.mxu0 0.0
  %856 = vmatpush1.msra.mxu0 0.0
  %857 = vmatprep.subr.mxu0 0.0
  %858 = vmatpush1.msra.mxu0 0.0
  %859 = vmatprep.subr.mxu0 0.0
  %860 = vmatpush1.msra.mxu0 0.0
  %861 = vmatprep.subr.mxu0 0.0
  %862 = vmatpush1.msra.mxu0 0.0
  %863 = vmatprep.subr.mxu0 0.0
  %864 = vmatpush1.msra.mxu0 0.0
  %865 = vmatprep.subr.mxu0 0.0
  %866 = vmatpush1.msra.mxu0 0.0
  %867 = vmatprep.subr.mxu0 0.0
  %868 = vmatpush1.msra.mxu0 0.0
  %869 = vmatprep.subr.mxu0 0.0
  %870 = vmatpush1.msra.mxu0 0.0
  %871 = vmatprep.subr.mxu0 0.0
  %872 = vmatpush1.msra.mxu0 0.0
  %873 = vmatprep.mubr.f32.mxu0 0.0
  %874 = vmatmul.mubr.f32.gmra.mrb[0].mxu0 %v441
  %v875 = vpop.f32.mrb[0].mxu0
  %v876 = vadd.f32 %v621, %v875
  %v877 = vpop.f32.mrb[0].mxu0
  %878 = vmatprep.mubr.f32.mxu0 0.0
  %879 = vmatmul.mubr.f32.gmra.mrb[0].mxu0 %v444
  %v880 = vpop.f32.mrb[0].mxu0
  %v881 = vadd.f32 %v626, %v880
  %v882 = vpop.f32.mrb[0].mxu0
  %883 = vmatprep.mubr.f32.mxu0 0.0
  %884 = vmatmul.mubr.f32.gmra.mrb[0].mxu0 %v447
  %v885 = vpop.f32.mrb[0].mxu0
  %v886 = vadd.f32 %v631, %v885
  %v887 = vpop.f32.mrb[0].mxu0
  %888 = vmatprep.mubr.f32.mxu0 0.0
  %889 = vmatmul.mubr.f32.gmra.mrb[0].mxu0 %v450
  %v890 = vpop.f32.mrb[0].mxu0
  %v891 = vadd.f32 %v636, %v890
  %v892 = vpop.f32.mrb[0].mxu0
  %893 = vmatprep.mubr.f32.mxu0 0.0
  %894 = vmatmul.mubr.f32.gmra.mrb[0].mxu0 %v453
  %v895 = vpop.f32.mrb[0].mxu0
  %v896 = vadd.f32 %v641, %v895
  %v897 = vpop.f32.mrb[0].mxu0
  %898 = vmatprep.mubr.f32.mxu0 0.0
  %899 = vmatmul.mubr.f32.gmra.mrb[0].mxu0 %v456
  %v900 = vpop.f32.mrb[0].mxu0
  %v901 = vadd.f32 %v646, %v900
  %v902 = vpop.f32.mrb[0].mxu0
  %903 = vmatprep.mubr.f32.mxu0 0.0
  %904 = vmatmul.mubr.f32.gmra.mrb[0].mxu0 %v459
  %v905 = vpop.f32.mrb[0].mxu0
  %v906 = vadd.f32 %v651, %v905
  %v907 = vpop.f32.mrb[0].mxu0
  %908 = vmatprep.mubr.f32.mxu0 0.0
  %909 = vmatmul.mubr.f32.gmra.mrb[0].mxu0 %v462
  %v910 = vpop.f32.mrb[0].mxu0
  %v911 = vadd.f32 %v656, %v910
  %v912 = vpop.f32.mrb[0].mxu0
  %913 = vmatprep.mubr.f32.mxu0 0.0
  %914 = vmatmul.mubr.f32.gmra.mrb[0].mxu0 %v465
  %v915 = vpop.f32.mrb[0].mxu0
  %v916 = vadd.f32 %v661, %v915
  %v917 = vpop.f32.mrb[0].mxu0
  %918 = vmatprep.mubr.f32.mxu0 0.0
  %919 = vmatmul.mubr.f32.gmra.mrb[0].mxu0 %v468
  %v920 = vpop.f32.mrb[0].mxu0
  %v921 = vadd.f32 %v666, %v920
  %v922 = vpop.f32.mrb[0].mxu0
  %923 = vmatprep.mubr.f32.mxu0 0.0
  %924 = vmatmul.mubr.f32.gmra.mrb[0].mxu0 %v471
  %v925 = vpop.f32.mrb[0].mxu0
  %v926 = vadd.f32 %v671, %v925
  %v927 = vpop.f32.mrb[0].mxu0
  %928 = vmatprep.mubr.f32.mxu0 0.0
  %929 = vmatmul.mubr.f32.gmra.mrb[0].mxu0 %v474
  %v930 = vpop.f32.mrb[0].mxu0
  %v931 = vadd.f32 %v676, %v930
  %v932 = vpop.f32.mrb[0].mxu0
  %933 = vmatprep.mubr.f32.mxu0 0.0
  %934 = vmatmul.mubr.f32.gmra.mrb[0].mxu0 %v477
  %v935 = vpop.f32.mrb[0].mxu0
  %v936 = vadd.f32 %v681, %v935
  %v937 = vpop.f32.mrb[0].mxu0
  %938 = vmatprep.mubr.f32.mxu0 0.0
  %939 = vmatmul.mubr.f32.gmra.mrb[0].mxu0 %v480
  %v940 = vpop.f32.mrb[0].mxu0
  %v941 = vadd.f32 %v686, %v940
  %v942 = vpop.f32.mrb[0].mxu0
  %943 = vmatprep.mubr.f32.mxu0 0.0
  %944 = vmatmul.mubr.f32.gmra.mrb[0].mxu0 %v483
  %v945 = vpop.f32.mrb[0].mxu0
  %v946 = vadd.f32 %v691, %v945
  %v947 = vpop.f32.mrb[0].mxu0
  %948 = vmatprep.mubr.f32.mxu0 0.0
  %949 = vmatmul.mubr.f32.gmra.mrb[0].mxu0 %v486
  %v950 = vpop.f32.mrb[0].mxu0
  %v951 = vadd.f32 %v696, %v950
  %v952 = vpop.f32.mrb[0].mxu0
  %953 = vmatprep.mubr.f32.mxu0 0.0
  %954 = vmatmul.mubr.f32.gmra.mrb[0].mxu0 %v489
  %v955 = vpop.f32.mrb[0].mxu0
  %v956 = vadd.f32 %v701, %v955
  %v957 = vpop.f32.mrb[0].mxu0
  %958 = vmatprep.mubr.f32.mxu0 0.0
  %959 = vmatmul.mubr.f32.gmra.mrb[0].mxu0 %v492
  %v960 = vpop.f32.mrb[0].mxu0
  %v961 = vadd.f32 %v706, %v960
  %v962 = vpop.f32.mrb[0].mxu0
  %963 = vmatprep.mubr.f32.mxu0 0.0
  %964 = vmatmul.mubr.f32.gmra.mrb[0].mxu0 %v495
  %v965 = vpop.f32.mrb[0].mxu0
  %v966 = vadd.f32 %v711, %v965
  %v967 = vpop.f32.mrb[0].mxu0
  %968 = vmatprep.mubr.f32.mxu0 0.0
  %969 = vmatmul.mubr.f32.gmra.mrb[0].mxu0 %v498
  %v970 = vpop.f32.mrb[0].mxu0
  %v971 = vadd.f32 %v716, %v970
  %v972 = vpop.f32.mrb[0].mxu0
  %973 = vmatprep.mubr.f32.mxu0 0.0
  %974 = vmatmul.mubr.f32.gmra.mrb[0].mxu0 %v501
  %v975 = vpop.f32.mrb[0].mxu0
  %v976 = vadd.f32 %v721, %v975
  %v977 = vpop.f32.mrb[0].mxu0
  %978 = vmatprep.mubr.f32.mxu0 0.0
  %979 = vmatmul.mubr.f32.gmra.mrb[0].mxu0 %v504
  %v980 = vpop.f32.mrb[0].mxu0
  %v981 = vadd.f32 %v726, %v980
  %v982 = vpop.f32.mrb[0].mxu0
  %983 = vmatprep.mubr.f32.mxu0 0.0
  %984 = vmatmul.mubr.f32.gmra.mrb[0].mxu0 %v507
  %v985 = vpop.f32.mrb[0].mxu0
  %v986 = vadd.f32 %v731, %v985
  %v987 = vpop.f32.mrb[0].mxu0
  %988 = vmatprep.mubr.f32.mxu0 0.0
  %989 = vmatmul.mubr.f32.gmra.mrb[0].mxu0 %v510
  %v990 = vpop.f32.mrb[0].mxu0
  %v991 = vadd.f32 %v736, %v990
  %v992 = vpop.f32.mrb[0].mxu0
  %993 = vmatprep.mubr.f32.mxu0 0.0
  %994 = vmatmul.mubr.f32.gmra.mrb[0].mxu0 %v513
  %v995 = vpop.f32.mrb[0].mxu0
  %v996 = vadd.f32 %v741, %v995
  %v997 = vpop.f32.mrb[0].mxu0
  %998 = vmatprep.mubr.f32.mxu0 0.0
  %999 = vmatmul.mubr.f32.gmra.mrb[0].mxu0 %v516
  %v1000 = vpop.f32.mrb[0].mxu0
  %v1001 = vadd.f32 %v746, %v1000
  %v1002 = vpop.f32.mrb[0].mxu0
  %1003 = vmatprep.mubr.f32.mxu0 0.0
  %1004 = vmatmul.mubr.f32.gmra.mrb[0].mxu0 %v519
  %v1005 = vpop.f32.mrb[0].mxu0
  %v1006 = vadd.f32 %v751, %v1005
  %v1007 = vpop.f32.mrb[0].mxu0
  %1008 = vmatprep.mubr.f32.mxu0 0.0
  %1009 = vmatmul.mubr.f32.gmra.mrb[0].mxu0 %v522
  %v1010 = vpop.f32.mrb[0].mxu0
  %v1011 = vadd.f32 %v756, %v1010
  %v1012 = vpop.f32.mrb[0].mxu0
  %1013 = vmatprep.mubr.f32.mxu0 0.0
  %1014 = vmatmul.mubr.f32.gmra.mrb[0].mxu0 %v525
  %v1015 = vpop.f32.mrb[0].mxu0
  %v1016 = vadd.f32 %v761, %v1015
  %v1017 = vpop.f32.mrb[0].mxu0
  %1018 = vmatprep.mubr.f32.mxu0 0.0
  %1019 = vmatmul.mubr.f32.gmra.mrb[0].mxu0 %v528
  %v1020 = vpop.f32.mrb[0].mxu0
  %v1021 = vadd.f32 %v766, %v1020
  %v1022 = vpop.f32.mrb[0].mxu0
  %1023 = vmatprep.mubr.f32.mxu0 0.0
  %1024 = vmatmul.mubr.f32.gmra.mrb[0].mxu0 %v531
  %v1025 = vpop.f32.mrb[0].mxu0
  %v1026 = vadd.f32 %v771, %v1025
  %v1027 = vpop.f32.mrb[0].mxu0
  %1028 = vmatprep.mubr.f32.mxu0 0.0
  %1029 = vmatmul.mubr.f32.gmra.mrb[0].mxu0 %v534
  %v1030 = vpop.f32.mrb[0].mxu0
  %v1031 = vadd.f32 %v776, %v1030
  %v1032 = vpop.f32.mrb[0].mxu0
  %1033 = vmatprep.mubr.f32.mxu0 0.0
  %1034 = vmatmul.mubr.f32.gmra.mrb[0].mxu0 %v537
  %v1035 = vpop.f32.mrb[0].mxu0
  %v1036 = vadd.f32 %v781, %v1035
  %v1037 = vpop.f32.mrb[0].mxu0
  %1038 = vmatprep.mubr.f32.mxu0 0.0
  %1039 = vmatmul.mubr.f32.gmra.mrb[0].mxu0 %v540
  %v1040 = vpop.f32.mrb[0].mxu0
  %v1041 = vadd.f32 %v786, %v1040
  %v1042 = vpop.f32.mrb[0].mxu0
  %1043 = vmatprep.mubr.f32.mxu0 0.0
  %1044 = vmatmul.mubr.f32.gmra.mrb[0].mxu0 %v543
  %v1045 = vpop.f32.mrb[0].mxu0
  %v1046 = vadd.f32 %v791, %v1045
  %v1047 = vpop.f32.mrb[0].mxu0
  %1048 = vmatprep.mubr.f32.mxu0 0.0
  %1049 = vmatmul.mubr.f32.gmra.mrb[0].mxu0 %v546
  %v1050 = vpop.f32.mrb[0].mxu0
  %v1051 = vadd.f32 %v796, %v1050
  %v1052 = vpop.f32.mrb[0].mxu0
  %1053 = vmatprep.mubr.f32.mxu0 0.0
  %1054 = vmatmul.mubr.f32.gmra.mrb[0].mxu0 %v549
  %v1055 = vpop.f32.mrb[0].mxu0
  %v1056 = vadd.f32 %v801, %v1055
  %v1057 = vpop.f32.mrb[0].mxu0
  %1058 = vmatprep.mubr.f32.mxu0 0.0
  %1059 = vmatmul.mubr.f32.gmra.mrb[0].mxu0 %v552
  %v1060 = vpop.f32.mrb[0].mxu0
  %v1061 = vadd.f32 %v806, %v1060
  %v1062 = vpop.f32.mrb[0].mxu0
  %1063 = vdwg.mxu0
  %vm1064 = vcmp.ge.f32.partialorder %v876, 0.0
  %vm1065 = vcmp.ge.f32.partialorder %v881, 0.0
  %vm1066 = vcmp.ge.f32.partialorder %v886, 0.0
  %vm1067 = vcmp.ge.f32.partialorder %v891, 0.0
  %vm1068 = vcmp.ge.f32.partialorder %v896, 0.0
  %vm1069 = vcmp.ge.f32.partialorder %v901, 0.0
  %vm1070 = vcmp.ge.f32.partialorder %v906, 0.0
  %vm1071 = vcmp.ge.f32.partialorder %v911, 0.0
  %vm1072 = vcmp.ge.f32.partialorder %v916, 0.0
  %vm1073 = vcmp.ge.f32.partialorder %v921, 0.0
  %vm1074 = vcmp.ge.f32.partialorder %v926, 0.0
  %vm1075 = vcmp.ge.f32.partialorder %v931, 0.0
  %vm1076 = vcmp.ge.f32.partialorder %v936, 0.0
  %vm1077 = vcmp.ge.f32.partialorder %v941, 0.0
  %vm1078 = vcmp.ge.f32.partialorder %v946, 0.0
  %vm1079 = vcmp.ge.f32.partialorder %v951, 0.0
  %vm1080 = vcmp.ge.f32.partialorder %v956, 0.0
  %vm1081 = vcmp.ge.f32.partialorder %v961, 0.0
  %vm1082 = vcmp.ge.f32.partialorder %v966, 0.0
  %vm1083 = vcmp.ge.f32.partialorder %v971, 0.0
  %vm1084 = vcmp.ge.f32.partialorder %v976, 0.0
  %vm1085 = vcmp.ge.f32.partialorder %v981, 0.0
  %vm1086 = vcmp.ge.f32.partialorder %v986, 0.0
  %vm1087 = vcmp.ge.f32.partialorder %v991, 0.0
  %vm1088 = vcmp.ge.f32.partialorder %v996, 0.0
  %vm1089 = vcmp.ge.f32.partialorder %v1001, 0.0
  %vm1090 = vcmp.ge.f32.partialorder %v1006, 0.0
  %vm1091 = vcmp.ge.f32.partialorder %v1011, 0.0
  %vm1092 = vcmp.ge.f32.partialorder %v1016, 0.0
  %vm1093 = vcmp.ge.f32.partialorder %v1021, 0.0
  %vm1094 = vcmp.ge.f32.partialorder %v1026, 0.0
  %vm1095 = vcmp.ge.f32.partialorder %v1031, 0.0
  %vm1096 = vcmp.ge.f32.partialorder %v1036, 0.0
  %vm1097 = vcmp.ge.f32.partialorder %v1041, 0.0
  %vm1098 = vcmp.ge.f32.partialorder %v1046, 0.0
  %vm1099 = vcmp.ge.f32.partialorder %v1051, 0.0
  %vm1100 = vcmp.ge.f32.partialorder %v1056, 0.0
  %vm1101 = vcmp.ge.f32.partialorder %v1061, 0.0
  %v1102 = vmul.f32 %v876, 0.05
  %v1103 = vmul.f32 %v881, 0.05
  %v1104 = vmul.f32 %v886, 0.05
  %v1105 = vmul.f32 %v891, 0.05
  %v1106 = vmul.f32 %v896, 0.05
  %v1107 = vmul.f32 %v901, 0.05
  %v1108 = vmul.f32 %v906, 0.05
  %v1109 = vmul.f32 %v911, 0.05
  %v1110 = vmul.f32 %v916, 0.05
  %v1111 = vmul.f32 %v921, 0.05
  %v1112 = vmul.f32 %v926, 0.05
  %v1113 = vmul.f32 %v931, 0.05
  %v1114 = vmul.f32 %v936, 0.05
  %v1115 = vmul.f32 %v941, 0.05
  %v1116 = vmul.f32 %v946, 0.05
  %v1117 = vmul.f32 %v951, 0.05
  %v1118 = vmul.f32 %v956, 0.05
  %v1119 = vmul.f32 %v961, 0.05
  %v1120 = vmul.f32 %v966, 0.05
  %v1121 = vmul.f32 %v971, 0.05
  %v1122 = vmul.f32 %v976, 0.05
  %v1123 = vmul.f32 %v981, 0.05
  %v1124 = vmul.f32 %v986, 0.05
  %v1125 = vmul.f32 %v991, 0.05
  %v1126 = vmul.f32 %v996, 0.05
  %v1127 = vmul.f32 %v1001, 0.05
  %v1128 = vmul.f32 %v1006, 0.05
  %v1129 = vmul.f32 %v1011, 0.05
  %v1130 = vmul.f32 %v1016, 0.05
  %v1131 = vmul.f32 %v1021, 0.05
  %v1132 = vmul.f32 %v1026, 0.05
  %v1133 = vmul.f32 %v1031, 0.05
  %v1134 = vmul.f32 %v1036, 0.05
  %v1135 = vmul.f32 %v1041, 0.05
  %v1136 = vmul.f32 %v1046, 0.05
  %v1137 = vmul.f32 %v1051, 0.05
  %v1138 = vmul.f32 %v1056, 0.05
  %v1139 = vmul.f32 %v1061, 0.05
  %v1140 = vsel %vm1064, %v876, %v1102
  %v1141 = vsel %vm1065, %v881, %v1103
  %v1142 = vsel %vm1066, %v886, %v1104
  %v1143 = vsel %vm1067, %v891, %v1105
  %v1144 = vsel %vm1068, %v896, %v1106
  %v1145 = vsel %vm1069, %v901, %v1107
  %v1146 = vsel %vm1070, %v906, %v1108
  %v1147 = vsel %vm1071, %v911, %v1109
  %v1148 = vsel %vm1072, %v916, %v1110
  %v1149 = vsel %vm1073, %v921, %v1111
  %v1150 = vsel %vm1074, %v926, %v1112
  %v1151 = vsel %vm1075, %v931, %v1113
  %v1152 = vsel %vm1076, %v936, %v1114
  %v1153 = vsel %vm1077, %v941, %v1115
  %v1154 = vsel %vm1078, %v946, %v1116
  %v1155 = vsel %vm1079, %v951, %v1117
  %v1156 = vsel %vm1080, %v956, %v1118
  %v1157 = vsel %vm1081, %v961, %v1119
  %v1158 = vsel %vm1082, %v966, %v1120
  %v1159 = vsel %vm1083, %v971, %v1121
  %v1160 = vsel %vm1084, %v976, %v1122
  %v1161 = vsel %vm1085, %v981, %v1123
  %v1162 = vsel %vm1086, %v986, %v1124
  %v1163 = vsel %vm1087, %v991, %v1125
  %v1164 = vsel %vm1088, %v996, %v1126
  %v1165 = vsel %vm1089, %v1001, %v1127
  %v1166 = vsel %vm1090, %v1006, %v1128
  %v1167 = vsel %vm1091, %v1011, %v1129
  %v1168 = vsel %vm1092, %v1016, %v1130
  %v1169 = vsel %vm1093, %v1021, %v1131
  %v1170 = vsel %vm1094, %v1026, %v1132
  %v1171 = vsel %vm1095, %v1031, %v1133
  %v1172 = vsel %vm1096, %v1036, %v1134
  %v1173 = vsel %vm1097, %v1041, %v1135
  %v1174 = vsel %vm1098, %v1046, %v1136
  %v1175 = vsel %vm1099, %v1051, %v1137
  %v1176 = vsel %vm1100, %v1056, %v1138
  %v1177 = vsel %vm1101, %v1061, %v1139
  %v1178 = vld [vmem:[%s4] sm:$0xff]
  %v1179 = vld [vmem:[%s4 + $0x8] sm:$0xff]
  %v1180 = vld [vmem:[%s4 + $0x10] sm:$0xff]
  %v1181 = vld [vmem:[%s4 + $0x18] sm:$0xff]
  %v1182 = vld [vmem:[%s4 + $0x20] sm:$0xff]
  %v1183 = vld [vmem:[%s4 + $0x28] sm:$0xff]
  %v1184 = vld [vmem:[%s4 + $0x30] sm:$0xff]
  %v1185 = vld [vmem:[%s4 + $0x38] sm:$0xff]
  %v1186 = vld [vmem:[%s4 + $0x40] sm:$0xff]
  %v1187 = vld [vmem:[%s4 + $0x48] sm:$0xff]
  %v1188 = vld [vmem:[%s4 + $0x50] sm:$0xff]
  %v1189 = vld [vmem:[%s4 + $0x58] sm:$0xff]
  %v1190 = vld [vmem:[%s4 + $0x60] sm:$0xff]
  %v1191 = vld [vmem:[%s4 + $0x68] sm:$0xff]
  %v1192 = vld [vmem:[%s4 + $0x70] sm:$0xff]
  %v1193 = vld [vmem:[%s4 + $0x78] sm:$0xff]
  %v1194 = vld [vmem:[%s4 + $0x80] sm:$0xff]
  %v1195 = vld [vmem:[%s4 + $0x88] sm:$0xff]
  %v1196 = vld [vmem:[%s4 + $0x90] sm:$0xff]
  %v1197 = vld [vmem:[%s4 + $0x98] sm:$0xff]
  %v1198 = vld [vmem:[%s4 + $0xa0] sm:$0xff]
  %v1199 = vld [vmem:[%s4 + $0xa8] sm:$0xff]
  %v1200 = vld [vmem:[%s4 + $0xb0] sm:$0xff]
  %v1201 = vld [vmem:[%s4 + $0xb8] sm:$0xff]
  %v1202 = vld [vmem:[%s4 + $0xc0] sm:$0xff]
  %v1203 = vld [vmem:[%s4 + $0xc8] sm:$0xff]
  %v1204 = vld [vmem:[%s4 + $0xd0] sm:$0xff]
  %v1205 = vld [vmem:[%s4 + $0xd8] sm:$0xff]
  %v1206 = vld [vmem:[%s4 + $0xe0] sm:$0xff]
  %v1207 = vld [vmem:[%s4 + $0xe8] sm:$0xff]
  %v1208 = vld [vmem:[%s4 + $0xf0] sm:$0xff]
  %v1209 = vld [vmem:[%s4 + $0xf8] sm:$0xff]
  %v1210 = vld [vmem:[%s4 + $0x100] sm:$0xff]
  %v1211 = vld [vmem:[%s4 + $0x108] sm:$0xff]
  %v1212 = vld [vmem:[%s4 + $0x110] sm:$0xff]
  %v1213 = vld [vmem:[%s4 + $0x118] sm:$0xff]
  %v1214 = vld [vmem:[%s4 + $0x120] sm:$0xff]
  %v1215 = vld [vmem:[%s4 + $0x128] sm:$0xff]
  %v1216 = vld [vmem:[%s4 + $0x130] sm:$0xff]
  %v1217 = vld [vmem:[%s4 + $0x138] sm:$0xff]
  %v1218 = vld [vmem:[%s4 + $0x140] sm:$0xff]
  %v1219 = vld [vmem:[%s4 + $0x148] sm:$0xff]
  %v1220 = vld [vmem:[%s4 + $0x150] sm:$0xff]
  %v1221 = vld [vmem:[%s4 + $0x158] sm:$0xff]
  %v1222 = vld [vmem:[%s4 + $0x160] sm:$0xff]
  %v1223 = vld [vmem:[%s4 + $0x168] sm:$0xff]
  %v1224 = vld [vmem:[%s4 + $0x170] sm:$0xff]
  %v1225 = vld [vmem:[%s4 + $0x178] sm:$0xff]
  %v1226 = vld [vmem:[%s4 + $0x180] sm:$0xff]
  %v1227 = vld [vmem:[%s4 + $0x188] sm:$0xff]
  %v1228 = vld [vmem:[%s4 + $0x190] sm:$0xff]
  %v1229 = vld [vmem:[%s4 + $0x198] sm:$0xff]
  %v1230 = vld [vmem:[%s4 + $0x1a0] sm:$0xff]
  %v1231 = vld [vmem:[%s4 + $0x1a8] sm:$0xff]
  %v1232 = vld [vmem:[%s4 + $0x1b0] sm:$0xff]
  %v1233 = vld [vmem:[%s4 + $0x1b8] sm:$0xff]
  %v1234 = vld [vmem:[%s4 + $0x1c0] sm:$0xff]
  %v1235 = vld [vmem:[%s4 + $0x1c8] sm:$0xff]
  %v1236 = vld [vmem:[%s4 + $0x1d0] sm:$0xff]
  %v1237 = vld [vmem:[%s4 + $0x1d8] sm:$0xff]
  %v1238 = vld [vmem:[%s4 + $0x1e0] sm:$0xff]
  %v1239 = vld [vmem:[%s4 + $0x1e8] sm:$0xff]
  %v1240 = vld [vmem:[%s4 + $0x1f0] sm:$0xff]
  %v1241 = vld [vmem:[%s4 + $0x1f8] sm:$0xff]
  %v1242 = vld [vmem:[%s4 + $0x200] sm:$0xff]
  %v1243 = vld [vmem:[%s4 + $0x208] sm:$0xff]
  %v1244 = vld [vmem:[%s4 + $0x210] sm:$0xff]
  %v1245 = vld [vmem:[%s4 + $0x218] sm:$0xff]
  %v1246 = vld [vmem:[%s4 + $0x220] sm:$0xff]
  %v1247 = vld [vmem:[%s4 + $0x228] sm:$0xff]
  %v1248 = vld [vmem:[%s4 + $0x230] sm:$0xff]
  %v1249 = vld [vmem:[%s4 + $0x238] sm:$0xff]
  %v1250 = vld [vmem:[%s4 + $0x240] sm:$0xff]
  %v1251 = vld [vmem:[%s4 + $0x248] sm:$0xff]
  %v1252 = vld [vmem:[%s4 + $0x250] sm:$0xff]
  %v1253 = vld [vmem:[%s4 + $0x258] sm:$0xff]
  %v1254 = vld [vmem:[%s4 + $0x260] sm:$0xff]
  %v1255 = vld [vmem:[%s4 + $0x268] sm:$0xff]
  %v1256 = vld [vmem:[%s4 + $0x270] sm:$0xff]
  %v1257 = vld [vmem:[%s4 + $0x278] sm:$0xff]
  %v1258 = vld [vmem:[%s4 + $0x280] sm:$0xff]
  %v1259 = vld [vmem:[%s4 + $0x288] sm:$0xff]
  %v1260 = vld [vmem:[%s4 + $0x290] sm:$0xff]
  %v1261 = vld [vmem:[%s4 + $0x298] sm:$0xff]
  %v1262 = vld [vmem:[%s4 + $0x2a0] sm:$0xff]
  %v1263 = vld [vmem:[%s4 + $0x2a8] sm:$0xff]
  %v1264 = vld [vmem:[%s4 + $0x2b0] sm:$0xff]
  %v1265 = vld [vmem:[%s4 + $0x2b8] sm:$0xff]
  %v1266 = vld [vmem:[%s4 + $0x2c0] sm:$0xff]
  %v1267 = vld [vmem:[%s4 + $0x2c8] sm:$0xff]
  %v1268 = vld [vmem:[%s4 + $0x2d0] sm:$0xff]
  %v1269 = vld [vmem:[%s4 + $0x2d8] sm:$0xff]
  %v1270 = vld [vmem:[%s4 + $0x2e0] sm:$0xff]
  %v1271 = vld [vmem:[%s4 + $0x2e8] sm:$0xff]
  %v1272 = vld [vmem:[%s4 + $0x2f0] sm:$0xff]
  %v1273 = vld [vmem:[%s4 + $0x2f8] sm:$0xff]
  %v1274 = vld [vmem:[%s5] sm:$0xff]
  %v1275 = vld [vmem:[%s5 + $0x8] sm:$0xff]
  %v1276 = vld [vmem:[%s5 + $0x10] sm:$0xff]
  %v1277 = vld [vmem:[%s5 + $0x18] sm:$0xff]
  %v1278 = vld [vmem:[%s5 + $0x20] sm:$0xff]
  %v1279 = vld [vmem:[%s5 + $0x28] sm:$0xff]
  %v1280 = vld [vmem:[%s5 + $0x30] sm:$0xff]
  %v1281 = vld [vmem:[%s5 + $0x38] sm:$0xff]
  %v1282 = vld [vmem:[%s5 + $0x40] sm:$0xff]
  %v1283 = vld [vmem:[%s5 + $0x48] sm:$0xff]
  %v1284 = vld [vmem:[%s5 + $0x50] sm:$0xff]
  %v1285 = vld [vmem:[%s5 + $0x58] sm:$0xff]
  %v1286 = vld [vmem:[%s5 + $0x60] sm:$0xff]
  %v1287 = vld [vmem:[%s5 + $0x68] sm:$0xff]
  %v1288 = vld [vmem:[%s5 + $0x70] sm:$0xff]
  %v1289 = vld [vmem:[%s5 + $0x78] sm:$0xff]
  %v1290 = vld [vmem:[%s5 + $0x80] sm:$0xff]
  %v1291 = vld [vmem:[%s5 + $0x88] sm:$0xff]
  %v1292 = vld [vmem:[%s5 + $0x90] sm:$0xff]
  %v1293 = vld [vmem:[%s5 + $0x98] sm:$0xff]
  %v1294 = vld [vmem:[%s5 + $0xa0] sm:$0xff]
  %v1295 = vld [vmem:[%s5 + $0xa8] sm:$0xff]
  %v1296 = vld [vmem:[%s5 + $0xb0] sm:$0xff]
  %v1297 = vld [vmem:[%s5 + $0xb8] sm:$0xff]
  %v1298 = vld [vmem:[%s5 + $0xc0] sm:$0xff]
  %v1299 = vld [vmem:[%s5 + $0xc8] sm:$0xff]
  %v1300 = vld [vmem:[%s5 + $0xd0] sm:$0xff]
  %v1301 = vld [vmem:[%s5 + $0xd8] sm:$0xff]
  %v1302 = vld [vmem:[%s5 + $0xe0] sm:$0xff]
  %v1303 = vld [vmem:[%s5 + $0xe8] sm:$0xff]
  %v1304 = vld [vmem:[%s5 + $0xf0] sm:$0xff]
  %v1305 = vld [vmem:[%s5 + $0xf8] sm:$0xff]
  %1307 = vset.pattern.permute.xlu0 0
  %1308 = vperm.xlu0 %1307, %v1274
  %v1309 = vpop.permute.xlu0 %1308
  %1312 = vset.pattern.permute.xlu0 0
  %1313 = vperm.xlu0 %1312, %v1275
  %v1314 = vpop.permute.xlu0 %1313
  %1317 = vset.pattern.permute.xlu0 0
  %1318 = vperm.xlu0 %1317, %v1276
  %v1319 = vpop.permute.xlu0 %1318
  %1322 = vset.pattern.permute.xlu0 0
  %1323 = vperm.xlu0 %1322, %v1277
  %v1324 = vpop.permute.xlu0 %1323
  %1327 = vset.pattern.permute.xlu0 0
  %1328 = vperm.xlu0 %1327, %v1278
  %v1329 = vpop.permute.xlu0 %1328
  %1332 = vset.pattern.permute.xlu0 0
  %1333 = vperm.xlu0 %1332, %v1279
  %v1334 = vpop.permute.xlu0 %1333
  %1337 = vset.pattern.permute.xlu0 0
  %1338 = vperm.xlu0 %1337, %v1280
  %v1339 = vpop.permute.xlu0 %1338
  %1342 = vset.pattern.permute.xlu0 0
  %1343 = vperm.xlu0 %1342, %v1281
  %v1344 = vpop.permute.xlu0 %1343
  %1347 = vset.pattern.permute.xlu0 0
  %1348 = vperm.xlu0 %1347, %v1282
  %v1349 = vpop.permute.xlu0 %1348
  %1352 = vset.pattern.permute.xlu0 0
  %1353 = vperm.xlu0 %1352, %v1283
  %v1354 = vpop.permute.xlu0 %1353
  %1357 = vset.pattern.permute.xlu0 0
  %1358 = vperm.xlu0 %1357, %v1284
  %v1359 = vpop.permute.xlu0 %1358
  %1362 = vset.pattern.permute.xlu0 0
  %1363 = vperm.xlu0 %1362, %v1285
  %v1364 = vpop.permute.xlu0 %1363
  %1367 = vset.pattern.permute.xlu0 0
  %1368 = vperm.xlu0 %1367, %v1286
  %v1369 = vpop.permute.xlu0 %1368
  %1372 = vset.pattern.permute.xlu0 0
  %1373 = vperm.xlu0 %1372, %v1287
  %v1374 = vpop.permute.xlu0 %1373
  %1377 = vset.pattern.permute.xlu0 0
  %1378 = vperm.xlu0 %1377, %v1288
  %v1379 = vpop.permute.xlu0 %1378
  %1382 = vset.pattern.permute.xlu0 0
  %1383 = vperm.xlu0 %1382, %v1289
  %v1384 = vpop.permute.xlu0 %1383
  %1387 = vset.pattern.permute.xlu0 0
  %1388 = vperm.xlu0 %1387, %v1290
  %v1389 = vpop.permute.xlu0 %1388
  %1392 = vset.pattern.permute.xlu0 0
  %1393 = vperm.xlu0 %1392, %v1291
  %v1394 = vpop.permute.xlu0 %1393
  %1397 = vset.pattern.permute.xlu0 0
  %1398 = vperm.xlu0 %1397, %v1292
  %v1399 = vpop.permute.xlu0 %1398
  %1402 = vset.pattern.permute.xlu0 0
  %1403 = vperm.xlu0 %1402, %v1293
  %v1404 = vpop.permute.xlu0 %1403
  %1407 = vset.pattern.permute.xlu0 0
  %1408 = vperm.xlu0 %1407, %v1294
  %v1409 = vpop.permute.xlu0 %1408
  %1412 = vset.pattern.permute.xlu0 0
  %1413 = vperm.xlu0 %1412, %v1295
  %v1414 = vpop.permute.xlu0 %1413
  %1417 = vset.pattern.permute.xlu0 0
  %1418 = vperm.xlu0 %1417, %v1296
  %v1419 = vpop.permute.xlu0 %1418
  %1422 = vset.pattern.permute.xlu0 0
  %1423 = vperm.xlu0 %1422, %v1297
  %v1424 = vpop.permute.xlu0 %1423
  %1427 = vset.pattern.permute.xlu0 0
  %1428 = vperm.xlu0 %1427, %v1298
  %v1429 = vpop.permute.xlu0 %1428
  %1432 = vset.pattern.permute.xlu0 0
  %1433 = vperm.xlu0 %1432, %v1299
  %v1434 = vpop.permute.xlu0 %1433
  %1437 = vset.pattern.permute.xlu0 0
  %1438 = vperm.xlu0 %1437, %v1300
  %v1439 = vpop.permute.xlu0 %1438
  %1442 = vset.pattern.permute.xlu0 0
  %1443 = vperm.xlu0 %1442, %v1301
  %v1444 = vpop.permute.xlu0 %1443
  %1447 = vset.pattern.permute.xlu0 0
  %1448 = vperm.xlu0 %1447, %v1302
  %v1449 = vpop.permute.xlu0 %1448
  %1452 = vset.pattern.permute.xlu0 0
  %1453 = vperm.xlu0 %1452, %v1303
  %v1454 = vpop.permute.xlu0 %1453
  %1457 = vset.pattern.permute.xlu0 0
  %1458 = vperm.xlu0 %1457, %v1304
  %v1459 = vpop.permute.xlu0 %1458
  %1462 = vset.pattern.permute.xlu0 0
  %1463 = vperm.xlu0 %1462, %v1305
  %v1464 = vpop.permute.xlu0 %1463
  %vm1466 = vcmask 359424
  %v1468 = vsel %vm1466, %v1180, 0
  %v1471 = vsel %vm1466, %v1183, 0
  %v1474 = vsel %vm1466, %v1186, 0
  %v1477 = vsel %vm1466, %v1189, 0
  %v1480 = vsel %vm1466, %v1192, 0
  %v1483 = vsel %vm1466, %v1195, 0
  %v1486 = vsel %vm1466, %v1198, 0
  %v1489 = vsel %vm1466, %v1201, 0
  %v1492 = vsel %vm1466, %v1204, 0
  %v1495 = vsel %vm1466, %v1207, 0
  %v1498 = vsel %vm1466, %v1210, 0
  %v1501 = vsel %vm1466, %v1213, 0
  %v1504 = vsel %vm1466, %v1216, 0
  %v1507 = vsel %vm1466, %v1219, 0
  %v1510 = vsel %vm1466, %v1222, 0
  %v1513 = vsel %vm1466, %v1225, 0
  %v1516 = vsel %vm1466, %v1228, 0
  %v1519 = vsel %vm1466, %v1231, 0
  %v1522 = vsel %vm1466, %v1234, 0
  %v1525 = vsel %vm1466, %v1237, 0
  %v1528 = vsel %vm1466, %v1240, 0
  %v1531 = vsel %vm1466, %v1243, 0
  %v1534 = vsel %vm1466, %v1246, 0
  %v1537 = vsel %vm1466, %v1249, 0
  %v1540 = vsel %vm1466, %v1252, 0
  %v1543 = vsel %vm1466, %v1255, 0
  %v1546 = vsel %vm1466, %v1258, 0
  %v1549 = vsel %vm1466, %v1261, 0
  %v1552 = vsel %vm1466, %v1264, 0
  %v1555 = vsel %vm1466, %v1267, 0
  %v1558 = vsel %vm1466, %v1270, 0
  %v1561 = vsel %vm1466, %v1273, 0
  %vm1563 = vcmask 1043456
  %v1565 = vsel %vm1563, %v1177, 0
  %1567 = vmatprep.subr.mxu0 0.0
  %1568 = vmatpush1.msra.mxu0 %v1140
  %1569 = vmatprep.subr.mxu0 0.0
  %1570 = vmatpush1.msra.mxu0 %v1141
  %1571 = vmatprep.subr.mxu0 0.0
  %1572 = vmatpush1.msra.mxu0 %v1142
  %1573 = vmatprep.subr.mxu0 0.0
  %1574 = vmatpush1.msra.mxu0 %v1143
  %1575 = vmatprep.subr.mxu0 0.0
  %1576 = vmatpush1.msra.mxu0 %v1144
  %1577 = vmatprep.subr.mxu0 0.0
  %1578 = vmatpush1.msra.mxu0 %v1145
  %1579 = vmatprep.subr.mxu0 0.0
  %1580 = vmatpush1.msra.mxu0 %v1146
  %1581 = vmatprep.subr.mxu0 0.0
  %1582 = vmatpush1.msra.mxu0 %v1147
  %1583 = vmatprep.subr.mxu0 0.0
  %1584 = vmatpush1.msra.mxu0 %v1148
  %1585 = vmatprep.subr.mxu0 0.0
  %1586 = vmatpush1.msra.mxu0 %v1149
  %1587 = vmatprep.subr.mxu0 0.0
  %1588 = vmatpush1.msra.mxu0 %v1150
  %1589 = vmatprep.subr.mxu0 0.0
  %1590 = vmatpush1.msra.mxu0 %v1151
  %1591 = vmatprep.subr.mxu0 0.0
  %1592 = vmatpush1.msra.mxu0 %v1152
  %1593 = vmatprep.subr.mxu0 0.0
  %1594 = vmatpush1.msra.mxu0 %v1153
  %1595 = vmatprep.subr.mxu0 0.0
  %1596 = vmatpush1.msra.mxu0 %v1154
  %1597 = vmatprep.subr.mxu0 0.0
  %1598 = vmatpush1.msra.mxu0 %v1155
  %1599 = vmatprep.subr.mxu0 0.0
  %1600 = vmatpush1.msra.mxu0 %v1156
  %1601 = vmatprep.subr.mxu0 0.0
  %1602 = vmatpush1.msra.mxu0 %v1157
  %1603 = vmatprep.subr.mxu0 0.0
  %1604 = vmatpush1.msra.mxu0 %v1158
  %1605 = vmatprep.subr.mxu0 0.0
  %1606 = vmatpush1.msra.mxu0 %v1159
  %1607 = vmatprep.subr.mxu0 0.0
  %1608 = vmatpush1.msra.mxu0 %v1160
  %1609 = vmatprep.subr.mxu0 0.0
  %1610 = vmatpush1.msra.mxu0 %v1161
  %1611 = vmatprep.subr.mxu0 0.0
  %1612 = vmatpush1.msra.mxu0 %v1162
  %1613 = vmatprep.subr.mxu0 0.0
  %1614 = vmatpush1.msra.mxu0 %v1163
  %1615 = vmatprep.subr.mxu0 0.0
  %1616 = vmatpush1.msra.mxu0 %v1164
  %1617 = vmatprep.subr.mxu0 0.0
  %1618 = vmatpush1.msra.mxu0 %v1165
  %1619 = vmatprep.subr.mxu0 0.0
  %1620 = vmatpush1.msra.mxu0 %v1166
  %1621 = vmatprep.subr.mxu0 0.0
  %1622 = vmatpush1.msra.mxu0 %v1167
  %1623 = vmatprep.subr.mxu0 0.0
  %1624 = vmatpush1.msra.mxu0 %v1168
  %1625 = vmatprep.subr.mxu0 0.0
  %1626 = vmatpush1.msra.mxu0 %v1169
  %1627 = vmatprep.subr.mxu0 0.0
  %1628 = vmatpush1.msra.mxu0 %v1170
  %1629 = vmatprep.subr.mxu0 0.0
  %1630 = vmatpush1.msra.mxu0 %v1171
  %1631 = vmatprep.mubr.f32.mxu0 %v1179
  %1632 = vmatmul.mubr.f32.gmra.mrb[0].mxu0 %v1178
  %v1633 = vpop.f32.mrb[0].mxu0
  %v1634 = vadd.f32 %v1309, %v1633
  %v1635 = vpop.f32.mrb[0].mxu0
  %1636 = vmatprep.mubr.f32.mxu0 %v1182
  %1637 = vmatmul.mubr.f32.gmra.mrb[0].mxu0 %v1181
  %v1638 = vpop.f32.mrb[0].mxu0
  %v1639 = vadd.f32 %v1314, %v1638
  %v1640 = vpop.f32.mrb[0].mxu0
  %1641 = vmatprep.mubr.f32.mxu0 %v1185
  %1642 = vmatmul.mubr.f32.gmra.mrb[0].mxu0 %v1184
  %v1643 = vpop.f32.mrb[0].mxu0
  %v1644 = vadd.f32 %v1319, %v1643
  %v1645 = vpop.f32.mrb[0].mxu0
  %1646 = vmatprep.mubr.f32.mxu0 %v1188
  %1647 = vmatmul.mubr.f32.gmra.mrb[0].mxu0 %v1187
  %v1648 = vpop.f32.mrb[0].mxu0
  %v1649 = vadd.f32 %v1324, %v1648
  %v1650 = vpop.f32.mrb[0].mxu0
  %1651 = vmatprep.mubr.f32.mxu0 %v1191
  %1652 = vmatmul.mubr.f32.gmra.mrb[0].mxu0 %v1190
  %v1653 = vpop.f32.mrb[0].mxu0
  %v1654 = vadd.f32 %v1329, %v1653
  %v1655 = vpop.f32.mrb[0].mxu0
  %1656 = vmatprep.mubr.f32.mxu0 %v1194
  %1657 = vmatmul.mubr.f32.gmra.mrb[0].mxu0 %v1193
  %v1658 = vpop.f32.mrb[0].mxu0
  %v1659 = vadd.f32 %v1334, %v1658
  %v1660 = vpop.f32.mrb[0].mxu0
  %1661 = vmatprep.mubr.f32.mxu0 %v1197
  %1662 = vmatmul.mubr.f32.gmra.mrb[0].mxu0 %v1196
  %v1663 = vpop.f32.mrb[0].mxu0
  %v1664 = vadd.f32 %v1339, %v1663
  %v1665 = vpop.f32.mrb[0].mxu0
  %1666 = vmatprep.mubr.f32.mxu0 %v1200
  %1667 = vmatmul.mubr.f32.gmra.mrb[0].mxu0 %v1199
  %v1668 = vpop.f32.mrb[0].mxu0
  %v1669 = vadd.f32 %v1344, %v1668
  %v1670 = vpop.f32.mrb[0].mxu0
  %1671 = vmatprep.mubr.f32.mxu0 %v1203
  %1672 = vmatmul.mubr.f32.gmra.mrb[0].mxu0 %v1202
  %v1673 = vpop.f32.mrb[0].mxu0
  %v1674 = vadd.f32 %v1349, %v1673
  %v1675 = vpop.f32.mrb[0].mxu0
  %1676 = vmatprep.mubr.f32.mxu0 %v1206
  %1677 = vmatmul.mubr.f32.gmra.mrb[0].mxu0 %v1205
  %v1678 = vpop.f32.mrb[0].mxu0
  %v1679 = vadd.f32 %v1354, %v1678
  %v1680 = vpop.f32.mrb[0].mxu0
  %1681 = vmatprep.mubr.f32.mxu0 %v1209
  %1682 = vmatmul.mubr.f32.gmra.mrb[0].mxu0 %v1208
  %v1683 = vpop.f32.mrb[0].mxu0
  %v1684 = vadd.f32 %v1359, %v1683
  %v1685 = vpop.f32.mrb[0].mxu0
  %1686 = vmatprep.mubr.f32.mxu0 %v1212
  %1687 = vmatmul.mubr.f32.gmra.mrb[0].mxu0 %v1211
  %v1688 = vpop.f32.mrb[0].mxu0
  %v1689 = vadd.f32 %v1364, %v1688
  %v1690 = vpop.f32.mrb[0].mxu0
  %1691 = vmatprep.mubr.f32.mxu0 %v1215
  %1692 = vmatmul.mubr.f32.gmra.mrb[0].mxu0 %v1214
  %v1693 = vpop.f32.mrb[0].mxu0
  %v1694 = vadd.f32 %v1369, %v1693
  %v1695 = vpop.f32.mrb[0].mxu0
  %1696 = vmatprep.mubr.f32.mxu0 %v1218
  %1697 = vmatmul.mubr.f32.gmra.mrb[0].mxu0 %v1217
  %v1698 = vpop.f32.mrb[0].mxu0
  %v1699 = vadd.f32 %v1374, %v1698
  %v1700 = vpop.f32.mrb[0].mxu0
  %1701 = vmatprep.mubr.f32.mxu0 %v1221
  %1702 = vmatmul.mubr.f32.gmra.mrb[0].mxu0 %v1220
  %v1703 = vpop.f32.mrb[0].mxu0
  %v1704 = vadd.f32 %v1379, %v1703
  %v1705 = vpop.f32.mrb[0].mxu0
  %1706 = vmatprep.mubr.f32.mxu0 %v1224
  %1707 = vmatmul.mubr.f32.gmra.mrb[0].mxu0 %v1223
  %v1708 = vpop.f32.mrb[0].mxu0
  %v1709 = vadd.f32 %v1384, %v1708
  %v1710 = vpop.f32.mrb[0].mxu0
  %1711 = vmatprep.mubr.f32.mxu0 %v1227
  %1712 = vmatmul.mubr.f32.gmra.mrb[0].mxu0 %v1226
  %v1713 = vpop.f32.mrb[0].mxu0
  %v1714 = vadd.f32 %v1389, %v1713
  %v1715 = vpop.f32.mrb[0].mxu0
  %1716 = vmatprep.mubr.f32.mxu0 %v1230
  %1717 = vmatmul.mubr.f32.gmra.mrb[0].mxu0 %v1229
  %v1718 = vpop.f32.mrb[0].mxu0
  %v1719 = vadd.f32 %v1394, %v1718
  %v1720 = vpop.f32.mrb[0].mxu0
  %1721 = vmatprep.mubr.f32.mxu0 %v1233
  %1722 = vmatmul.mubr.f32.gmra.mrb[0].mxu0 %v1232
  %v1723 = vpop.f32.mrb[0].mxu0
  %v1724 = vadd.f32 %v1399, %v1723
  %v1725 = vpop.f32.mrb[0].mxu0
  %1726 = vmatprep.mubr.f32.mxu0 %v1236
  %1727 = vmatmul.mubr.f32.gmra.mrb[0].mxu0 %v1235
  %v1728 = vpop.f32.mrb[0].mxu0
  %v1729 = vadd.f32 %v1404, %v1728
  %v1730 = vpop.f32.mrb[0].mxu0
  %1731 = vmatprep.mubr.f32.mxu0 %v1239
  %1732 = vmatmul.mubr.f32.gmra.mrb[0].mxu0 %v1238
  %v1733 = vpop.f32.mrb[0].mxu0
  %v1734 = vadd.f32 %v1409, %v1733
  %v1735 = vpop.f32.mrb[0].mxu0
  %1736 = vmatprep.mubr.f32.mxu0 %v1242
  %1737 = vmatmul.mubr.f32.gmra.mrb[0].mxu0 %v1241
  %v1738 = vpop.f32.mrb[0].mxu0
  %v1739 = vadd.f32 %v1414, %v1738
  %v1740 = vpop.f32.mrb[0].mxu0
  %1741 = vmatprep.mubr.f32.mxu0 %v1245
  %1742 = vmatmul.mubr.f32.gmra.mrb[0].mxu0 %v1244
  %v1743 = vpop.f32.mrb[0].mxu0
  %v1744 = vadd.f32 %v1419, %v1743
  %v1745 = vpop.f32.mrb[0].mxu0
  %1746 = vmatprep.mubr.f32.mxu0 %v1248
  %1747 = vmatmul.mubr.f32.gmra.mrb[0].mxu0 %v1247
  %v1748 = vpop.f32.mrb[0].mxu0
  %v1749 = vadd.f32 %v1424, %v1748
  %v1750 = vpop.f32.mrb[0].mxu0
  %1751 = vmatprep.mubr.f32.mxu0 %v1251
  %1752 = vmatmul.mubr.f32.gmra.mrb[0].mxu0 %v1250
  %v1753 = vpop.f32.mrb[0].mxu0
  %v1754 = vadd.f32 %v1429, %v1753
  %v1755 = vpop.f32.mrb[0].mxu0
  %1756 = vmatprep.mubr.f32.mxu0 %v1254
  %1757 = vmatmul.mubr.f32.gmra.mrb[0].mxu0 %v1253
  %v1758 = vpop.f32.mrb[0].mxu0
  %v1759 = vadd.f32 %v1434, %v1758
  %v1760 = vpop.f32.mrb[0].mxu0
  %1761 = vmatprep.mubr.f32.mxu0 %v1257
  %1762 = vmatmul.mubr.f32.gmra.mrb[0].mxu0 %v1256
  %v1763 = vpop.f32.mrb[0].mxu0
  %v1764 = vadd.f32 %v1439, %v1763
  %v1765 = vpop.f32.mrb[0].mxu0
  %1766 = vmatprep.mubr.f32.mxu0 %v1260
  %1767 = vmatmul.mubr.f32.gmra.mrb[0].mxu0 %v1259
  %v1768 = vpop.f32.mrb[0].mxu0
  %v1769 = vadd.f32 %v1444, %v1768
  %v1770 = vpop.f32.mrb[0].mxu0
  %1771 = vmatprep.mubr.f32.mxu0 %v1263
  %1772 = vmatmul.mubr.f32.gmra.mrb[0].mxu0 %v1262
  %v1773 = vpop.f32.mrb[0].mxu0
  %v1774 = vadd.f32 %v1449, %v1773
  %v1775 = vpop.f32.mrb[0].mxu0
  %1776 = vmatprep.mubr.f32.mxu0 %v1266
  %1777 = vmatmul.mubr.f32.gmra.mrb[0].mxu0 %v1265
  %v1778 = vpop.f32.mrb[0].mxu0
  %v1779 = vadd.f32 %v1454, %v1778
  %v1780 = vpop.f32.mrb[0].mxu0
  %1781 = vmatprep.mubr.f32.mxu0 %v1269
  %1782 = vmatmul.mubr.f32.gmra.mrb[0].mxu0 %v1268
  %v1783 = vpop.f32.mrb[0].mxu0
  %v1784 = vadd.f32 %v1459, %v1783
  %v1785 = vpop.f32.mrb[0].mxu0
  %1786 = vmatprep.mubr.f32.mxu0 %v1272
  %1787 = vmatmul.mubr.f32.gmra.mrb[0].mxu0 %v1271
  %v1788 = vpop.f32.mrb[0].mxu0
  %v1789 = vadd.f32 %v1464, %v1788
  %v1790 = vpop.f32.mrb[0].mxu0
  %1791 = vdwg.mxu0
  %1792 = vmatprep.subr.mxu0 0.0
  %1793 = vmatpush1.msra.mxu0 %v1172
  %1794 = vmatprep.subr.mxu0 0.0
  %1795 = vmatpush1.msra.mxu0 %v1173
  %1796 = vmatprep.subr.mxu0 0.0
  %1797 = vmatpush1.msra.mxu0 %v1174
  %1798 = vmatprep.subr.mxu0 0.0
  %1799 = vmatpush1.msra.mxu0 %v1175
  %1800 = vmatprep.subr.mxu0 0.0
  %1801 = vmatpush1.msra.mxu0 %v1176
  %1802 = vmatprep.subr.mxu0 0.0
  %1803 = vmatpush1.msra.mxu0 %v1565
  %1804 = vmatprep.subr.mxu0 0.0
  %1805 = vmatpush1.msra.mxu0 0.0
  %1806 = vmatprep.subr.mxu0 0.0
  %1807 = vmatpush1.msra.mxu0 0.0
  %1808 = vmatprep.subr.mxu0 0.0
  %1809 = vmatpush1.msra.mxu0 0.0
  %1810 = vmatprep.subr.mxu0 0.0
  %1811 = vmatpush1.msra.mxu0 0.0
  %1812 = vmatprep.subr.mxu0 0.0
  %1813 = vmatpush1.msra.mxu0 0.0
  %1814 = vmatprep.subr.mxu0 0.0
  %1815 = vmatpush1.msra.mxu0 0.0
  %1816 = vmatprep.subr.mxu0 0.0
  %1817 = vmatpush1.msra.mxu0 0.0
  %1818 = vmatprep.subr.mxu0 0.0
  %1819 = vmatpush1.msra.mxu0 0.0
  %1820 = vmatprep.subr.mxu0 0.0
  %1821 = vmatpush1.msra.mxu0 0.0
  %1822 = vmatprep.subr.mxu0 0.0
  %1823 = vmatpush1.msra.mxu0 0.0
  %1824 = vmatprep.subr.mxu0 0.0
  %1825 = vmatpush1.msra.mxu0 0.0
  %1826 = vmatprep.subr.mxu0 0.0
  %1827 = vmatpush1.msra.mxu0 0.0
  %1828 = vmatprep.subr.mxu0 0.0
  %1829 = vmatpush1.msra.mxu0 0.0
  %1830 = vmatprep.subr.mxu0 0.0
  %1831 = vmatpush1.msra.mxu0 0.0
  %1832 = vmatprep.subr.mxu0 0.0
  %1833 = vmatpush1.msra.mxu0 0.0
  %1834 = vmatprep.subr.mxu0 0.0
  %1835 = vmatpush1.msra.mxu0 0.0
  %1836 = vmatprep.subr.mxu0 0.0
  %1837 = vmatpush1.msra.mxu0 0.0
  %1838 = vmatprep.subr.mxu0 0.0
  %1839 = vmatpush1.msra.mxu0 0.0
  %1840 = vmatprep.subr.mxu0 0.0
  %1841 = vmatpush1.msra.mxu0 0.0
  %1842 = vmatprep.subr.mxu0 0.0
  %1843 = vmatpush1.msra.mxu0 0.0
  %1844 = vmatprep.subr.mxu0 0.0
  %1845 = vmatpush1.msra.mxu0 0.0
  %1846 = vmatprep.subr.mxu0 0.0
  %1847 = vmatpush1.msra.mxu0 0.0
  %1848 = vmatprep.subr.mxu0 0.0
  %1849 = vmatpush1.msra.mxu0 0.0
  %1850 = vmatprep.subr.mxu0 0.0
  %1851 = vmatpush1.msra.mxu0 0.0
  %1852 = vmatprep.subr.mxu0 0.0
  %1853 = vmatpush1.msra.mxu0 0.0
  %1854 = vmatprep.subr.mxu0 0.0
  %1855 = vmatpush1.msra.mxu0 0.0
  %1856 = vmatprep.mubr.f32.mxu0 0.0
  %1857 = vmatmul.mubr.f32.gmra.mrb[0].mxu0 %v1468
  %v1858 = vpop.f32.mrb[0].mxu0
  %v1859 = vadd.f32 %v1634, %v1858
  %v1860 = vpop.f32.mrb[0].mxu0
  %1861 = vmatprep.mubr.f32.mxu0 0.0
  %1862 = vmatmul.mubr.f32.gmra.mrb[0].mxu0 %v1471
  %v1863 = vpop.f32.mrb[0].mxu0
  %v1864 = vadd.f32 %v1639, %v1863
  %v1865 = vpop.f32.mrb[0].mxu0
  %1866 = vmatprep.mubr.f32.mxu0 0.0
  %1867 = vmatmul.mubr.f32.gmra.mrb[0].mxu0 %v1474
  %v1868 = vpop.f32.mrb[0].mxu0
  %v1869 = vadd.f32 %v1644, %v1868
  %v1870 = vpop.f32.mrb[0].mxu0
  %1871 = vmatprep.mubr.f32.mxu0 0.0
  %1872 = vmatmul.mubr.f32.gmra.mrb[0].mxu0 %v1477
  %v1873 = vpop.f32.mrb[0].mxu0
  %v1874 = vadd.f32 %v1649, %v1873
  %v1875 = vpop.f32.mrb[0].mxu0
  %1876 = vmatprep.mubr.f32.mxu0 0.0
  %1877 = vmatmul.mubr.f32.gmra.mrb[0].mxu0 %v1480
  %v1878 = vpop.f32.mrb[0].mxu0
  %v1879 = vadd.f32 %v1654, %v1878
  %v1880 = vpop.f32.mrb[0].mxu0
  %1881 = vmatprep.mubr.f32.mxu0 0.0
  %1882 = vmatmul.mubr.f32.gmra.mrb[0].mxu0 %v1483
  %v1883 = vpop.f32.mrb[0].mxu0
  %v1884 = vadd.f32 %v1659, %v1883
  %v1885 = vpop.f32.mrb[0].mxu0
  %1886 = vmatprep.mubr.f32.mxu0 0.0
  %1887 = vmatmul.mubr.f32.gmra.mrb[0].mxu0 %v1486
  %v1888 = vpop.f32.mrb[0].mxu0
  %v1889 = vadd.f32 %v1664, %v1888
  %v1890 = vpop.f32.mrb[0].mxu0
  %1891 = vmatprep.mubr.f32.mxu0 0.0
  %1892 = vmatmul.mubr.f32.gmra.mrb[0].mxu0 %v1489
  %v1893 = vpop.f32.mrb[0].mxu0
  %v1894 = vadd.f32 %v1669, %v1893
  %v1895 = vpop.f32.mrb[0].mxu0
  %1896 = vmatprep.mubr.f32.mxu0 0.0
  %1897 = vmatmul.mubr.f32.gmra.mrb[0].mxu0 %v1492
  %v1898 = vpop.f32.mrb[0].mxu0
  %v1899 = vadd.f32 %v1674, %v1898
  %v1900 = vpop.f32.mrb[0].mxu0
  %1901 = vmatprep.mubr.f32.mxu0 0.0
  %1902 = vmatmul.mubr.f32.gmra.mrb[0].mxu0 %v1495
  %v1903 = vpop.f32.mrb[0].mxu0
  %v1904 = vadd.f32 %v1679, %v1903
  %v1905 = vpop.f32.mrb[0].mxu0
  %1906 = vmatprep.mubr.f32.mxu0 0.0
  %1907 = vmatmul.mubr.f32.gmra.mrb[0].mxu0 %v1498
  %v1908 = vpop.f32.mrb[0].mxu0
  %v1909 = vadd.f32 %v1684, %v1908
  %v1910 = vpop.f32.mrb[0].mxu0
  %1911 = vmatprep.mubr.f32.mxu0 0.0
  %1912 = vmatmul.mubr.f32.gmra.mrb[0].mxu0 %v1501
  %v1913 = vpop.f32.mrb[0].mxu0
  %v1914 = vadd.f32 %v1689, %v1913
  %v1915 = vpop.f32.mrb[0].mxu0
  %1916 = vmatprep.mubr.f32.mxu0 0.0
  %1917 = vmatmul.mubr.f32.gmra.mrb[0].mxu0 %v1504
  %v1918 = vpop.f32.mrb[0].mxu0
  %v1919 = vadd.f32 %v1694, %v1918
  %v1920 = vpop.f32.mrb[0].mxu0
  %1921 = vmatprep.mubr.f32.mxu0 0.0
  %1922 = vmatmul.mubr.f32.gmra.mrb[0].mxu0 %v1507
  %v1923 = vpop.f32.mrb[0].mxu0
  %v1924 = vadd.f32 %v1699, %v1923
  %v1925 = vpop.f32.mrb[0].mxu0
  %1926 = vmatprep.mubr.f32.mxu0 0.0
  %1927 = vmatmul.mubr.f32.gmra.mrb[0].mxu0 %v1510
  %v1928 = vpop.f32.mrb[0].mxu0
  %v1929 = vadd.f32 %v1704, %v1928
  %v1930 = vpop.f32.mrb[0].mxu0
  %1931 = vmatprep.mubr.f32.mxu0 0.0
  %1932 = vmatmul.mubr.f32.gmra.mrb[0].mxu0 %v1513
  %v1933 = vpop.f32.mrb[0].mxu0
  %v1934 = vadd.f32 %v1709, %v1933
  %v1935 = vpop.f32.mrb[0].mxu0
  %1936 = vmatprep.mubr.f32.mxu0 0.0
  %1937 = vmatmul.mubr.f32.gmra.mrb[0].mxu0 %v1516
  %v1938 = vpop.f32.mrb[0].mxu0
  %v1939 = vadd.f32 %v1714, %v1938
  %v1940 = vpop.f32.mrb[0].mxu0
  %1941 = vmatprep.mubr.f32.mxu0 0.0
  %1942 = vmatmul.mubr.f32.gmra.mrb[0].mxu0 %v1519
  %v1943 = vpop.f32.mrb[0].mxu0
  %v1944 = vadd.f32 %v1719, %v1943
  %v1945 = vpop.f32.mrb[0].mxu0
  %1946 = vmatprep.mubr.f32.mxu0 0.0
  %1947 = vmatmul.mubr.f32.gmra.mrb[0].mxu0 %v1522
  %v1948 = vpop.f32.mrb[0].mxu0
  %v1949 = vadd.f32 %v1724, %v1948
  %v1950 = vpop.f32.mrb[0].mxu0
  %1951 = vmatprep.mubr.f32.mxu0 0.0
  %1952 = vmatmul.mubr.f32.gmra.mrb[0].mxu0 %v1525
  %v1953 = vpop.f32.mrb[0].mxu0
  %v1954 = vadd.f32 %v1729, %v1953
  %v1955 = vpop.f32.mrb[0].mxu0
  %1956 = vmatprep.mubr.f32.mxu0 0.0
  %1957 = vmatmul.mubr.f32.gmra.mrb[0].mxu0 %v1528
  %v1958 = vpop.f32.mrb[0].mxu0
  %v1959 = vadd.f32 %v1734, %v1958
  %v1960 = vpop.f32.mrb[0].mxu0
  %1961 = vmatprep.mubr.f32.mxu0 0.0
  %1962 = vmatmul.mubr.f32.gmra.mrb[0].mxu0 %v1531
  %v1963 = vpop.f32.mrb[0].mxu0
  %v1964 = vadd.f32 %v1739, %v1963
  %v1965 = vpop.f32.mrb[0].mxu0
  %1966 = vmatprep.mubr.f32.mxu0 0.0
  %1967 = vmatmul.mubr.f32.gmra.mrb[0].mxu0 %v1534
  %v1968 = vpop.f32.mrb[0].mxu0
  %v1969 = vadd.f32 %v1744, %v1968
  %v1970 = vpop.f32.mrb[0].mxu0
  %1971 = vmatprep.mubr.f32.mxu0 0.0
  %1972 = vmatmul.mubr.f32.gmra.mrb[0].mxu0 %v1537
  %v1973 = vpop.f32.mrb[0].mxu0
  %v1974 = vadd.f32 %v1749, %v1973
  %v1975 = vpop.f32.mrb[0].mxu0
  %1976 = vmatprep.mubr.f32.mxu0 0.0
  %1977 = vmatmul.mubr.f32.gmra.mrb[0].mxu0 %v1540
  %v1978 = vpop.f32.mrb[0].mxu0
  %v1979 = vadd.f32 %v1754, %v1978
  %v1980 = vpop.f32.mrb[0].mxu0
  %1981 = vmatprep.mubr.f32.mxu0 0.0
  %1982 = vmatmul.mubr.f32.gmra.mrb[0].mxu0 %v1543
  %v1983 = vpop.f32.mrb[0].mxu0
  %v1984 = vadd.f32 %v1759, %v1983
  %v1985 = vpop.f32.mrb[0].mxu0
  %1986 = vmatprep.mubr.f32.mxu0 0.0
  %1987 = vmatmul.mubr.f32.gmra.mrb[0].mxu0 %v1546
  %v1988 = vpop.f32.mrb[0].mxu0
  %v1989 = vadd.f32 %v1764, %v1988
  %v1990 = vpop.f32.mrb[0].mxu0
  %1991 = vmatprep.mubr.f32.mxu0 0.0
  %1992 = vmatmul.mubr.f32.gmra.mrb[0].mxu0 %v1549
  %v1993 = vpop.f32.mrb[0].mxu0
  %v1994 = vadd.f32 %v1769, %v1993
  %v1995 = vpop.f32.mrb[0].mxu0
  %1996 = vmatprep.mubr.f32.mxu0 0.0
  %1997 = vmatmul.mubr.f32.gmra.mrb[0].mxu0 %v1552
  %v1998 = vpop.f32.mrb[0].mxu0
  %v1999 = vadd.f32 %v1774, %v1998
  %v2000 = vpop.f32.mrb[0].mxu0
  %2001 = vmatprep.mubr.f32.mxu0 0.0
  %2002 = vmatmul.mubr.f32.gmra.mrb[0].mxu0 %v1555
  %v2003 = vpop.f32.mrb[0].mxu0
  %v2004 = vadd.f32 %v1779, %v2003
  %v2005 = vpop.f32.mrb[0].mxu0
  %2006 = vmatprep.mubr.f32.mxu0 0.0
  %2007 = vmatmul.mubr.f32.gmra.mrb[0].mxu0 %v1558
  %v2008 = vpop.f32.mrb[0].mxu0
  %v2009 = vadd.f32 %v1784, %v2008
  %v2010 = vpop.f32.mrb[0].mxu0
  %2011 = vmatprep.mubr.f32.mxu0 0.0
  %2012 = vmatmul.mubr.f32.gmra.mrb[0].mxu0 %v1561
  %v2013 = vpop.f32.mrb[0].mxu0
  %v2014 = vadd.f32 %v1789, %v2013
  %v2015 = vpop.f32.mrb[0].mxu0
  %2016 = vdwg.mxu0
  %vm2017 = vcmp.ge.f32.partialorder %v1859, 0.0
  %vm2018 = vcmp.ge.f32.partialorder %v1864, 0.0
  %vm2019 = vcmp.ge.f32.partialorder %v1869, 0.0
  %vm2020 = vcmp.ge.f32.partialorder %v1874, 0.0
  %vm2021 = vcmp.ge.f32.partialorder %v1879, 0.0
  %vm2022 = vcmp.ge.f32.partialorder %v1884, 0.0
  %vm2023 = vcmp.ge.f32.partialorder %v1889, 0.0
  %vm2024 = vcmp.ge.f32.partialorder %v1894, 0.0
  %vm2025 = vcmp.ge.f32.partialorder %v1899, 0.0
  %vm2026 = vcmp.ge.f32.partialorder %v1904, 0.0
  %vm2027 = vcmp.ge.f32.partialorder %v1909, 0.0
  %vm2028 = vcmp.ge.f32.partialorder %v1914, 0.0
  %vm2029 = vcmp.ge.f32.partialorder %v1919, 0.0
  %vm2030 = vcmp.ge.f32.partialorder %v1924, 0.0
  %vm2031 = vcmp.ge.f32.partialorder %v1929, 0.0
  %vm2032 = vcmp.ge.f32.partialorder %v1934, 0.0
  %vm2033 = vcmp.ge.f32.partialorder %v1939, 0.0
  %vm2034 = vcmp.ge.f32.partialorder %v1944, 0.0
  %vm2035 = vcmp.ge.f32.partialorder %v1949, 0.0
  %vm2036 = vcmp.ge.f32.partialorder %v1954, 0.0
  %vm2037 = vcmp.ge.f32.partialorder %v1959, 0.0
  %vm2038 = vcmp.ge.f32.partialorder %v1964, 0.0
  %vm2039 = vcmp.ge.f32.partialorder %v1969, 0.0
  %vm2040 = vcmp.ge.f32.partialorder %v1974, 0.0
  %vm2041 = vcmp.ge.f32.partialorder %v1979, 0.0
  %vm2042 = vcmp.ge.f32.partialorder %v1984, 0.0
  %vm2043 = vcmp.ge.f32.partialorder %v1989, 0.0
  %vm2044 = vcmp.ge.f32.partialorder %v1994, 0.0
  %vm2045 = vcmp.ge.f32.partialorder %v1999, 0.0
  %vm2046 = vcmp.ge.f32.partialorder %v2004, 0.0
  %vm2047 = vcmp.ge.f32.partialorder %v2009, 0.0
  %vm2048 = vcmp.ge.f32.partialorder %v2014, 0.0
  %v2049 = vmul.f32 %v1859, 0.05
  %v2050 = vmul.f32 %v1864, 0.05
  %v2051 = vmul.f32 %v1869, 0.05
  %v2052 = vmul.f32 %v1874, 0.05
  %v2053 = vmul.f32 %v1879, 0.05
  %v2054 = vmul.f32 %v1884, 0.05
  %v2055 = vmul.f32 %v1889, 0.05
  %v2056 = vmul.f32 %v1894, 0.05
  %v2057 = vmul.f32 %v1899, 0.05
  %v2058 = vmul.f32 %v1904, 0.05
  %v2059 = vmul.f32 %v1909, 0.05
  %v2060 = vmul.f32 %v1914, 0.05
  %v2061 = vmul.f32 %v1919, 0.05
  %v2062 = vmul.f32 %v1924, 0.05
  %v2063 = vmul.f32 %v1929, 0.05
  %v2064 = vmul.f32 %v1934, 0.05
  %v2065 = vmul.f32 %v1939, 0.05
  %v2066 = vmul.f32 %v1944, 0.05
  %v2067 = vmul.f32 %v1949, 0.05
  %v2068 = vmul.f32 %v1954, 0.05
  %v2069 = vmul.f32 %v1959, 0.05
  %v2070 = vmul.f32 %v1964, 0.05
  %v2071 = vmul.f32 %v1969, 0.05
  %v2072 = vmul.f32 %v1974, 0.05
  %v2073 = vmul.f32 %v1979, 0.05
  %v2074 = vmul.f32 %v1984, 0.05
  %v2075 = vmul.f32 %v1989, 0.05
  %v2076 = vmul.f32 %v1994, 0.05
  %v2077 = vmul.f32 %v1999, 0.05
  %v2078 = vmul.f32 %v2004, 0.05
  %v2079 = vmul.f32 %v2009, 0.05
  %v2080 = vmul.f32 %v2014, 0.05
  %v2081 = vsel %vm2017, %v1859, %v2049
  %v2082 = vsel %vm2018, %v1864, %v2050
  %v2083 = vsel %vm2019, %v1869, %v2051
  %v2084 = vsel %vm2020, %v1874, %v2052
  %v2085 = vsel %vm2021, %v1879, %v2053
  %v2086 = vsel %vm2022, %v1884, %v2054
  %v2087 = vsel %vm2023, %v1889, %v2055
  %v2088 = vsel %vm2024, %v1894, %v2056
  %v2089 = vsel %vm2025, %v1899, %v2057
  %v2090 = vsel %vm2026, %v1904, %v2058
  %v2091 = vsel %vm2027, %v1909, %v2059
  %v2092 = vsel %vm2028, %v1914, %v2060
  %v2093 = vsel %vm2029, %v1919, %v2061
  %v2094 = vsel %vm2030, %v1924, %v2062
  %v2095 = vsel %vm2031, %v1929, %v2063
  %v2096 = vsel %vm2032, %v1934, %v2064
  %v2097 = vsel %vm2033, %v1939, %v2065
  %v2098 = vsel %vm2034, %v1944, %v2066
  %v2099 = vsel %vm2035, %v1949, %v2067
  %v2100 = vsel %vm2036, %v1954, %v2068
  %v2101 = vsel %vm2037, %v1959, %v2069
  %v2102 = vsel %vm2038, %v1964, %v2070
  %v2103 = vsel %vm2039, %v1969, %v2071
  %v2104 = vsel %vm2040, %v1974, %v2072
  %v2105 = vsel %vm2041, %v1979, %v2073
  %v2106 = vsel %vm2042, %v1984, %v2074
  %v2107 = vsel %vm2043, %v1989, %v2075
  %v2108 = vsel %vm2044, %v1994, %v2076
  %v2109 = vsel %vm2045, %v1999, %v2077
  %v2110 = vsel %vm2046, %v2004, %v2078
  %v2111 = vsel %vm2047, %v2009, %v2079
  %v2112 = vsel %vm2048, %v2014, %v2080
  %v2113 = vld [vmem:[%s6] sm:$0xff]
  %v2114 = vld [vmem:[%s6 + $0x8] sm:$0xff]
  %v2115 = vld [vmem:[%s6 + $0x10] sm:$0xff]
  %v2116 = vld [vmem:[%s6 + $0x18] sm:$0xff]
  %v2117 = vld [vmem:[%s6 + $0x20] sm:$0xff]
  %v2118 = vld [vmem:[%s6 + $0x28] sm:$0xff]
  %v2119 = vld [vmem:[%s6 + $0x30] sm:$0xff]
  %v2120 = vld [vmem:[%s6 + $0x38] sm:$0xff]
  %v2121 = vld [vmem:[%s6 + $0x40] sm:$0xff]
  %v2122 = vld [vmem:[%s6 + $0x48] sm:$0xff]
  %v2123 = vld [vmem:[%s6 + $0x50] sm:$0xff]
  %v2124 = vld [vmem:[%s6 + $0x58] sm:$0xff]
  %v2125 = vld [vmem:[%s6 + $0x60] sm:$0xff]
  %v2126 = vld [vmem:[%s6 + $0x68] sm:$0xff]
  %v2127 = vld [vmem:[%s6 + $0x70] sm:$0xff]
  %v2128 = vld [vmem:[%s6 + $0x78] sm:$0xff]
  %v2129 = vld [vmem:[%s6 + $0x80] sm:$0xff]
  %v2130 = vld [vmem:[%s6 + $0x88] sm:$0xff]
  %v2131 = vld [vmem:[%s6 + $0x90] sm:$0xff]
  %v2132 = vld [vmem:[%s6 + $0x98] sm:$0xff]
  %v2133 = vld [vmem:[%s6 + $0xa0] sm:$0xff]
  %v2134 = vld [vmem:[%s6 + $0xa8] sm:$0xff]
  %v2135 = vld [vmem:[%s6 + $0xb0] sm:$0xff]
  %v2136 = vld [vmem:[%s6 + $0xb8] sm:$0xff]
  %v2137 = vld [vmem:[%s6 + $0xc0] sm:$0xff]
  %v2138 = vld [vmem:[%s6 + $0xc8] sm:$0xff]
  %v2139 = vld [vmem:[%s6 + $0xd0] sm:$0xff]
  %v2140 = vld [vmem:[%s6 + $0xd8] sm:$0xff]
  %v2141 = vld [vmem:[%s6 + $0xe0] sm:$0xff]
  %v2142 = vld [vmem:[%s6 + $0xe8] sm:$0xff]
  %v2143 = vld [vmem:[%s6 + $0xf0] sm:$0xff]
  %v2144 = vld [vmem:[%s6 + $0xf8] sm:$0xff]
  %v2145 = vld [vmem:[%s6 + $0x100] sm:$0xff]
  %v2146 = vld [vmem:[%s6 + $0x108] sm:$0xff]
  %v2147 = vld [vmem:[%s6 + $0x110] sm:$0xff]
  %v2148 = vld [vmem:[%s6 + $0x118] sm:$0xff]
  %v2149 = vld [vmem:[%s6 + $0x120] sm:$0xff]
  %v2150 = vld [vmem:[%s6 + $0x128] sm:$0xff]
  %v2151 = vld [vmem:[%s6 + $0x130] sm:$0xff]
  %v2152 = vld [vmem:[%s6 + $0x138] sm:$0xff]
  %v2153 = vld [vmem:[%s6 + $0x140] sm:$0xff]
  %v2154 = vld [vmem:[%s6 + $0x148] sm:$0xff]
  %v2155 = vld [vmem:[%s6 + $0x150] sm:$0xff]
  %v2156 = vld [vmem:[%s6 + $0x158] sm:$0xff]
  %v2157 = vld [vmem:[%s6 + $0x160] sm:$0xff]
  %v2158 = vld [vmem:[%s6 + $0x168] sm:$0xff]
  %v2159 = vld [vmem:[%s6 + $0x170] sm:$0xff]
  %v2160 = vld [vmem:[%s6 + $0x178] sm:$0xff]
  %v2161 = vld [vmem:[%s6 + $0x180] sm:$0xff]
  %v2162 = vld [vmem:[%s6 + $0x188] sm:$0xff]
  %v2163 = vld [vmem:[%s7] sm:$0xff]
  %v2164 = vld [vmem:[%s7 + $0x8] sm:$0xff]
  %v2165 = vld [vmem:[%s7 + $0x10] sm:$0xff]
  %v2166 = vld [vmem:[%s7 + $0x18] sm:$0xff]
  %v2167 = vld [vmem:[%s7 + $0x20] sm:$0xff]
  %v2168 = vld [vmem:[%s7 + $0x28] sm:$0xff]
  %v2169 = vld [vmem:[%s7 + $0x30] sm:$0xff]
  %v2170 = vld [vmem:[%s7 + $0x38] sm:$0xff]
  %v2171 = vld [vmem:[%s7 + $0x40] sm:$0xff]
  %v2172 = vld [vmem:[%s7 + $0x48] sm:$0xff]
  %v2173 = vld [vmem:[%s7 + $0x50] sm:$0xff]
  %v2174 = vld [vmem:[%s7 + $0x58] sm:$0xff]
  %v2175 = vld [vmem:[%s7 + $0x60] sm:$0xff]
  %v2176 = vld [vmem:[%s7 + $0x68] sm:$0xff]
  %v2177 = vld [vmem:[%s7 + $0x70] sm:$0xff]
  %v2178 = vld [vmem:[%s7 + $0x78] sm:$0xff]
  %v2179 = vld [vmem:[%s7 + $0x80] sm:$0xff]
  %v2180 = vld [vmem:[%s7 + $0x88] sm:$0xff]
  %v2181 = vld [vmem:[%s7 + $0x90] sm:$0xff]
  %v2182 = vld [vmem:[%s7 + $0x98] sm:$0xff]
  %v2183 = vld [vmem:[%s7 + $0xa0] sm:$0xff]
  %v2184 = vld [vmem:[%s7 + $0xa8] sm:$0xff]
  %v2185 = vld [vmem:[%s7 + $0xb0] sm:$0xff]
  %v2186 = vld [vmem:[%s7 + $0xb8] sm:$0xff]
  %v2187 = vld [vmem:[%s7 + $0xc0] sm:$0xff]
  %2189 = vset.pattern.permute.xlu0 0
  %2190 = vperm.xlu0 %2189, %v2163
  %v2191 = vpop.permute.xlu0 %2190
  %2194 = vset.pattern.permute.xlu0 0
  %2195 = vperm.xlu0 %2194, %v2164
  %v2196 = vpop.permute.xlu0 %2195
  %2199 = vset.pattern.permute.xlu0 0
  %2200 = vperm.xlu0 %2199, %v2165
  %v2201 = vpop.permute.xlu0 %2200
  %2204 = vset.pattern.permute.xlu0 0
  %2205 = vperm.xlu0 %2204, %v2166
  %v2206 = vpop.permute.xlu0 %2205
  %2209 = vset.pattern.permute.xlu0 0
  %2210 = vperm.xlu0 %2209, %v2167
  %v2211 = vpop.permute.xlu0 %2210
  %2214 = vset.pattern.permute.xlu0 0
  %2215 = vperm.xlu0 %2214, %v2168
  %v2216 = vpop.permute.xlu0 %2215
  %2219 = vset.pattern.permute.xlu0 0
  %2220 = vperm.xlu0 %2219, %v2169
  %v2221 = vpop.permute.xlu0 %2220
  %2224 = vset.pattern.permute.xlu0 0
  %2225 = vperm.xlu0 %2224, %v2170
  %v2226 = vpop.permute.xlu0 %2225
  %2229 = vset.pattern.permute.xlu0 0
  %2230 = vperm.xlu0 %2229, %v2171
  %v2231 = vpop.permute.xlu0 %2230
  %2234 = vset.pattern.permute.xlu0 0
  %2235 = vperm.xlu0 %2234, %v2172
  %v2236 = vpop.permute.xlu0 %2235
  %2239 = vset.pattern.permute.xlu0 0
  %2240 = vperm.xlu0 %2239, %v2173
  %v2241 = vpop.permute.xlu0 %2240
  %2244 = vset.pattern.permute.xlu0 0
  %2245 = vperm.xlu0 %2244, %v2174
  %v2246 = vpop.permute.xlu0 %2245
  %2249 = vset.pattern.permute.xlu0 0
  %2250 = vperm.xlu0 %2249, %v2175
  %v2251 = vpop.permute.xlu0 %2250
  %2254 = vset.pattern.permute.xlu0 0
  %2255 = vperm.xlu0 %2254, %v2176
  %v2256 = vpop.permute.xlu0 %2255
  %2259 = vset.pattern.permute.xlu0 0
  %2260 = vperm.xlu0 %2259, %v2177
  %v2261 = vpop.permute.xlu0 %2260
  %2264 = vset.pattern.permute.xlu0 0
  %2265 = vperm.xlu0 %2264, %v2178
  %v2266 = vpop.permute.xlu0 %2265
  %2269 = vset.pattern.permute.xlu0 0
  %2270 = vperm.xlu0 %2269, %v2179
  %v2271 = vpop.permute.xlu0 %2270
  %2274 = vset.pattern.permute.xlu0 0
  %2275 = vperm.xlu0 %2274, %v2180
  %v2276 = vpop.permute.xlu0 %2275
  %2279 = vset.pattern.permute.xlu0 0
  %2280 = vperm.xlu0 %2279, %v2181
  %v2281 = vpop.permute.xlu0 %2280
  %2284 = vset.pattern.permute.xlu0 0
  %2285 = vperm.xlu0 %2284, %v2182
  %v2286 = vpop.permute.xlu0 %2285
  %2289 = vset.pattern.permute.xlu0 0
  %2290 = vperm.xlu0 %2289, %v2183
  %v2291 = vpop.permute.xlu0 %2290
  %2294 = vset.pattern.permute.xlu0 0
  %2295 = vperm.xlu0 %2294, %v2184
  %v2296 = vpop.permute.xlu0 %2295
  %2299 = vset.pattern.permute.xlu0 0
  %2300 = vperm.xlu0 %2299, %v2185
  %v2301 = vpop.permute.xlu0 %2300
  %2304 = vset.pattern.permute.xlu0 0
  %2305 = vperm.xlu0 %2304, %v2186
  %v2306 = vpop.permute.xlu0 %2305
  %2309 = vset.pattern.permute.xlu0 0
  %2310 = vperm.xlu0 %2309, %v2187
  %v2311 = vpop.permute.xlu0 %2310
  %2313 = vmatprep.subr.mxu0 0.0
  %2314 = vmatpush1.msra.mxu0 %v2081
  %2315 = vmatprep.subr.mxu0 0.0
  %2316 = vmatpush1.msra.mxu0 %v2082
  %2317 = vmatprep.subr.mxu0 0.0
  %2318 = vmatpush1.msra.mxu0 %v2083
  %2319 = vmatprep.subr.mxu0 0.0
  %2320 = vmatpush1.msra.mxu0 %v2084
  %2321 = vmatprep.subr.mxu0 0.0
  %2322 = vmatpush1.msra.mxu0 %v2085
  %2323 = vmatprep.subr.mxu0 0.0
  %2324 = vmatpush1.msra.mxu0 %v2086
  %2325 = vmatprep.subr.mxu0 0.0
  %2326 = vmatpush1.msra.mxu0 %v2087
  %2327 = vmatprep.subr.mxu0 0.0
  %2328 = vmatpush1.msra.mxu0 %v2088
  %2329 = vmatprep.subr.mxu0 0.0
  %2330 = vmatpush1.msra.mxu0 %v2089
  %2331 = vmatprep.subr.mxu0 0.0
  %2332 = vmatpush1.msra.mxu0 %v2090
  %2333 = vmatprep.subr.mxu0 0.0
  %2334 = vmatpush1.msra.mxu0 %v2091
  %2335 = vmatprep.subr.mxu0 0.0
  %2336 = vmatpush1.msra.mxu0 %v2092
  %2337 = vmatprep.subr.mxu0 0.0
  %2338 = vmatpush1.msra.mxu0 %v2093
  %2339 = vmatprep.subr.mxu0 0.0
  %2340 = vmatpush1.msra.mxu0 %v2094
  %2341 = vmatprep.subr.mxu0 0.0
  %2342 = vmatpush1.msra.mxu0 %v2095
  %2343 = vmatprep.subr.mxu0 0.0
  %2344 = vmatpush1.msra.mxu0 %v2096
  %2345 = vmatprep.subr.mxu0 0.0
  %2346 = vmatpush1.msra.mxu0 %v2097
  %2347 = vmatprep.subr.mxu0 0.0
  %2348 = vmatpush1.msra.mxu0 %v2098
  %2349 = vmatprep.subr.mxu0 0.0
  %2350 = vmatpush1.msra.mxu0 %v2099
  %2351 = vmatprep.subr.mxu0 0.0
  %2352 = vmatpush1.msra.mxu0 %v2100
  %2353 = vmatprep.subr.mxu0 0.0
  %2354 = vmatpush1.msra.mxu0 %v2101
  %2355 = vmatprep.subr.mxu0 0.0
  %2356 = vmatpush1.msra.mxu0 %v2102
  %2357 = vmatprep.subr.mxu0 0.0
  %2358 = vmatpush1.msra.mxu0 %v2103
  %2359 = vmatprep.subr.mxu0 0.0
  %2360 = vmatpush1.msra.mxu0 %v2104
  %2361 = vmatprep.subr.mxu0 0.0
  %2362 = vmatpush1.msra.mxu0 %v2105
  %2363 = vmatprep.subr.mxu0 0.0
  %2364 = vmatpush1.msra.mxu0 %v2106
  %2365 = vmatprep.subr.mxu0 0.0
  %2366 = vmatpush1.msra.mxu0 %v2107
  %2367 = vmatprep.subr.mxu0 0.0
  %2368 = vmatpush1.msra.mxu0 %v2108
  %2369 = vmatprep.subr.mxu0 0.0
  %2370 = vmatpush1.msra.mxu0 %v2109
  %2371 = vmatprep.subr.mxu0 0.0
  %2372 = vmatpush1.msra.mxu0 %v2110
  %2373 = vmatprep.subr.mxu0 0.0
  %2374 = vmatpush1.msra.mxu0 %v2111
  %2375 = vmatprep.subr.mxu0 0.0
  %2376 = vmatpush1.msra.mxu0 %v2112
  %2377 = vmatprep.mubr.f32.mxu0 %v2114
  %2378 = vmatmul.mubr.f32.gmra.mrb[0].mxu0 %v2113
  %v2379 = vpop.f32.mrb[0].mxu0
  %v2380 = vadd.f32 %v2191, %v2379
  %v2381 = vpop.f32.mrb[0].mxu0
  %2382 = vmatprep.mubr.f32.mxu0 %v2116
  %2383 = vmatmul.mubr.f32.gmra.mrb[0].mxu0 %v2115
  %v2384 = vpop.f32.mrb[0].mxu0
  %v2385 = vadd.f32 %v2196, %v2384
  %v2386 = vpop.f32.mrb[0].mxu0
  %2387 = vmatprep.mubr.f32.mxu0 %v2118
  %2388 = vmatmul.mubr.f32.gmra.mrb[0].mxu0 %v2117
  %v2389 = vpop.f32.mrb[0].mxu0
  %v2390 = vadd.f32 %v2201, %v2389
  %v2391 = vpop.f32.mrb[0].mxu0
  %2392 = vmatprep.mubr.f32.mxu0 %v2120
  %2393 = vmatmul.mubr.f32.gmra.mrb[0].mxu0 %v2119
  %v2394 = vpop.f32.mrb[0].mxu0
  %v2395 = vadd.f32 %v2206, %v2394
  %v2396 = vpop.f32.mrb[0].mxu0
  %2397 = vmatprep.mubr.f32.mxu0 %v2122
  %2398 = vmatmul.mubr.f32.gmra.mrb[0].mxu0 %v2121
  %v2399 = vpop.f32.mrb[0].mxu0
  %v2400 = vadd.f32 %v2211, %v2399
  %v2401 = vpop.f32.mrb[0].mxu0
  %2402 = vmatprep.mubr.f32.mxu0 %v2124
  %2403 = vmatmul.mubr.f32.gmra.mrb[0].mxu0 %v2123
  %v2404 = vpop.f32.mrb[0].mxu0
  %v2405 = vadd.f32 %v2216, %v2404
  %v2406 = vpop.f32.mrb[0].mxu0
  %2407 = vmatprep.mubr.f32.mxu0 %v2126
  %2408 = vmatmul.mubr.f32.gmra.mrb[0].mxu0 %v2125
  %v2409 = vpop.f32.mrb[0].mxu0
  %v2410 = vadd.f32 %v2221, %v2409
  %v2411 = vpop.f32.mrb[0].mxu0
  %2412 = vmatprep.mubr.f32.mxu0 %v2128
  %2413 = vmatmul.mubr.f32.gmra.mrb[0].mxu0 %v2127
  %v2414 = vpop.f32.mrb[0].mxu0
  %v2415 = vadd.f32 %v2226, %v2414
  %v2416 = vpop.f32.mrb[0].mxu0
  %2417 = vmatprep.mubr.f32.mxu0 %v2130
  %2418 = vmatmul.mubr.f32.gmra.mrb[0].mxu0 %v2129
  %v2419 = vpop.f32.mrb[0].mxu0
  %v2420 = vadd.f32 %v2231, %v2419
  %v2421 = vpop.f32.mrb[0].mxu0
  %2422 = vmatprep.mubr.f32.mxu0 %v2132
  %2423 = vmatmul.mubr.f32.gmra.mrb[0].mxu0 %v2131
  %v2424 = vpop.f32.mrb[0].mxu0
  %v2425 = vadd.f32 %v2236, %v2424
  %v2426 = vpop.f32.mrb[0].mxu0
  %2427 = vmatprep.mubr.f32.mxu0 %v2134
  %2428 = vmatmul.mubr.f32.gmra.mrb[0].mxu0 %v2133
  %v2429 = vpop.f32.mrb[0].mxu0
  %v2430 = vadd.f32 %v2241, %v2429
  %v2431 = vpop.f32.mrb[0].mxu0
  %2432 = vmatprep.mubr.f32.mxu0 %v2136
  %2433 = vmatmul.mubr.f32.gmra.mrb[0].mxu0 %v2135
  %v2434 = vpop.f32.mrb[0].mxu0
  %v2435 = vadd.f32 %v2246, %v2434
  %v2436 = vpop.f32.mrb[0].mxu0
  %2437 = vmatprep.mubr.f32.mxu0 %v2138
  %2438 = vmatmul.mubr.f32.gmra.mrb[0].mxu0 %v2137
  %v2439 = vpop.f32.mrb[0].mxu0
  %v2440 = vadd.f32 %v2251, %v2439
  %v2441 = vpop.f32.mrb[0].mxu0
  %2442 = vmatprep.mubr.f32.mxu0 %v2140
  %2443 = vmatmul.mubr.f32.gmra.mrb[0].mxu0 %v2139
  %v2444 = vpop.f32.mrb[0].mxu0
  %v2445 = vadd.f32 %v2256, %v2444
  %v2446 = vpop.f32.mrb[0].mxu0
  %2447 = vmatprep.mubr.f32.mxu0 %v2142
  %2448 = vmatmul.mubr.f32.gmra.mrb[0].mxu0 %v2141
  %v2449 = vpop.f32.mrb[0].mxu0
  %v2450 = vadd.f32 %v2261, %v2449
  %v2451 = vpop.f32.mrb[0].mxu0
  %2452 = vmatprep.mubr.f32.mxu0 %v2144
  %2453 = vmatmul.mubr.f32.gmra.mrb[0].mxu0 %v2143
  %v2454 = vpop.f32.mrb[0].mxu0
  %v2455 = vadd.f32 %v2266, %v2454
  %v2456 = vpop.f32.mrb[0].mxu0
  %2457 = vmatprep.mubr.f32.mxu0 %v2146
  %2458 = vmatmul.mubr.f32.gmra.mrb[0].mxu0 %v2145
  %v2459 = vpop.f32.mrb[0].mxu0
  %v2460 = vadd.f32 %v2271, %v2459
  %v2461 = vpop.f32.mrb[0].mxu0
  %2462 = vmatprep.mubr.f32.mxu0 %v2148
  %2463 = vmatmul.mubr.f32.gmra.mrb[0].mxu0 %v2147
  %v2464 = vpop.f32.mrb[0].mxu0
  %v2465 = vadd.f32 %v2276, %v2464
  %v2466 = vpop.f32.mrb[0].mxu0
  %2467 = vmatprep.mubr.f32.mxu0 %v2150
  %2468 = vmatmul.mubr.f32.gmra.mrb[0].mxu0 %v2149
  %v2469 = vpop.f32.mrb[0].mxu0
  %v2470 = vadd.f32 %v2281, %v2469
  %v2471 = vpop.f32.mrb[0].mxu0
  %2472 = vmatprep.mubr.f32.mxu0 %v2152
  %2473 = vmatmul.mubr.f32.gmra.mrb[0].mxu0 %v2151
  %v2474 = vpop.f32.mrb[0].mxu0
  %v2475 = vadd.f32 %v2286, %v2474
  %v2476 = vpop.f32.mrb[0].mxu0
  %2477 = vmatprep.mubr.f32.mxu0 %v2154
  %2478 = vmatmul.mubr.f32.gmra.mrb[0].mxu0 %v2153
  %v2479 = vpop.f32.mrb[0].mxu0
  %v2480 = vadd.f32 %v2291, %v2479
  %v2481 = vpop.f32.mrb[0].mxu0
  %2482 = vmatprep.mubr.f32.mxu0 %v2156
  %2483 = vmatmul.mubr.f32.gmra.mrb[0].mxu0 %v2155
  %v2484 = vpop.f32.mrb[0].mxu0
  %v2485 = vadd.f32 %v2296, %v2484
  %v2486 = vpop.f32.mrb[0].mxu0
  %2487 = vmatprep.mubr.f32.mxu0 %v2158
  %2488 = vmatmul.mubr.f32.gmra.mrb[0].mxu0 %v2157
  %v2489 = vpop.f32.mrb[0].mxu0
  %v2490 = vadd.f32 %v2301, %v2489
  %v2491 = vpop.f32.mrb[0].mxu0
  %2492 = vmatprep.mubr.f32.mxu0 %v2160
  %2493 = vmatmul.mubr.f32.gmra.mrb[0].mxu0 %v2159
  %v2494 = vpop.f32.mrb[0].mxu0
  %v2495 = vadd.f32 %v2306, %v2494
  %v2496 = vpop.f32.mrb[0].mxu0
  %2497 = vmatprep.mubr.f32.mxu0 %v2162
  %2498 = vmatmul.mubr.f32.gmra.mrb[0].mxu0 %v2161
  %v2499 = vpop.f32.mrb[0].mxu0
  %v2500 = vadd.f32 %v2311, %v2499
  %v2501 = vpop.f32.mrb[0].mxu0
  %2502 = vdwg.mxu0
  %vm2503 = vcmp.ge.f32.partialorder %v2380, 0.0
  %vm2504 = vcmp.ge.f32.partialorder %v2385, 0.0
  %vm2505 = vcmp.ge.f32.partialorder %v2390, 0.0
  %vm2506 = vcmp.ge.f32.partialorder %v2395, 0.0
  %vm2507 = vcmp.ge.f32.partialorder %v2400, 0.0
  %vm2508 = vcmp.ge.f32.partialorder %v2405, 0.0
  %vm2509 = vcmp.ge.f32.partialorder %v2410, 0.0
  %vm2510 = vcmp.ge.f32.partialorder %v2415, 0.0
  %vm2511 = vcmp.ge.f32.partialorder %v2420, 0.0
  %vm2512 = vcmp.ge.f32.partialorder %v2425, 0.0
  %vm2513 = vcmp.ge.f32.partialorder %v2430, 0.0
  %vm2514 = vcmp.ge.f32.partialorder %v2435, 0.0
  %vm2515 = vcmp.ge.f32.partialorder %v2440, 0.0
  %vm2516 = vcmp.ge.f32.partialorder %v2445, 0.0
  %vm2517 = vcmp.ge.f32.partialorder %v2450, 0.0
  %vm2518 = vcmp.ge.f32.partialorder %v2455, 0.0
  %vm2519 = vcmp.ge.f32.partialorder %v2460, 0.0
  %vm2520 = vcmp.ge.f32.partialorder %v2465, 0.0
  %vm2521 = vcmp.ge.f32.partialorder %v2470, 0.0
  %vm2522 = vcmp.ge.f32.partialorder %v2475, 0.0
  %vm2523 = vcmp.ge.f32.partialorder %v2480, 0.0
  %vm2524 = vcmp.ge.f32.partialorder %v2485, 0.0
  %vm2525 = vcmp.ge.f32.partialorder %v2490, 0.0
  %vm2526 = vcmp.ge.f32.partialorder %v2495, 0.0
  %vm2527 = vcmp.ge.f32.partialorder %v2500, 0.0
  %v2528 = vmul.f32 %v2380, 0.05
  %v2529 = vmul.f32 %v2385, 0.05
  %v2530 = vmul.f32 %v2390, 0.05
  %v2531 = vmul.f32 %v2395, 0.05
  %v2532 = vmul.f32 %v2400, 0.05
  %v2533 = vmul.f32 %v2405, 0.05
  %v2534 = vmul.f32 %v2410, 0.05
  %v2535 = vmul.f32 %v2415, 0.05
  %v2536 = vmul.f32 %v2420, 0.05
  %v2537 = vmul.f32 %v2425, 0.05
  %v2538 = vmul.f32 %v2430, 0.05
  %v2539 = vmul.f32 %v2435, 0.05
  %v2540 = vmul.f32 %v2440, 0.05
  %v2541 = vmul.f32 %v2445, 0.05
  %v2542 = vmul.f32 %v2450, 0.05
  %v2543 = vmul.f32 %v2455, 0.05
  %v2544 = vmul.f32 %v2460, 0.05
  %v2545 = vmul.f32 %v2465, 0.05
  %v2546 = vmul.f32 %v2470, 0.05
  %v2547 = vmul.f32 %v2475, 0.05
  %v2548 = vmul.f32 %v2480, 0.05
  %v2549 = vmul.f32 %v2485, 0.05
  %v2550 = vmul.f32 %v2490, 0.05
  %v2551 = vmul.f32 %v2495, 0.05
  %v2552 = vmul.f32 %v2500, 0.05
  %v2553 = vsel %vm2503, %v2380, %v2528
  %v2554 = vsel %vm2504, %v2385, %v2529
  %v2555 = vsel %vm2505, %v2390, %v2530
  %v2556 = vsel %vm2506, %v2395, %v2531
  %v2557 = vsel %vm2507, %v2400, %v2532
  %v2558 = vsel %vm2508, %v2405, %v2533
  %v2559 = vsel %vm2509, %v2410, %v2534
  %v2560 = vsel %vm2510, %v2415, %v2535
  %v2561 = vsel %vm2511, %v2420, %v2536
  %v2562 = vsel %vm2512, %v2425, %v2537
  %v2563 = vsel %vm2513, %v2430, %v2538
  %v2564 = vsel %vm2514, %v2435, %v2539
  %v2565 = vsel %vm2515, %v2440, %v2540
  %v2566 = vsel %vm2516, %v2445, %v2541
  %v2567 = vsel %vm2517, %v2450, %v2542
  %v2568 = vsel %vm2518, %v2455, %v2543
  %v2569 = vsel %vm2519, %v2460, %v2544
  %v2570 = vsel %vm2520, %v2465, %v2545
  %v2571 = vsel %vm2521, %v2470, %v2546
  %v2572 = vsel %vm2522, %v2475, %v2547
  %v2573 = vsel %vm2523, %v2480, %v2548
  %v2574 = vsel %vm2524, %v2485, %v2549
  %v2575 = vsel %vm2525, %v2490, %v2550
  %v2576 = vsel %vm2526, %v2495, %v2551
  %v2577 = vsel %vm2527, %v2500, %v2552
  %v2578 = vld [vmem:[%s8] sm:$0xff]
  %v2579 = vld [vmem:[%s8 + $0x8] sm:$0xff]
  %v2580 = vld [vmem:[%s8 + $0x10] sm:$0xff]
  %v2581 = vld [vmem:[%s8 + $0x18] sm:$0xff]
  %v2582 = vld [vmem:[%s8 + $0x20] sm:$0xff]
  %v2583 = vld [vmem:[%s8 + $0x28] sm:$0xff]
  %v2584 = vld [vmem:[%s8 + $0x30] sm:$0xff]
  %v2585 = vld [vmem:[%s8 + $0x38] sm:$0xff]
  %v2586 = vld [vmem:[%s8 + $0x40] sm:$0xff]
  %v2587 = vld [vmem:[%s8 + $0x48] sm:$0xff]
  %v2588 = vld [vmem:[%s8 + $0x50] sm:$0xff]
  %v2589 = vld [vmem:[%s8 + $0x58] sm:$0xff]
  %v2590 = vld [vmem:[%s8 + $0x60] sm:$0xff]
  %v2591 = vld [vmem:[%s8 + $0x68] sm:$0xff]
  %v2592 = vld [vmem:[%s8 + $0x70] sm:$0xff]
  %v2593 = vld [vmem:[%s8 + $0x78] sm:$0xff]
  %v2594 = vld [vmem:[%s8 + $0x80] sm:$0xff]
  %v2595 = vld [vmem:[%s8 + $0x88] sm:$0xff]
  %v2596 = vld [vmem:[%s8 + $0x90] sm:$0xff]
  %v2597 = vld [vmem:[%s8 + $0x98] sm:$0xff]
  %v2598 = vld [vmem:[%s8 + $0xa0] sm:$0xff]
  %v2599 = vld [vmem:[%s8 + $0xa8] sm:$0xff]
  %v2600 = vld [vmem:[%s8 + $0xb0] sm:$0xff]
  %v2601 = vld [vmem:[%s8 + $0xb8] sm:$0xff]
  %v2602 = vld [vmem:[%s8 + $0xc0] sm:$0xff]
  %v2603 = vld [vmem:[%s8 + $0xc8] sm:$0xff]
  %v2604 = vld [vmem:[%s8 + $0xd0] sm:$0xff]
  %v2605 = vld [vmem:[%s8 + $0xd8] sm:$0xff]
  %v2606 = vld [vmem:[%s8 + $0xe0] sm:$0xff]
  %v2607 = vld [vmem:[%s8 + $0xe8] sm:$0xff]
  %v2608 = vld [vmem:[%s8 + $0xf0] sm:$0xff]
  %v2609 = vld [vmem:[%s8 + $0xf8] sm:$0xff]
  %v2610 = vld [vmem:[%s9] sm:$0xff]
  %v2611 = vld [vmem:[%s9 + $0x8] sm:$0xff]
  %v2612 = vld [vmem:[%s9 + $0x10] sm:$0xff]
  %v2613 = vld [vmem:[%s9 + $0x18] sm:$0xff]
  %v2614 = vld [vmem:[%s9 + $0x20] sm:$0xff]
  %v2615 = vld [vmem:[%s9 + $0x28] sm:$0xff]
  %v2616 = vld [vmem:[%s9 + $0x30] sm:$0xff]
  %v2617 = vld [vmem:[%s9 + $0x38] sm:$0xff]
  %v2618 = vld [vmem:[%s9 + $0x40] sm:$0xff]
  %v2619 = vld [vmem:[%s9 + $0x48] sm:$0xff]
  %v2620 = vld [vmem:[%s9 + $0x50] sm:$0xff]
  %v2621 = vld [vmem:[%s9 + $0x58] sm:$0xff]
  %v2622 = vld [vmem:[%s9 + $0x60] sm:$0xff]
  %v2623 = vld [vmem:[%s9 + $0x68] sm:$0xff]
  %v2624 = vld [vmem:[%s9 + $0x70] sm:$0xff]
  %v2625 = vld [vmem:[%s9 + $0x78] sm:$0xff]
  %2627 = vset.pattern.permute.xlu0 0
  %2628 = vperm.xlu0 %2627, %v2610
  %v2629 = vpop.permute.xlu0 %2628
  %2632 = vset.pattern.permute.xlu0 0
  %2633 = vperm.xlu0 %2632, %v2611
  %v2634 = vpop.permute.xlu0 %2633
  %2637 = vset.pattern.permute.xlu0 0
  %2638 = vperm.xlu0 %2637, %v2612
  %v2639 = vpop.permute.xlu0 %2638
  %2642 = vset.pattern.permute.xlu0 0
  %2643 = vperm.xlu0 %2642, %v2613
  %v2644 = vpop.permute.xlu0 %2643
  %2647 = vset.pattern.permute.xlu0 0
  %2648 = vperm.xlu0 %2647, %v2614
  %v2649 = vpop.permute.xlu0 %2648
  %2652 = vset.pattern.permute.xlu0 0
  %2653 = vperm.xlu0 %2652, %v2615
  %v2654 = vpop.permute.xlu0 %2653
  %2657 = vset.pattern.permute.xlu0 0
  %2658 = vperm.xlu0 %2657, %v2616
  %v2659 = vpop.permute.xlu0 %2658
  %2662 = vset.pattern.permute.xlu0 0
  %2663 = vperm.xlu0 %2662, %v2617
  %v2664 = vpop.permute.xlu0 %2663
  %2667 = vset.pattern.permute.xlu0 0
  %2668 = vperm.xlu0 %2667, %v2618
  %v2669 = vpop.permute.xlu0 %2668
  %2672 = vset.pattern.permute.xlu0 0
  %2673 = vperm.xlu0 %2672, %v2619
  %v2674 = vpop.permute.xlu0 %2673
  %2677 = vset.pattern.permute.xlu0 0
  %2678 = vperm.xlu0 %2677, %v2620
  %v2679 = vpop.permute.xlu0 %2678
  %2682 = vset.pattern.permute.xlu0 0
  %2683 = vperm.xlu0 %2682, %v2621
  %v2684 = vpop.permute.xlu0 %2683
  %2687 = vset.pattern.permute.xlu0 0
  %2688 = vperm.xlu0 %2687, %v2622
  %v2689 = vpop.permute.xlu0 %2688
  %2692 = vset.pattern.permute.xlu0 0
  %2693 = vperm.xlu0 %2692, %v2623
  %v2694 = vpop.permute.xlu0 %2693
  %2697 = vset.pattern.permute.xlu0 0
  %2698 = vperm.xlu0 %2697, %v2624
  %v2699 = vpop.permute.xlu0 %2698
  %2702 = vset.pattern.permute.xlu0 0
  %2703 = vperm.xlu0 %2702, %v2625
  %v2704 = vpop.permute.xlu0 %2703
  %vm2706 = vcmask 588800
  %v2708 = vsel %vm2706, %v2579, 0
  %v2711 = vsel %vm2706, %v2581, 0
  %v2714 = vsel %vm2706, %v2583, 0
  %v2717 = vsel %vm2706, %v2585, 0
  %v2720 = vsel %vm2706, %v2587, 0
  %v2723 = vsel %vm2706, %v2589, 0
  %v2726 = vsel %vm2706, %v2591, 0
  %v2729 = vsel %vm2706, %v2593, 0
  %v2732 = vsel %vm2706, %v2595, 0
  %v2735 = vsel %vm2706, %v2597, 0
  %v2738 = vsel %vm2706, %v2599, 0
  %v2741 = vsel %vm2706, %v2601, 0
  %v2744 = vsel %vm2706, %v2603, 0
  %v2747 = vsel %vm2706, %v2605, 0
  %v2750 = vsel %vm2706, %v2607, 0
  %v2753 = vsel %vm2706, %v2609, 0
  %2755 = vmatprep.subr.mxu0 0.0
  %2756 = vmatpush1.msra.mxu0 %v2553
  %2757 = vmatprep.subr.mxu0 0.0
  %2758 = vmatpush1.msra.mxu0 %v2554
  %2759 = vmatprep.subr.mxu0 0.0
  %2760 = vmatpush1.msra.mxu0 %v2555
  %2761 = vmatprep.subr.mxu0 0.0
  %2762 = vmatpush1.msra.mxu0 %v2556
  %2763 = vmatprep.subr.mxu0 0.0
  %2764 = vmatpush1.msra.mxu0 %v2557
  %2765 = vmatprep.subr.mxu0 0.0
  %2766 = vmatpush1.msra.mxu0 %v2558
  %2767 = vmatprep.subr.mxu0 0.0
  %2768 = vmatpush1.msra.mxu0 %v2559
  %2769 = vmatprep.subr.mxu0 0.0
  %2770 = vmatpush1.msra.mxu0 %v2560
  %2771 = vmatprep.subr.mxu0 0.0
  %2772 = vmatpush1.msra.mxu0 %v2561
  %2773 = vmatprep.subr.mxu0 0.0
  %2774 = vmatpush1.msra.mxu0 %v2562
  %2775 = vmatprep.subr.mxu0 0.0
  %2776 = vmatpush1.msra.mxu0 %v2563
  %2777 = vmatprep.subr.mxu0 0.0
  %2778 = vmatpush1.msra.mxu0 %v2564
  %2779 = vmatprep.subr.mxu0 0.0
  %2780 = vmatpush1.msra.mxu0 %v2565
  %2781 = vmatprep.subr.mxu0 0.0
  %2782 = vmatpush1.msra.mxu0 %v2566
  %2783 = vmatprep.subr.mxu0 0.0
  %2784 = vmatpush1.msra.mxu0 %v2567
  %2785 = vmatprep.subr.mxu0 0.0
  %2786 = vmatpush1.msra.mxu0 %v2568
  %2787 = vmatprep.subr.mxu0 0.0
  %2788 = vmatpush1.msra.mxu0 %v2569
  %2789 = vmatprep.subr.mxu0 0.0
  %2790 = vmatpush1.msra.mxu0 %v2570
  %2791 = vmatprep.subr.mxu0 0.0
  %2792 = vmatpush1.msra.mxu0 %v2571
  %2793 = vmatprep.subr.mxu0 0.0
  %2794 = vmatpush1.msra.mxu0 %v2572
  %2795 = vmatprep.subr.mxu0 0.0
  %2796 = vmatpush1.msra.mxu0 %v2573
  %2797 = vmatprep.subr.mxu0 0.0
  %2798 = vmatpush1.msra.mxu0 %v2574
  %2799 = vmatprep.subr.mxu0 0.0
  %2800 = vmatpush1.msra.mxu0 %v2575
  %2801 = vmatprep.subr.mxu0 0.0
  %2802 = vmatpush1.msra.mxu0 %v2576
  %2803 = vmatprep.subr.mxu0 0.0
  %2804 = vmatpush1.msra.mxu0 %v2577
  %2805 = vmatprep.subr.mxu0 0.0
  %2806 = vmatpush1.msra.mxu0 0.0
  %2807 = vmatprep.subr.mxu0 0.0
  %2808 = vmatpush1.msra.mxu0 0.0
  %2809 = vmatprep.subr.mxu0 0.0
  %2810 = vmatpush1.msra.mxu0 0.0
  %2811 = vmatprep.subr.mxu0 0.0
  %2812 = vmatpush1.msra.mxu0 0.0
  %2813 = vmatprep.subr.mxu0 0.0
  %2814 = vmatpush1.msra.mxu0 0.0
  %2815 = vmatprep.subr.mxu0 0.0
  %2816 = vmatpush1.msra.mxu0 0.0
  %2817 = vmatprep.subr.mxu0 0.0
  %2818 = vmatpush1.msra.mxu0 0.0
  %2819 = vmatprep.mubr.f32.mxu0 %v2708
  %2820 = vmatmul.mubr.f32.gmra.mrb[0].mxu0 %v2578
  %v2821 = vpop.f32.mrb[0].mxu0
  %v2822 = vadd.f32 %v2629, %v2821
  %v2823 = vpop.f32.mrb[0].mxu0
  %2824 = vmatprep.mubr.f32.mxu0 %v2711
  %2825 = vmatmul.mubr.f32.gmra.mrb[0].mxu0 %v2580
  %v2826 = vpop.f32.mrb[0].mxu0
  %v2827 = vadd.f32 %v2634, %v2826
  %v2828 = vpop.f32.mrb[0].mxu0
  %2829 = vmatprep.mubr.f32.mxu0 %v2714
  %2830 = vmatmul.mubr.f32.gmra.mrb[0].mxu0 %v2582
  %v2831 = vpop.f32.mrb[0].mxu0
  %v2832 = vadd.f32 %v2639, %v2831
  %v2833 = vpop.f32.mrb[0].mxu0
  %2834 = vmatprep.mubr.f32.mxu0 %v2717
  %2835 = vmatmul.mubr.f32.gmra.mrb[0].mxu0 %v2584
  %v2836 = vpop.f32.mrb[0].mxu0
  %v2837 = vadd.f32 %v2644, %v2836
  %v2838 = vpop.f32.mrb[0].mxu0
  %2839 = vmatprep.mubr.f32.mxu0 %v2720
  %2840 = vmatmul.mubr.f32.gmra.mrb[0].mxu0 %v2586
  %v2841 = vpop.f32.mrb[0].mxu0
  %v2842 = vadd.f32 %v2649, %v2841
  %v2843 = vpop.f32.mrb[0].mxu0
  %2844 = vmatprep.mubr.f32.mxu0 %v2723
  %2845 = vmatmul.mubr.f32.gmra.mrb[0].mxu0 %v2588
  %v2846 = vpop.f32.mrb[0].mxu0
  %v2847 = vadd.f32 %v2654, %v2846
  %v2848 = vpop.f32.mrb[0].mxu0
  %2849 = vmatprep.mubr.f32.mxu0 %v2726
  %2850 = vmatmul.mubr.f32.gmra.mrb[0].mxu0 %v2590
  %v2851 = vpop.f32.mrb[0].mxu0
  %v2852 = vadd.f32 %v2659, %v2851
  %v2853 = vpop.f32.mrb[0].mxu0
  %2854 = vmatprep.mubr.f32.mxu0 %v2729
  %2855 = vmatmul.mubr.f32.gmra.mrb[0].mxu0 %v2592
  %v2856 = vpop.f32.mrb[0].mxu0
  %v2857 = vadd.f32 %v2664, %v2856
  %v2858 = vpop.f32.mrb[0].mxu0
  %2859 = vmatprep.mubr.f32.mxu0 %v2732
  %2860 = vmatmul.mubr.f32.gmra.mrb[0].mxu0 %v2594
  %v2861 = vpop.f32.mrb[0].mxu0
  %v2862 = vadd.f32 %v2669, %v2861
  %v2863 = vpop.f32.mrb[0].mxu0
  %2864 = vmatprep.mubr.f32.mxu0 %v2735
  %2865 = vmatmul.mubr.f32.gmra.mrb[0].mxu0 %v2596
  %v2866 = vpop.f32.mrb[0].mxu0
  %v2867 = vadd.f32 %v2674, %v2866
  %v2868 = vpop.f32.mrb[0].mxu0
  %2869 = vmatprep.mubr.f32.mxu0 %v2738
  %2870 = vmatmul.mubr.f32.gmra.mrb[0].mxu0 %v2598
  %v2871 = vpop.f32.mrb[0].mxu0
  %v2872 = vadd.f32 %v2679, %v2871
  %v2873 = vpop.f32.mrb[0].mxu0
  %2874 = vmatprep.mubr.f32.mxu0 %v2741
  %2875 = vmatmul.mubr.f32.gmra.mrb[0].mxu0 %v2600
  %v2876 = vpop.f32.mrb[0].mxu0
  %v2877 = vadd.f32 %v2684, %v2876
  %v2878 = vpop.f32.mrb[0].mxu0
  %2879 = vmatprep.mubr.f32.mxu0 %v2744
  %2880 = vmatmul.mubr.f32.gmra.mrb[0].mxu0 %v2602
  %v2881 = vpop.f32.mrb[0].mxu0
  %v2882 = vadd.f32 %v2689, %v2881
  %v2883 = vpop.f32.mrb[0].mxu0
  %2884 = vmatprep.mubr.f32.mxu0 %v2747
  %2885 = vmatmul.mubr.f32.gmra.mrb[0].mxu0 %v2604
  %v2886 = vpop.f32.mrb[0].mxu0
  %v2887 = vadd.f32 %v2694, %v2886
  %v2888 = vpop.f32.mrb[0].mxu0
  %2889 = vmatprep.mubr.f32.mxu0 %v2750
  %2890 = vmatmul.mubr.f32.gmra.mrb[0].mxu0 %v2606
  %v2891 = vpop.f32.mrb[0].mxu0
  %v2892 = vadd.f32 %v2699, %v2891
  %v2893 = vpop.f32.mrb[0].mxu0
  %2894 = vmatprep.mubr.f32.mxu0 %v2753
  %2895 = vmatmul.mubr.f32.gmra.mrb[0].mxu0 %v2608
  %v2896 = vpop.f32.mrb[0].mxu0
  %v2897 = vadd.f32 %v2704, %v2896
  %v2898 = vpop.f32.mrb[0].mxu0
  %2899 = vdwg.mxu0
  %v2900 = vld [vmem:[%s1] sm:$0xff]
  %v2901 = vld [vmem:[%s1 + $0x8] sm:$0xff]
  %v2902 = vld [vmem:[%s1 + $0x10] sm:$0xff]
  %v2903 = vld [vmem:[%s1 + $0x18] sm:$0xff]
  %v2904 = vld [vmem:[%s1 + $0x20] sm:$0xff]
  %v2905 = vld [vmem:[%s1 + $0x28] sm:$0xff]
  %v2906 = vld [vmem:[%s1 + $0x30] sm:$0xff]
  %v2907 = vld [vmem:[%s1 + $0x38] sm:$0xff]
  %v2908 = vld [vmem:[%s1 + $0x40] sm:$0xff]
  %v2909 = vld [vmem:[%s1 + $0x48] sm:$0xff]
  %v2910 = vld [vmem:[%s1 + $0x50] sm:$0xff]
  %v2911 = vld [vmem:[%s1 + $0x58] sm:$0xff]
  %v2912 = vld [vmem:[%s1 + $0x60] sm:$0xff]
  %v2913 = vld [vmem:[%s1 + $0x68] sm:$0xff]
  %v2914 = vld [vmem:[%s1 + $0x70] sm:$0xff]
  %v2915 = vld [vmem:[%s1 + $0x78] sm:$0xff]
  %v2916 = vld [vmem:[%s1 + $0x80] sm:$0xff]
  %v2917 = vld [vmem:[%s1 + $0x88] sm:$0xff]
  %v2918 = vld [vmem:[%s1 + $0x90] sm:$0xff]
  %v2919 = vld [vmem:[%s1 + $0x98] sm:$0xff]
  %v2920 = vld [vmem:[%s1 + $0xa0] sm:$0xff]
  %v2921 = vld [vmem:[%s1 + $0xa8] sm:$0xff]
  %v2922 = vld [vmem:[%s1 + $0xb0] sm:$0xff]
  %v2923 = vld [vmem:[%s1 + $0xb8] sm:$0xff]
  %v2924 = vld [vmem:[%s1 + $0xc0] sm:$0xff]
  %v2925 = vld [vmem:[%s1 + $0xc8] sm:$0xff]
  %v2926 = vld [vmem:[%s1 + $0xd0] sm:$0xff]
  %v2927 = vld [vmem:[%s1 + $0xd8] sm:$0xff]
  %v2928 = vld [vmem:[%s1 + $0xe0] sm:$0xff]
  %v2929 = vld [vmem:[%s1 + $0xe8] sm:$0xff]
  %v2930 = vld [vmem:[%s1 + $0xf0] sm:$0xff]
  %v2931 = vld [vmem:[%s1 + $0xf8] sm:$0xff]
  %v2932 = vld [vmem:[%s1 + $0x100] sm:$0xff]
  %v2933 = vld [vmem:[%s1 + $0x108] sm:$0xff]
  %v2934 = vld [vmem:[%s1 + $0x110] sm:$0xff]
  %v2935 = vld [vmem:[%s1 + $0x118] sm:$0xff]
  %v2936 = vld [vmem:[%s1 + $0x120] sm:$0xff]
  %v2937 = vld [vmem:[%s1 + $0x128] sm:$0xff]
  %v2938 = vld [vmem:[%s1 + $0x130] sm:$0xff]
  %v2939 = vld [vmem:[%s1 + $0x138] sm:$0xff]
  %v2940 = vld [vmem:[%s1 + $0x140] sm:$0xff]
  %v2941 = vld [vmem:[%s1 + $0x148] sm:$0xff]
  %v2942 = vld [vmem:[%s1 + $0x150] sm:$0xff]
  %v2943 = vld [vmem:[%s1 + $0x158] sm:$0xff]
  %v2944 = vld [vmem:[%s10] sm:$0xff]
  %v2945 = vld [vmem:[%s10 + $0x8] sm:$0xff]
  %v2946 = vld [vmem:[%s10 + $0x10] sm:$0xff]
  %v2947 = vld [vmem:[%s10 + $0x18] sm:$0xff]
  %v2948 = vld [vmem:[%s10 + $0x20] sm:$0xff]
  %v2949 = vld [vmem:[%s10 + $0x28] sm:$0xff]
  %v2950 = vld [vmem:[%s10 + $0x30] sm:$0xff]
  %v2951 = vld [vmem:[%s10 + $0x38] sm:$0xff]
  %v2952 = vld [vmem:[%s10 + $0x40] sm:$0xff]
  %v2953 = vld [vmem:[%s10 + $0x48] sm:$0xff]
  %v2954 = vld [vmem:[%s10 + $0x50] sm:$0xff]
  %v2955 = vld [vmem:[%s10 + $0x58] sm:$0xff]
  %v2956 = vld [vmem:[%s10 + $0x60] sm:$0xff]
  %v2957 = vld [vmem:[%s10 + $0x68] sm:$0xff]
  %v2958 = vld [vmem:[%s10 + $0x70] sm:$0xff]
  %v2959 = vld [vmem:[%s10 + $0x78] sm:$0xff]
  %v2960 = vld [vmem:[%s10 + $0x80] sm:$0xff]
  %v2961 = vld [vmem:[%s10 + $0x88] sm:$0xff]
  %v2962 = vld [vmem:[%s10 + $0x90] sm:$0xff]
  %v2963 = vld [vmem:[%s10 + $0x98] sm:$0xff]
  %v2964 = vld [vmem:[%s10 + $0xa0] sm:$0xff]
  %v2965 = vld [vmem:[%s10 + $0xa8] sm:$0xff]
  %v2966 = vld [vmem:[%s10 + $0xb0] sm:$0xff]
  %v2967 = vld [vmem:[%s10 + $0xb8] sm:$0xff]
  %v2968 = vld [vmem:[%s10 + $0xc0] sm:$0xff]
  %v2969 = vld [vmem:[%s10 + $0xc8] sm:$0xff]
  %v2970 = vld [vmem:[%s10 + $0xd0] sm:$0xff]
  %v2971 = vld [vmem:[%s10 + $0xd8] sm:$0xff]
  %v2972 = vld [vmem:[%s10 + $0xe0] sm:$0xff]
  %v2973 = vld [vmem:[%s10 + $0xe8] sm:$0xff]
  %v2974 = vld [vmem:[%s10 + $0xf0] sm:$0xff]
  %v2975 = vld [vmem:[%s10 + $0xf8] sm:$0xff]
  %v2976 = vld [vmem:[%s10 + $0x100] sm:$0xff]
  %v2977 = vld [vmem:[%s10 + $0x108] sm:$0xff]
  %v2978 = vld [vmem:[%s10 + $0x110] sm:$0xff]
  %v2979 = vld [vmem:[%s10 + $0x118] sm:$0xff]
  %v2980 = vld [vmem:[%s10 + $0x120] sm:$0xff]
  %v2981 = vld [vmem:[%s10 + $0x128] sm:$0xff]
  %v2982 = vld [vmem:[%s10 + $0x130] sm:$0xff]
  %v2983 = vld [vmem:[%s10 + $0x138] sm:$0xff]
  %v2984 = vld [vmem:[%s10 + $0x140] sm:$0xff]
  %v2985 = vld [vmem:[%s10 + $0x148] sm:$0xff]
  %v2986 = vld [vmem:[%s10 + $0x150] sm:$0xff]
  %v2987 = vld [vmem:[%s10 + $0x158] sm:$0xff]
  %v2988 = vld [vmem:[%s10 + $0x160] sm:$0xff]
  %v2989 = vld [vmem:[%s10 + $0x168] sm:$0xff]
  %v2990 = vld [vmem:[%s10 + $0x170] sm:$0xff]
  %v2991 = vld [vmem:[%s10 + $0x178] sm:$0xff]
  %v2992 = vld [vmem:[%s10 + $0x180] sm:$0xff]
  %v2993 = vld [vmem:[%s10 + $0x188] sm:$0xff]
  %v2994 = vld [vmem:[%s10 + $0x190] sm:$0xff]
  %v2995 = vld [vmem:[%s10 + $0x198] sm:$0xff]
  %v2996 = vld [vmem:[%s10 + $0x1a0] sm:$0xff]
  %v2997 = vld [vmem:[%s10 + $0x1a8] sm:$0xff]
  %v2998 = vld [vmem:[%s10 + $0x1b0] sm:$0xff]
  %v2999 = vld [vmem:[%s10 + $0x1b8] sm:$0xff]
  %v3000 = vld [vmem:[%s10 + $0x1c0] sm:$0xff]
  %v3001 = vld [vmem:[%s10 + $0x1c8] sm:$0xff]
  %v3002 = vld [vmem:[%s10 + $0x1d0] sm:$0xff]
  %v3003 = vld [vmem:[%s10 + $0x1d8] sm:$0xff]
  %v3004 = vld [vmem:[%s10 + $0x1e0] sm:$0xff]
  %v3005 = vld [vmem:[%s10 + $0x1e8] sm:$0xff]
  %v3006 = vld [vmem:[%s10 + $0x1f0] sm:$0xff]
  %v3007 = vld [vmem:[%s10 + $0x1f8] sm:$0xff]
  %v3008 = vld [vmem:[%s10 + $0x200] sm:$0xff]
  %v3009 = vld [vmem:[%s10 + $0x208] sm:$0xff]
  %v3010 = vld [vmem:[%s10 + $0x210] sm:$0xff]
  %v3011 = vld [vmem:[%s10 + $0x218] sm:$0xff]
  %v3012 = vld [vmem:[%s10 + $0x220] sm:$0xff]
  %v3013 = vld [vmem:[%s10 + $0x228] sm:$0xff]
  %v3014 = vld [vmem:[%s10 + $0x230] sm:$0xff]
  %v3015 = vld [vmem:[%s10 + $0x238] sm:$0xff]
  %v3016 = vld [vmem:[%s10 + $0x240] sm:$0xff]
  %v3017 = vld [vmem:[%s10 + $0x248] sm:$0xff]
  %v3018 = vld [vmem:[%s10 + $0x250] sm:$0xff]
  %v3019 = vld [vmem:[%s10 + $0x258] sm:$0xff]
  %v3020 = vld [vmem:[%s10 + $0x260] sm:$0xff]
  %v3021 = vld [vmem:[%s10 + $0x268] sm:$0xff]
  %v3022 = vld [vmem:[%s10 + $0x270] sm:$0xff]
  %v3023 = vld [vmem:[%s10 + $0x278] sm:$0xff]
  %v3024 = vld [vmem:[%s10 + $0x280] sm:$0xff]
  %v3025 = vld [vmem:[%s10 + $0x288] sm:$0xff]
  %v3026 = vld [vmem:[%s10 + $0x290] sm:$0xff]
  %v3027 = vld [vmem:[%s10 + $0x298] sm:$0xff]
  %v3028 = vld [vmem:[%s10 + $0x2a0] sm:$0xff]
  %v3029 = vld [vmem:[%s10 + $0x2a8] sm:$0xff]
  %v3030 = vld [vmem:[%s10 + $0x2b0] sm:$0xff]
  %v3031 = vld [vmem:[%s10 + $0x2b8] sm:$0xff]
  %v3032 = vld [vmem:[%s10 + $0x2c0] sm:$0xff]
  %v3033 = vld [vmem:[%s10 + $0x2c8] sm:$0xff]
  %v3034 = vld [vmem:[%s10 + $0x2d0] sm:$0xff]
  %v3035 = vld [vmem:[%s10 + $0x2d8] sm:$0xff]
  %v3036 = vld [vmem:[%s10 + $0x2e0] sm:$0xff]
  %v3037 = vld [vmem:[%s10 + $0x2e8] sm:$0xff]
  %v3038 = vld [vmem:[%s10 + $0x2f0] sm:$0xff]
  %v3039 = vld [vmem:[%s10 + $0x2f8] sm:$0xff]
  %v3040 = vld [vmem:[%s11] sm:$0xff]
  %v3041 = vld [vmem:[%s11 + $0x8] sm:$0xff]
  %v3042 = vld [vmem:[%s11 + $0x10] sm:$0xff]
  %v3043 = vld [vmem:[%s11 + $0x18] sm:$0xff]
  %v3044 = vld [vmem:[%s11 + $0x20] sm:$0xff]
  %v3045 = vld [vmem:[%s11 + $0x28] sm:$0xff]
  %v3046 = vld [vmem:[%s11 + $0x30] sm:$0xff]
  %v3047 = vld [vmem:[%s11 + $0x38] sm:$0xff]
  %v3048 = vld [vmem:[%s11 + $0x40] sm:$0xff]
  %v3049 = vld [vmem:[%s11 + $0x48] sm:$0xff]
  %v3050 = vld [vmem:[%s11 + $0x50] sm:$0xff]
  %v3051 = vld [vmem:[%s11 + $0x58] sm:$0xff]
  %v3052 = vld [vmem:[%s11 + $0x60] sm:$0xff]
  %v3053 = vld [vmem:[%s11 + $0x68] sm:$0xff]
  %v3054 = vld [vmem:[%s11 + $0x70] sm:$0xff]
  %v3055 = vld [vmem:[%s11 + $0x78] sm:$0xff]
  %v3056 = vld [vmem:[%s11 + $0x80] sm:$0xff]
  %v3057 = vld [vmem:[%s11 + $0x88] sm:$0xff]
  %v3058 = vld [vmem:[%s11 + $0x90] sm:$0xff]
  %v3059 = vld [vmem:[%s11 + $0x98] sm:$0xff]
  %v3060 = vld [vmem:[%s11 + $0xa0] sm:$0xff]
  %v3061 = vld [vmem:[%s11 + $0xa8] sm:$0xff]
  %v3062 = vld [vmem:[%s11 + $0xb0] sm:$0xff]
  %v3063 = vld [vmem:[%s11 + $0xb8] sm:$0xff]
  %v3064 = vld [vmem:[%s11 + $0xc0] sm:$0xff]
  %v3065 = vld [vmem:[%s11 + $0xc8] sm:$0xff]
  %v3066 = vld [vmem:[%s11 + $0xd0] sm:$0xff]
  %v3067 = vld [vmem:[%s11 + $0xd8] sm:$0xff]
  %v3068 = vld [vmem:[%s11 + $0xe0] sm:$0xff]
  %v3069 = vld [vmem:[%s11 + $0xe8] sm:$0xff]
  %v3070 = vld [vmem:[%s11 + $0xf0] sm:$0xff]
  %v3071 = vld [vmem:[%s11 + $0xf8] sm:$0xff]
  %3073 = vset.pattern.permute.xlu0 0
  %3074 = vperm.xlu0 %3073, %v3040
  %v3075 = vpop.permute.xlu0 %3074
  %3078 = vset.pattern.permute.xlu0 0
  %3079 = vperm.xlu0 %3078, %v3041
  %v3080 = vpop.permute.xlu0 %3079
  %3083 = vset.pattern.permute.xlu0 0
  %3084 = vperm.xlu0 %3083, %v3042
  %v3085 = vpop.permute.xlu0 %3084
  %3088 = vset.pattern.permute.xlu0 0
  %3089 = vperm.xlu0 %3088, %v3043
  %v3090 = vpop.permute.xlu0 %3089
  %3093 = vset.pattern.permute.xlu0 0
  %3094 = vperm.xlu0 %3093, %v3044
  %v3095 = vpop.permute.xlu0 %3094
  %3098 = vset.pattern.permute.xlu0 0
  %3099 = vperm.xlu0 %3098, %v3045
  %v3100 = vpop.permute.xlu0 %3099
  %3103 = vset.pattern.permute.xlu0 0
  %3104 = vperm.xlu0 %3103, %v3046
  %v3105 = vpop.permute.xlu0 %3104
  %3108 = vset.pattern.permute.xlu0 0
  %3109 = vperm.xlu0 %3108, %v3047
  %v3110 = vpop.permute.xlu0 %3109
  %3113 = vset.pattern.permute.xlu0 0
  %3114 = vperm.xlu0 %3113, %v3048
  %v3115 = vpop.permute.xlu0 %3114
  %3118 = vset.pattern.permute.xlu0 0
  %3119 = vperm.xlu0 %3118, %v3049
  %v3120 = vpop.permute.xlu0 %3119
  %3123 = vset.pattern.permute.xlu0 0
  %3124 = vperm.xlu0 %3123, %v3050
  %v3125 = vpop.permute.xlu0 %3124
  %3128 = vset.pattern.permute.xlu0 0
  %3129 = vperm.xlu0 %3128, %v3051
  %v3130 = vpop.permute.xlu0 %3129
  %3133 = vset.pattern.permute.xlu0 0
  %3134 = vperm.xlu0 %3133, %v3052
  %v3135 = vpop.permute.xlu0 %3134
  %3138 = vset.pattern.permute.xlu0 0
  %3139 = vperm.xlu0 %3138, %v3053
  %v3140 = vpop.permute.xlu0 %3139
  %3143 = vset.pattern.permute.xlu0 0
  %3144 = vperm.xlu0 %3143, %v3054
  %v3145 = vpop.permute.xlu0 %3144
  %3148 = vset.pattern.permute.xlu0 0
  %3149 = vperm.xlu0 %3148, %v3055
  %v3150 = vpop.permute.xlu0 %3149
  %3153 = vset.pattern.permute.xlu0 0
  %3154 = vperm.xlu0 %3153, %v3056
  %v3155 = vpop.permute.xlu0 %3154
  %3158 = vset.pattern.permute.xlu0 0
  %3159 = vperm.xlu0 %3158, %v3057
  %v3160 = vpop.permute.xlu0 %3159
  %3163 = vset.pattern.permute.xlu0 0
  %3164 = vperm.xlu0 %3163, %v3058
  %v3165 = vpop.permute.xlu0 %3164
  %3168 = vset.pattern.permute.xlu0 0
  %3169 = vperm.xlu0 %3168, %v3059
  %v3170 = vpop.permute.xlu0 %3169
  %3173 = vset.pattern.permute.xlu0 0
  %3174 = vperm.xlu0 %3173, %v3060
  %v3175 = vpop.permute.xlu0 %3174
  %3178 = vset.pattern.permute.xlu0 0
  %3179 = vperm.xlu0 %3178, %v3061
  %v3180 = vpop.permute.xlu0 %3179
  %3183 = vset.pattern.permute.xlu0 0
  %3184 = vperm.xlu0 %3183, %v3062
  %v3185 = vpop.permute.xlu0 %3184
  %3188 = vset.pattern.permute.xlu0 0
  %3189 = vperm.xlu0 %3188, %v3063
  %v3190 = vpop.permute.xlu0 %3189
  %3193 = vset.pattern.permute.xlu0 0
  %3194 = vperm.xlu0 %3193, %v3064
  %v3195 = vpop.permute.xlu0 %3194
  %3198 = vset.pattern.permute.xlu0 0
  %3199 = vperm.xlu0 %3198, %v3065
  %v3200 = vpop.permute.xlu0 %3199
  %3203 = vset.pattern.permute.xlu0 0
  %3204 = vperm.xlu0 %3203, %v3066
  %v3205 = vpop.permute.xlu0 %3204
  %3208 = vset.pattern.permute.xlu0 0
  %3209 = vperm.xlu0 %3208, %v3067
  %v3210 = vpop.permute.xlu0 %3209
  %3213 = vset.pattern.permute.xlu0 0
  %3214 = vperm.xlu0 %3213, %v3068
  %v3215 = vpop.permute.xlu0 %3214
  %3218 = vset.pattern.permute.xlu0 0
  %3219 = vperm.xlu0 %3218, %v3069
  %v3220 = vpop.permute.xlu0 %3219
  %3223 = vset.pattern.permute.xlu0 0
  %3224 = vperm.xlu0 %3223, %v3070
  %v3225 = vpop.permute.xlu0 %3224
  %3228 = vset.pattern.permute.xlu0 0
  %3229 = vperm.xlu0 %3228, %v3071
  %v3230 = vpop.permute.xlu0 %3229
  %v3233 = vsel %vm439, %v2946, 0
  %v3236 = vsel %vm439, %v2949, 0
  %v3239 = vsel %vm439, %v2952, 0
  %v3242 = vsel %vm439, %v2955, 0
  %v3245 = vsel %vm439, %v2958, 0
  %v3248 = vsel %vm439, %v2961, 0
  %v3251 = vsel %vm439, %v2964, 0
  %v3254 = vsel %vm439, %v2967, 0
  %v3257 = vsel %vm439, %v2970, 0
  %v3260 = vsel %vm439, %v2973, 0
  %v3263 = vsel %vm439, %v2976, 0
  %v3266 = vsel %vm439, %v2979, 0
  %v3269 = vsel %vm439, %v2982, 0
  %v3272 = vsel %vm439, %v2985, 0
  %v3275 = vsel %vm439, %v2988, 0
  %v3278 = vsel %vm439, %v2991, 0
  %v3281 = vsel %vm439, %v2994, 0
  %v3284 = vsel %vm439, %v2997, 0
  %v3287 = vsel %vm439, %v3000, 0
  %v3290 = vsel %vm439, %v3003, 0
  %v3293 = vsel %vm439, %v3006, 0
  %v3296 = vsel %vm439, %v3009, 0
  %v3299 = vsel %vm439, %v3012, 0
  %v3302 = vsel %vm439, %v3015, 0
  %v3305 = vsel %vm439, %v3018, 0
  %v3308 = vsel %vm439, %v3021, 0
  %v3311 = vsel %vm439, %v3024, 0
  %v3314 = vsel %vm439, %v3027, 0
  %v3317 = vsel %vm439, %v3030, 0
  %v3320 = vsel %vm439, %v3033, 0
  %v3323 = vsel %vm439, %v3036, 0
  %v3326 = vsel %vm439, %v3039, 0
  %3328 = vmatprep.subr.mxu0 0.0
  %3329 = vmatpush1.msra.mxu0 %v2900
  %3330 = vmatprep.subr.mxu0 0.0
  %3331 = vmatpush1.msra.mxu0 %v2901
  %3332 = vmatprep.subr.mxu0 0.0
  %3333 = vmatpush1.msra.mxu0 %v2902
  %3334 = vmatprep.subr.mxu0 0.0
  %3335 = vmatpush1.msra.mxu0 %v2903
  %3336 = vmatprep.subr.mxu0 0.0
  %3337 = vmatpush1.msra.mxu0 %v2904
  %3338 = vmatprep.subr.mxu0 0.0
  %3339 = vmatpush1.msra.mxu0 %v2905
  %3340 = vmatprep.subr.mxu0 0.0
  %3341 = vmatpush1.msra.mxu0 %v2906
  %3342 = vmatprep.subr.mxu0 0.0
  %3343 = vmatpush1.msra.mxu0 %v2907
  %3344 = vmatprep.subr.mxu0 0.0
  %3345 = vmatpush1.msra.mxu0 %v2908
  %3346 = vmatprep.subr.mxu0 0.0
  %3347 = vmatpush1.msra.mxu0 %v2909
  %3348 = vmatprep.subr.mxu0 0.0
  %3349 = vmatpush1.msra.mxu0 %v2910
  %3350 = vmatprep.subr.mxu0 0.0
  %3351 = vmatpush1.msra.mxu0 %v2911
  %3352 = vmatprep.subr.mxu0 0.0
  %3353 = vmatpush1.msra.mxu0 %v2912
  %3354 = vmatprep.subr.mxu0 0.0
  %3355 = vmatpush1.msra.mxu0 %v2913
  %3356 = vmatprep.subr.mxu0 0.0
  %3357 = vmatpush1.msra.mxu0 %v2914
  %3358 = vmatprep.subr.mxu0 0.0
  %3359 = vmatpush1.msra.mxu0 %v2915
  %3360 = vmatprep.subr.mxu0 0.0
  %3361 = vmatpush1.msra.mxu0 %v2916
  %3362 = vmatprep.subr.mxu0 0.0
  %3363 = vmatpush1.msra.mxu0 %v2917
  %3364 = vmatprep.subr.mxu0 0.0
  %3365 = vmatpush1.msra.mxu0 %v2918
  %3366 = vmatprep.subr.mxu0 0.0
  %3367 = vmatpush1.msra.mxu0 %v2919
  %3368 = vmatprep.subr.mxu0 0.0
  %3369 = vmatpush1.msra.mxu0 %v2920
  %3370 = vmatprep.subr.mxu0 0.0
  %3371 = vmatpush1.msra.mxu0 %v2921
  %3372 = vmatprep.subr.mxu0 0.0
  %3373 = vmatpush1.msra.mxu0 %v2922
  %3374 = vmatprep.subr.mxu0 0.0
  %3375 = vmatpush1.msra.mxu0 %v2923
  %3376 = vmatprep.subr.mxu0 0.0
  %3377 = vmatpush1.msra.mxu0 %v2924
  %3378 = vmatprep.subr.mxu0 0.0
  %3379 = vmatpush1.msra.mxu0 %v2925
  %3380 = vmatprep.subr.mxu0 0.0
  %3381 = vmatpush1.msra.mxu0 %v2926
  %3382 = vmatprep.subr.mxu0 0.0
  %3383 = vmatpush1.msra.mxu0 %v2927
  %3384 = vmatprep.subr.mxu0 0.0
  %3385 = vmatpush1.msra.mxu0 %v2928
  %3386 = vmatprep.subr.mxu0 0.0
  %3387 = vmatpush1.msra.mxu0 %v2929
  %3388 = vmatprep.subr.mxu0 0.0
  %3389 = vmatpush1.msra.mxu0 %v2930
  %3390 = vmatprep.subr.mxu0 0.0
  %3391 = vmatpush1.msra.mxu0 %v2931
  %3392 = vmatprep.mubr.f32.mxu0 %v2945
  %3393 = vmatmul.mubr.f32.gmra.mrb[0].mxu0 %v2944
  %v3394 = vpop.f32.mrb[0].mxu0
  %v3395 = vadd.f32 %v3075, %v3394
  %v3396 = vpop.f32.mrb[0].mxu0
  %3397 = vmatprep.mubr.f32.mxu0 %v2948
  %3398 = vmatmul.mubr.f32.gmra.mrb[0].mxu0 %v2947
  %v3399 = vpop.f32.mrb[0].mxu0
  %v3400 = vadd.f32 %v3080, %v3399
  %v3401 = vpop.f32.mrb[0].mxu0
  %3402 = vmatprep.mubr.f32.mxu0 %v2951
  %3403 = vmatmul.mubr.f32.gmra.mrb[0].mxu0 %v2950
  %v3404 = vpop.f32.mrb[0].mxu0
  %v3405 = vadd.f32 %v3085, %v3404
  %v3406 = vpop.f32.mrb[0].mxu0
  %3407 = vmatprep.mubr.f32.mxu0 %v2954
  %3408 = vmatmul.mubr.f32.gmra.mrb[0].mxu0 %v2953
  %v3409 = vpop.f32.mrb[0].mxu0
  %v3410 = vadd.f32 %v3090, %v3409
  %v3411 = vpop.f32.mrb[0].mxu0
  %3412 = vmatprep.mubr.f32.mxu0 %v2957
  %3413 = vmatmul.mubr.f32.gmra.mrb[0].mxu0 %v2956
  %v3414 = vpop.f32.mrb[0].mxu0
  %v3415 = vadd.f32 %v3095, %v3414
  %v3416 = vpop.f32.mrb[0].mxu0
  %3417 = vmatprep.mubr.f32.mxu0 %v2960
  %3418 = vmatmul.mubr.f32.gmra.mrb[0].mxu0 %v2959
  %v3419 = vpop.f32.mrb[0].mxu0
  %v3420 = vadd.f32 %v3100, %v3419
  %v3421 = vpop.f32.mrb[0].mxu0
  %3422 = vmatprep.mubr.f32.mxu0 %v2963
  %3423 = vmatmul.mubr.f32.gmra.mrb[0].mxu0 %v2962
  %v3424 = vpop.f32.mrb[0].mxu0
  %v3425 = vadd.f32 %v3105, %v3424
  %v3426 = vpop.f32.mrb[0].mxu0
  %3427 = vmatprep.mubr.f32.mxu0 %v2966
  %3428 = vmatmul.mubr.f32.gmra.mrb[0].mxu0 %v2965
  %v3429 = vpop.f32.mrb[0].mxu0
  %v3430 = vadd.f32 %v3110, %v3429
  %v3431 = vpop.f32.mrb[0].mxu0
  %3432 = vmatprep.mubr.f32.mxu0 %v2969
  %3433 = vmatmul.mubr.f32.gmra.mrb[0].mxu0 %v2968
  %v3434 = vpop.f32.mrb[0].mxu0
  %v3435 = vadd.f32 %v3115, %v3434
  %v3436 = vpop.f32.mrb[0].mxu0
  %3437 = vmatprep.mubr.f32.mxu0 %v2972
  %3438 = vmatmul.mubr.f32.gmra.mrb[0].mxu0 %v2971
  %v3439 = vpop.f32.mrb[0].mxu0
  %v3440 = vadd.f32 %v3120, %v3439
  %v3441 = vpop.f32.mrb[0].mxu0
  %3442 = vmatprep.mubr.f32.mxu0 %v2975
  %3443 = vmatmul.mubr.f32.gmra.mrb[0].mxu0 %v2974
  %v3444 = vpop.f32.mrb[0].mxu0
  %v3445 = vadd.f32 %v3125, %v3444
  %v3446 = vpop.f32.mrb[0].mxu0
  %3447 = vmatprep.mubr.f32.mxu0 %v2978
  %3448 = vmatmul.mubr.f32.gmra.mrb[0].mxu0 %v2977
  %v3449 = vpop.f32.mrb[0].mxu0
  %v3450 = vadd.f32 %v3130, %v3449
  %v3451 = vpop.f32.mrb[0].mxu0
  %3452 = vmatprep.mubr.f32.mxu0 %v2981
  %3453 = vmatmul.mubr.f32.gmra.mrb[0].mxu0 %v2980
  %v3454 = vpop.f32.mrb[0].mxu0
  %v3455 = vadd.f32 %v3135, %v3454
  %v3456 = vpop.f32.mrb[0].mxu0
  %3457 = vmatprep.mubr.f32.mxu0 %v2984
  %3458 = vmatmul.mubr.f32.gmra.mrb[0].mxu0 %v2983
  %v3459 = vpop.f32.mrb[0].mxu0
  %v3460 = vadd.f32 %v3140, %v3459
  %v3461 = vpop.f32.mrb[0].mxu0
  %3462 = vmatprep.mubr.f32.mxu0 %v2987
  %3463 = vmatmul.mubr.f32.gmra.mrb[0].mxu0 %v2986
  %v3464 = vpop.f32.mrb[0].mxu0
  %v3465 = vadd.f32 %v3145, %v3464
  %v3466 = vpop.f32.mrb[0].mxu0
  %3467 = vmatprep.mubr.f32.mxu0 %v2990
  %3468 = vmatmul.mubr.f32.gmra.mrb[0].mxu0 %v2989
  %v3469 = vpop.f32.mrb[0].mxu0
  %v3470 = vadd.f32 %v3150, %v3469
  %v3471 = vpop.f32.mrb[0].mxu0
  %3472 = vmatprep.mubr.f32.mxu0 %v2993
  %3473 = vmatmul.mubr.f32.gmra.mrb[0].mxu0 %v2992
  %v3474 = vpop.f32.mrb[0].mxu0
  %v3475 = vadd.f32 %v3155, %v3474
  %v3476 = vpop.f32.mrb[0].mxu0
  %3477 = vmatprep.mubr.f32.mxu0 %v2996
  %3478 = vmatmul.mubr.f32.gmra.mrb[0].mxu0 %v2995
  %v3479 = vpop.f32.mrb[0].mxu0
  %v3480 = vadd.f32 %v3160, %v3479
  %v3481 = vpop.f32.mrb[0].mxu0
  %3482 = vmatprep.mubr.f32.mxu0 %v2999
  %3483 = vmatmul.mubr.f32.gmra.mrb[0].mxu0 %v2998
  %v3484 = vpop.f32.mrb[0].mxu0
  %v3485 = vadd.f32 %v3165, %v3484
  %v3486 = vpop.f32.mrb[0].mxu0
  %3487 = vmatprep.mubr.f32.mxu0 %v3002
  %3488 = vmatmul.mubr.f32.gmra.mrb[0].mxu0 %v3001
  %v3489 = vpop.f32.mrb[0].mxu0
  %v3490 = vadd.f32 %v3170, %v3489
  %v3491 = vpop.f32.mrb[0].mxu0
  %3492 = vmatprep.mubr.f32.mxu0 %v3005
  %3493 = vmatmul.mubr.f32.gmra.mrb[0].mxu0 %v3004
  %v3494 = vpop.f32.mrb[0].mxu0
  %v3495 = vadd.f32 %v3175, %v3494
  %v3496 = vpop.f32.mrb[0].mxu0
  %3497 = vmatprep.mubr.f32.mxu0 %v3008
  %3498 = vmatmul.mubr.f32.gmra.mrb[0].mxu0 %v3007
  %v3499 = vpop.f32.mrb[0].mxu0
  %v3500 = vadd.f32 %v3180, %v3499
  %v3501 = vpop.f32.mrb[0].mxu0
  %3502 = vmatprep.mubr.f32.mxu0 %v3011
  %3503 = vmatmul.mubr.f32.gmra.mrb[0].mxu0 %v3010
  %v3504 = vpop.f32.mrb[0].mxu0
  %v3505 = vadd.f32 %v3185, %v3504
  %v3506 = vpop.f32.mrb[0].mxu0
  %3507 = vmatprep.mubr.f32.mxu0 %v3014
  %3508 = vmatmul.mubr.f32.gmra.mrb[0].mxu0 %v3013
  %v3509 = vpop.f32.mrb[0].mxu0
  %v3510 = vadd.f32 %v3190, %v3509
  %v3511 = vpop.f32.mrb[0].mxu0
  %3512 = vmatprep.mubr.f32.mxu0 %v3017
  %3513 = vmatmul.mubr.f32.gmra.mrb[0].mxu0 %v3016
  %v3514 = vpop.f32.mrb[0].mxu0
  %v3515 = vadd.f32 %v3195, %v3514
  %v3516 = vpop.f32.mrb[0].mxu0
  %3517 = vmatprep.mubr.f32.mxu0 %v3020
  %3518 = vmatmul.mubr.f32.gmra.mrb[0].mxu0 %v3019
  %v3519 = vpop.f32.mrb[0].mxu0
  %v3520 = vadd.f32 %v3200, %v3519
  %v3521 = vpop.f32.mrb[0].mxu0
  %3522 = vmatprep.mubr.f32.mxu0 %v3023
  %3523 = vmatmul.mubr.f32.gmra.mrb[0].mxu0 %v3022
  %v3524 = vpop.f32.mrb[0].mxu0
  %v3525 = vadd.f32 %v3205, %v3524
  %v3526 = vpop.f32.mrb[0].mxu0
  %3527 = vmatprep.mubr.f32.mxu0 %v3026
  %3528 = vmatmul.mubr.f32.gmra.mrb[0].mxu0 %v3025
  %v3529 = vpop.f32.mrb[0].mxu0
  %v3530 = vadd.f32 %v3210, %v3529
  %v3531 = vpop.f32.mrb[0].mxu0
  %3532 = vmatprep.mubr.f32.mxu0 %v3029
  %3533 = vmatmul.mubr.f32.gmra.mrb[0].mxu0 %v3028
  %v3534 = vpop.f32.mrb[0].mxu0
  %v3535 = vadd.f32 %v3215, %v3534
  %v3536 = vpop.f32.mrb[0].mxu0
  %3537 = vmatprep.mubr.f32.mxu0 %v3032
  %3538 = vmatmul.mubr.f32.gmra.mrb[0].mxu0 %v3031
  %v3539 = vpop.f32.mrb[0].mxu0
  %v3540 = vadd.f32 %v3220, %v3539
  %v3541 = vpop.f32.mrb[0].mxu0
  %3542 = vmatprep.mubr.f32.mxu0 %v3035
  %3543 = vmatmul.mubr.f32.gmra.mrb[0].mxu0 %v3034
  %v3544 = vpop.f32.mrb[0].mxu0
  %v3545 = vadd.f32 %v3225, %v3544
  %v3546 = vpop.f32.mrb[0].mxu0
  %3547 = vmatprep.mubr.f32.mxu0 %v3038
  %3548 = vmatmul.mubr.f32.gmra.mrb[0].mxu0 %v3037
  %v3549 = vpop.f32.mrb[0].mxu0
  %v3550 = vadd.f32 %v3230, %v3549
  %v3551 = vpop.f32.mrb[0].mxu0
  %3552 = vdwg.mxu0
  %3553 = vmatprep.subr.mxu0 0.0
  %3554 = vmatpush1.msra.mxu0 %v2932
  %3555 = vmatprep.subr.mxu0 0.0
  %3556 = vmatpush1.msra.mxu0 %v2933
  %3557 = vmatprep.subr.mxu0 0.0
  %3558 = vmatpush1.msra.mxu0 %v2934
  %3559 = vmatprep.subr.mxu0 0.0
  %3560 = vmatpush1.msra.mxu0 %v2935
  %3561 = vmatprep.subr.mxu0 0.0
  %3562 = vmatpush1.msra.mxu0 %v2936
  %3563 = vmatprep.subr.mxu0 0.0
  %3564 = vmatpush1.msra.mxu0 %v2937
  %3565 = vmatprep.subr.mxu0 0.0
  %3566 = vmatpush1.msra.mxu0 %v2938
  %3567 = vmatprep.subr.mxu0 0.0
  %3568 = vmatpush1.msra.mxu0 %v2939
  %3569 = vmatprep.subr.mxu0 0.0
  %3570 = vmatpush1.msra.mxu0 %v2940
  %3571 = vmatprep.subr.mxu0 0.0
  %3572 = vmatpush1.msra.mxu0 %v2941
  %3573 = vmatprep.subr.mxu0 0.0
  %3574 = vmatpush1.msra.mxu0 %v2942
  %3575 = vmatprep.subr.mxu0 0.0
  %3576 = vmatpush1.msra.mxu0 %v2943
  %3577 = vmatprep.subr.mxu0 0.0
  %3578 = vmatpush1.msra.mxu0 0.0
  %3579 = vmatprep.subr.mxu0 0.0
  %3580 = vmatpush1.msra.mxu0 0.0
  %3581 = vmatprep.subr.mxu0 0.0
  %3582 = vmatpush1.msra.mxu0 0.0
  %3583 = vmatprep.subr.mxu0 0.0
  %3584 = vmatpush1.msra.mxu0 0.0
  %3585 = vmatprep.subr.mxu0 0.0
  %3586 = vmatpush1.msra.mxu0 0.0
  %3587 = vmatprep.subr.mxu0 0.0
  %3588 = vmatpush1.msra.mxu0 0.0
  %3589 = vmatprep.subr.mxu0 0.0
  %3590 = vmatpush1.msra.mxu0 0.0
  %3591 = vmatprep.subr.mxu0 0.0
  %3592 = vmatpush1.msra.mxu0 0.0
  %3593 = vmatprep.subr.mxu0 0.0
  %3594 = vmatpush1.msra.mxu0 0.0
  %3595 = vmatprep.subr.mxu0 0.0
  %3596 = vmatpush1.msra.mxu0 0.0
  %3597 = vmatprep.subr.mxu0 0.0
  %3598 = vmatpush1.msra.mxu0 0.0
  %3599 = vmatprep.subr.mxu0 0.0
  %3600 = vmatpush1.msra.mxu0 0.0
  %3601 = vmatprep.subr.mxu0 0.0
  %3602 = vmatpush1.msra.mxu0 0.0
  %3603 = vmatprep.subr.mxu0 0.0
  %3604 = vmatpush1.msra.mxu0 0.0
  %3605 = vmatprep.subr.mxu0 0.0
  %3606 = vmatpush1.msra.mxu0 0.0
  %3607 = vmatprep.subr.mxu0 0.0
  %3608 = vmatpush1.msra.mxu0 0.0
  %3609 = vmatprep.subr.mxu0 0.0
  %3610 = vmatpush1.msra.mxu0 0.0
  %3611 = vmatprep.subr.mxu0 0.0
  %3612 = vmatpush1.msra.mxu0 0.0
  %3613 = vmatprep.subr.mxu0 0.0
  %3614 = vmatpush1.msra.mxu0 0.0
  %3615 = vmatprep.subr.mxu0 0.0
  %3616 = vmatpush1.msra.mxu0 0.0
  %3617 = vmatprep.mubr.f32.mxu0 0.0
  %3618 = vmatmul.mubr.f32.gmra.mrb[0].mxu0 %v3233
  %v3619 = vpop.f32.mrb[0].mxu0
  %v3620 = vadd.f32 %v3395, %v3619
  %v3621 = vpop.f32.mrb[0].mxu0
  %3622 = vmatprep.mubr.f32.mxu0 0.0
  %3623 = vmatmul.mubr.f32.gmra.mrb[0].mxu0 %v3236
  %v3624 = vpop.f32.mrb[0].mxu0
  %v3625 = vadd.f32 %v3400, %v3624
  %v3626 = vpop.f32.mrb[0].mxu0
  %3627 = vmatprep.mubr.f32.mxu0 0.0
  %3628 = vmatmul.mubr.f32.gmra.mrb[0].mxu0 %v3239
  %v3629 = vpop.f32.mrb[0].mxu0
  %v3630 = vadd.f32 %v3405, %v3629
  %v3631 = vpop.f32.mrb[0].mxu0
  %3632 = vmatprep.mubr.f32.mxu0 0.0
  %3633 = vmatmul.mubr.f32.gmra.mrb[0].mxu0 %v3242
  %v3634 = vpop.f32.mrb[0].mxu0
  %v3635 = vadd.f32 %v3410, %v3634
  %v3636 = vpop.f32.mrb[0].mxu0
  %3637 = vmatprep.mubr.f32.mxu0 0.0
  %3638 = vmatmul.mubr.f32.gmra.mrb[0].mxu0 %v3245
  %v3639 = vpop.f32.mrb[0].mxu0
  %v3640 = vadd.f32 %v3415, %v3639
  %v3641 = vpop.f32.mrb[0].mxu0
  %3642 = vmatprep.mubr.f32.mxu0 0.0
  %3643 = vmatmul.mubr.f32.gmra.mrb[0].mxu0 %v3248
  %v3644 = vpop.f32.mrb[0].mxu0
  %v3645 = vadd.f32 %v3420, %v3644
  %v3646 = vpop.f32.mrb[0].mxu0
  %3647 = vmatprep.mubr.f32.mxu0 0.0
  %3648 = vmatmul.mubr.f32.gmra.mrb[0].mxu0 %v3251
  %v3649 = vpop.f32.mrb[0].mxu0
  %v3650 = vadd.f32 %v3425, %v3649
  %v3651 = vpop.f32.mrb[0].mxu0
  %3652 = vmatprep.mubr.f32.mxu0 0.0
  %3653 = vmatmul.mubr.f32.gmra.mrb[0].mxu0 %v3254
  %v3654 = vpop.f32.mrb[0].mxu0
  %v3655 = vadd.f32 %v3430, %v3654
  %v3656 = vpop.f32.mrb[0].mxu0
  %3657 = vmatprep.mubr.f32.mxu0 0.0
  %3658 = vmatmul.mubr.f32.gmra.mrb[0].mxu0 %v3257
  %v3659 = vpop.f32.mrb[0].mxu0
  %v3660 = vadd.f32 %v3435, %v3659
  %v3661 = vpop.f32.mrb[0].mxu0
  %3662 = vmatprep.mubr.f32.mxu0 0.0
  %3663 = vmatmul.mubr.f32.gmra.mrb[0].mxu0 %v3260
  %v3664 = vpop.f32.mrb[0].mxu0
  %v3665 = vadd.f32 %v3440, %v3664
  %v3666 = vpop.f32.mrb[0].mxu0
  %3667 = vmatprep.mubr.f32.mxu0 0.0
  %3668 = vmatmul.mubr.f32.gmra.mrb[0].mxu0 %v3263
  %v3669 = vpop.f32.mrb[0].mxu0
  %v3670 = vadd.f32 %v3445, %v3669
  %v3671 = vpop.f32.mrb[0].mxu0
  %3672 = vmatprep.mubr.f32.mxu0 0.0
  %3673 = vmatmul.mubr.f32.gmra.mrb[0].mxu0 %v3266
  %v3674 = vpop.f32.mrb[0].mxu0
  %v3675 = vadd.f32 %v3450, %v3674
  %v3676 = vpop.f32.mrb[0].mxu0
  %3677 = vmatprep.mubr.f32.mxu0 0.0
  %3678 = vmatmul.mubr.f32.gmra.mrb[0].mxu0 %v3269
  %v3679 = vpop.f32.mrb[0].mxu0
  %v3680 = vadd.f32 %v3455, %v3679
  %v3681 = vpop.f32.mrb[0].mxu0
  %3682 = vmatprep.mubr.f32.mxu0 0.0
  %3683 = vmatmul.mubr.f32.gmra.mrb[0].mxu0 %v3272
  %v3684 = vpop.f32.mrb[0].mxu0
  %v3685 = vadd.f32 %v3460, %v3684
  %v3686 = vpop.f32.mrb[0].mxu0
  %3687 = vmatprep.mubr.f32.mxu0 0.0
  %3688 = vmatmul.mubr.f32.gmra.mrb[0].mxu0 %v3275
  %v3689 = vpop.f32.mrb[0].mxu0
  %v3690 = vadd.f32 %v3465, %v3689
  %v3691 = vpop.f32.mrb[0].mxu0
  %3692 = vmatprep.mubr.f32.mxu0 0.0
  %3693 = vmatmul.mubr.f32.gmra.mrb[0].mxu0 %v3278
  %v3694 = vpop.f32.mrb[0].mxu0
  %v3695 = vadd.f32 %v3470, %v3694
  %v3696 = vpop.f32.mrb[0].mxu0
  %3697 = vmatprep.mubr.f32.mxu0 0.0
  %3698 = vmatmul.mubr.f32.gmra.mrb[0].mxu0 %v3281
  %v3699 = vpop.f32.mrb[0].mxu0
  %v3700 = vadd.f32 %v3475, %v3699
  %v3701 = vpop.f32.mrb[0].mxu0
  %3702 = vmatprep.mubr.f32.mxu0 0.0
  %3703 = vmatmul.mubr.f32.gmra.mrb[0].mxu0 %v3284
  %v3704 = vpop.f32.mrb[0].mxu0
  %v3705 = vadd.f32 %v3480, %v3704
  %v3706 = vpop.f32.mrb[0].mxu0
  %3707 = vmatprep.mubr.f32.mxu0 0.0
  %3708 = vmatmul.mubr.f32.gmra.mrb[0].mxu0 %v3287
  %v3709 = vpop.f32.mrb[0].mxu0
  %v3710 = vadd.f32 %v3485, %v3709
  %v3711 = vpop.f32.mrb[0].mxu0
  %3712 = vmatprep.mubr.f32.mxu0 0.0
  %3713 = vmatmul.mubr.f32.gmra.mrb[0].mxu0 %v3290
  %v3714 = vpop.f32.mrb[0].mxu0
  %v3715 = vadd.f32 %v3490, %v3714
  %v3716 = vpop.f32.mrb[0].mxu0
  %3717 = vmatprep.mubr.f32.mxu0 0.0
  %3718 = vmatmul.mubr.f32.gmra.mrb[0].mxu0 %v3293
  %v3719 = vpop.f32.mrb[0].mxu0
  %v3720 = vadd.f32 %v3495, %v3719
  %v3721 = vpop.f32.mrb[0].mxu0
  %3722 = vmatprep.mubr.f32.mxu0 0.0
  %3723 = vmatmul.mubr.f32.gmra.mrb[0].mxu0 %v3296
  %v3724 = vpop.f32.mrb[0].mxu0
  %v3725 = vadd.f32 %v3500, %v3724
  %v3726 = vpop.f32.mrb[0].mxu0
  %3727 = vmatprep.mubr.f32.mxu0 0.0
  %3728 = vmatmul.mubr.f32.gmra.mrb[0].mxu0 %v3299
  %v3729 = vpop.f32.mrb[0].mxu0
  %v3730 = vadd.f32 %v3505, %v3729
  %v3731 = vpop.f32.mrb[0].mxu0
  %3732 = vmatprep.mubr.f32.mxu0 0.0
  %3733 = vmatmul.mubr.f32.gmra.mrb[0].mxu0 %v3302
  %v3734 = vpop.f32.mrb[0].mxu0
  %v3735 = vadd.f32 %v3510, %v3734
  %v3736 = vpop.f32.mrb[0].mxu0
  %3737 = vmatprep.mubr.f32.mxu0 0.0
  %3738 = vmatmul.mubr.f32.gmra.mrb[0].mxu0 %v3305
  %v3739 = vpop.f32.mrb[0].mxu0
  %v3740 = vadd.f32 %v3515, %v3739
  %v3741 = vpop.f32.mrb[0].mxu0
  %3742 = vmatprep.mubr.f32.mxu0 0.0
  %3743 = vmatmul.mubr.f32.gmra.mrb[0].mxu0 %v3308
  %v3744 = vpop.f32.mrb[0].mxu0
  %v3745 = vadd.f32 %v3520, %v3744
  %v3746 = vpop.f32.mrb[0].mxu0
  %3747 = vmatprep.mubr.f32.mxu0 0.0
  %3748 = vmatmul.mubr.f32.gmra.mrb[0].mxu0 %v3311
  %v3749 = vpop.f32.mrb[0].mxu0
  %v3750 = vadd.f32 %v3525, %v3749
  %v3751 = vpop.f32.mrb[0].mxu0
  %3752 = vmatprep.mubr.f32.mxu0 0.0
  %3753 = vmatmul.mubr.f32.gmra.mrb[0].mxu0 %v3314
  %v3754 = vpop.f32.mrb[0].mxu0
  %v3755 = vadd.f32 %v3530, %v3754
  %v3756 = vpop.f32.mrb[0].mxu0
  %3757 = vmatprep.mubr.f32.mxu0 0.0
  %3758 = vmatmul.mubr.f32.gmra.mrb[0].mxu0 %v3317
  %v3759 = vpop.f32.mrb[0].mxu0
  %v3760 = vadd.f32 %v3535, %v3759
  %v3761 = vpop.f32.mrb[0].mxu0
  %3762 = vmatprep.mubr.f32.mxu0 0.0
  %3763 = vmatmul.mubr.f32.gmra.mrb[0].mxu0 %v3320
  %v3764 = vpop.f32.mrb[0].mxu0
  %v3765 = vadd.f32 %v3540, %v3764
  %v3766 = vpop.f32.mrb[0].mxu0
  %3767 = vmatprep.mubr.f32.mxu0 0.0
  %3768 = vmatmul.mubr.f32.gmra.mrb[0].mxu0 %v3323
  %v3769 = vpop.f32.mrb[0].mxu0
  %v3770 = vadd.f32 %v3545, %v3769
  %v3771 = vpop.f32.mrb[0].mxu0
  %3772 = vmatprep.mubr.f32.mxu0 0.0
  %3773 = vmatmul.mubr.f32.gmra.mrb[0].mxu0 %v3326
  %v3774 = vpop.f32.mrb[0].mxu0
  %v3775 = vadd.f32 %v3550, %v3774
  %v3776 = vpop.f32.mrb[0].mxu0
  %3777 = vdwg.mxu0
  %vm3778 = vcmp.ge.f32.partialorder %v3620, 0.0
  %vm3779 = vcmp.ge.f32.partialorder %v3625, 0.0
  %vm3780 = vcmp.ge.f32.partialorder %v3630, 0.0
  %vm3781 = vcmp.ge.f32.partialorder %v3635, 0.0
  %vm3782 = vcmp.ge.f32.partialorder %v3640, 0.0
  %vm3783 = vcmp.ge.f32.partialorder %v3645, 0.0
  %vm3784 = vcmp.ge.f32.partialorder %v3650, 0.0
  %vm3785 = vcmp.ge.f32.partialorder %v3655, 0.0
  %vm3786 = vcmp.ge.f32.partialorder %v3660, 0.0
  %vm3787 = vcmp.ge.f32.partialorder %v3665, 0.0
  %vm3788 = vcmp.ge.f32.partialorder %v3670, 0.0
  %vm3789 = vcmp.ge.f32.partialorder %v3675, 0.0
  %vm3790 = vcmp.ge.f32.partialorder %v3680, 0.0
  %vm3791 = vcmp.ge.f32.partialorder %v3685, 0.0
  %vm3792 = vcmp.ge.f32.partialorder %v3690, 0.0
  %vm3793 = vcmp.ge.f32.partialorder %v3695, 0.0
  %vm3794 = vcmp.ge.f32.partialorder %v3700, 0.0
  %vm3795 = vcmp.ge.f32.partialorder %v3705, 0.0
  %vm3796 = vcmp.ge.f32.partialorder %v3710, 0.0
  %vm3797 = vcmp.ge.f32.partialorder %v3715, 0.0
  %vm3798 = vcmp.ge.f32.partialorder %v3720, 0.0
  %vm3799 = vcmp.ge.f32.partialorder %v3725, 0.0
  %vm3800 = vcmp.ge.f32.partialorder %v3730, 0.0
  %vm3801 = vcmp.ge.f32.partialorder %v3735, 0.0
  %vm3802 = vcmp.ge.f32.partialorder %v3740, 0.0
  %vm3803 = vcmp.ge.f32.partialorder %v3745, 0.0
  %vm3804 = vcmp.ge.f32.partialorder %v3750, 0.0
  %vm3805 = vcmp.ge.f32.partialorder %v3755, 0.0
  %vm3806 = vcmp.ge.f32.partialorder %v3760, 0.0
  %vm3807 = vcmp.ge.f32.partialorder %v3765, 0.0
  %vm3808 = vcmp.ge.f32.partialorder %v3770, 0.0
  %vm3809 = vcmp.ge.f32.partialorder %v3775, 0.0
  %v3810 = vmul.f32 %v3620, 0.05
  %v3811 = vmul.f32 %v3625, 0.05
  %v3812 = vmul.f32 %v3630, 0.05
  %v3813 = vmul.f32 %v3635, 0.05
  %v3814 = vmul.f32 %v3640, 0.05
  %v3815 = vmul.f32 %v3645, 0.05
  %v3816 = vmul.f32 %v3650, 0.05
  %v3817 = vmul.f32 %v3655, 0.05
  %v3818 = vmul.f32 %v3660, 0.05
  %v3819 = vmul.f32 %v3665, 0.05
  %v3820 = vmul.f32 %v3670, 0.05
  %v3821 = vmul.f32 %v3675, 0.05
  %v3822 = vmul.f32 %v3680, 0.05
  %v3823 = vmul.f32 %v3685, 0.05
  %v3824 = vmul.f32 %v3690, 0.05
  %v3825 = vmul.f32 %v3695, 0.05
  %v3826 = vmul.f32 %v3700, 0.05
  %v3827 = vmul.f32 %v3705, 0.05
  %v3828 = vmul.f32 %v3710, 0.05
  %v3829 = vmul.f32 %v3715, 0.05
  %v3830 = vmul.f32 %v3720, 0.05
  %v3831 = vmul.f32 %v3725, 0.05
  %v3832 = vmul.f32 %v3730, 0.05
  %v3833 = vmul.f32 %v3735, 0.05
  %v3834 = vmul.f32 %v3740, 0.05
  %v3835 = vmul.f32 %v3745, 0.05
  %v3836 = vmul.f32 %v3750, 0.05
  %v3837 = vmul.f32 %v3755, 0.05
  %v3838 = vmul.f32 %v3760, 0.05
  %v3839 = vmul.f32 %v3765, 0.05
  %v3840 = vmul.f32 %v3770, 0.05
  %v3841 = vmul.f32 %v3775, 0.05
  %v3842 = vsel %vm3778, %v3620, %v3810
  %v3843 = vsel %vm3779, %v3625, %v3811
  %v3844 = vsel %vm3780, %v3630, %v3812
  %v3845 = vsel %vm3781, %v3635, %v3813
  %v3846 = vsel %vm3782, %v3640, %v3814
  %v3847 = vsel %vm3783, %v3645, %v3815
  %v3848 = vsel %vm3784, %v3650, %v3816
  %v3849 = vsel %vm3785, %v3655, %v3817
  %v3850 = vsel %vm3786, %v3660, %v3818
  %v3851 = vsel %vm3787, %v3665, %v3819
  %v3852 = vsel %vm3788, %v3670, %v3820
  %v3853 = vsel %vm3789, %v3675, %v3821
  %v3854 = vsel %vm3790, %v3680, %v3822
  %v3855 = vsel %vm3791, %v3685, %v3823
  %v3856 = vsel %vm3792, %v3690, %v3824
  %v3857 = vsel %vm3793, %v3695, %v3825
  %v3858 = vsel %vm3794, %v3700, %v3826
  %v3859 = vsel %vm3795, %v3705, %v3827
  %v3860 = vsel %vm3796, %v3710, %v3828
  %v3861 = vsel %vm3797, %v3715, %v3829
  %v3862 = vsel %vm3798, %v3720, %v3830
  %v3863 = vsel %vm3799, %v3725, %v3831
  %v3864 = vsel %vm3800, %v3730, %v3832
  %v3865 = vsel %vm3801, %v3735, %v3833
  %v3866 = vsel %vm3802, %v3740, %v3834
  %v3867 = vsel %vm3803, %v3745, %v3835
  %v3868 = vsel %vm3804, %v3750, %v3836
  %v3869 = vsel %vm3805, %v3755, %v3837
  %v3870 = vsel %vm3806, %v3760, %v3838
  %v3871 = vsel %vm3807, %v3765, %v3839
  %v3872 = vsel %vm3808, %v3770, %v3840
  %v3873 = vsel %vm3809, %v3775, %v3841
  %v3874 = vld [vmem:[%s12] sm:$0xff]
  %v3875 = vld [vmem:[%s12 + $0x8] sm:$0xff]
  %v3876 = vld [vmem:[%s12 + $0x10] sm:$0xff]
  %v3877 = vld [vmem:[%s12 + $0x18] sm:$0xff]
  %v3878 = vld [vmem:[%s12 + $0x20] sm:$0xff]
  %v3879 = vld [vmem:[%s12 + $0x28] sm:$0xff]
  %v3880 = vld [vmem:[%s12 + $0x30] sm:$0xff]
  %v3881 = vld [vmem:[%s12 + $0x38] sm:$0xff]
  %v3882 = vld [vmem:[%s12 + $0x40] sm:$0xff]
  %v3883 = vld [vmem:[%s12 + $0x48] sm:$0xff]
  %v3884 = vld [vmem:[%s12 + $0x50] sm:$0xff]
  %v3885 = vld [vmem:[%s12 + $0x58] sm:$0xff]
  %v3886 = vld [vmem:[%s12 + $0x60] sm:$0xff]
  %v3887 = vld [vmem:[%s12 + $0x68] sm:$0xff]
  %v3888 = vld [vmem:[%s12 + $0x70] sm:$0xff]
  %v3889 = vld [vmem:[%s12 + $0x78] sm:$0xff]
  %v3890 = vld [vmem:[%s12 + $0x80] sm:$0xff]
  %v3891 = vld [vmem:[%s12 + $0x88] sm:$0xff]
  %v3892 = vld [vmem:[%s12 + $0x90] sm:$0xff]
  %v3893 = vld [vmem:[%s12 + $0x98] sm:$0xff]
  %v3894 = vld [vmem:[%s12 + $0xa0] sm:$0xff]
  %v3895 = vld [vmem:[%s12 + $0xa8] sm:$0xff]
  %v3896 = vld [vmem:[%s12 + $0xb0] sm:$0xff]
  %v3897 = vld [vmem:[%s12 + $0xb8] sm:$0xff]
  %v3898 = vld [vmem:[%s12 + $0xc0] sm:$0xff]
  %v3899 = vld [vmem:[%s12 + $0xc8] sm:$0xff]
  %v3900 = vld [vmem:[%s12 + $0xd0] sm:$0xff]
  %v3901 = vld [vmem:[%s12 + $0xd8] sm:$0xff]
  %v3902 = vld [vmem:[%s12 + $0xe0] sm:$0xff]
  %v3903 = vld [vmem:[%s12 + $0xe8] sm:$0xff]
  %v3904 = vld [vmem:[%s12 + $0xf0] sm:$0xff]
  %v3905 = vld [vmem:[%s12 + $0xf8] sm:$0xff]
  %v3906 = vld [vmem:[%s13] sm:$0xff]
  %v3907 = vld [vmem:[%s13 + $0x8] sm:$0xff]
  %v3908 = vld [vmem:[%s13 + $0x10] sm:$0xff]
  %v3909 = vld [vmem:[%s13 + $0x18] sm:$0xff]
  %v3910 = vld [vmem:[%s13 + $0x20] sm:$0xff]
  %v3911 = vld [vmem:[%s13 + $0x28] sm:$0xff]
  %v3912 = vld [vmem:[%s13 + $0x30] sm:$0xff]
  %v3913 = vld [vmem:[%s13 + $0x38] sm:$0xff]
  %v3914 = vld [vmem:[%s13 + $0x40] sm:$0xff]
  %v3915 = vld [vmem:[%s13 + $0x48] sm:$0xff]
  %v3916 = vld [vmem:[%s13 + $0x50] sm:$0xff]
  %v3917 = vld [vmem:[%s13 + $0x58] sm:$0xff]
  %v3918 = vld [vmem:[%s13 + $0x60] sm:$0xff]
  %v3919 = vld [vmem:[%s13 + $0x68] sm:$0xff]
  %v3920 = vld [vmem:[%s13 + $0x70] sm:$0xff]
  %v3921 = vld [vmem:[%s13 + $0x78] sm:$0xff]
  %3923 = vset.pattern.permute.xlu0 0
  %3924 = vperm.xlu0 %3923, %v3906
  %v3925 = vpop.permute.xlu0 %3924
  %3928 = vset.pattern.permute.xlu0 0
  %3929 = vperm.xlu0 %3928, %v3907
  %v3930 = vpop.permute.xlu0 %3929
  %3933 = vset.pattern.permute.xlu0 0
  %3934 = vperm.xlu0 %3933, %v3908
  %v3935 = vpop.permute.xlu0 %3934
  %3938 = vset.pattern.permute.xlu0 0
  %3939 = vperm.xlu0 %3938, %v3909
  %v3940 = vpop.permute.xlu0 %3939
  %3943 = vset.pattern.permute.xlu0 0
  %3944 = vperm.xlu0 %3943, %v3910
  %v3945 = vpop.permute.xlu0 %3944
  %3948 = vset.pattern.permute.xlu0 0
  %3949 = vperm.xlu0 %3948, %v3911
  %v3950 = vpop.permute.xlu0 %3949
  %3953 = vset.pattern.permute.xlu0 0
  %3954 = vperm.xlu0 %3953, %v3912
  %v3955 = vpop.permute.xlu0 %3954
  %3958 = vset.pattern.permute.xlu0 0
  %3959 = vperm.xlu0 %3958, %v3913
  %v3960 = vpop.permute.xlu0 %3959
  %3963 = vset.pattern.permute.xlu0 0
  %3964 = vperm.xlu0 %3963, %v3914
  %v3965 = vpop.permute.xlu0 %3964
  %3968 = vset.pattern.permute.xlu0 0
  %3969 = vperm.xlu0 %3968, %v3915
  %v3970 = vpop.permute.xlu0 %3969
  %3973 = vset.pattern.permute.xlu0 0
  %3974 = vperm.xlu0 %3973, %v3916
  %v3975 = vpop.permute.xlu0 %3974
  %3978 = vset.pattern.permute.xlu0 0
  %3979 = vperm.xlu0 %3978, %v3917
  %v3980 = vpop.permute.xlu0 %3979
  %3983 = vset.pattern.permute.xlu0 0
  %3984 = vperm.xlu0 %3983, %v3918
  %v3985 = vpop.permute.xlu0 %3984
  %3988 = vset.pattern.permute.xlu0 0
  %3989 = vperm.xlu0 %3988, %v3919
  %v3990 = vpop.permute.xlu0 %3989
  %3993 = vset.pattern.permute.xlu0 0
  %3994 = vperm.xlu0 %3993, %v3920
  %v3995 = vpop.permute.xlu0 %3994
  %3998 = vset.pattern.permute.xlu0 0
  %3999 = vperm.xlu0 %3998, %v3921
  %v4000 = vpop.permute.xlu0 %3999
  %4002 = vmatprep.subr.mxu0 0.0
  %4003 = vmatpush1.msra.mxu0 %v3842
  %4004 = vmatprep.subr.mxu0 0.0
  %4005 = vmatpush1.msra.mxu0 %v3843
  %4006 = vmatprep.subr.mxu0 0.0
  %4007 = vmatpush1.msra.mxu0 %v3844
  %4008 = vmatprep.subr.mxu0 0.0
  %4009 = vmatpush1.msra.mxu0 %v3845
  %4010 = vmatprep.subr.mxu0 0.0
  %4011 = vmatpush1.msra.mxu0 %v3846
  %4012 = vmatprep.subr.mxu0 0.0
  %4013 = vmatpush1.msra.mxu0 %v3847
  %4014 = vmatprep.subr.mxu0 0.0
  %4015 = vmatpush1.msra.mxu0 %v3848
  %4016 = vmatprep.subr.mxu0 0.0
  %4017 = vmatpush1.msra.mxu0 %v3849
  %4018 = vmatprep.subr.mxu0 0.0
  %4019 = vmatpush1.msra.mxu0 %v3850
  %4020 = vmatprep.subr.mxu0 0.0
  %4021 = vmatpush1.msra.mxu0 %v3851
  %4022 = vmatprep.subr.mxu0 0.0
  %4023 = vmatpush1.msra.mxu0 %v3852
  %4024 = vmatprep.subr.mxu0 0.0
  %4025 = vmatpush1.msra.mxu0 %v3853
  %4026 = vmatprep.subr.mxu0 0.0
  %4027 = vmatpush1.msra.mxu0 %v3854
  %4028 = vmatprep.subr.mxu0 0.0
  %4029 = vmatpush1.msra.mxu0 %v3855
  %4030 = vmatprep.subr.mxu0 0.0
  %4031 = vmatpush1.msra.mxu0 %v3856
  %4032 = vmatprep.subr.mxu0 0.0
  %4033 = vmatpush1.msra.mxu0 %v3857
  %4034 = vmatprep.subr.mxu0 0.0
  %4035 = vmatpush1.msra.mxu0 %v3858
  %4036 = vmatprep.subr.mxu0 0.0
  %4037 = vmatpush1.msra.mxu0 %v3859
  %4038 = vmatprep.subr.mxu0 0.0
  %4039 = vmatpush1.msra.mxu0 %v3860
  %4040 = vmatprep.subr.mxu0 0.0
  %4041 = vmatpush1.msra.mxu0 %v3861
  %4042 = vmatprep.subr.mxu0 0.0
  %4043 = vmatpush1.msra.mxu0 %v3862
  %4044 = vmatprep.subr.mxu0 0.0
  %4045 = vmatpush1.msra.mxu0 %v3863
  %4046 = vmatprep.subr.mxu0 0.0
  %4047 = vmatpush1.msra.mxu0 %v3864
  %4048 = vmatprep.subr.mxu0 0.0
  %4049 = vmatpush1.msra.mxu0 %v3865
  %4050 = vmatprep.subr.mxu0 0.0
  %4051 = vmatpush1.msra.mxu0 %v3866
  %4052 = vmatprep.subr.mxu0 0.0
  %4053 = vmatpush1.msra.mxu0 %v3867
  %4054 = vmatprep.subr.mxu0 0.0
  %4055 = vmatpush1.msra.mxu0 %v3868
  %4056 = vmatprep.subr.mxu0 0.0
  %4057 = vmatpush1.msra.mxu0 %v3869
  %4058 = vmatprep.subr.mxu0 0.0
  %4059 = vmatpush1.msra.mxu0 %v3870
  %4060 = vmatprep.subr.mxu0 0.0
  %4061 = vmatpush1.msra.mxu0 %v3871
  %4062 = vmatprep.subr.mxu0 0.0
  %4063 = vmatpush1.msra.mxu0 %v3872
  %4064 = vmatprep.subr.mxu0 0.0
  %4065 = vmatpush1.msra.mxu0 %v3873
  %4066 = vmatprep.mubr.f32.mxu0 %v3875
  %4067 = vmatmul.mubr.f32.gmra.mrb[0].mxu0 %v3874
  %v4068 = vpop.f32.mrb[0].mxu0
  %v4069 = vadd.f32 %v3925, %v4068
  %v4070 = vpop.f32.mrb[0].mxu0
  %4071 = vmatprep.mubr.f32.mxu0 %v3877
  %4072 = vmatmul.mubr.f32.gmra.mrb[0].mxu0 %v3876
  %v4073 = vpop.f32.mrb[0].mxu0
  %v4074 = vadd.f32 %v3930, %v4073
  %v4075 = vpop.f32.mrb[0].mxu0
  %4076 = vmatprep.mubr.f32.mxu0 %v3879
  %4077 = vmatmul.mubr.f32.gmra.mrb[0].mxu0 %v3878
  %v4078 = vpop.f32.mrb[0].mxu0
  %v4079 = vadd.f32 %v3935, %v4078
  %v4080 = vpop.f32.mrb[0].mxu0
  %4081 = vmatprep.mubr.f32.mxu0 %v3881
  %4082 = vmatmul.mubr.f32.gmra.mrb[0].mxu0 %v3880
  %v4083 = vpop.f32.mrb[0].mxu0
  %v4084 = vadd.f32 %v3940, %v4083
  %v4085 = vpop.f32.mrb[0].mxu0
  %4086 = vmatprep.mubr.f32.mxu0 %v3883
  %4087 = vmatmul.mubr.f32.gmra.mrb[0].mxu0 %v3882
  %v4088 = vpop.f32.mrb[0].mxu0
  %v4089 = vadd.f32 %v3945, %v4088
  %v4090 = vpop.f32.mrb[0].mxu0
  %4091 = vmatprep.mubr.f32.mxu0 %v3885
  %4092 = vmatmul.mubr.f32.gmra.mrb[0].mxu0 %v3884
  %v4093 = vpop.f32.mrb[0].mxu0
  %v4094 = vadd.f32 %v3950, %v4093
  %v4095 = vpop.f32.mrb[0].mxu0
  %4096 = vmatprep.mubr.f32.mxu0 %v3887
  %4097 = vmatmul.mubr.f32.gmra.mrb[0].mxu0 %v3886
  %v4098 = vpop.f32.mrb[0].mxu0
  %v4099 = vadd.f32 %v3955, %v4098
  %v4100 = vpop.f32.mrb[0].mxu0
  %4101 = vmatprep.mubr.f32.mxu0 %v3889
  %4102 = vmatmul.mubr.f32.gmra.mrb[0].mxu0 %v3888
  %v4103 = vpop.f32.mrb[0].mxu0
  %v4104 = vadd.f32 %v3960, %v4103
  %v4105 = vpop.f32.mrb[0].mxu0
  %4106 = vmatprep.mubr.f32.mxu0 %v3891
  %4107 = vmatmul.mubr.f32.gmra.mrb[0].mxu0 %v3890
  %v4108 = vpop.f32.mrb[0].mxu0
  %v4109 = vadd.f32 %v3965, %v4108
  %v4110 = vpop.f32.mrb[0].mxu0
  %4111 = vmatprep.mubr.f32.mxu0 %v3893
  %4112 = vmatmul.mubr.f32.gmra.mrb[0].mxu0 %v3892
  %v4113 = vpop.f32.mrb[0].mxu0
  %v4114 = vadd.f32 %v3970, %v4113
  %v4115 = vpop.f32.mrb[0].mxu0
  %4116 = vmatprep.mubr.f32.mxu0 %v3895
  %4117 = vmatmul.mubr.f32.gmra.mrb[0].mxu0 %v3894
  %v4118 = vpop.f32.mrb[0].mxu0
  %v4119 = vadd.f32 %v3975, %v4118
  %v4120 = vpop.f32.mrb[0].mxu0
  %4121 = vmatprep.mubr.f32.mxu0 %v3897
  %4122 = vmatmul.mubr.f32.gmra.mrb[0].mxu0 %v3896
  %v4123 = vpop.f32.mrb[0].mxu0
  %v4124 = vadd.f32 %v3980, %v4123
  %v4125 = vpop.f32.mrb[0].mxu0
  %4126 = vmatprep.mubr.f32.mxu0 %v3899
  %4127 = vmatmul.mubr.f32.gmra.mrb[0].mxu0 %v3898
  %v4128 = vpop.f32.mrb[0].mxu0
  %v4129 = vadd.f32 %v3985, %v4128
  %v4130 = vpop.f32.mrb[0].mxu0
  %4131 = vmatprep.mubr.f32.mxu0 %v3901
  %4132 = vmatmul.mubr.f32.gmra.mrb[0].mxu0 %v3900
  %v4133 = vpop.f32.mrb[0].mxu0
  %v4134 = vadd.f32 %v3990, %v4133
  %v4135 = vpop.f32.mrb[0].mxu0
  %4136 = vmatprep.mubr.f32.mxu0 %v3903
  %4137 = vmatmul.mubr.f32.gmra.mrb[0].mxu0 %v3902
  %v4138 = vpop.f32.mrb[0].mxu0
  %v4139 = vadd.f32 %v3995, %v4138
  %v4140 = vpop.f32.mrb[0].mxu0
  %4141 = vmatprep.mubr.f32.mxu0 %v3905
  %4142 = vmatmul.mubr.f32.gmra.mrb[0].mxu0 %v3904
  %v4143 = vpop.f32.mrb[0].mxu0
  %v4144 = vadd.f32 %v4000, %v4143
  %v4145 = vpop.f32.mrb[0].mxu0
  %4146 = vdwg.mxu0
  %vm4147 = vcmp.ge.f32.partialorder %v4069, 0.0
  %vm4148 = vcmp.ge.f32.partialorder %v4074, 0.0
  %vm4149 = vcmp.ge.f32.partialorder %v4079, 0.0
  %vm4150 = vcmp.ge.f32.partialorder %v4084, 0.0
  %vm4151 = vcmp.ge.f32.partialorder %v4089, 0.0
  %vm4152 = vcmp.ge.f32.partialorder %v4094, 0.0
  %vm4153 = vcmp.ge.f32.partialorder %v4099, 0.0
  %vm4154 = vcmp.ge.f32.partialorder %v4104, 0.0
  %vm4155 = vcmp.ge.f32.partialorder %v4109, 0.0
  %vm4156 = vcmp.ge.f32.partialorder %v4114, 0.0
  %vm4157 = vcmp.ge.f32.partialorder %v4119, 0.0
  %vm4158 = vcmp.ge.f32.partialorder %v4124, 0.0
  %vm4159 = vcmp.ge.f32.partialorder %v4129, 0.0
  %vm4160 = vcmp.ge.f32.partialorder %v4134, 0.0
  %vm4161 = vcmp.ge.f32.partialorder %v4139, 0.0
  %vm4162 = vcmp.ge.f32.partialorder %v4144, 0.0
  %v4163 = vmul.f32 %v4069, 0.05
  %v4164 = vmul.f32 %v4074, 0.05
  %v4165 = vmul.f32 %v4079, 0.05
  %v4166 = vmul.f32 %v4084, 0.05
  %v4167 = vmul.f32 %v4089, 0.05
  %v4168 = vmul.f32 %v4094, 0.05
  %v4169 = vmul.f32 %v4099, 0.05
  %v4170 = vmul.f32 %v4104, 0.05
  %v4171 = vmul.f32 %v4109, 0.05
  %v4172 = vmul.f32 %v4114, 0.05
  %v4173 = vmul.f32 %v4119, 0.05
  %v4174 = vmul.f32 %v4124, 0.05
  %v4175 = vmul.f32 %v4129, 0.05
  %v4176 = vmul.f32 %v4134, 0.05
  %v4177 = vmul.f32 %v4139, 0.05
  %v4178 = vmul.f32 %v4144, 0.05
  %v4179 = vsel %vm4147, %v4069, %v4163
  %v4180 = vsel %vm4148, %v4074, %v4164
  %v4181 = vsel %vm4149, %v4079, %v4165
  %v4182 = vsel %vm4150, %v4084, %v4166
  %v4183 = vsel %vm4151, %v4089, %v4167
  %v4184 = vsel %vm4152, %v4094, %v4168
  %v4185 = vsel %vm4153, %v4099, %v4169
  %v4186 = vsel %vm4154, %v4104, %v4170
  %v4187 = vsel %vm4155, %v4109, %v4171
  %v4188 = vsel %vm4156, %v4114, %v4172
  %v4189 = vsel %vm4157, %v4119, %v4173
  %v4190 = vsel %vm4158, %v4124, %v4174
  %v4191 = vsel %vm4159, %v4129, %v4175
  %v4192 = vsel %vm4160, %v4134, %v4176
  %v4193 = vsel %vm4161, %v4139, %v4177
  %v4194 = vsel %vm4162, %v4144, %v4178
  %v4195 = vld [vmem:[%s14] sm:$0xff]
  %v4196 = vld [vmem:[%s14 + $0x8] sm:$0xff]
  %v4197 = vld [vmem:[%s14 + $0x10] sm:$0xff]
  %v4198 = vld [vmem:[%s14 + $0x18] sm:$0xff]
  %v4199 = vld [vmem:[%s14 + $0x20] sm:$0xff]
  %v4200 = vld [vmem:[%s14 + $0x28] sm:$0xff]
  %v4201 = vld [vmem:[%s14 + $0x30] sm:$0xff]
  %v4202 = vld [vmem:[%s14 + $0x38] sm:$0xff]
  %v4203 = vld [vmem:[%s15] sm:$0xff]
  %v4204 = vld [vmem:[%s15 + $0x8] sm:$0xff]
  %v4205 = vld [vmem:[%s15 + $0x10] sm:$0xff]
  %v4206 = vld [vmem:[%s15 + $0x18] sm:$0xff]
  %v4207 = vld [vmem:[%s15 + $0x20] sm:$0xff]
  %v4208 = vld [vmem:[%s15 + $0x28] sm:$0xff]
  %v4209 = vld [vmem:[%s15 + $0x30] sm:$0xff]
  %v4210 = vld [vmem:[%s15 + $0x38] sm:$0xff]
  %4212 = vset.pattern.permute.xlu0 0
  %4213 = vperm.xlu0 %4212, %v4203
  %v4214 = vpop.permute.xlu0 %4213
  %4217 = vset.pattern.permute.xlu0 0
  %4218 = vperm.xlu0 %4217, %v4204
  %v4219 = vpop.permute.xlu0 %4218
  %4222 = vset.pattern.permute.xlu0 0
  %4223 = vperm.xlu0 %4222, %v4205
  %v4224 = vpop.permute.xlu0 %4223
  %4227 = vset.pattern.permute.xlu0 0
  %4228 = vperm.xlu0 %4227, %v4206
  %v4229 = vpop.permute.xlu0 %4228
  %4232 = vset.pattern.permute.xlu0 0
  %4233 = vperm.xlu0 %4232, %v4207
  %v4234 = vpop.permute.xlu0 %4233
  %4237 = vset.pattern.permute.xlu0 0
  %4238 = vperm.xlu0 %4237, %v4208
  %v4239 = vpop.permute.xlu0 %4238
  %4242 = vset.pattern.permute.xlu0 0
  %4243 = vperm.xlu0 %4242, %v4209
  %v4244 = vpop.permute.xlu0 %4243
  %4247 = vset.pattern.permute.xlu0 0
  %4248 = vperm.xlu0 %4247, %v4210
  %v4249 = vpop.permute.xlu0 %4248
  %4251 = vmatprep.subr.mxu0 0.0
  %4252 = vmatpush1.msra.mxu0 %v4179
  %4253 = vmatprep.subr.mxu0 0.0
  %4254 = vmatpush1.msra.mxu0 %v4180
  %4255 = vmatprep.subr.mxu0 0.0
  %4256 = vmatpush1.msra.mxu0 %v4181
  %4257 = vmatprep.subr.mxu0 0.0
  %4258 = vmatpush1.msra.mxu0 %v4182
  %4259 = vmatprep.subr.mxu0 0.0
  %4260 = vmatpush1.msra.mxu0 %v4183
  %4261 = vmatprep.subr.mxu0 0.0
  %4262 = vmatpush1.msra.mxu0 %v4184
  %4263 = vmatprep.subr.mxu0 0.0
  %4264 = vmatpush1.msra.mxu0 %v4185
  %4265 = vmatprep.subr.mxu0 0.0
  %4266 = vmatpush1.msra.mxu0 %v4186
  %4267 = vmatprep.subr.mxu0 0.0
  %4268 = vmatpush1.msra.mxu0 %v4187
  %4269 = vmatprep.subr.mxu0 0.0
  %4270 = vmatpush1.msra.mxu0 %v4188
  %4271 = vmatprep.subr.mxu0 0.0
  %4272 = vmatpush1.msra.mxu0 %v4189
  %4273 = vmatprep.subr.mxu0 0.0
  %4274 = vmatpush1.msra.mxu0 %v4190
  %4275 = vmatprep.subr.mxu0 0.0
  %4276 = vmatpush1.msra.mxu0 %v4191
  %4277 = vmatprep.subr.mxu0 0.0
  %4278 = vmatpush1.msra.mxu0 %v4192
  %4279 = vmatprep.subr.mxu0 0.0
  %4280 = vmatpush1.msra.mxu0 %v4193
  %4281 = vmatprep.subr.mxu0 0.0
  %4282 = vmatpush1.msra.mxu0 %v4194
  %4283 = vmatprep.subr.mxu0 0.0
  %4284 = vmatpush1.msra.mxu0 0.0
  %4285 = vmatprep.subr.mxu0 0.0
  %4286 = vmatpush1.msra.mxu0 0.0
  %4287 = vmatprep.subr.mxu0 0.0
  %4288 = vmatpush1.msra.mxu0 0.0
  %4289 = vmatprep.subr.mxu0 0.0
  %4290 = vmatpush1.msra.mxu0 0.0
  %4291 = vmatprep.subr.mxu0 0.0
  %4292 = vmatpush1.msra.mxu0 0.0
  %4293 = vmatprep.subr.mxu0 0.0
  %4294 = vmatpush1.msra.mxu0 0.0
  %4295 = vmatprep.subr.mxu0 0.0
  %4296 = vmatpush1.msra.mxu0 0.0
  %4297 = vmatprep.subr.mxu0 0.0
  %4298 = vmatpush1.msra.mxu0 0.0
  %4299 = vmatprep.subr.mxu0 0.0
  %4300 = vmatpush1.msra.mxu0 0.0
  %4301 = vmatprep.subr.mxu0 0.0
  %4302 = vmatpush1.msra.mxu0 0.0
  %4303 = vmatprep.subr.mxu0 0.0
  %4304 = vmatpush1.msra.mxu0 0.0
  %4305 = vmatprep.subr.mxu0 0.0
  %4306 = vmatpush1.msra.mxu0 0.0
  %4307 = vmatprep.subr.mxu0 0.0
  %4308 = vmatpush1.msra.mxu0 0.0
  %4309 = vmatprep.subr.mxu0 0.0
  %4310 = vmatpush1.msra.mxu0 0.0
  %4311 = vmatprep.subr.mxu0 0.0
  %4312 = vmatpush1.msra.mxu0 0.0
  %4313 = vmatprep.subr.mxu0 0.0
  %4314 = vmatpush1.msra.mxu0 0.0
  %4315 = vmatprep.mubr.f32.mxu0 0.0
  %4316 = vmatmul.mubr.f32.gmra.mrb[0].mxu0 %v4195
  %v4317 = vpop.f32.mrb[0].mxu0
  %v4318 = vadd.f32 %v4214, %v4317
  %v4319 = vpop.f32.mrb[0].mxu0
  %4320 = vmatprep.mubr.f32.mxu0 0.0
  %4321 = vmatmul.mubr.f32.gmra.mrb[0].mxu0 %v4196
  %v4322 = vpop.f32.mrb[0].mxu0
  %v4323 = vadd.f32 %v4219, %v4322
  %v4324 = vpop.f32.mrb[0].mxu0
  %4325 = vmatprep.mubr.f32.mxu0 0.0
  %4326 = vmatmul.mubr.f32.gmra.mrb[0].mxu0 %v4197
  %v4327 = vpop.f32.mrb[0].mxu0
  %v4328 = vadd.f32 %v4224, %v4327
  %v4329 = vpop.f32.mrb[0].mxu0
  %4330 = vmatprep.mubr.f32.mxu0 0.0
  %4331 = vmatmul.mubr.f32.gmra.mrb[0].mxu0 %v4198
  %v4332 = vpop.f32.mrb[0].mxu0
  %v4333 = vadd.f32 %v4229, %v4332
  %v4334 = vpop.f32.mrb[0].mxu0
  %4335 = vmatprep.mubr.f32.mxu0 0.0
  %4336 = vmatmul.mubr.f32.gmra.mrb[0].mxu0 %v4199
  %v4337 = vpop.f32.mrb[0].mxu0
  %v4338 = vadd.f32 %v4234, %v4337
  %v4339 = vpop.f32.mrb[0].mxu0
  %4340 = vmatprep.mubr.f32.mxu0 0.0
  %4341 = vmatmul.mubr.f32.gmra.mrb[0].mxu0 %v4200
  %v4342 = vpop.f32.mrb[0].mxu0
  %v4343 = vadd.f32 %v4239, %v4342
  %v4344 = vpop.f32.mrb[0].mxu0
  %4345 = vmatprep.mubr.f32.mxu0 0.0
  %4346 = vmatmul.mubr.f32.gmra.mrb[0].mxu0 %v4201
  %v4347 = vpop.f32.mrb[0].mxu0
  %v4348 = vadd.f32 %v4244, %v4347
  %v4349 = vpop.f32.mrb[0].mxu0
  %4350 = vmatprep.mubr.f32.mxu0 0.0
  %4351 = vmatmul.mubr.f32.gmra.mrb[0].mxu0 %v4202
  %v4352 = vpop.f32.mrb[0].mxu0
  %v4353 = vadd.f32 %v4249, %v4352
  %v4354 = vpop.f32.mrb[0].mxu0
  %4355 = vdwg.mxu0
  %vm4356 = vcmask 15360
  %4357 = vst.msk [vmem:[%s16] sm:$0xff] %vm4356, %v2822
  %4358 = vst.msk [vmem:[%s16 + $0x8] sm:$0xff] %vm4356, %v2827
  %4359 = vst.msk [vmem:[%s16 + $0x10] sm:$0xff] %vm4356, %v2832
  %4360 = vst.msk [vmem:[%s16 + $0x18] sm:$0xff] %vm4356, %v2837
  %4361 = vst.msk [vmem:[%s16 + $0x20] sm:$0xff] %vm4356, %v2842
  %4362 = vst.msk [vmem:[%s16 + $0x28] sm:$0xff] %vm4356, %v2847
  %4363 = vst.msk [vmem:[%s16 + $0x30] sm:$0xff] %vm4356, %v2852
  %4364 = vst.msk [vmem:[%s16 + $0x38] sm:$0xff] %vm4356, %v2857
  %4365 = vst.msk [vmem:[%s16 + $0x40] sm:$0xff] %vm4356, %v2862
  %4366 = vst.msk [vmem:[%s16 + $0x48] sm:$0xff] %vm4356, %v2867
  %4367 = vst.msk [vmem:[%s16 + $0x50] sm:$0xff] %vm4356, %v2872
  %4368 = vst.msk [vmem:[%s16 + $0x58] sm:$0xff] %vm4356, %v2877
  %4369 = vst.msk [vmem:[%s16 + $0x60] sm:$0xff] %vm4356, %v2882
  %4370 = vst.msk [vmem:[%s16 + $0x68] sm:$0xff] %vm4356, %v2887
  %4371 = vst.msk [vmem:[%s16 + $0x70] sm:$0xff] %vm4356, %v2892
  %4372 = vst.msk [vmem:[%s16 + $0x78] sm:$0xff] %vm4356, %v2897
  %4373 = vst.msk [vmem:[%s16 + $0x80] sm:$0xff] %vm4356, %v4318
  %4374 = vst.msk [vmem:[%s16 + $0x88] sm:$0xff] %vm4356, %v4323
  %4375 = vst.msk [vmem:[%s16 + $0x90] sm:$0xff] %vm4356, %v4328
  %4376 = vst.msk [vmem:[%s16 + $0x98] sm:$0xff] %vm4356, %v4333
  %4377 = vst.msk [vmem:[%s16 + $0xa0] sm:$0xff] %vm4356, %v4338
  %4378 = vst.msk [vmem:[%s16 + $0xa8] sm:$0xff] %vm4356, %v4343
  %4379 = vst.msk [vmem:[%s16 + $0xb0] sm:$0xff] %vm4356, %v4348
  %4380 = vst.msk [vmem:[%s16 + $0xb8] sm:$0xff] %vm4356, %v4353
  // Predicated region
  $region66: #{forward.9} parent=0 // pred_check
    _
  $region67: #{forward.9} parent=0 // pred_check_branch
    %4382 = sbr.rel (0) target = $region69
  $region68: #{forward.9} parent=0 // pred_region
    _
  $region69: #{forward.9} parent=0 // pred_fallthru
    _
  // Predicated region
  $region70: #{forward.9} parent=0 // pred_check
    _
  $region71: #{forward.9} parent=0 // pred_check_branch
    %4384 = sbr.rel (0) target = $region73
  $region72: #{forward.9} parent=0 // pred_region
    _
  $region73: #{forward.9} parent=0 // pred_fallthru
    _

</llo_original>
